<compile_context>
chip_gen: v6e
topology: v6e:2x2x1
jax: 0.10.0
libtpu: 0.0.40
codegen_flags: <defaults>
</compile_context>

<pallas_src>
import math

import jax
import jax.numpy as jnp
from jax import lax
from jax.experimental import pallas as pl
from jax.experimental.pallas import tpu as pltpu

# ---------------- configuration (small shapes consistent with the module) ----
PATCH = 8                 # patch_size
DIM = 32                  # transformer width (dim)
DEPTH = 4                 # transformer depth
HEADS = 2
DHEAD = 16
INNER = HEADS * DHEAD     # == DIM
MLP = int(DIM * 4.0)      # mlp_ratio = 4
WAVE_DIM = 128
LN_EPS = 1e-5
BN_EPS = 1e-5
ATTN_SCALE = DHEAD ** -0.5


# ============================ in-kernel helpers ==============================
def _mxu(a, b):
    """MXU matmul: bf16 operands, f32 accumulation."""
    return jnp.dot(a.astype(jnp.bfloat16), b.astype(jnp.bfloat16),
                   preferred_element_type=jnp.float32)


def _mxu_nt(a, b):
    """a @ b.T (contract last dims of both), bf16 operands / f32 accumulation."""
    return lax.dot_general(a.astype(jnp.bfloat16), b.astype(jnp.bfloat16),
                           (((1,), (1,)), ((), ())),
                           preferred_element_type=jnp.float32)


def _gelu(x):
    # TODO(synk): PyTorch nn.GELU() default is exact erf-GELU; the tanh
    # approximation (EUP-friendly) is used inside kernels.
    c = math.sqrt(2.0 / math.pi)
    return 0.5 * x * (1.0 + jnp.tanh(c * (x + 0.044715 * x * x * x)))


def _layernorm(x, g, b):
    mu = jnp.mean(x, axis=-1, keepdims=True)
    var = jnp.mean(jnp.square(x - mu), axis=-1, keepdims=True)
    return (x - mu) * lax.rsqrt(var + LN_EPS) * g + b


# ============================ BlockSpec helpers ==============================
def _full(shape):
    """Whole-array block, grid-less call."""
    n = len(shape)
    return pl.BlockSpec(tuple(shape), lambda: (0,) * n)


def _rep_spec(shape):
    """Whole-array block, identical for every grid step (stays VMEM-resident)."""
    n = len(shape)
    return pl.BlockSpec(tuple(shape), lambda b: (0,) * n)


def _batch_spec(shape):
    """Leading (batch) axis indexed by the grid, full extent elsewhere."""
    n = len(shape)
    return pl.BlockSpec((1,) + tuple(shape[1:]), lambda b: (b,) + (0,) * (n - 1))


# ====================== kernel 1: dynamic embedding head =====================
def _dyn_embed_kernel(we_ref, fc1w_ref, fc1b_ref, fc2w_ref, fc2b_ref,
                      fcww_ref, fcwb_ref, fcbw_ref, fcbb_ref,
                      dynw_ref, dynb_ref):
    we = we_ref[...]                                              # (C, 128)
    h = _gelu(_mxu(we, fc1w_ref[...]) + fc1b_ref[...])
    h = _gelu(_mxu(h, fc2w_ref[...]) + fc2b_ref[...])
    we = we + h                                                   # FCBlock residual
    # dynamic conv weight / bias, *0.02 scale folded in-kernel
    dynw_ref[...] = (_mxu(we, fcww_ref[...]) + fcwb_ref[...]) * 0.02
    wmean = jnp.mean(we, axis=0, keepdims=True)                   # (1, 128)
    dynb_ref[...] = (_mxu(wmean, fcbw_ref[...]) + fcbb_ref[...]) * 0.02


def dynamic_embedding(params, waves):
    """Fused DynamicEmbedding head: returns (C*p*p, D) conv weight, (1, D) bias."""
    # TODO(synk): the latent-token nn.TransformerEncoder inside WavesTransformer
    # is simplified to direct linear projections of the wave embeddings.
    we = posemb_sincos_1d(waves, WAVE_DIM).astype(jnp.float32)    # (C, 128)
    C = we.shape[0]
    args = (we,
            params["fc1_w"], params["fc1_b"].reshape(1, -1),
            params["fc2_w"], params["fc2_b"].reshape(1, -1),
            params["fcw_w"], params["fcw_b"].reshape(1, -1),
            params["fcb_w"], params["fcb_b"].reshape(1, -1))
    dynw, dynb = pl.pallas_call(
        _dyn_embed_kernel,
        out_shape=(jax.ShapeDtypeStruct((C, PATCH * PATCH * DIM), jnp.float32),
                   jax.ShapeDtypeStruct((1, DIM), jnp.float32)),
        in_specs=[_full(a.shape) for a in args],
        out_specs=(_full((C, PATCH * PATCH * DIM)), _full((1, DIM))),
    )(*args)
    # (C, p*p*D) row-major == (C*p*p, D) row-major -> free reshape
    return dynw.reshape(C * PATCH * PATCH, DIM), dynb


# ======= kernel 2: patch embed + transformer stack + final LN + FPN heads ====
def transformer_and_fpn(params, xp_pad, base, wm, gh, gw):
    B, S, CPP = xp_pad.shape
    L = gh * gw
    GH2, GW2 = gh // 2, gw // 2
    L4 = GH2 * GW2
    bf = jnp.bfloat16

    layers = params["layers"]
    stack = lambda key: jnp.stack([lp[key] for lp in layers])

    # ---- resident weights: pre-cast matmul operands to bf16 ----
    wm_b = wm.astype(bf)                                          # (C*p*p, D)
    ln1g = stack("attn_ln_g")[:, None, :]                         # (DEPTH,1,D)
    ln1b = stack("attn_ln_b")[:, None, :]
    wqkv = stack("w_qkv").astype(bf)                              # (DEPTH,D,3*INNER)
    wo = stack("w_out").astype(bf)                                # (DEPTH,INNER,D)
    ln2g = stack("ff_ln_g")[:, None, :]
    ln2b = stack("ff_ln_b")[:, None, :]
    w1 = stack("ff_w1").astype(bf)                                # (DEPTH,D,MLP)
    b1 = stack("ff_b1")[:, None, :]                               # (DEPTH,1,MLP)
    w2 = stack("ff_w2").astype(bf)                                # (DEPTH,MLP,D)
    b2 = stack("ff_b2")[:, None, :]
    ng = params["norm_g"].reshape(1, DIM)
    nb = params["norm_b"].reshape(1, DIM)

    # ---- FPN weights: concat the 2x2 ConvT taps along output channels ----
    def convt_cat(w):  # PyTorch ConvT weight (Cin, Cout, 2, 2) -> (Cin, 4*Cout)
        return jnp.concatenate([w[:, :, a, b] for a in range(2) for b in range(2)],
                               axis=1)

    f1w1 = convt_cat(params["fpn1_w1"]).astype(bf)                # (D, 4D)
    f1b1 = jnp.tile(params["fpn1_b1"], 4).reshape(1, 4 * DIM)
    # TODO(synk): BatchNorm2d is applied in eval mode using running statistics.
    bn_scale = params["bn_g"] * lax.rsqrt(params["bn_var"] + BN_EPS)
    bn_shift = params["bn_b"] - params["bn_mean"] * bn_scale
    bns = jnp.tile(bn_scale, 4).reshape(1, 4 * DIM)
    bnt = jnp.tile(bn_shift, 4).reshape(1, 4 * DIM)
    f1w2 = convt_cat(params["fpn1_w2"]).astype(bf)                # (D, 4D)
    f1b2 = jnp.tile(params["fpn1_b2"], 4).reshape(1, 4 * DIM)
    f2w = convt_cat(params["fpn2_w"]).astype(bf)                  # (D, 4D)
    f2b = jnp.tile(params["fpn2_b"], 4).reshape(1, 4 * DIM)

    weights = (wm_b, ln1g, ln1b, wqkv, wo, ln2g, ln2b, w1, b1, w2, b2, ng, nb,
               f1w1, f1b1, bns, bnt, f1w2, f1b2, f2w, f2b)

    def kernel(xp_ref, base_ref,
               wm_ref, ln1g_ref, ln1b_ref, wqkv_ref, wo_ref,
               ln2g_ref, ln2b_ref, w1_ref, b1_ref, w2_ref, b2_ref,
               ng_ref, nb_ref,
               f1w1_ref, f1b1_ref, bns_ref, bnt_ref, f1w2_ref, f1b2_ref,
               f2w_ref, f2b_ref,
               out1_ref, out2_ref, out3_ref, out4_ref, out5_ref):
        # Patch embedding.  Row L (last) is the cls slot with zero pixels, so
        # it only receives base[L] (= cls token); rows 0..L-1 get conv(patch)
        # + dynamic bias + pos/meta encodings (all folded into `base`).
        x = _mxu(xp_ref[0], wm_ref[...]) + base_ref[0]            # (S, D) f32

        feat_tok = []
        for l in range(DEPTH):
            # ---- pre-LN multi-head self attention + residual ----
            xn = _layernorm(x, ln1g_ref[l], ln1b_ref[l])
            qkv = _mxu(xn, wqkv_ref[l])                           # (S, 3*INNER)
            head_out = []
            for h in range(HEADS):
                q = qkv[:, h * DHEAD:(h + 1) * DHEAD]
                k = qkv[:, INNER + h * DHEAD:INNER + (h + 1) * DHEAD]
                v = qkv[:, 2 * INNER + h * DHEAD:2 * INNER + (h + 1) * DHEAD]
                s = _mxu_nt(q, k) * ATTN_SCALE                    # (S, S)
                s = s - jnp.max(s, axis=-1, keepdims=True)
                p = jnp.exp(s)
                p = p * pl.reciprocal(jnp.sum(p, axis=-1, keepdims=True),
                                      approx=True)
                head_out.append(_mxu(p, v))                       # (S, DHEAD)
            o_cat = jnp.concatenate(head_out, axis=-1)            # (S, INNER)
            x = x + _mxu(o_cat, wo_ref[l])                        # single out-proj
            # ---- pre-LN MLP + residual ----
            xn = _layernorm(x, ln2g_ref[l], ln2b_ref[l])
            hid = _gelu(_mxu(xn, w1_ref[l]) + b1_ref[l])          # (S, MLP)
            x = x + _mxu(hid, w2_ref[l]) + b2_ref[l]
            feat_tok.append(x[:L, :])                             # spatial tokens

        xf = _layernorm(x, ng_ref[...], nb_ref[...])              # final norm

        # ---- fpn1: ConvT(2,2) -> BN(eval) -> GELU -> ConvT(2,2), lane-dense --
        f1b1v = f1b1_ref[...]
        bnsv = bns_ref[...]
        bntv = bnt_ref[...]
        f1w2v = f1w2_ref[...]
        f1b2v = f1b2_ref[...]
        y = _gelu((_mxu(feat_tok[0], f1w1_ref[...]) + f1b1v) * bnsv + bntv)  # (L,4D)
        for ab in range(4):                                       # ab = a*2+b
            out1_ref[0, ab] = _mxu(y[:, ab * DIM:(ab + 1) * DIM], f1w2v) + f1b2v

        # ---- fpn2: single ConvT(2,2), lane-dense (L, 4D) ----
        out2_ref[0] = _mxu(feat_tok[1], f2w_ref[...]) + f2b_ref[...]

        # ---- fpn3: identity ----
        out3_ref[0] = feat_tok[2]

        # ---- fpn4: 2x2 max-pool, fully vectorized ----
        t = feat_tok[3].reshape(L // 2, 2, DIM)                   # pair cols
        cmax = jnp.maximum(t[:, 0, :], t[:, 1, :])                # (gh*gw/2, D)
        r = cmax.reshape(GH2, 2, GW2, DIM)                        # pair rows
        out4_ref[0] = jnp.maximum(r[:, 0, :, :], r[:, 1, :, :]).reshape(L4, DIM)

        # ---- fpn5: identity on final-norm tokens ----
        out5_ref[0] = xf[:L, :]

    out_shapes = (jax.ShapeDtypeStruct((B, 4, L, 4 * DIM), jnp.float32),
                  jax.ShapeDtypeStruct((B, L, 4 * DIM), jnp.float32),
                  jax.ShapeDtypeStruct((B, L, DIM), jnp.float32),
                  jax.ShapeDtypeStruct((B, L4, DIM), jnp.float32),
                  jax.ShapeDtypeStruct((B, L, DIM), jnp.float32))
    out_specs = tuple(_batch_spec(s.shape) for s in out_shapes)

    return pl.pallas_call(
        kernel,
        grid=(B,),
        out_shape=out_shapes,
        in_specs=[_batch_spec(xp_pad.shape), _batch_spec(base.shape)]
                 + [_rep_spec(w.shape) for w in weights],
        out_specs=out_specs,
        compiler_params=pltpu.CompilerParams(
            dimension_semantics=("parallel",)),      # 2nd TensorCore on v7x
    )(xp_pad, base, *weights)


# ================================ plain-JAX glue =============================
def posemb_sincos_1d(pos, dim, temperature=10000.0):
    omega = jnp.arange(dim // 2, dtype=jnp.float32) / (dim // 2 - 1)
    omega = 1.0 / (temperature ** omega)
    scaled = pos[:, None] * omega[None, :]
    return jnp.concatenate([jnp.sin(scaled), jnp.cos(scaled)], axis=1)


def posemb_sincos_2d_with_gsd(h, w, dim, gsd, temperature=10000.0):
    y, x = jnp.meshgrid(jnp.arange(h, dtype=jnp.float32),
                        jnp.arange(w, dtype=jnp.float32), indexing="ij")
    omega = jnp.arange(dim // 4, dtype=jnp.float32) / (dim // 4 - 1)
    omega = 1.0 / (temperature ** (2.0 * omega / dim)) * (gsd / 1.0)
    yv = y.reshape(-1)[:, None] * omega[None, :]
    xv = x.reshape(-1)[:, None] * omega[None, :]
    return jnp.concatenate([jnp.sin(xv), jnp.cos(xv), jnp.sin(yv), jnp.cos(yv)],
                           axis=1)


# ================================ parameters =================================
def init_params(key):
    kit = iter(jax.random.split(key, 100))

    def nrm(shape, std=0.02):
        return jax.random.normal(next(kit), shape, dtype=jnp.float32) * std

    p = {}
    p["cls_token"] = nrm((1, 1, DIM))                       # randn * 0.02
    # --- DynamicEmbedding: FCBlock + weight/bias generator ---
    p["fc1_w"] = nrm((WAVE_DIM, WAVE_DIM)); p["fc1_b"] = jnp.zeros((WAVE_DIM,), jnp.float32)
    p["fc2_w"] = nrm((WAVE_DIM, WAVE_DIM)); p["fc2_b"] = jnp.zeros((WAVE_DIM,), jnp.float32)
    p["fcw_w"] = nrm((WAVE_DIM, PATCH * PATCH * DIM)); p["fcw_b"] = nrm((PATCH * PATCH * DIM,))
    p["fcb_w"] = nrm((WAVE_DIM, DIM)); p["fcb_b"] = nrm((DIM,))
    # --- Transformer layers (simple_vit style: pre-LN attention + pre-LN MLP) ---
    layers = []
    for _ in range(DEPTH):
        layers.append(dict(
            attn_ln_g=jnp.ones((DIM,), jnp.float32),
            attn_ln_b=jnp.zeros((DIM,), jnp.float32),
            w_qkv=nrm((DIM, 3 * INNER)),        # Linear(dim, 3*inner, bias=False)
            w_out=nrm((INNER, DIM)),            # Linear(inner, dim, bias=False)
            ff_ln_g=jnp.ones((DIM,), jnp.float32),
            ff_ln_b=jnp.zeros((DIM,), jnp.float32),
            ff_w1=nrm((DIM, MLP)), ff_b1=jnp.zeros((MLP,), jnp.float32),
            ff_w2=nrm((MLP, DIM)), ff_b2=jnp.zeros((DIM,), jnp.float32)))
    p["layers"] = layers
    p["norm_g"] = jnp.ones((DIM,), jnp.float32)
    p["norm_b"] = jnp.zeros((DIM,), jnp.float32)
    # --- FPN heads (ConvTranspose2d weights in PyTorch (Cin, Cout, kH, kW)) ---
    p["fpn1_w1"] = nrm((DIM, DIM, 2, 2), 0.05); p["fpn1_b1"] = nrm((DIM,))
    p["bn_g"] = 1.0 + nrm((DIM,)); p["bn_b"] = nrm((DIM,))
    p["bn_mean"] = nrm((DIM,)); p["bn_var"] = 1.0 + jnp.abs(nrm((DIM,)))
    p["fpn1_w2"] = nrm((DIM, DIM, 2, 2), 0.05); p["fpn1_b2"] = nrm((DIM,))
    p["fpn2_w"] = nrm((DIM, DIM, 2, 2), 0.05); p["fpn2_b"] = nrm((DIM,))
    # TODO(synk): checkpoint loading (hf_hub_download / load_from_ckpt) replaced
    # by deterministic in-script initialization.
    return p


# ================================ forward pass ===============================
@jax.jit
def segment_encoder_forward(params, cube, time, latlon, gsd, waves):
    B, C, H, W = cube.shape
    p = PATCH
    gh, gw = H // p, W // p
    L = gh * gw
    D = DIM

    # ---------------- DynamicEmbedding (to_patch_embed), one fused kernel ----
    Wm, dynb = dynamic_embedding(params, waves)            # (C*p*p, D), (1, D)

    # ---------------- patch extraction + encodings (cheap glue) --------------
    xp = cube.reshape(B, C, gh, p, gw, p)
    xp = jnp.transpose(xp, (0, 2, 4, 1, 3, 5)).reshape(B, L, C * p * p)
    # cls slot appended LAST with zero pixels (its conv contribution vanishes);
    # attention is permutation invariant, so semantics match cls-first PyTorch.
    xp_pad = jnp.concatenate(
        [xp, jnp.zeros((B, 1, C * p * p), jnp.float32)], axis=1)   # (B, S, C*p*p)

    pos = posemb_sincos_2d_with_gsd(gh, gw, D - 8, gsd)            # (L, D-8)
    time_latlon = jnp.concatenate([time, latlon], axis=-1)         # (B, 8)
    pos_meta = jnp.concatenate(
        [jnp.broadcast_to(pos[None], (B, L, D - 8)),
         jnp.broadcast_to(time_latlon[:, None, :], (B, L, 8))], axis=-1)
    base_tokens = pos_meta + dynb[None]                    # dyn conv bias folded in
    cls = jnp.broadcast_to(params["cls_token"], (B, 1, D))
    base = jnp.concatenate([base_tokens, cls], axis=1)             # (B, S, D)

    # -------- fused transformer stack + FPN heads (ONE pallas_call) ----------
    o1, o2, o3, o4, o5 = transformer_and_fpn(params, xp_pad, base, Wm, gh, gw)

    # -------- de-interleave / NHWC->NCHW layout plumbing (plain JAX) ---------
    # o1: (B, ab, L, cd*D+ch) -> pixel (4i+2a+c, 4j+2b+d)
    out1 = (o1.reshape(B, 2, 2, gh, gw, 2, 2, D)
              .transpose(0, 7, 3, 1, 5, 4, 2, 6)
              .reshape(B, D, 4 * gh, 4 * gw))
    # o2: (B, L, ab*D+ch) -> pixel (2i+a, 2j+b)
    out2 = (o2.reshape(B, gh, gw, 2, 2, D)
              .transpose(0, 5, 1, 3, 2, 4)
              .reshape(B, D, 2 * gh, 2 * gw))
    out3 = o3.reshape(B, gh, gw, D).transpose(0, 3, 1, 2)
    out4 = o4.reshape(B, gh // 2, gw // 2, D).transpose(0, 3, 1, 2)
    out5 = o5.reshape(B, gh, gw, D).transpose(0, 3, 1, 2)
    return [out1, out2, out3, out4, out5]


# ==================================== main ===================================
if __name__ == "__main__":
    key = jax.random.PRNGKey(0)
    kparam, kdata = jax.random.split(key)
    params = init_params(kparam)

    B, C, H, W = 2, 4, 32, 32
    ks = jax.random.split(kdata, 3)
    cube = jax.random.normal(ks[0], (B, C, H, W), dtype=jnp.float32)   # pixels (NCHW)
    time = jax.random.normal(ks[1], (B, 4), dtype=jnp.float32)         # week/hour sincos
    latlon = jax.random.normal(ks[2], (B, 4), dtype=jnp.float32)       # lat/lon sincos
    gsd = jnp.float32(10.0)
    waves = jnp.array([0.49, 0.56, 0.665, 0.842], dtype=jnp.float32)   # wavelengths (um)

    feats = segment_encoder_forward(params, cube, time, latlon, gsd, waves)
    feats = jax.block_until_ready(feats)

    expected = [(B, DIM, 16, 16), (B, DIM, 8, 8), (B, DIM, 4, 4),
                (B, DIM, 2, 2), (B, DIM, 4, 4)]
    assert [tuple(f.shape) for f in feats] == expected, \
        [tuple(f.shape) for f in feats]
    assert all(bool(jnp.all(jnp.isfinite(f))) for f in feats)
    print("KERNEL_OK")
</pallas_src>

<mosaic_0001>
module attributes {stable_mosaic.version = 11 : i64} {
  func.func @_dyn_embed_kernel(%arg0: memref<4x128xf32, #tpu.memory_space<vmem>>, %arg1: memref<128x128xf32, #tpu.memory_space<vmem>>, %arg2: memref<1x128xf32, #tpu.memory_space<vmem>>, %arg3: memref<128x128xf32, #tpu.memory_space<vmem>>, %arg4: memref<1x128xf32, #tpu.memory_space<vmem>>, %arg5: memref<128x2048xf32, #tpu.memory_space<vmem>>, %arg6: memref<1x2048xf32, #tpu.memory_space<vmem>>, %arg7: memref<128x32xf32, #tpu.memory_space<vmem>>, %arg8: memref<1x32xf32, #tpu.memory_space<vmem>>, %arg9: memref<4x2048xf32, #tpu.memory_space<vmem>>, %arg10: memref<1x32xf32, #tpu.memory_space<vmem>>) attributes {dimension_semantics = [], scalar_prefetch = 0 : i64, scratch_operands = 0 : i64, tpu.core_type = #tpu.core_type<tc>} {
    %c0 = arith.constant 0 : index
    %c0_0 = arith.constant 0 : index
    %0 = vector.load %arg0[%c0, %c0_0] : memref<4x128xf32, #tpu.memory_space<vmem>>, vector<4x128xf32>
    %c0_1 = arith.constant 0 : index
    %c0_2 = arith.constant 0 : index
    %1 = vector.load %arg1[%c0_1, %c0_2] : memref<128x128xf32, #tpu.memory_space<vmem>>, vector<128x128xf32>
    %2 = arith.truncf %0 : vector<4x128xf32> to vector<4x128xbf16>
    %3 = arith.truncf %1 : vector<128x128xf32> to vector<128x128xbf16>
    %cst = arith.constant dense<0.000000e+00> : vector<4x128xf32>
    %4 = tpu.matmul %2, %3, %cst {dimension_numbers = #tpu.dot_dimension_numbers<[1], [0], [0], [1], [0, 0, 1, 1], [], []>} : vector<4x128xbf16>, vector<128x128xbf16>, vector<4x128xf32> -> vector<4x128xf32>
    %c0_3 = arith.constant 0 : index
    %c0_4 = arith.constant 0 : index
    %5 = vector.load %arg2[%c0_3, %c0_4] : memref<1x128xf32, #tpu.memory_space<vmem>>, vector<1x128xf32>
    %6 = vector.broadcast %5 : vector<1x128xf32> to vector<4x128xf32>
    %7 = arith.addf %4, %6 : vector<4x128xf32>
    %cst_5 = arith.constant 5.000000e-01 : f32
    %8 = vector.broadcast %cst_5 : f32 to vector<4x128xf32>
    %9 = arith.mulf %8, %7 : vector<4x128xf32>
    %cst_6 = arith.constant 4.471500e-02 : f32
    %10 = vector.broadcast %cst_6 : f32 to vector<4x128xf32>
    %11 = arith.mulf %10, %7 : vector<4x128xf32>
    %12 = arith.mulf %11, %7 : vector<4x128xf32>
    %13 = arith.mulf %12, %7 : vector<4x128xf32>
    %14 = arith.addf %7, %13 : vector<4x128xf32>
    %cst_7 = arith.constant 0.797884583 : f32
    %15 = vector.broadcast %cst_7 : f32 to vector<4x128xf32>
    %16 = arith.mulf %15, %14 : vector<4x128xf32>
    %17 = math.tanh %16 : vector<4x128xf32>
    %cst_8 = arith.constant 1.000000e+00 : f32
    %18 = vector.broadcast %cst_8 : f32 to vector<4x128xf32>
    %19 = arith.addf %18, %17 : vector<4x128xf32>
    %20 = arith.mulf %9, %19 : vector<4x128xf32>
    %c0_9 = arith.constant 0 : index
    %c0_10 = arith.constant 0 : index
    %21 = vector.load %arg3[%c0_9, %c0_10] : memref<128x128xf32, #tpu.memory_space<vmem>>, vector<128x128xf32>
    %22 = arith.truncf %20 : vector<4x128xf32> to vector<4x128xbf16>
    %23 = arith.truncf %21 : vector<128x128xf32> to vector<128x128xbf16>
    %cst_11 = arith.constant dense<0.000000e+00> : vector<4x128xf32>
    %24 = tpu.matmul %22, %23, %cst_11 {dimension_numbers = #tpu.dot_dimension_numbers<[1], [0], [0], [1], [0, 0, 1, 1], [], []>} : vector<4x128xbf16>, vector<128x128xbf16>, vector<4x128xf32> -> vector<4x128xf32>
    %c0_12 = arith.constant 0 : index
    %c0_13 = arith.constant 0 : index
    %25 = vector.load %arg4[%c0_12, %c0_13] : memref<1x128xf32, #tpu.memory_space<vmem>>, vector<1x128xf32>
    %26 = vector.broadcast %25 : vector<1x128xf32> to vector<4x128xf32>
    %27 = arith.addf %24, %26 : vector<4x128xf32>
    %cst_14 = arith.constant 5.000000e-01 : f32
    %28 = vector.broadcast %cst_14 : f32 to vector<4x128xf32>
    %29 = arith.mulf %28, %27 : vector<4x128xf32>
    %cst_15 = arith.constant 4.471500e-02 : f32
    %30 = vector.broadcast %cst_15 : f32 to vector<4x128xf32>
    %31 = arith.mulf %30, %27 : vector<4x128xf32>
    %32 = arith.mulf %31, %27 : vector<4x128xf32>
    %33 = arith.mulf %32, %27 : vector<4x128xf32>
    %34 = arith.addf %27, %33 : vector<4x128xf32>
    %cst_16 = arith.constant 0.797884583 : f32
    %35 = vector.broadcast %cst_16 : f32 to vector<4x128xf32>
    %36 = arith.mulf %35, %34 : vector<4x128xf32>
    %37 = math.tanh %36 : vector<4x128xf32>
    %cst_17 = arith.constant 1.000000e+00 : f32
    %38 = vector.broadcast %cst_17 : f32 to vector<4x128xf32>
    %39 = arith.addf %38, %37 : vector<4x128xf32>
    %40 = arith.mulf %29, %39 : vector<4x128xf32>
    %41 = arith.addf %0, %40 : vector<4x128xf32>
    %c0_18 = arith.constant 0 : index
    %c0_19 = arith.constant 0 : index
    %42 = vector.load %arg5[%c0_18, %c0_19] : memref<128x2048xf32, #tpu.memory_space<vmem>>, vector<128x2048xf32>
    %43 = arith.truncf %41 : vector<4x128xf32> to vector<4x128xbf16>
    %44 = arith.truncf %42 : vector<128x2048xf32> to vector<128x2048xbf16>
    %cst_20 = arith.constant dense<0.000000e+00> : vector<4x2048xf32>
    %45 = tpu.matmul %43, %44, %cst_20 {dimension_numbers = #tpu.dot_dimension_numbers<[1], [0], [0], [1], [0, 0, 1, 1], [], []>} : vector<4x128xbf16>, vector<128x2048xbf16>, vector<4x2048xf32> -> vector<4x2048xf32>
    %c0_21 = arith.constant 0 : index
    %c0_22 = arith.constant 0 : index
    %46 = vector.load %arg6[%c0_21, %c0_22] : memref<1x2048xf32, #tpu.memory_space<vmem>>, vector<1x2048xf32>
    %47 = vector.broadcast %46 : vector<1x2048xf32> to vector<4x2048xf32>
    %48 = arith.addf %45, %47 : vector<4x2048xf32>
    %cst_23 = arith.constant 2.000000e-02 : f32
    %49 = vector.broadcast %cst_23 : f32 to vector<4x2048xf32>
    %50 = arith.mulf %48, %49 : vector<4x2048xf32>
    %c0_24 = arith.constant 0 : index
    %c0_25 = arith.constant 0 : index
    %51 = vector.load %arg9[%c0_24, %c0_25] : memref<4x2048xf32, #tpu.memory_space<vmem>>, vector<4x2048xf32>
    tpu.vector_store %arg9[%c0_24, %c0_25], %50 {strides = array<i32>} : memref<4x2048xf32, #tpu.memory_space<vmem>>, vector<4x2048xf32>,
    %cst_26 = arith.constant dense<0.000000e+00> : vector<128xf32>
    %52 = vector.multi_reduction <add>, %41, %cst_26 [0] : vector<4x128xf32> to vector<128xf32>
    %53 = vector.shape_cast %52 : vector<128xf32> to vector<1x128xf32>
    %cst_27 = arith.constant 4.000000e+00 : f32
    %54 = vector.broadcast %cst_27 : f32 to vector<1x128xf32>
    %55 = arith.divf %53, %54 : vector<1x128xf32>
    %c0_28 = arith.constant 0 : index
    %c0_29 = arith.constant 0 : index
    %56 = vector.load %arg7[%c0_28, %c0_29] : memref<128x32xf32, #tpu.memory_space<vmem>>, vector<128x32xf32>
    %57 = arith.truncf %55 : vector<1x128xf32> to vector<1x128xbf16>
    %58 = arith.truncf %56 : vector<128x32xf32> to vector<128x32xbf16>
    %cst_30 = arith.constant dense<0.000000e+00> : vector<1x32xf32>
    %59 = tpu.matmul %57, %58, %cst_30 {dimension_numbers = #tpu.dot_dimension_numbers<[1], [0], [0], [1], [0, 0, 1, 1], [], []>} : vector<1x128xbf16>, vector<128x32xbf16>, vector<1x32xf32> -> vector<1x32xf32>
    %c0_31 = arith.constant 0 : index
    %c0_32 = arith.constant 0 : index
    %60 = vector.load %arg8[%c0_31, %c0_32] : memref<1x32xf32, #tpu.memory_space<vmem>>, vector<1x32xf32>
    %61 = arith.addf %59, %60 : vector<1x32xf32>
    %cst_33 = arith.constant 2.000000e-02 : f32
    %62 = vector.broadcast %cst_33 : f32 to vector<1x32xf32>
    %63 = arith.mulf %61, %62 : vector<1x32xf32>
    %c0_34 = arith.constant 0 : index
    %c0_35 = arith.constant 0 : index
    %64 = vector.load %arg10[%c0_34, %c0_35] : memref<1x32xf32, #tpu.memory_space<vmem>>, vector<1x32xf32>
    tpu.vector_store %arg10[%c0_34, %c0_35], %63 {strides = array<i32>} : memref<1x32xf32, #tpu.memory_space<vmem>>, vector<1x32xf32>,
    return
  }
}

module attributes {stable_mosaic.version = 11 : i64} {
  func.func @kernel(%arg0: i32, %arg1: memref<1x17x256xf32, #tpu.memory_space<vmem>>, %arg2: memref<1x17x32xf32, #tpu.memory_space<vmem>>, %arg3: memref<256x32xbf16, #tpu.memory_space<vmem>>, %arg4: memref<4x1x32xf32, #tpu.memory_space<vmem>>, %arg5: memref<4x1x32xf32, #tpu.memory_space<vmem>>, %arg6: memref<4x32x96xbf16, #tpu.memory_space<vmem>>, %arg7: memref<4x32x32xbf16, #tpu.memory_space<vmem>>, %arg8: memref<4x1x32xf32, #tpu.memory_space<vmem>>, %arg9: memref<4x1x32xf32, #tpu.memory_space<vmem>>, %arg10: memref<4x32x128xbf16, #tpu.memory_space<vmem>>, %arg11: memref<4x1x128xf32, #tpu.memory_space<vmem>>, %arg12: memref<4x128x32xbf16, #tpu.memory_space<vmem>>, %arg13: memref<4x1x32xf32, #tpu.memory_space<vmem>>, %arg14: memref<1x32xf32, #tpu.memory_space<vmem>>, %arg15: memref<1x32xf32, #tpu.memory_space<vmem>>, %arg16: memref<32x128xbf16, #tpu.memory_space<vmem>>, %arg17: memref<1x128xf32, #tpu.memory_space<vmem>>, %arg18: memref<1x128xf32, #tpu.memory_space<vmem>>, %arg19: memref<1x128xf32, #tpu.memory_space<vmem>>, %arg20: memref<32x128xbf16, #tpu.memory_space<vmem>>, %arg21: memref<1x128xf32, #tpu.memory_space<vmem>>, %arg22: memref<32x128xbf16, #tpu.memory_space<vmem>>, %arg23: memref<1x128xf32, #tpu.memory_space<vmem>>, %arg24: memref<1x4x16x128xf32, #tpu.memory_space<vmem>>, %arg25: memref<1x16x128xf32, #tpu.memory_space<vmem>>, %arg26: memref<1x16x32xf32, #tpu.memory_space<vmem>>, %arg27: memref<1x4x32xf32, #tpu.memory_space<vmem>>, %arg28: memref<1x16x32xf32, #tpu.memory_space<vmem>>) attributes {dimension_semantics = [#tpu.dimension_semantics<parallel>], iteration_bounds = array<i64: 2>, scalar_prefetch = 0 : i64, scratch_operands = 0 : i64, tpu.core_type = #tpu.core_type<tc>, window_params = [{transform_indices = @transform_0, window_bounds = array<i64: 1, 17, 256>}, {transform_indices = @transform_1, window_bounds = array<i64: 1, 17, 32>}, {pipeline_mode = #tpu.pipeline_mode<synchronous>, transform_indices = @transform_2, window_bounds = array<i64: 256, 32>}, {pipeline_mode = #tpu.pipeline_mode<synchronous>, transform_indices = @transform_3, window_bounds = array<i64: 4, 1, 32>}, {pipeline_mode = #tpu.pipeline_mode<synchronous>, transform_indices = @transform_4, window_bounds = array<i64: 4, 1, 32>}, {pipeline_mode = #tpu.pipeline_mode<synchronous>, transform_indices = @transform_5, window_bounds = array<i64: 4, 32, 96>}, {pipeline_mode = #tpu.pipeline_mode<synchronous>, transform_indices = @transform_6, window_bounds = array<i64: 4, 32, 32>}, {pipeline_mode = #tpu.pipeline_mode<synchronous>, transform_indices = @transform_7, window_bounds = array<i64: 4, 1, 32>}, {pipeline_mode = #tpu.pipeline_mode<synchronous>, transform_indices = @transform_8, window_bounds = array<i64: 4, 1, 32>}, {pipeline_mode = #tpu.pipeline_mode<synchronous>, transform_indices = @transform_9, window_bounds = array<i64: 4, 32, 128>}, {pipeline_mode = #tpu.pipeline_mode<synchronous>, transform_indices = @transform_10, window_bounds = array<i64: 4, 1, 128>}, {pipeline_mode = #tpu.pipeline_mode<synchronous>, transform_indices = @transform_11, window_bounds = array<i64: 4, 128, 32>}, {pipeline_mode = #tpu.pipeline_mode<synchronous>, transform_indices = @transform_12, window_bounds = array<i64: 4, 1, 32>}, {pipeline_mode = #tpu.pipeline_mode<synchronous>, transform_indices = @transform_13, window_bounds = array<i64: 1, 32>}, {pipeline_mode = #tpu.pipeline_mode<synchronous>, transform_indices = @transform_14, window_bounds = array<i64: 1, 32>}, {pipeline_mode = #tpu.pipeline_mode<synchronous>, transform_indices = @transform_15, window_bounds = array<i64: 32, 128>}, {pipeline_mode = #tpu.pipeline_mode<synchronous>, transform_indices = @transform_16, window_bounds = array<i64: 1, 128>}, {pipeline_mode = #tpu.pipeline_mode<synchronous>, transform_indices = @transform_17, window_bounds = array<i64: 1, 128>}, {pipeline_mode = #tpu.pipeline_mode<synchronous>, transform_indices = @transform_18, window_bounds = array<i64: 1, 128>}, {pipeline_mode = #tpu.pipeline_mode<synchronous>, transform_indices = @transform_19, window_bounds = array<i64: 32, 128>}, {pipeline_mode = #tpu.pipeline_mode<synchronous>, transform_indices = @transform_20, window_bounds = array<i64: 1, 128>}, {pipeline_mode = #tpu.pipeline_mode<synchronous>, transform_indices = @transform_21, window_bounds = array<i64: 32, 128>}, {pipeline_mode = #tpu.pipeline_mode<synchronous>, transform_indices = @transform_22, window_bounds = array<i64: 1, 128>}, {transform_indices = @transform_23, window_bounds = array<i64: 1, 4, 16, 128>}, {transform_indices = @transform_24, window_bounds = array<i64: 1, 16, 128>}, {transform_indices = @transform_25, window_bounds = array<i64: 1, 16, 32>}, {transform_indices = @transform_26, window_bounds = array<i64: 1, 4, 32>}, {transform_indices = @transform_27, window_bounds = array<i64: 1, 16, 32>}]} {
    %c0 = arith.constant 0 : index
    %c0_0 = arith.constant 0 : index
    %c0_1 = arith.constant 0 : index
    %0 = vector.load %arg1[%c0, %c0_0, %c0_1] : memref<1x17x256xf32, #tpu.memory_space<vmem>>, vector<1x17x256xf32>
    %1 = vector.shape_cast %0 : vector<1x17x256xf32> to vector<17x256xf32>
    %c0_2 = arith.constant 0 : index
    %c0_3 = arith.constant 0 : index
    %2 = vector.load %arg3[%c0_2, %c0_3] : memref<256x32xbf16, #tpu.memory_space<vmem>>, vector<256x32xbf16>
    %3 = arith.truncf %1 : vector<17x256xf32> to vector<17x256xbf16>
    %cst = arith.constant dense<0.000000e+00> : vector<17x32xf32>
    %4 = tpu.matmul %3, %2, %cst {dimension_numbers = #tpu.dot_dimension_numbers<[1], [0], [0], [1], [0, 0, 1, 1], [], []>} : vector<17x256xbf16>, vector<256x32xbf16>, vector<17x32xf32> -> vector<17x32xf32>
    %c0_4 = arith.constant 0 : index
    %c0_5 = arith.constant 0 : index
    %c0_6 = arith.constant 0 : index
    %5 = vector.load %arg2[%c0_4, %c0_5, %c0_6] : memref<1x17x32xf32, #tpu.memory_space<vmem>>, vector<1x17x32xf32>
    %6 = vector.shape_cast %5 : vector<1x17x32xf32> to vector<17x32xf32>
    %7 = arith.addf %4, %6 : vector<17x32xf32>
    %c0_7 = arith.constant 0 : index
    %c0_8 = arith.constant 0 : index
    %c0_9 = arith.constant 0 : index
    %8 = vector.load %arg4[%c0_7, %c0_8, %c0_9] : memref<4x1x32xf32, #tpu.memory_space<vmem>>, vector<1x1x32xf32>
    %9 = vector.shape_cast %8 : vector<1x1x32xf32> to vector<1x32xf32>
    %c0_10 = arith.constant 0 : index
    %c0_11 = arith.constant 0 : index
    %c0_12 = arith.constant 0 : index
    %10 = vector.load %arg5[%c0_10, %c0_11, %c0_12] : memref<4x1x32xf32, #tpu.memory_space<vmem>>, vector<1x1x32xf32>
    %11 = vector.shape_cast %10 : vector<1x1x32xf32> to vector<1x32xf32>
    %cst_13 = arith.constant dense<0.000000e+00> : vector<17xf32>
    %12 = vector.multi_reduction <add>, %7, %cst_13 [1] : vector<17x32xf32> to vector<17xf32>
    %13 = vector.shape_cast %12 : vector<17xf32> to vector<17x1xf32>
    %cst_14 = arith.constant 3.200000e+01 : f32
    %14 = vector.broadcast %cst_14 : f32 to vector<17x1xf32>
    %15 = arith.divf %13, %14 : vector<17x1xf32>
    %16 = vector.broadcast %15 : vector<17x1xf32> to vector<17x32xf32>
    %17 = arith.subf %7, %16 : vector<17x32xf32>
    %18 = arith.mulf %17, %17 : vector<17x32xf32>
    %cst_15 = arith.constant dense<0.000000e+00> : vector<17xf32>
    %19 = vector.multi_reduction <add>, %18, %cst_15 [1] : vector<17x32xf32> to vector<17xf32>
    %20 = vector.shape_cast %19 : vector<17xf32> to vector<17x1xf32>
    %cst_16 = arith.constant 3.200000e+01 : f32
    %21 = vector.broadcast %cst_16 : f32 to vector<17x1xf32>
    %22 = arith.divf %20, %21 : vector<17x1xf32>
    %23 = vector.broadcast %15 : vector<17x1xf32> to vector<17x32xf32>
    %24 = arith.subf %7, %23 : vector<17x32xf32>
    %cst_17 = arith.constant 9.99999974E-6 : f32
    %25 = vector.broadcast %cst_17 : f32 to vector<17x1xf32>
    %26 = arith.addf %22, %25 : vector<17x1xf32>
    %27 = math.rsqrt %26 : vector<17x1xf32>
    %28 = vector.broadcast %27 : vector<17x1xf32> to vector<17x32xf32>
    %29 = arith.mulf %24, %28 : vector<17x32xf32>
    %30 = vector.broadcast %9 : vector<1x32xf32> to vector<17x32xf32>
    %31 = arith.mulf %29, %30 : vector<17x32xf32>
    %32 = vector.broadcast %11 : vector<1x32xf32> to vector<17x32xf32>
    %33 = arith.addf %31, %32 : vector<17x32xf32>
    %c0_18 = arith.constant 0 : index
    %c0_19 = arith.constant 0 : index
    %c0_20 = arith.constant 0 : index
    %34 = vector.load %arg6[%c0_18, %c0_19, %c0_20] : memref<4x32x96xbf16, #tpu.memory_space<vmem>>, vector<1x32x96xbf16>
    %35 = vector.shape_cast %34 : vector<1x32x96xbf16> to vector<32x96xbf16>
    %36 = arith.truncf %33 : vector<17x32xf32> to vector<17x32xbf16>
    %cst_21 = arith.constant dense<0.000000e+00> : vector<17x96xf32>
    %37 = tpu.matmul %36, %35, %cst_21 {dimension_numbers = #tpu.dot_dimension_numbers<[1], [0], [0], [1], [0, 0, 1, 1], [], []>} : vector<17x32xbf16>, vector<32x96xbf16>, vector<17x96xf32> -> vector<17x96xf32>
    %38 = vector.extract_strided_slice %37 {offsets = [0, 0], sizes = [17, 16], strides = [1, 1]} : vector<17x96xf32> to vector<17x16xf32>
    %39 = vector.extract_strided_slice %37 {offsets = [0, 32], sizes = [17, 16], strides = [1, 1]} : vector<17x96xf32> to vector<17x16xf32>
    %40 = vector.extract_strided_slice %37 {offsets = [0, 64], sizes = [17, 16], strides = [1, 1]} : vector<17x96xf32> to vector<17x16xf32>
    %41 = arith.truncf %38 : vector<17x16xf32> to vector<17x16xbf16>
    %42 = arith.truncf %39 : vector<17x16xf32> to vector<17x16xbf16>
    %cst_22 = arith.constant dense<0.000000e+00> : vector<17x17xf32>
    %43 = tpu.matmul %41, %42, %cst_22 {dimension_numbers = #tpu.dot_dimension_numbers<[1], [1], [0], [0], [0, 0, 1, 0], [], []>} : vector<17x16xbf16>, vector<17x16xbf16>, vector<17x17xf32> -> vector<17x17xf32>
    %cst_23 = arith.constant 2.500000e-01 : f32
    %44 = vector.broadcast %cst_23 : f32 to vector<17x17xf32>
    %45 = arith.mulf %43, %44 : vector<17x17xf32>
    %cst_24 = arith.constant dense<0xFF800000> : vector<17xf32>
    %46 = vector.multi_reduction <maximumf>, %45, %cst_24 [1] : vector<17x17xf32> to vector<17xf32>
    %47 = vector.shape_cast %46 : vector<17xf32> to vector<17x1xf32>
    %48 = vector.broadcast %47 : vector<17x1xf32> to vector<17x17xf32>
    %49 = arith.subf %45, %48 : vector<17x17xf32>
    %50 = math.exp %49 : vector<17x17xf32>
    %cst_25 = arith.constant dense<0.000000e+00> : vector<17xf32>
    %51 = vector.multi_reduction <add>, %50, %cst_25 [1] : vector<17x17xf32> to vector<17xf32>
    %52 = vector.shape_cast %51 : vector<17xf32> to vector<17x1xf32>
    %53 = tpu.reciprocal %52 {approx = true} : vector<17x1xf32> -> vector<17x1xf32>
    %54 = vector.broadcast %53 : vector<17x1xf32> to vector<17x17xf32>
    %55 = arith.mulf %50, %54 : vector<17x17xf32>
    %56 = arith.truncf %55 : vector<17x17xf32> to vector<17x17xbf16>
    %57 = arith.truncf %40 : vector<17x16xf32> to vector<17x16xbf16>
    %cst_26 = arith.constant dense<0.000000e+00> : vector<17x16xf32>
    %58 = tpu.matmul %56, %57, %cst_26 {dimension_numbers = #tpu.dot_dimension_numbers<[1], [0], [0], [1], [0, 0, 1, 1], [], []>} : vector<17x17xbf16>, vector<17x16xbf16>, vector<17x16xf32> -> vector<17x16xf32>
    %59 = vector.extract_strided_slice %37 {offsets = [0, 16], sizes = [17, 16], strides = [1, 1]} : vector<17x96xf32> to vector<17x16xf32>
    %60 = vector.extract_strided_slice %37 {offsets = [0, 48], sizes = [17, 16], strides = [1, 1]} : vector<17x96xf32> to vector<17x16xf32>
    %61 = vector.extract_strided_slice %37 {offsets = [0, 80], sizes = [17, 16], strides = [1, 1]} : vector<17x96xf32> to vector<17x16xf32>
    %62 = arith.truncf %59 : vector<17x16xf32> to vector<17x16xbf16>
    %63 = arith.truncf %60 : vector<17x16xf32> to vector<17x16xbf16>
    %cst_27 = arith.constant dense<0.000000e+00> : vector<17x17xf32>
    %64 = tpu.matmul %62, %63, %cst_27 {dimension_numbers = #tpu.dot_dimension_numbers<[1], [1], [0], [0], [0, 0, 1, 0], [], []>} : vector<17x16xbf16>, vector<17x16xbf16>, vector<17x17xf32> -> vector<17x17xf32>
    %cst_28 = arith.constant 2.500000e-01 : f32
    %65 = vector.broadcast %cst_28 : f32 to vector<17x17xf32>
    %66 = arith.mulf %64, %65 : vector<17x17xf32>
    %cst_29 = arith.constant dense<0xFF800000> : vector<17xf32>
    %67 = vector.multi_reduction <maximumf>, %66, %cst_29 [1] : vector<17x17xf32> to vector<17xf32>
    %68 = vector.shape_cast %67 : vector<17xf32> to vector<17x1xf32>
    %69 = vector.broadcast %68 : vector<17x1xf32> to vector<17x17xf32>
    %70 = arith.subf %66, %69 : vector<17x17xf32>
    %71 = math.exp %70 : vector<17x17xf32>
    %cst_30 = arith.constant dense<0.000000e+00> : vector<17xf32>
    %72 = vector.multi_reduction <add>, %71, %cst_30 [1] : vector<17x17xf32> to vector<17xf32>
    %73 = vector.shape_cast %72 : vector<17xf32> to vector<17x1xf32>
    %74 = tpu.reciprocal %73 {approx = true} : vector<17x1xf32> -> vector<17x1xf32>
    %75 = vector.broadcast %74 : vector<17x1xf32> to vector<17x17xf32>
    %76 = arith.mulf %71, %75 : vector<17x17xf32>
    %77 = arith.truncf %76 : vector<17x17xf32> to vector<17x17xbf16>
    %78 = arith.truncf %61 : vector<17x16xf32> to vector<17x16xbf16>
    %cst_31 = arith.constant dense<0.000000e+00> : vector<17x16xf32>
    %79 = tpu.matmul %77, %78, %cst_31 {dimension_numbers = #tpu.dot_dimension_numbers<[1], [0], [0], [1], [0, 0, 1, 1], [], []>} : vector<17x17xbf16>, vector<17x16xbf16>, vector<17x16xf32> -> vector<17x16xf32>
    %80 = tpu.concatenate %58, %79 in 1 : vector<17x16xf32>, vector<17x16xf32> -> vector<17x32xf32>
    %c0_32 = arith.constant 0 : index
    %c0_33 = arith.constant 0 : index
    %c0_34 = arith.constant 0 : index
    %81 = vector.load %arg7[%c0_32, %c0_33, %c0_34] : memref<4x32x32xbf16, #tpu.memory_space<vmem>>, vector<1x32x32xbf16>
    %82 = vector.shape_cast %81 : vector<1x32x32xbf16> to vector<32x32xbf16>
    %83 = arith.truncf %80 : vector<17x32xf32> to vector<17x32xbf16>
    %cst_35 = arith.constant dense<0.000000e+00> : vector<17x32xf32>
    %84 = tpu.matmul %83, %82, %cst_35 {dimension_numbers = #tpu.dot_dimension_numbers<[1], [0], [0], [1], [0, 0, 1, 1], [], []>} : vector<17x32xbf16>, vector<32x32xbf16>, vector<17x32xf32> -> vector<17x32xf32>
    %85 = arith.addf %7, %84 : vector<17x32xf32>
    %c0_36 = arith.constant 0 : index
    %c0_37 = arith.constant 0 : index
    %c0_38 = arith.constant 0 : index
    %86 = vector.load %arg8[%c0_36, %c0_37, %c0_38] : memref<4x1x32xf32, #tpu.memory_space<vmem>>, vector<1x1x32xf32>
    %87 = vector.shape_cast %86 : vector<1x1x32xf32> to vector<1x32xf32>
    %c0_39 = arith.constant 0 : index
    %c0_40 = arith.constant 0 : index
    %c0_41 = arith.constant 0 : index
    %88 = vector.load %arg9[%c0_39, %c0_40, %c0_41] : memref<4x1x32xf32, #tpu.memory_space<vmem>>, vector<1x1x32xf32>
    %89 = vector.shape_cast %88 : vector<1x1x32xf32> to vector<1x32xf32>
    %cst_42 = arith.constant dense<0.000000e+00> : vector<17xf32>
    %90 = vector.multi_reduction <add>, %85, %cst_42 [1] : vector<17x32xf32> to vector<17xf32>
    %91 = vector.shape_cast %90 : vector<17xf32> to vector<17x1xf32>
    %cst_43 = arith.constant 3.200000e+01 : f32
    %92 = vector.broadcast %cst_43 : f32 to vector<17x1xf32>
    %93 = arith.divf %91, %92 : vector<17x1xf32>
    %94 = vector.broadcast %93 : vector<17x1xf32> to vector<17x32xf32>
    %95 = arith.subf %85, %94 : vector<17x32xf32>
    %96 = arith.mulf %95, %95 : vector<17x32xf32>
    %cst_44 = arith.constant dense<0.000000e+00> : vector<17xf32>
    %97 = vector.multi_reduction <add>, %96, %cst_44 [1] : vector<17x32xf32> to vector<17xf32>
    %98 = vector.shape_cast %97 : vector<17xf32> to vector<17x1xf32>
    %cst_45 = arith.constant 3.200000e+01 : f32
    %99 = vector.broadcast %cst_45 : f32 to vector<17x1xf32>
    %100 = arith.divf %98, %99 : vector<17x1xf32>
    %101 = vector.broadcast %93 : vector<17x1xf32> to vector<17x32xf32>
    %102 = arith.subf %85, %101 : vector<17x32xf32>
    %cst_46 = arith.constant 9.99999974E-6 : f32
    %103 = vector.broadcast %cst_46 : f32 to vector<17x1xf32>
    %104 = arith.addf %100, %103 : vector<17x1xf32>
    %105 = math.rsqrt %104 : vector<17x1xf32>
    %106 = vector.broadcast %105 : vector<17x1xf32> to vector<17x32xf32>
    %107 = arith.mulf %102, %106 : vector<17x32xf32>
    %108 = vector.broadcast %87 : vector<1x32xf32> to vector<17x32xf32>
    %109 = arith.mulf %107, %108 : vector<17x32xf32>
    %110 = vector.broadcast %89 : vector<1x32xf32> to vector<17x32xf32>
    %111 = arith.addf %109, %110 : vector<17x32xf32>
    %c0_47 = arith.constant 0 : index
    %c0_48 = arith.constant 0 : index
    %c0_49 = arith.constant 0 : index
    %112 = vector.load %arg10[%c0_47, %c0_48, %c0_49] : memref<4x32x128xbf16, #tpu.memory_space<vmem>>, vector<1x32x128xbf16>
    %113 = vector.shape_cast %112 : vector<1x32x128xbf16> to vector<32x128xbf16>
    %114 = arith.truncf %111 : vector<17x32xf32> to vector<17x32xbf16>
    %cst_50 = arith.constant dense<0.000000e+00> : vector<17x128xf32>
    %115 = tpu.matmul %114, %113, %cst_50 {dimension_numbers = #tpu.dot_dimension_numbers<[1], [0], [0], [1], [0, 0, 1, 1], [], []>} : vector<17x32xbf16>, vector<32x128xbf16>, vector<17x128xf32> -> vector<17x128xf32>
    %c0_51 = arith.constant 0 : index
    %c0_52 = arith.constant 0 : index
    %c0_53 = arith.constant 0 : index
    %116 = vector.load %arg11[%c0_51, %c0_52, %c0_53] : memref<4x1x128xf32, #tpu.memory_space<vmem>>, vector<1x1x128xf32>
    %117 = vector.shape_cast %116 : vector<1x1x128xf32> to vector<1x128xf32>
    %118 = vector.broadcast %117 : vector<1x128xf32> to vector<17x128xf32>
    %119 = arith.addf %115, %118 : vector<17x128xf32>
    %cst_54 = arith.constant 5.000000e-01 : f32
    %120 = vector.broadcast %cst_54 : f32 to vector<17x128xf32>
    %121 = arith.mulf %120, %119 : vector<17x128xf32>
    %cst_55 = arith.constant 4.471500e-02 : f32
    %122 = vector.broadcast %cst_55 : f32 to vector<17x128xf32>
    %123 = arith.mulf %122, %119 : vector<17x128xf32>
    %124 = arith.mulf %123, %119 : vector<17x128xf32>
    %125 = arith.mulf %124, %119 : vector<17x128xf32>
    %126 = arith.addf %119, %125 : vector<17x128xf32>
    %cst_56 = arith.constant 0.797884583 : f32
    %127 = vector.broadcast %cst_56 : f32 to vector<17x128xf32>
    %128 = arith.mulf %127, %126 : vector<17x128xf32>
    %129 = math.tanh %128 : vector<17x128xf32>
    %cst_57 = arith.constant 1.000000e+00 : f32
    %130 = vector.broadcast %cst_57 : f32 to vector<17x128xf32>
    %131 = arith.addf %130, %129 : vector<17x128xf32>
    %132 = arith.mulf %121, %131 : vector<17x128xf32>
    %c0_58 = arith.constant 0 : index
    %c0_59 = arith.constant 0 : index
    %c0_60 = arith.constant 0 : index
    %133 = vector.load %arg12[%c0_58, %c0_59, %c0_60] : memref<4x128x32xbf16, #tpu.memory_space<vmem>>, vector<1x128x32xbf16>
    %134 = vector.shape_cast %133 : vector<1x128x32xbf16> to vector<128x32xbf16>
    %135 = arith.truncf %132 : vector<17x128xf32> to vector<17x128xbf16>
    %cst_61 = arith.constant dense<0.000000e+00> : vector<17x32xf32>
    %136 = tpu.matmul %135, %134, %cst_61 {dimension_numbers = #tpu.dot_dimension_numbers<[1], [0], [0], [1], [0, 0, 1, 1], [], []>} : vector<17x128xbf16>, vector<128x32xbf16>, vector<17x32xf32> -> vector<17x32xf32>
    %137 = arith.addf %85, %136 : vector<17x32xf32>
    %c0_62 = arith.constant 0 : index
    %c0_63 = arith.constant 0 : index
    %c0_64 = arith.constant 0 : index
    %138 = vector.load %arg13[%c0_62, %c0_63, %c0_64] : memref<4x1x32xf32, #tpu.memory_space<vmem>>, vector<1x1x32xf32>
    %139 = vector.shape_cast %138 : vector<1x1x32xf32> to vector<1x32xf32>
    %140 = vector.broadcast %139 : vector<1x32xf32> to vector<17x32xf32>
    %141 = arith.addf %137, %140 : vector<17x32xf32>
    %142 = vector.extract_strided_slice %141 {offsets = [0, 0], sizes = [16, 32], strides = [1, 1]} : vector<17x32xf32> to vector<16x32xf32>
    %c1 = arith.constant 1 : index
    %c0_65 = arith.constant 0 : index
    %c0_66 = arith.constant 0 : index
    %143 = vector.load %arg4[%c1, %c0_65, %c0_66] : memref<4x1x32xf32, #tpu.memory_space<vmem>>, vector<1x1x32xf32>
    %144 = vector.shape_cast %143 : vector<1x1x32xf32> to vector<1x32xf32>
    %c1_67 = arith.constant 1 : index
    %c0_68 = arith.constant 0 : index
    %c0_69 = arith.constant 0 : index
    %145 = vector.load %arg5[%c1_67, %c0_68, %c0_69] : memref<4x1x32xf32, #tpu.memory_space<vmem>>, vector<1x1x32xf32>
    %146 = vector.shape_cast %145 : vector<1x1x32xf32> to vector<1x32xf32>
    %cst_70 = arith.constant dense<0.000000e+00> : vector<17xf32>
    %147 = vector.multi_reduction <add>, %141, %cst_70 [1] : vector<17x32xf32> to vector<17xf32>
    %148 = vector.shape_cast %147 : vector<17xf32> to vector<17x1xf32>
    %cst_71 = arith.constant 3.200000e+01 : f32
    %149 = vector.broadcast %cst_71 : f32 to vector<17x1xf32>
    %150 = arith.divf %148, %149 : vector<17x1xf32>
    %151 = vector.broadcast %150 : vector<17x1xf32> to vector<17x32xf32>
    %152 = arith.subf %141, %151 : vector<17x32xf32>
    %153 = arith.mulf %152, %152 : vector<17x32xf32>
    %cst_72 = arith.constant dense<0.000000e+00> : vector<17xf32>
    %154 = vector.multi_reduction <add>, %153, %cst_72 [1] : vector<17x32xf32> to vector<17xf32>
    %155 = vector.shape_cast %154 : vector<17xf32> to vector<17x1xf32>
    %cst_73 = arith.constant 3.200000e+01 : f32
    %156 = vector.broadcast %cst_73 : f32 to vector<17x1xf32>
    %157 = arith.divf %155, %156 : vector<17x1xf32>
    %158 = vector.broadcast %150 : vector<17x1xf32> to vector<17x32xf32>
    %159 = arith.subf %141, %158 : vector<17x32xf32>
    %cst_74 = arith.constant 9.99999974E-6 : f32
    %160 = vector.broadcast %cst_74 : f32 to vector<17x1xf32>
    %161 = arith.addf %157, %160 : vector<17x1xf32>
    %162 = math.rsqrt %161 : vector<17x1xf32>
    %163 = vector.broadcast %162 : vector<17x1xf32> to vector<17x32xf32>
    %164 = arith.mulf %159, %163 : vector<17x32xf32>
    %165 = vector.broadcast %144 : vector<1x32xf32> to vector<17x32xf32>
    %166 = arith.mulf %164, %165 : vector<17x32xf32>
    %167 = vector.broadcast %146 : vector<1x32xf32> to vector<17x32xf32>
    %168 = arith.addf %166, %167 : vector<17x32xf32>
    %c1_75 = arith.constant 1 : index
    %c0_76 = arith.constant 0 : index
    %c0_77 = arith.constant 0 : index
    %169 = vector.load %arg6[%c1_75, %c0_76, %c0_77] : memref<4x32x96xbf16, #tpu.memory_space<vmem>>, vector<1x32x96xbf16>
    %170 = vector.shape_cast %169 : vector<1x32x96xbf16> to vector<32x96xbf16>
    %171 = arith.truncf %168 : vector<17x32xf32> to vector<17x32xbf16>
    %cst_78 = arith.constant dense<0.000000e+00> : vector<17x96xf32>
    %172 = tpu.matmul %171, %170, %cst_78 {dimension_numbers = #tpu.dot_dimension_numbers<[1], [0], [0], [1], [0, 0, 1, 1], [], []>} : vector<17x32xbf16>, vector<32x96xbf16>, vector<17x96xf32> -> vector<17x96xf32>
    %173 = vector.extract_strided_slice %172 {offsets = [0, 0], sizes = [17, 16], strides = [1, 1]} : vector<17x96xf32> to vector<17x16xf32>
    %174 = vector.extract_strided_slice %172 {offsets = [0, 32], sizes = [17, 16], strides = [1, 1]} : vector<17x96xf32> to vector<17x16xf32>
    %175 = vector.extract_strided_slice %172 {offsets = [0, 64], sizes = [17, 16], strides = [1, 1]} : vector<17x96xf32> to vector<17x16xf32>
    %176 = arith.truncf %173 : vector<17x16xf32> to vector<17x16xbf16>
    %177 = arith.truncf %174 : vector<17x16xf32> to vector<17x16xbf16>
    %cst_79 = arith.constant dense<0.000000e+00> : vector<17x17xf32>
    %178 = tpu.matmul %176, %177, %cst_79 {dimension_numbers = #tpu.dot_dimension_numbers<[1], [1], [0], [0], [0, 0, 1, 0], [], []>} : vector<17x16xbf16>, vector<17x16xbf16>, vector<17x17xf32> -> vector<17x17xf32>
    %cst_80 = arith.constant 2.500000e-01 : f32
    %179 = vector.broadcast %cst_80 : f32 to vector<17x17xf32>
    %180 = arith.mulf %178, %179 : vector<17x17xf32>
    %cst_81 = arith.constant dense<0xFF800000> : vector<17xf32>
    %181 = vector.multi_reduction <maximumf>, %180, %cst_81 [1] : vector<17x17xf32> to vector<17xf32>
    %182 = vector.shape_cast %181 : vector<17xf32> to vector<17x1xf32>
    %183 = vector.broadcast %182 : vector<17x1xf32> to vector<17x17xf32>
    %184 = arith.subf %180, %183 : vector<17x17xf32>
    %185 = math.exp %184 : vector<17x17xf32>
    %cst_82 = arith.constant dense<0.000000e+00> : vector<17xf32>
    %186 = vector.multi_reduction <add>, %185, %cst_82 [1] : vector<17x17xf32> to vector<17xf32>
    %187 = vector.shape_cast %186 : vector<17xf32> to vector<17x1xf32>
    %188 = tpu.reciprocal %187 {approx = true} : vector<17x1xf32> -> vector<17x1xf32>
    %189 = vector.broadcast %188 : vector<17x1xf32> to vector<17x17xf32>
    %190 = arith.mulf %185, %189 : vector<17x17xf32>
    %191 = arith.truncf %190 : vector<17x17xf32> to vector<17x17xbf16>
    %192 = arith.truncf %175 : vector<17x16xf32> to vector<17x16xbf16>
    %cst_83 = arith.constant dense<0.000000e+00> : vector<17x16xf32>
    %193 = tpu.matmul %191, %192, %cst_83 {dimension_numbers = #tpu.dot_dimension_numbers<[1], [0], [0], [1], [0, 0, 1, 1], [], []>} : vector<17x17xbf16>, vector<17x16xbf16>, vector<17x16xf32> -> vector<17x16xf32>
    %194 = vector.extract_strided_slice %172 {offsets = [0, 16], sizes = [17, 16], strides = [1, 1]} : vector<17x96xf32> to vector<17x16xf32>
    %195 = vector.extract_strided_slice %172 {offsets = [0, 48], sizes = [17, 16], strides = [1, 1]} : vector<17x96xf32> to vector<17x16xf32>
    %196 = vector.extract_strided_slice %172 {offsets = [0, 80], sizes = [17, 16], strides = [1, 1]} : vector<17x96xf32> to vector<17x16xf32>
    %197 = arith.truncf %194 : vector<17x16xf32> to vector<17x16xbf16>
    %198 = arith.truncf %195 : vector<17x16xf32> to vector<17x16xbf16>
    %cst_84 = arith.constant dense<0.000000e+00> : vector<17x17xf32>
    %199 = tpu.matmul %197, %198, %cst_84 {dimension_numbers = #tpu.dot_dimension_numbers<[1], [1], [0], [0], [0, 0, 1, 0], [], []>} : vector<17x16xbf16>, vector<17x16xbf16>, vector<17x17xf32> -> vector<17x17xf32>
    %cst_85 = arith.constant 2.500000e-01 : f32
    %200 = vector.broadcast %cst_85 : f32 to vector<17x17xf32>
    %201 = arith.mulf %199, %200 : vector<17x17xf32>
    %cst_86 = arith.constant dense<0xFF800000> : vector<17xf32>
    %202 = vector.multi_reduction <maximumf>, %201, %cst_86 [1] : vector<17x17xf32> to vector<17xf32>
    %203 = vector.shape_cast %202 : vector<17xf32> to vector<17x1xf32>
    %204 = vector.broadcast %203 : vector<17x1xf32> to vector<17x17xf32>
    %205 = arith.subf %201, %204 : vector<17x17xf32>
    %206 = math.exp %205 : vector<17x17xf32>
    %cst_87 = arith.constant dense<0.000000e+00> : vector<17xf32>
    %207 = vector.multi_reduction <add>, %206, %cst_87 [1] : vector<17x17xf32> to vector<17xf32>
    %208 = vector.shape_cast %207 : vector<17xf32> to vector<17x1xf32>
    %209 = tpu.reciprocal %208 {approx = true} : vector<17x1xf32> -> vector<17x1xf32>
    %210 = vector.broadcast %209 : vector<17x1xf32> to vector<17x17xf32>
    %211 = arith.mulf %206, %210 : vector<17x17xf32>
    %212 = arith.truncf %211 : vector<17x17xf32> to vector<17x17xbf16>
    %213 = arith.truncf %196 : vector<17x16xf32> to vector<17x16xbf16>
    %cst_88 = arith.constant dense<0.000000e+00> : vector<17x16xf32>
    %214 = tpu.matmul %212, %213, %cst_88 {dimension_numbers = #tpu.dot_dimension_numbers<[1], [0], [0], [1], [0, 0, 1, 1], [], []>} : vector<17x17xbf16>, vector<17x16xbf16>, vector<17x16xf32> -> vector<17x16xf32>
    %215 = tpu.concatenate %193, %214 in 1 : vector<17x16xf32>, vector<17x16xf32> -> vector<17x32xf32>
    %c1_89 = arith.constant 1 : index
    %c0_90 = arith.constant 0 : index
    %c0_91 = arith.constant 0 : index
    %216 = vector.load %arg7[%c1_89, %c0_90, %c0_91] : memref<4x32x32xbf16, #tpu.memory_space<vmem>>, vector<1x32x32xbf16>
    %217 = vector.shape_cast %216 : vector<1x32x32xbf16> to vector<32x32xbf16>
    %218 = arith.truncf %215 : vector<17x32xf32> to vector<17x32xbf16>
    %cst_92 = arith.constant dense<0.000000e+00> : vector<17x32xf32>
    %219 = tpu.matmul %218, %217, %cst_92 {dimension_numbers = #tpu.dot_dimension_numbers<[1], [0], [0], [1], [0, 0, 1, 1], [], []>} : vector<17x32xbf16>, vector<32x32xbf16>, vector<17x32xf32> -> vector<17x32xf32>
    %220 = arith.addf %141, %219 : vector<17x32xf32>
    %c1_93 = arith.constant 1 : index
    %c0_94 = arith.constant 0 : index
    %c0_95 = arith.constant 0 : index
    %221 = vector.load %arg8[%c1_93, %c0_94, %c0_95] : memref<4x1x32xf32, #tpu.memory_space<vmem>>, vector<1x1x32xf32>
    %222 = vector.shape_cast %221 : vector<1x1x32xf32> to vector<1x32xf32>
    %c1_96 = arith.constant 1 : index
    %c0_97 = arith.constant 0 : index
    %c0_98 = arith.constant 0 : index
    %223 = vector.load %arg9[%c1_96, %c0_97, %c0_98] : memref<4x1x32xf32, #tpu.memory_space<vmem>>, vector<1x1x32xf32>
    %224 = vector.shape_cast %223 : vector<1x1x32xf32> to vector<1x32xf32>
    %cst_99 = arith.constant dense<0.000000e+00> : vector<17xf32>
    %225 = vector.multi_reduction <add>, %220, %cst_99 [1] : vector<17x32xf32> to vector<17xf32>
    %226 = vector.shape_cast %225 : vector<17xf32> to vector<17x1xf32>
    %cst_100 = arith.constant 3.200000e+01 : f32
    %227 = vector.broadcast %cst_100 : f32 to vector<17x1xf32>
    %228 = arith.divf %226, %227 : vector<17x1xf32>
    %229 = vector.broadcast %228 : vector<17x1xf32> to vector<17x32xf32>
    %230 = arith.subf %220, %229 : vector<17x32xf32>
    %231 = arith.mulf %230, %230 : vector<17x32xf32>
    %cst_101 = arith.constant dense<0.000000e+00> : vector<17xf32>
    %232 = vector.multi_reduction <add>, %231, %cst_101 [1] : vector<17x32xf32> to vector<17xf32>
    %233 = vector.shape_cast %232 : vector<17xf32> to vector<17x1xf32>
    %cst_102 = arith.constant 3.200000e+01 : f32
    %234 = vector.broadcast %cst_102 : f32 to vector<17x1xf32>
    %235 = arith.divf %233, %234 : vector<17x1xf32>
    %236 = vector.broadcast %228 : vector<17x1xf32> to vector<17x32xf32>
    %237 = arith.subf %220, %236 : vector<17x32xf32>
    %cst_103 = arith.constant 9.99999974E-6 : f32
    %238 = vector.broadcast %cst_103 : f32 to vector<17x1xf32>
    %239 = arith.addf %235, %238 : vector<17x1xf32>
    %240 = math.rsqrt %239 : vector<17x1xf32>
    %241 = vector.broadcast %240 : vector<17x1xf32> to vector<17x32xf32>
    %242 = arith.mulf %237, %241 : vector<17x32xf32>
    %243 = vector.broadcast %222 : vector<1x32xf32> to vector<17x32xf32>
    %244 = arith.mulf %242, %243 : vector<17x32xf32>
    %245 = vector.broadcast %224 : vector<1x32xf32> to vector<17x32xf32>
    %246 = arith.addf %244, %245 : vector<17x32xf32>
    %c1_104 = arith.constant 1 : index
    %c0_105 = arith.constant 0 : index
    %c0_106 = arith.constant 0 : index
    %247 = vector.load %arg10[%c1_104, %c0_105, %c0_106] : memref<4x32x128xbf16, #tpu.memory_space<vmem>>, vector<1x32x128xbf16>
    %248 = vector.shape_cast %247 : vector<1x32x128xbf16> to vector<32x128xbf16>
    %249 = arith.truncf %246 : vector<17x32xf32> to vector<17x32xbf16>
    %cst_107 = arith.constant dense<0.000000e+00> : vector<17x128xf32>
    %250 = tpu.matmul %249, %248, %cst_107 {dimension_numbers = #tpu.dot_dimension_numbers<[1], [0], [0], [1], [0, 0, 1, 1], [], []>} : vector<17x32xbf16>, vector<32x128xbf16>, vector<17x128xf32> -> vector<17x128xf32>
    %c1_108 = arith.constant 1 : index
    %c0_109 = arith.constant 0 : index
    %c0_110 = arith.constant 0 : index
    %251 = vector.load %arg11[%c1_108, %c0_109, %c0_110] : memref<4x1x128xf32, #tpu.memory_space<vmem>>, vector<1x1x128xf32>
    %252 = vector.shape_cast %251 : vector<1x1x128xf32> to vector<1x128xf32>
    %253 = vector.broadcast %252 : vector<1x128xf32> to vector<17x128xf32>
    %254 = arith.addf %250, %253 : vector<17x128xf32>
    %cst_111 = arith.constant 5.000000e-01 : f32
    %255 = vector.broadcast %cst_111 : f32 to vector<17x128xf32>
    %256 = arith.mulf %255, %254 : vector<17x128xf32>
    %cst_112 = arith.constant 4.471500e-02 : f32
    %257 = vector.broadcast %cst_112 : f32 to vector<17x128xf32>
    %258 = arith.mulf %257, %254 : vector<17x128xf32>
    %259 = arith.mulf %258, %254 : vector<17x128xf32>
    %260 = arith.mulf %259, %254 : vector<17x128xf32>
    %261 = arith.addf %254, %260 : vector<17x128xf32>
    %cst_113 = arith.constant 0.797884583 : f32
    %262 = vector.broadcast %cst_113 : f32 to vector<17x128xf32>
    %263 = arith.mulf %262, %261 : vector<17x128xf32>
    %264 = math.tanh %263 : vector<17x128xf32>
    %cst_114 = arith.constant 1.000000e+00 : f32
    %265 = vector.broadcast %cst_114 : f32 to vector<17x128xf32>
    %266 = arith.addf %265, %264 : vector<17x128xf32>
    %267 = arith.mulf %256, %266 : vector<17x128xf32>
    %c1_115 = arith.constant 1 : index
    %c0_116 = arith.constant 0 : index
    %c0_117 = arith.constant 0 : index
    %268 = vector.load %arg12[%c1_115, %c0_116, %c0_117] : memref<4x128x32xbf16, #tpu.memory_space<vmem>>, vector<1x128x32xbf16>
    %269 = vector.shape_cast %268 : vector<1x128x32xbf16> to vector<128x32xbf16>
    %270 = arith.truncf %267 : vector<17x128xf32> to vector<17x128xbf16>
    %cst_118 = arith.constant dense<0.000000e+00> : vector<17x32xf32>
    %271 = tpu.matmul %270, %269, %cst_118 {dimension_numbers = #tpu.dot_dimension_numbers<[1], [0], [0], [1], [0, 0, 1, 1], [], []>} : vector<17x128xbf16>, vector<128x32xbf16>, vector<17x32xf32> -> vector<17x32xf32>
    %272 = arith.addf %220, %271 : vector<17x32xf32>
    %c1_119 = arith.constant 1 : index
    %c0_120 = arith.constant 0 : index
    %c0_121 = arith.constant 0 : index
    %273 = vector.load %arg13[%c1_119, %c0_120, %c0_121] : memref<4x1x32xf32, #tpu.memory_space<vmem>>, vector<1x1x32xf32>
    %274 = vector.shape_cast %273 : vector<1x1x32xf32> to vector<1x32xf32>
    %275 = vector.broadcast %274 : vector<1x32xf32> to vector<17x32xf32>
    %276 = arith.addf %272, %275 : vector<17x32xf32>
    %277 = vector.extract_strided_slice %276 {offsets = [0, 0], sizes = [16, 32], strides = [1, 1]} : vector<17x32xf32> to vector<16x32xf32>
    %c2 = arith.constant 2 : index
    %c0_122 = arith.constant 0 : index
    %c0_123 = arith.constant 0 : index
    %278 = vector.load %arg4[%c2, %c0_122, %c0_123] : memref<4x1x32xf32, #tpu.memory_space<vmem>>, vector<1x1x32xf32>
    %279 = vector.shape_cast %278 : vector<1x1x32xf32> to vector<1x32xf32>
    %c2_124 = arith.constant 2 : index
    %c0_125 = arith.constant 0 : index
    %c0_126 = arith.constant 0 : index
    %280 = vector.load %arg5[%c2_124, %c0_125, %c0_126] : memref<4x1x32xf32, #tpu.memory_space<vmem>>, vector<1x1x32xf32>
    %281 = vector.shape_cast %280 : vector<1x1x32xf32> to vector<1x32xf32>
    %cst_127 = arith.constant dense<0.000000e+00> : vector<17xf32>
    %282 = vector.multi_reduction <add>, %276, %cst_127 [1] : vector<17x32xf32> to vector<17xf32>
    %283 = vector.shape_cast %282 : vector<17xf32> to vector<17x1xf32>
    %cst_128 = arith.constant 3.200000e+01 : f32
    %284 = vector.broadcast %cst_128 : f32 to vector<17x1xf32>
    %285 = arith.divf %283, %284 : vector<17x1xf32>
    %286 = vector.broadcast %285 : vector<17x1xf32> to vector<17x32xf32>
    %287 = arith.subf %276, %286 : vector<17x32xf32>
    %288 = arith.mulf %287, %287 : vector<17x32xf32>
    %cst_129 = arith.constant dense<0.000000e+00> : vector<17xf32>
    %289 = vector.multi_reduction <add>, %288, %cst_129 [1] : vector<17x32xf32> to vector<17xf32>
    %290 = vector.shape_cast %289 : vector<17xf32> to vector<17x1xf32>
    %cst_130 = arith.constant 3.200000e+01 : f32
    %291 = vector.broadcast %cst_130 : f32 to vector<17x1xf32>
    %292 = arith.divf %290, %291 : vector<17x1xf32>
    %293 = vector.broadcast %285 : vector<17x1xf32> to vector<17x32xf32>
    %294 = arith.subf %276, %293 : vector<17x32xf32>
    %cst_131 = arith.constant 9.99999974E-6 : f32
    %295 = vector.broadcast %cst_131 : f32 to vector<17x1xf32>
    %296 = arith.addf %292, %295 : vector<17x1xf32>
    %297 = math.rsqrt %296 : vector<17x1xf32>
    %298 = vector.broadcast %297 : vector<17x1xf32> to vector<17x32xf32>
    %299 = arith.mulf %294, %298 : vector<17x32xf32>
    %300 = vector.broadcast %279 : vector<1x32xf32> to vector<17x32xf32>
    %301 = arith.mulf %299, %300 : vector<17x32xf32>
    %302 = vector.broadcast %281 : vector<1x32xf32> to vector<17x32xf32>
    %303 = arith.addf %301, %302 : vector<17x32xf32>
    %c2_132 = arith.constant 2 : index
    %c0_133 = arith.constant 0 : index
    %c0_134 = arith.constant 0 : index
    %304 = vector.load %arg6[%c2_132, %c0_133, %c0_134] : memref<4x32x96xbf16, #tpu.memory_space<vmem>>, vector<1x32x96xbf16>
    %305 = vector.shape_cast %304 : vector<1x32x96xbf16> to vector<32x96xbf16>
    %306 = arith.truncf %303 : vector<17x32xf32> to vector<17x32xbf16>
    %cst_135 = arith.constant dense<0.000000e+00> : vector<17x96xf32>
    %307 = tpu.matmul %306, %305, %cst_135 {dimension_numbers = #tpu.dot_dimension_numbers<[1], [0], [0], [1], [0, 0, 1, 1], [], []>} : vector<17x32xbf16>, vector<32x96xbf16>, vector<17x96xf32> -> vector<17x96xf32>
    %308 = vector.extract_strided_slice %307 {offsets = [0, 0], sizes = [17, 16], strides = [1, 1]} : vector<17x96xf32> to vector<17x16xf32>
    %309 = vector.extract_strided_slice %307 {offsets = [0, 32], sizes = [17, 16], strides = [1, 1]} : vector<17x96xf32> to vector<17x16xf32>
    %310 = vector.extract_strided_slice %307 {offsets = [0, 64], sizes = [17, 16], strides = [1, 1]} : vector<17x96xf32> to vector<17x16xf32>
    %311 = arith.truncf %308 : vector<17x16xf32> to vector<17x16xbf16>
    %312 = arith.truncf %309 : vector<17x16xf32> to vector<17x16xbf16>
    %cst_136 = arith.constant dense<0.000000e+00> : vector<17x17xf32>
    %313 = tpu.matmul %311, %312, %cst_136 {dimension_numbers = #tpu.dot_dimension_numbers<[1], [1], [0], [0], [0, 0, 1, 0], [], []>} : vector<17x16xbf16>, vector<17x16xbf16>, vector<17x17xf32> -> vector<17x17xf32>
    %cst_137 = arith.constant 2.500000e-01 : f32
    %314 = vector.broadcast %cst_137 : f32 to vector<17x17xf32>
    %315 = arith.mulf %313, %314 : vector<17x17xf32>
    %cst_138 = arith.constant dense<0xFF800000> : vector<17xf32>
    %316 = vector.multi_reduction <maximumf>, %315, %cst_138 [1] : vector<17x17xf32> to vector<17xf32>
    %317 = vector.shape_cast %316 : vector<17xf32> to vector<17x1xf32>
    %318 = vector.broadcast %317 : vector<17x1xf32> to vector<17x17xf32>
    %319 = arith.subf %315, %318 : vector<17x17xf32>
    %320 = math.exp %319 : vector<17x17xf32>
    %cst_139 = arith.constant dense<0.000000e+00> : vector<17xf32>
    %321 = vector.multi_reduction <add>, %320, %cst_139 [1] : vector<17x17xf32> to vector<17xf32>
    %322 = vector.shape_cast %321 : vector<17xf32> to vector<17x1xf32>
    %323 = tpu.reciprocal %322 {approx = true} : vector<17x1xf32> -> vector<17x1xf32>
    %324 = vector.broadcast %323 : vector<17x1xf32> to vector<17x17xf32>
    %325 = arith.mulf %320, %324 : vector<17x17xf32>
    %326 = arith.truncf %325 : vector<17x17xf32> to vector<17x17xbf16>
    %327 = arith.truncf %310 : vector<17x16xf32> to vector<17x16xbf16>
    %cst_140 = arith.constant dense<0.000000e+00> : vector<17x16xf32>
    %328 = tpu.matmul %326, %327, %cst_140 {dimension_numbers = #tpu.dot_dimension_numbers<[1], [0], [0], [1], [0, 0, 1, 1], [], []>} : vector<17x17xbf16>, vector<17x16xbf16>, vector<17x16xf32> -> vector<17x16xf32>
    %329 = vector.extract_strided_slice %307 {offsets = [0, 16], sizes = [17, 16], strides = [1, 1]} : vector<17x96xf32> to vector<17x16xf32>
    %330 = vector.extract_strided_slice %307 {offsets = [0, 48], sizes = [17, 16], strides = [1, 1]} : vector<17x96xf32> to vector<17x16xf32>
    %331 = vector.extract_strided_slice %307 {offsets = [0, 80], sizes = [17, 16], strides = [1, 1]} : vector<17x96xf32> to vector<17x16xf32>
    %332 = arith.truncf %329 : vector<17x16xf32> to vector<17x16xbf16>
    %333 = arith.truncf %330 : vector<17x16xf32> to vector<17x16xbf16>
    %cst_141 = arith.constant dense<0.000000e+00> : vector<17x17xf32>
    %334 = tpu.matmul %332, %333, %cst_141 {dimension_numbers = #tpu.dot_dimension_numbers<[1], [1], [0], [0], [0, 0, 1, 0], [], []>} : vector<17x16xbf16>, vector<17x16xbf16>, vector<17x17xf32> -> vector<17x17xf32>
    %cst_142 = arith.constant 2.500000e-01 : f32
    %335 = vector.broadcast %cst_142 : f32 to vector<17x17xf32>
    %336 = arith.mulf %334, %335 : vector<17x17xf32>
    %cst_143 = arith.constant dense<0xFF800000> : vector<17xf32>
    %337 = vector.multi_reduction <maximumf>, %336, %cst_143 [1] : vector<17x17xf32> to vector<17xf32>
    %338 = vector.shape_cast %337 : vector<17xf32> to vector<17x1xf32>
    %339 = vector.broadcast %338 : vector<17x1xf32> to vector<17x17xf32>
    %340 = arith.subf %336, %339 : vector<17x17xf32>
    %341 = math.exp %340 : vector<17x17xf32>
    %cst_144 = arith.constant dense<0.000000e+00> : vector<17xf32>
    %342 = vector.multi_reduction <add>, %341, %cst_144 [1] : vector<17x17xf32> to vector<17xf32>
    %343 = vector.shape_cast %342 : vector<17xf32> to vector<17x1xf32>
    %344 = tpu.reciprocal %343 {approx = true} : vector<17x1xf32> -> vector<17x1xf32>
    %345 = vector.broadcast %344 : vector<17x1xf32> to vector<17x17xf32>
    %346 = arith.mulf %341, %345 : vector<17x17xf32>
    %347 = arith.truncf %346 : vector<17x17xf32> to vector<17x17xbf16>
    %348 = arith.truncf %331 : vector<17x16xf32> to vector<17x16xbf16>
    %cst_145 = arith.constant dense<0.000000e+00> : vector<17x16xf32>
    %349 = tpu.matmul %347, %348, %cst_145 {dimension_numbers = #tpu.dot_dimension_numbers<[1], [0], [0], [1], [0, 0, 1, 1], [], []>} : vector<17x17xbf16>, vector<17x16xbf16>, vector<17x16xf32> -> vector<17x16xf32>
    %350 = tpu.concatenate %328, %349 in 1 : vector<17x16xf32>, vector<17x16xf32> -> vector<17x32xf32>
    %c2_146 = arith.constant 2 : index
    %c0_147 = arith.constant 0 : index
    %c0_148 = arith.constant 0 : index
    %351 = vector.load %arg7[%c2_146, %c0_147, %c0_148] : memref<4x32x32xbf16, #tpu.memory_space<vmem>>, vector<1x32x32xbf16>
    %352 = vector.shape_cast %351 : vector<1x32x32xbf16> to vector<32x32xbf16>
    %353 = arith.truncf %350 : vector<17x32xf32> to vector<17x32xbf16>
    %cst_149 = arith.constant dense<0.000000e+00> : vector<17x32xf32>
    %354 = tpu.matmul %353, %352, %cst_149 {dimension_numbers = #tpu.dot_dimension_numbers<[1], [0], [0], [1], [0, 0, 1, 1], [], []>} : vector<17x32xbf16>, vector<32x32xbf16>, vector<17x32xf32> -> vector<17x32xf32>
    %355 = arith.addf %276, %354 : vector<17x32xf32>
    %c2_150 = arith.constant 2 : index
    %c0_151 = arith.constant 0 : index
    %c0_152 = arith.constant 0 : index
    %356 = vector.load %arg8[%c2_150, %c0_151, %c0_152] : memref<4x1x32xf32, #tpu.memory_space<vmem>>, vector<1x1x32xf32>
    %357 = vector.shape_cast %356 : vector<1x1x32xf32> to vector<1x32xf32>
    %c2_153 = arith.constant 2 : index
    %c0_154 = arith.constant 0 : index
    %c0_155 = arith.constant 0 : index
    %358 = vector.load %arg9[%c2_153, %c0_154, %c0_155] : memref<4x1x32xf32, #tpu.memory_space<vmem>>, vector<1x1x32xf32>
    %359 = vector.shape_cast %358 : vector<1x1x32xf32> to vector<1x32xf32>
    %cst_156 = arith.constant dense<0.000000e+00> : vector<17xf32>
    %360 = vector.multi_reduction <add>, %355, %cst_156 [1] : vector<17x32xf32> to vector<17xf32>
    %361 = vector.shape_cast %360 : vector<17xf32> to vector<17x1xf32>
    %cst_157 = arith.constant 3.200000e+01 : f32
    %362 = vector.broadcast %cst_157 : f32 to vector<17x1xf32>
    %363 = arith.divf %361, %362 : vector<17x1xf32>
    %364 = vector.broadcast %363 : vector<17x1xf32> to vector<17x32xf32>
    %365 = arith.subf %355, %364 : vector<17x32xf32>
    %366 = arith.mulf %365, %365 : vector<17x32xf32>
    %cst_158 = arith.constant dense<0.000000e+00> : vector<17xf32>
    %367 = vector.multi_reduction <add>, %366, %cst_158 [1] : vector<17x32xf32> to vector<17xf32>
    %368 = vector.shape_cast %367 : vector<17xf32> to vector<17x1xf32>
    %cst_159 = arith.constant 3.200000e+01 : f32
    %369 = vector.broadcast %cst_159 : f32 to vector<17x1xf32>
    %370 = arith.divf %368, %369 : vector<17x1xf32>
    %371 = vector.broadcast %363 : vector<17x1xf32> to vector<17x32xf32>
    %372 = arith.subf %355, %371 : vector<17x32xf32>
    %cst_160 = arith.constant 9.99999974E-6 : f32
    %373 = vector.broadcast %cst_160 : f32 to vector<17x1xf32>
    %374 = arith.addf %370, %373 : vector<17x1xf32>
    %375 = math.rsqrt %374 : vector<17x1xf32>
    %376 = vector.broadcast %375 : vector<17x1xf32> to vector<17x32xf32>
    %377 = arith.mulf %372, %376 : vector<17x32xf32>
    %378 = vector.broadcast %357 : vector<1x32xf32> to vector<17x32xf32>
    %379 = arith.mulf %377, %378 : vector<17x32xf32>
    %380 = vector.broadcast %359 : vector<1x32xf32> to vector<17x32xf32>
    %381 = arith.addf %379, %380 : vector<17x32xf32>
    %c2_161 = arith.constant 2 : index
    %c0_162 = arith.constant 0 : index
    %c0_163 = arith.constant 0 : index
    %382 = vector.load %arg10[%c2_161, %c0_162, %c0_163] : memref<4x32x128xbf16, #tpu.memory_space<vmem>>, vector<1x32x128xbf16>
    %383 = vector.shape_cast %382 : vector<1x32x128xbf16> to vector<32x128xbf16>
    %384 = arith.truncf %381 : vector<17x32xf32> to vector<17x32xbf16>
    %cst_164 = arith.constant dense<0.000000e+00> : vector<17x128xf32>
    %385 = tpu.matmul %384, %383, %cst_164 {dimension_numbers = #tpu.dot_dimension_numbers<[1], [0], [0], [1], [0, 0, 1, 1], [], []>} : vector<17x32xbf16>, vector<32x128xbf16>, vector<17x128xf32> -> vector<17x128xf32>
    %c2_165 = arith.constant 2 : index
    %c0_166 = arith.constant 0 : index
    %c0_167 = arith.constant 0 : index
    %386 = vector.load %arg11[%c2_165, %c0_166, %c0_167] : memref<4x1x128xf32, #tpu.memory_space<vmem>>, vector<1x1x128xf32>
    %387 = vector.shape_cast %386 : vector<1x1x128xf32> to vector<1x128xf32>
    %388 = vector.broadcast %387 : vector<1x128xf32> to vector<17x128xf32>
    %389 = arith.addf %385, %388 : vector<17x128xf32>
    %cst_168 = arith.constant 5.000000e-01 : f32
    %390 = vector.broadcast %cst_168 : f32 to vector<17x128xf32>
    %391 = arith.mulf %390, %389 : vector<17x128xf32>
    %cst_169 = arith.constant 4.471500e-02 : f32
    %392 = vector.broadcast %cst_169 : f32 to vector<17x128xf32>
    %393 = arith.mulf %392, %389 : vector<17x128xf32>
    %394 = arith.mulf %393, %389 : vector<17x128xf32>
    %395 = arith.mulf %394, %389 : vector<17x128xf32>
    %396 = arith.addf %389, %395 : vector<17x128xf32>
    %cst_170 = arith.constant 0.797884583 : f32
    %397 = vector.broadcast %cst_170 : f32 to vector<17x128xf32>
    %398 = arith.mulf %397, %396 : vector<17x128xf32>
    %399 = math.tanh %398 : vector<17x128xf32>
    %cst_171 = arith.constant 1.000000e+00 : f32
    %400 = vector.broadcast %cst_171 : f32 to vector<17x128xf32>
    %401 = arith.addf %400, %399 : vector<17x128xf32>
    %402 = arith.mulf %391, %401 : vector<17x128xf32>
    %c2_172 = arith.constant 2 : index
    %c0_173 = arith.constant 0 : index
    %c0_174 = arith.constant 0 : index
    %403 = vector.load %arg12[%c2_172, %c0_173, %c0_174] : memref<4x128x32xbf16, #tpu.memory_space<vmem>>, vector<1x128x32xbf16>
    %404 = vector.shape_cast %403 : vector<1x128x32xbf16> to vector<128x32xbf16>
    %405 = arith.truncf %402 : vector<17x128xf32> to vector<17x128xbf16>
    %cst_175 = arith.constant dense<0.000000e+00> : vector<17x32xf32>
    %406 = tpu.matmul %405, %404, %cst_175 {dimension_numbers = #tpu.dot_dimension_numbers<[1], [0], [0], [1], [0, 0, 1, 1], [], []>} : vector<17x128xbf16>, vector<128x32xbf16>, vector<17x32xf32> -> vector<17x32xf32>
    %407 = arith.addf %355, %406 : vector<17x32xf32>
    %c2_176 = arith.constant 2 : index
    %c0_177 = arith.constant 0 : index
    %c0_178 = arith.constant 0 : index
    %408 = vector.load %arg13[%c2_176, %c0_177, %c0_178] : memref<4x1x32xf32, #tpu.memory_space<vmem>>, vector<1x1x32xf32>
    %409 = vector.shape_cast %408 : vector<1x1x32xf32> to vector<1x32xf32>
    %410 = vector.broadcast %409 : vector<1x32xf32> to vector<17x32xf32>
    %411 = arith.addf %407, %410 : vector<17x32xf32>
    %412 = vector.extract_strided_slice %411 {offsets = [0, 0], sizes = [16, 32], strides = [1, 1]} : vector<17x32xf32> to vector<16x32xf32>
    %c3 = arith.constant 3 : index
    %c0_179 = arith.constant 0 : index
    %c0_180 = arith.constant 0 : index
    %413 = vector.load %arg4[%c3, %c0_179, %c0_180] : memref<4x1x32xf32, #tpu.memory_space<vmem>>, vector<1x1x32xf32>
    %414 = vector.shape_cast %413 : vector<1x1x32xf32> to vector<1x32xf32>
    %c3_181 = arith.constant 3 : index
    %c0_182 = arith.constant 0 : index
    %c0_183 = arith.constant 0 : index
    %415 = vector.load %arg5[%c3_181, %c0_182, %c0_183] : memref<4x1x32xf32, #tpu.memory_space<vmem>>, vector<1x1x32xf32>
    %416 = vector.shape_cast %415 : vector<1x1x32xf32> to vector<1x32xf32>
    %cst_184 = arith.constant dense<0.000000e+00> : vector<17xf32>
    %417 = vector.multi_reduction <add>, %411, %cst_184 [1] : vector<17x32xf32> to vector<17xf32>
    %418 = vector.shape_cast %417 : vector<17xf32> to vector<17x1xf32>
    %cst_185 = arith.constant 3.200000e+01 : f32
    %419 = vector.broadcast %cst_185 : f32 to vector<17x1xf32>
    %420 = arith.divf %418, %419 : vector<17x1xf32>
    %421 = vector.broadcast %420 : vector<17x1xf32> to vector<17x32xf32>
    %422 = arith.subf %411, %421 : vector<17x32xf32>
    %423 = arith.mulf %422, %422 : vector<17x32xf32>
    %cst_186 = arith.constant dense<0.000000e+00> : vector<17xf32>
    %424 = vector.multi_reduction <add>, %423, %cst_186 [1] : vector<17x32xf32> to vector<17xf32>
    %425 = vector.shape_cast %424 : vector<17xf32> to vector<17x1xf32>
    %cst_187 = arith.constant 3.200000e+01 : f32
    %426 = vector.broadcast %cst_187 : f32 to vector<17x1xf32>
    %427 = arith.divf %425, %426 : vector<17x1xf32>
    %428 = vector.broadcast %420 : vector<17x1xf32> to vector<17x32xf32>
    %429 = arith.subf %411, %428 : vector<17x32xf32>
    %cst_188 = arith.constant 9.99999974E-6 : f32
    %430 = vector.broadcast %cst_188 : f32 to vector<17x1xf32>
    %431 = arith.addf %427, %430 : vector<17x1xf32>
    %432 = math.rsqrt %431 : vector<17x1xf32>
    %433 = vector.broadcast %432 : vector<17x1xf32> to vector<17x32xf32>
    %434 = arith.mulf %429, %433 : vector<17x32xf32>
    %435 = vector.broadcast %414 : vector<1x32xf32> to vector<17x32xf32>
    %436 = arith.mulf %434, %435 : vector<17x32xf32>
    %437 = vector.broadcast %416 : vector<1x32xf32> to vector<17x32xf32>
    %438 = arith.addf %436, %437 : vector<17x32xf32>
    %c3_189 = arith.constant 3 : index
    %c0_190 = arith.constant 0 : index
    %c0_191 = arith.constant 0 : index
    %439 = vector.load %arg6[%c3_189, %c0_190, %c0_191] : memref<4x32x96xbf16, #tpu.memory_space<vmem>>, vector<1x32x96xbf16>
    %440 = vector.shape_cast %439 : vector<1x32x96xbf16> to vector<32x96xbf16>
    %441 = arith.truncf %438 : vector<17x32xf32> to vector<17x32xbf16>
    %cst_192 = arith.constant dense<0.000000e+00> : vector<17x96xf32>
    %442 = tpu.matmul %441, %440, %cst_192 {dimension_numbers = #tpu.dot_dimension_numbers<[1], [0], [0], [1], [0, 0, 1, 1], [], []>} : vector<17x32xbf16>, vector<32x96xbf16>, vector<17x96xf32> -> vector<17x96xf32>
    %443 = vector.extract_strided_slice %442 {offsets = [0, 0], sizes = [17, 16], strides = [1, 1]} : vector<17x96xf32> to vector<17x16xf32>
    %444 = vector.extract_strided_slice %442 {offsets = [0, 32], sizes = [17, 16], strides = [1, 1]} : vector<17x96xf32> to vector<17x16xf32>
    %445 = vector.extract_strided_slice %442 {offsets = [0, 64], sizes = [17, 16], strides = [1, 1]} : vector<17x96xf32> to vector<17x16xf32>
    %446 = arith.truncf %443 : vector<17x16xf32> to vector<17x16xbf16>
    %447 = arith.truncf %444 : vector<17x16xf32> to vector<17x16xbf16>
    %cst_193 = arith.constant dense<0.000000e+00> : vector<17x17xf32>
    %448 = tpu.matmul %446, %447, %cst_193 {dimension_numbers = #tpu.dot_dimension_numbers<[1], [1], [0], [0], [0, 0, 1, 0], [], []>} : vector<17x16xbf16>, vector<17x16xbf16>, vector<17x17xf32> -> vector<17x17xf32>
    %cst_194 = arith.constant 2.500000e-01 : f32
    %449 = vector.broadcast %cst_194 : f32 to vector<17x17xf32>
    %450 = arith.mulf %448, %449 : vector<17x17xf32>
    %cst_195 = arith.constant dense<0xFF800000> : vector<17xf32>
    %451 = vector.multi_reduction <maximumf>, %450, %cst_195 [1] : vector<17x17xf32> to vector<17xf32>
    %452 = vector.shape_cast %451 : vector<17xf32> to vector<17x1xf32>
    %453 = vector.broadcast %452 : vector<17x1xf32> to vector<17x17xf32>
    %454 = arith.subf %450, %453 : vector<17x17xf32>
    %455 = math.exp %454 : vector<17x17xf32>
    %cst_196 = arith.constant dense<0.000000e+00> : vector<17xf32>
    %456 = vector.multi_reduction <add>, %455, %cst_196 [1] : vector<17x17xf32> to vector<17xf32>
    %457 = vector.shape_cast %456 : vector<17xf32> to vector<17x1xf32>
    %458 = tpu.reciprocal %457 {approx = true} : vector<17x1xf32> -> vector<17x1xf32>
    %459 = vector.broadcast %458 : vector<17x1xf32> to vector<17x17xf32>
    %460 = arith.mulf %455, %459 : vector<17x17xf32>
    %461 = arith.truncf %460 : vector<17x17xf32> to vector<17x17xbf16>
    %462 = arith.truncf %445 : vector<17x16xf32> to vector<17x16xbf16>
    %cst_197 = arith.constant dense<0.000000e+00> : vector<17x16xf32>
    %463 = tpu.matmul %461, %462, %cst_197 {dimension_numbers = #tpu.dot_dimension_numbers<[1], [0], [0], [1], [0, 0, 1, 1], [], []>} : vector<17x17xbf16>, vector<17x16xbf16>, vector<17x16xf32> -> vector<17x16xf32>
    %464 = vector.extract_strided_slice %442 {offsets = [0, 16], sizes = [17, 16], strides = [1, 1]} : vector<17x96xf32> to vector<17x16xf32>
    %465 = vector.extract_strided_slice %442 {offsets = [0, 48], sizes = [17, 16], strides = [1, 1]} : vector<17x96xf32> to vector<17x16xf32>
    %466 = vector.extract_strided_slice %442 {offsets = [0, 80], sizes = [17, 16], strides = [1, 1]} : vector<17x96xf32> to vector<17x16xf32>
    %467 = arith.truncf %464 : vector<17x16xf32> to vector<17x16xbf16>
    %468 = arith.truncf %465 : vector<17x16xf32> to vector<17x16xbf16>
    %cst_198 = arith.constant dense<0.000000e+00> : vector<17x17xf32>
    %469 = tpu.matmul %467, %468, %cst_198 {dimension_numbers = #tpu.dot_dimension_numbers<[1], [1], [0], [0], [0, 0, 1, 0], [], []>} : vector<17x16xbf16>, vector<17x16xbf16>, vector<17x17xf32> -> vector<17x17xf32>
    %cst_199 = arith.constant 2.500000e-01 : f32
    %470 = vector.broadcast %cst_199 : f32 to vector<17x17xf32>
    %471 = arith.mulf %469, %470 : vector<17x17xf32>
    %cst_200 = arith.constant dense<0xFF800000> : vector<17xf32>
    %472 = vector.multi_reduction <maximumf>, %471, %cst_200 [1] : vector<17x17xf32> to vector<17xf32>
    %473 = vector.shape_cast %472 : vector<17xf32> to vector<17x1xf32>
    %474 = vector.broadcast %473 : vector<17x1xf32> to vector<17x17xf32>
    %475 = arith.subf %471, %474 : vector<17x17xf32>
    %476 = math.exp %475 : vector<17x17xf32>
    %cst_201 = arith.constant dense<0.000000e+00> : vector<17xf32>
    %477 = vector.multi_reduction <add>, %476, %cst_201 [1] : vector<17x17xf32> to vector<17xf32>
    %478 = vector.shape_cast %477 : vector<17xf32> to vector<17x1xf32>
    %479 = tpu.reciprocal %478 {approx = true} : vector<17x1xf32> -> vector<17x1xf32>
    %480 = vector.broadcast %479 : vector<17x1xf32> to vector<17x17xf32>
    %481 = arith.mulf %476, %480 : vector<17x17xf32>
    %482 = arith.truncf %481 : vector<17x17xf32> to vector<17x17xbf16>
    %483 = arith.truncf %466 : vector<17x16xf32> to vector<17x16xbf16>
    %cst_202 = arith.constant dense<0.000000e+00> : vector<17x16xf32>
    %484 = tpu.matmul %482, %483, %cst_202 {dimension_numbers = #tpu.dot_dimension_numbers<[1], [0], [0], [1], [0, 0, 1, 1], [], []>} : vector<17x17xbf16>, vector<17x16xbf16>, vector<17x16xf32> -> vector<17x16xf32>
    %485 = tpu.concatenate %463, %484 in 1 : vector<17x16xf32>, vector<17x16xf32> -> vector<17x32xf32>
    %c3_203 = arith.constant 3 : index
    %c0_204 = arith.constant 0 : index
    %c0_205 = arith.constant 0 : index
    %486 = vector.load %arg7[%c3_203, %c0_204, %c0_205] : memref<4x32x32xbf16, #tpu.memory_space<vmem>>, vector<1x32x32xbf16>
    %487 = vector.shape_cast %486 : vector<1x32x32xbf16> to vector<32x32xbf16>
    %488 = arith.truncf %485 : vector<17x32xf32> to vector<17x32xbf16>
    %cst_206 = arith.constant dense<0.000000e+00> : vector<17x32xf32>
    %489 = tpu.matmul %488, %487, %cst_206 {dimension_numbers = #tpu.dot_dimension_numbers<[1], [0], [0], [1], [0, 0, 1, 1], [], []>} : vector<17x32xbf16>, vector<32x32xbf16>, vector<17x32xf32> -> vector<17x32xf32>
    %490 = arith.addf %411, %489 : vector<17x32xf32>
    %c3_207 = arith.constant 3 : index
    %c0_208 = arith.constant 0 : index
    %c0_209 = arith.constant 0 : index
    %491 = vector.load %arg8[%c3_207, %c0_208, %c0_209] : memref<4x1x32xf32, #tpu.memory_space<vmem>>, vector<1x1x32xf32>
    %492 = vector.shape_cast %491 : vector<1x1x32xf32> to vector<1x32xf32>
    %c3_210 = arith.constant 3 : index
    %c0_211 = arith.constant 0 : index
    %c0_212 = arith.constant 0 : index
    %493 = vector.load %arg9[%c3_210, %c0_211, %c0_212] : memref<4x1x32xf32, #tpu.memory_space<vmem>>, vector<1x1x32xf32>
    %494 = vector.shape_cast %493 : vector<1x1x32xf32> to vector<1x32xf32>
    %cst_213 = arith.constant dense<0.000000e+00> : vector<17xf32>
    %495 = vector.multi_reduction <add>, %490, %cst_213 [1] : vector<17x32xf32> to vector<17xf32>
    %496 = vector.shape_cast %495 : vector<17xf32> to vector<17x1xf32>
    %cst_214 = arith.constant 3.200000e+01 : f32
    %497 = vector.broadcast %cst_214 : f32 to vector<17x1xf32>
    %498 = arith.divf %496, %497 : vector<17x1xf32>
    %499 = vector.broadcast %498 : vector<17x1xf32> to vector<17x32xf32>
    %500 = arith.subf %490, %499 : vector<17x32xf32>
    %501 = arith.mulf %500, %500 : vector<17x32xf32>
    %cst_215 = arith.constant dense<0.000000e+00> : vector<17xf32>
    %502 = vector.multi_reduction <add>, %501, %cst_215 [1] : vector<17x32xf32> to vector<17xf32>
    %503 = vector.shape_cast %502 : vector<17xf32> to vector<17x1xf32>
    %cst_216 = arith.constant 3.200000e+01 : f32
    %504 = vector.broadcast %cst_216 : f32 to vector<17x1xf32>
    %505 = arith.divf %503, %504 : vector<17x1xf32>
    %506 = vector.broadcast %498 : vector<17x1xf32> to vector<17x32xf32>
    %507 = arith.subf %490, %506 : vector<17x32xf32>
    %cst_217 = arith.constant 9.99999974E-6 : f32
    %508 = vector.broadcast %cst_217 : f32 to vector<17x1xf32>
    %509 = arith.addf %505, %508 : vector<17x1xf32>
    %510 = math.rsqrt %509 : vector<17x1xf32>
    %511 = vector.broadcast %510 : vector<17x1xf32> to vector<17x32xf32>
    %512 = arith.mulf %507, %511 : vector<17x32xf32>
    %513 = vector.broadcast %492 : vector<1x32xf32> to vector<17x32xf32>
    %514 = arith.mulf %512, %513 : vector<17x32xf32>
    %515 = vector.broadcast %494 : vector<1x32xf32> to vector<17x32xf32>
    %516 = arith.addf %514, %515 : vector<17x32xf32>
    %c3_218 = arith.constant 3 : index
    %c0_219 = arith.constant 0 : index
    %c0_220 = arith.constant 0 : index
    %517 = vector.load %arg10[%c3_218, %c0_219, %c0_220] : memref<4x32x128xbf16, #tpu.memory_space<vmem>>, vector<1x32x128xbf16>
    %518 = vector.shape_cast %517 : vector<1x32x128xbf16> to vector<32x128xbf16>
    %519 = arith.truncf %516 : vector<17x32xf32> to vector<17x32xbf16>
    %cst_221 = arith.constant dense<0.000000e+00> : vector<17x128xf32>
    %520 = tpu.matmul %519, %518, %cst_221 {dimension_numbers = #tpu.dot_dimension_numbers<[1], [0], [0], [1], [0, 0, 1, 1], [], []>} : vector<17x32xbf16>, vector<32x128xbf16>, vector<17x128xf32> -> vector<17x128xf32>
    %c3_222 = arith.constant 3 : index
    %c0_223 = arith.constant 0 : index
    %c0_224 = arith.constant 0 : index
    %521 = vector.load %arg11[%c3_222, %c0_223, %c0_224] : memref<4x1x128xf32, #tpu.memory_space<vmem>>, vector<1x1x128xf32>
    %522 = vector.shape_cast %521 : vector<1x1x128xf32> to vector<1x128xf32>
    %523 = vector.broadcast %522 : vector<1x128xf32> to vector<17x128xf32>
    %524 = arith.addf %520, %523 : vector<17x128xf32>
    %cst_225 = arith.constant 5.000000e-01 : f32
    %525 = vector.broadcast %cst_225 : f32 to vector<17x128xf32>
    %526 = arith.mulf %525, %524 : vector<17x128xf32>
    %cst_226 = arith.constant 4.471500e-02 : f32
    %527 = vector.broadcast %cst_226 : f32 to vector<17x128xf32>
    %528 = arith.mulf %527, %524 : vector<17x128xf32>
    %529 = arith.mulf %528, %524 : vector<17x128xf32>
    %530 = arith.mulf %529, %524 : vector<17x128xf32>
    %531 = arith.addf %524, %530 : vector<17x128xf32>
    %cst_227 = arith.constant 0.797884583 : f32
    %532 = vector.broadcast %cst_227 : f32 to vector<17x128xf32>
    %533 = arith.mulf %532, %531 : vector<17x128xf32>
    %534 = math.tanh %533 : vector<17x128xf32>
    %cst_228 = arith.constant 1.000000e+00 : f32
    %535 = vector.broadcast %cst_228 : f32 to vector<17x128xf32>
    %536 = arith.addf %535, %534 : vector<17x128xf32>
    %537 = arith.mulf %526, %536 : vector<17x128xf32>
    %c3_229 = arith.constant 3 : index
    %c0_230 = arith.constant 0 : index
    %c0_231 = arith.constant 0 : index
    %538 = vector.load %arg12[%c3_229, %c0_230, %c0_231] : memref<4x128x32xbf16, #tpu.memory_space<vmem>>, vector<1x128x32xbf16>
    %539 = vector.shape_cast %538 : vector<1x128x32xbf16> to vector<128x32xbf16>
    %540 = arith.truncf %537 : vector<17x128xf32> to vector<17x128xbf16>
    %cst_232 = arith.constant dense<0.000000e+00> : vector<17x32xf32>
    %541 = tpu.matmul %540, %539, %cst_232 {dimension_numbers = #tpu.dot_dimension_numbers<[1], [0], [0], [1], [0, 0, 1, 1], [], []>} : vector<17x128xbf16>, vector<128x32xbf16>, vector<17x32xf32> -> vector<17x32xf32>
    %542 = arith.addf %490, %541 : vector<17x32xf32>
    %c3_233 = arith.constant 3 : index
    %c0_234 = arith.constant 0 : index
    %c0_235 = arith.constant 0 : index
    %543 = vector.load %arg13[%c3_233, %c0_234, %c0_235] : memref<4x1x32xf32, #tpu.memory_space<vmem>>, vector<1x1x32xf32>
    %544 = vector.shape_cast %543 : vector<1x1x32xf32> to vector<1x32xf32>
    %545 = vector.broadcast %544 : vector<1x32xf32> to vector<17x32xf32>
    %546 = arith.addf %542, %545 : vector<17x32xf32>
    %547 = vector.extract_strided_slice %546 {offsets = [0, 0], sizes = [16, 32], strides = [1, 1]} : vector<17x32xf32> to vector<16x32xf32>
    %c0_236 = arith.constant 0 : index
    %c0_237 = arith.constant 0 : index
    %548 = vector.load %arg14[%c0_236, %c0_237] : memref<1x32xf32, #tpu.memory_space<vmem>>, vector<1x32xf32>
    %c0_238 = arith.constant 0 : index
    %c0_239 = arith.constant 0 : index
    %549 = vector.load %arg15[%c0_238, %c0_239] : memref<1x32xf32, #tpu.memory_space<vmem>>, vector<1x32xf32>
    %cst_240 = arith.constant dense<0.000000e+00> : vector<17xf32>
    %550 = vector.multi_reduction <add>, %546, %cst_240 [1] : vector<17x32xf32> to vector<17xf32>
    %551 = vector.shape_cast %550 : vector<17xf32> to vector<17x1xf32>
    %cst_241 = arith.constant 3.200000e+01 : f32
    %552 = vector.broadcast %cst_241 : f32 to vector<17x1xf32>
    %553 = arith.divf %551, %552 : vector<17x1xf32>
    %554 = vector.broadcast %553 : vector<17x1xf32> to vector<17x32xf32>
    %555 = arith.subf %546, %554 : vector<17x32xf32>
    %556 = arith.mulf %555, %555 : vector<17x32xf32>
    %cst_242 = arith.constant dense<0.000000e+00> : vector<17xf32>
    %557 = vector.multi_reduction <add>, %556, %cst_242 [1] : vector<17x32xf32> to vector<17xf32>
    %558 = vector.shape_cast %557 : vector<17xf32> to vector<17x1xf32>
    %cst_243 = arith.constant 3.200000e+01 : f32
    %559 = vector.broadcast %cst_243 : f32 to vector<17x1xf32>
    %560 = arith.divf %558, %559 : vector<17x1xf32>
    %561 = vector.broadcast %553 : vector<17x1xf32> to vector<17x32xf32>
    %562 = arith.subf %546, %561 : vector<17x32xf32>
    %cst_244 = arith.constant 9.99999974E-6 : f32
    %563 = vector.broadcast %cst_244 : f32 to vector<17x1xf32>
    %564 = arith.addf %560, %563 : vector<17x1xf32>
    %565 = math.rsqrt %564 : vector<17x1xf32>
    %566 = vector.broadcast %565 : vector<17x1xf32> to vector<17x32xf32>
    %567 = arith.mulf %562, %566 : vector<17x32xf32>
    %568 = vector.broadcast %548 : vector<1x32xf32> to vector<17x32xf32>
    %569 = arith.mulf %567, %568 : vector<17x32xf32>
    %570 = vector.broadcast %549 : vector<1x32xf32> to vector<17x32xf32>
    %571 = arith.addf %569, %570 : vector<17x32xf32>
    %c0_245 = arith.constant 0 : index
    %c0_246 = arith.constant 0 : index
    %572 = vector.load %arg17[%c0_245, %c0_246] : memref<1x128xf32, #tpu.memory_space<vmem>>, vector<1x128xf32>
    %c0_247 = arith.constant 0 : index
    %c0_248 = arith.constant 0 : index
    %573 = vector.load %arg18[%c0_247, %c0_248] : memref<1x128xf32, #tpu.memory_space<vmem>>, vector<1x128xf32>
    %c0_249 = arith.constant 0 : index
    %c0_250 = arith.constant 0 : index
    %574 = vector.load %arg19[%c0_249, %c0_250] : memref<1x128xf32, #tpu.memory_space<vmem>>, vector<1x128xf32>
    %c0_251 = arith.constant 0 : index
    %c0_252 = arith.constant 0 : index
    %575 = vector.load %arg20[%c0_251, %c0_252] : memref<32x128xbf16, #tpu.memory_space<vmem>>, vector<32x128xbf16>
    %c0_253 = arith.constant 0 : index
    %c0_254 = arith.constant 0 : index
    %576 = vector.load %arg21[%c0_253, %c0_254] : memref<1x128xf32, #tpu.memory_space<vmem>>, vector<1x128xf32>
    %c0_255 = arith.constant 0 : index
    %c0_256 = arith.constant 0 : index
    %577 = vector.load %arg16[%c0_255, %c0_256] : memref<32x128xbf16, #tpu.memory_space<vmem>>, vector<32x128xbf16>
    %578 = arith.truncf %142 : vector<16x32xf32> to vector<16x32xbf16>
    %cst_257 = arith.constant dense<0.000000e+00> : vector<16x128xf32>
    %579 = tpu.matmul %578, %577, %cst_257 {dimension_numbers = #tpu.dot_dimension_numbers<[1], [0], [0], [1], [0, 0, 1, 1], [], []>} : vector<16x32xbf16>, vector<32x128xbf16>, vector<16x128xf32> -> vector<16x128xf32>
    %580 = vector.broadcast %572 : vector<1x128xf32> to vector<16x128xf32>
    %581 = arith.addf %579, %580 : vector<16x128xf32>
    %582 = vector.broadcast %573 : vector<1x128xf32> to vector<16x128xf32>
    %583 = arith.mulf %581, %582 : vector<16x128xf32>
    %584 = vector.broadcast %574 : vector<1x128xf32> to vector<16x128xf32>
    %585 = arith.addf %583, %584 : vector<16x128xf32>
    %cst_258 = arith.constant 5.000000e-01 : f32
    %586 = vector.broadcast %cst_258 : f32 to vector<16x128xf32>
    %587 = arith.mulf %586, %585 : vector<16x128xf32>
    %cst_259 = arith.constant 4.471500e-02 : f32
    %588 = vector.broadcast %cst_259 : f32 to vector<16x128xf32>
    %589 = arith.mulf %588, %585 : vector<16x128xf32>
    %590 = arith.mulf %589, %585 : vector<16x128xf32>
    %591 = arith.mulf %590, %585 : vector<16x128xf32>
    %592 = arith.addf %585, %591 : vector<16x128xf32>
    %cst_260 = arith.constant 0.797884583 : f32
    %593 = vector.broadcast %cst_260 : f32 to vector<16x128xf32>
    %594 = arith.mulf %593, %592 : vector<16x128xf32>
    %595 = math.tanh %594 : vector<16x128xf32>
    %cst_261 = arith.constant 1.000000e+00 : f32
    %596 = vector.broadcast %cst_261 : f32 to vector<16x128xf32>
    %597 = arith.addf %596, %595 : vector<16x128xf32>
    %598 = arith.mulf %587, %597 : vector<16x128xf32>
    %599 = vector.extract_strided_slice %598 {offsets = [0, 0], sizes = [16, 32], strides = [1, 1]} : vector<16x128xf32> to vector<16x32xf32>
    %600 = arith.truncf %599 : vector<16x32xf32> to vector<16x32xbf16>
    %cst_262 = arith.constant dense<0.000000e+00> : vector<16x128xf32>
    %601 = tpu.matmul %600, %575, %cst_262 {dimension_numbers = #tpu.dot_dimension_numbers<[1], [0], [0], [1], [0, 0, 1, 1], [], []>} : vector<16x32xbf16>, vector<32x128xbf16>, vector<16x128xf32> -> vector<16x128xf32>
    %602 = vector.broadcast %576 : vector<1x128xf32> to vector<16x128xf32>
    %603 = arith.addf %601, %602 : vector<16x128xf32>
    %c0_263 = arith.constant 0 : index
    %c0_264 = arith.constant 0 : index
    %c0_265 = arith.constant 0 : index
    %c0_266 = arith.constant 0 : index
    %604 = vector.load %arg24[%c0_263, %c0_264, %c0_265, %c0_266] : memref<1x4x16x128xf32, #tpu.memory_space<vmem>>, vector<1x1x16x128xf32>
    %605 = vector.shape_cast %604 : vector<1x1x16x128xf32> to vector<16x128xf32>
    %606 = vector.shape_cast %603 : vector<16x128xf32> to vector<1x1x16x128xf32>
    tpu.vector_store %arg24[%c0_263, %c0_264, %c0_265, %c0_266], %606 {strides = array<i32>} : memref<1x4x16x128xf32, #tpu.memory_space<vmem>>, vector<1x1x16x128xf32>,
    %607 = vector.extract_strided_slice %598 {offsets = [0, 32], sizes = [16, 32], strides = [1, 1]} : vector<16x128xf32> to vector<16x32xf32>
    %608 = arith.truncf %607 : vector<16x32xf32> to vector<16x32xbf16>
    %cst_267 = arith.constant dense<0.000000e+00> : vector<16x128xf32>
    %609 = tpu.matmul %608, %575, %cst_267 {dimension_numbers = #tpu.dot_dimension_numbers<[1], [0], [0], [1], [0, 0, 1, 1], [], []>} : vector<16x32xbf16>, vector<32x128xbf16>, vector<16x128xf32> -> vector<16x128xf32>
    %610 = vector.broadcast %576 : vector<1x128xf32> to vector<16x128xf32>
    %611 = arith.addf %609, %610 : vector<16x128xf32>
    %c0_268 = arith.constant 0 : index
    %c1_269 = arith.constant 1 : index
    %c0_270 = arith.constant 0 : index
    %c0_271 = arith.constant 0 : index
    %612 = vector.load %arg24[%c0_268, %c1_269, %c0_270, %c0_271] : memref<1x4x16x128xf32, #tpu.memory_space<vmem>>, vector<1x1x16x128xf32>
    %613 = vector.shape_cast %612 : vector<1x1x16x128xf32> to vector<16x128xf32>
    %614 = vector.shape_cast %611 : vector<16x128xf32> to vector<1x1x16x128xf32>
    tpu.vector_store %arg24[%c0_268, %c1_269, %c0_270, %c0_271], %614 {strides = array<i32>} : memref<1x4x16x128xf32, #tpu.memory_space<vmem>>, vector<1x1x16x128xf32>,
    %615 = vector.extract_strided_slice %598 {offsets = [0, 64], sizes = [16, 32], strides = [1, 1]} : vector<16x128xf32> to vector<16x32xf32>
    %616 = arith.truncf %615 : vector<16x32xf32> to vector<16x32xbf16>
    %cst_272 = arith.constant dense<0.000000e+00> : vector<16x128xf32>
    %617 = tpu.matmul %616, %575, %cst_272 {dimension_numbers = #tpu.dot_dimension_numbers<[1], [0], [0], [1], [0, 0, 1, 1], [], []>} : vector<16x32xbf16>, vector<32x128xbf16>, vector<16x128xf32> -> vector<16x128xf32>
    %618 = vector.broadcast %576 : vector<1x128xf32> to vector<16x128xf32>
    %619 = arith.addf %617, %618 : vector<16x128xf32>
    %c0_273 = arith.constant 0 : index
    %c2_274 = arith.constant 2 : index
    %c0_275 = arith.constant 0 : index
    %c0_276 = arith.constant 0 : index
    %620 = vector.load %arg24[%c0_273, %c2_274, %c0_275, %c0_276] : memref<1x4x16x128xf32, #tpu.memory_space<vmem>>, vector<1x1x16x128xf32>
    %621 = vector.shape_cast %620 : vector<1x1x16x128xf32> to vector<16x128xf32>
    %622 = vector.shape_cast %619 : vector<16x128xf32> to vector<1x1x16x128xf32>
    tpu.vector_store %arg24[%c0_273, %c2_274, %c0_275, %c0_276], %622 {strides = array<i32>} : memref<1x4x16x128xf32, #tpu.memory_space<vmem>>, vector<1x1x16x128xf32>,
    %623 = vector.extract_strided_slice %598 {offsets = [0, 96], sizes = [16, 32], strides = [1, 1]} : vector<16x128xf32> to vector<16x32xf32>
    %624 = arith.truncf %623 : vector<16x32xf32> to vector<16x32xbf16>
    %cst_277 = arith.constant dense<0.000000e+00> : vector<16x128xf32>
    %625 = tpu.matmul %624, %575, %cst_277 {dimension_numbers = #tpu.dot_dimension_numbers<[1], [0], [0], [1], [0, 0, 1, 1], [], []>} : vector<16x32xbf16>, vector<32x128xbf16>, vector<16x128xf32> -> vector<16x128xf32>
    %626 = vector.broadcast %576 : vector<1x128xf32> to vector<16x128xf32>
    %627 = arith.addf %625, %626 : vector<16x128xf32>
    %c0_278 = arith.constant 0 : index
    %c3_279 = arith.constant 3 : index
    %c0_280 = arith.constant 0 : index
    %c0_281 = arith.constant 0 : index
    %628 = vector.load %arg24[%c0_278, %c3_279, %c0_280, %c0_281] : memref<1x4x16x128xf32, #tpu.memory_space<vmem>>, vector<1x1x16x128xf32>
    %629 = vector.shape_cast %628 : vector<1x1x16x128xf32> to vector<16x128xf32>
    %630 = vector.shape_cast %627 : vector<16x128xf32> to vector<1x1x16x128xf32>
    tpu.vector_store %arg24[%c0_278, %c3_279, %c0_280, %c0_281], %630 {strides = array<i32>} : memref<1x4x16x128xf32, #tpu.memory_space<vmem>>, vector<1x1x16x128xf32>,
    %c0_282 = arith.constant 0 : index
    %c0_283 = arith.constant 0 : index
    %631 = vector.load %arg22[%c0_282, %c0_283] : memref<32x128xbf16, #tpu.memory_space<vmem>>, vector<32x128xbf16>
    %632 = arith.truncf %277 : vector<16x32xf32> to vector<16x32xbf16>
    %cst_284 = arith.constant dense<0.000000e+00> : vector<16x128xf32>
    %633 = tpu.matmul %632, %631, %cst_284 {dimension_numbers = #tpu.dot_dimension_numbers<[1], [0], [0], [1], [0, 0, 1, 1], [], []>} : vector<16x32xbf16>, vector<32x128xbf16>, vector<16x128xf32> -> vector<16x128xf32>
    %c0_285 = arith.constant 0 : index
    %c0_286 = arith.constant 0 : index
    %634 = vector.load %arg23[%c0_285, %c0_286] : memref<1x128xf32, #tpu.memory_space<vmem>>, vector<1x128xf32>
    %635 = vector.broadcast %634 : vector<1x128xf32> to vector<16x128xf32>
    %636 = arith.addf %633, %635 : vector<16x128xf32>
    %c0_287 = arith.constant 0 : index
    %c0_288 = arith.constant 0 : index
    %c0_289 = arith.constant 0 : index
    %637 = vector.load %arg25[%c0_287, %c0_288, %c0_289] : memref<1x16x128xf32, #tpu.memory_space<vmem>>, vector<1x16x128xf32>
    %638 = vector.shape_cast %637 : vector<1x16x128xf32> to vector<16x128xf32>
    %639 = vector.shape_cast %636 : vector<16x128xf32> to vector<1x16x128xf32>
    tpu.vector_store %arg25[%c0_287, %c0_288, %c0_289], %639 {strides = array<i32>} : memref<1x16x128xf32, #tpu.memory_space<vmem>>, vector<1x16x128xf32>,
    %c0_290 = arith.constant 0 : index
    %c0_291 = arith.constant 0 : index
    %c0_292 = arith.constant 0 : index
    %640 = vector.load %arg26[%c0_290, %c0_291, %c0_292] : memref<1x16x32xf32, #tpu.memory_space<vmem>>, vector<1x16x32xf32>
    %641 = vector.shape_cast %640 : vector<1x16x32xf32> to vector<16x32xf32>
    %642 = vector.shape_cast %412 : vector<16x32xf32> to vector<1x16x32xf32>
    tpu.vector_store %arg26[%c0_290, %c0_291, %c0_292], %642 {strides = array<i32>} : memref<1x16x32xf32, #tpu.memory_space<vmem>>, vector<1x16x32xf32>,
    %643 = vector.shape_cast %547 : vector<16x32xf32> to vector<8x2x32xf32>
    %644 = vector.extract_strided_slice %643 {offsets = [0, 0, 0], sizes = [8, 1, 32], strides = [1, 1, 1]} : vector<8x2x32xf32> to vector<8x1x32xf32>
    %645 = vector.shape_cast %644 : vector<8x1x32xf32> to vector<8x32xf32>
    %646 = vector.extract_strided_slice %643 {offsets = [0, 1, 0], sizes = [8, 1, 32], strides = [1, 1, 1]} : vector<8x2x32xf32> to vector<8x1x32xf32>
    %647 = vector.shape_cast %646 : vector<8x1x32xf32> to vector<8x32xf32>
    %648 = arith.maximumf %645, %647 : vector<8x32xf32>
    %649 = vector.shape_cast %648 : vector<8x32xf32> to vector<2x2x2x32xf32>
    %650 = vector.extract_strided_slice %649 {offsets = [0, 0, 0, 0], sizes = [2, 1, 2, 32], strides = [1, 1, 1, 1]} : vector<2x2x2x32xf32> to vector<2x1x2x32xf32>
    %651 = vector.shape_cast %650 : vector<2x1x2x32xf32> to vector<2x2x32xf32>
    %652 = vector.extract_strided_slice %649 {offsets = [0, 1, 0, 0], sizes = [2, 1, 2, 32], strides = [1, 1, 1, 1]} : vector<2x2x2x32xf32> to vector<2x1x2x32xf32>
    %653 = vector.shape_cast %652 : vector<2x1x2x32xf32> to vector<2x2x32xf32>
    %654 = arith.maximumf %651, %653 : vector<2x2x32xf32>
    %655 = vector.shape_cast %654 : vector<2x2x32xf32> to vector<4x32xf32>
    %c0_293 = arith.constant 0 : index
    %c0_294 = arith.constant 0 : index
    %c0_295 = arith.constant 0 : index
    %656 = vector.load %arg27[%c0_293, %c0_294, %c0_295] : memref<1x4x32xf32, #tpu.memory_space<vmem>>, vector<1x4x32xf32>
    %657 = vector.shape_cast %656 : vector<1x4x32xf32> to vector<4x32xf32>
    %658 = vector.shape_cast %655 : vector<4x32xf32> to vector<1x4x32xf32>
    tpu.vector_store %arg27[%c0_293, %c0_294, %c0_295], %658 {strides = array<i32>} : memref<1x4x32xf32, #tpu.memory_space<vmem>>, vector<1x4x32xf32>,
    %659 = vector.extract_strided_slice %571 {offsets = [0, 0], sizes = [16, 32], strides = [1, 1]} : vector<17x32xf32> to vector<16x32xf32>
    %c0_296 = arith.constant 0 : index
    %c0_297 = arith.constant 0 : index
    %c0_298 = arith.constant 0 : index
    %660 = vector.load %arg28[%c0_296, %c0_297, %c0_298] : memref<1x16x32xf32, #tpu.memory_space<vmem>>, vector<1x16x32xf32>
    %661 = vector.shape_cast %660 : vector<1x16x32xf32> to vector<16x32xf32>
    %662 = vector.shape_cast %659 : vector<16x32xf32> to vector<1x16x32xf32>
    tpu.vector_store %arg28[%c0_296, %c0_297, %c0_298], %662 {strides = array<i32>} : memref<1x16x32xf32, #tpu.memory_space<vmem>>, vector<1x16x32xf32>,
    return
  }
  func.func @transform_0(%arg0: i32) -> (i32, i32, i32) {
    %c0_i32 = arith.constant 0 : i32
    %c0_i32_0 = arith.constant 0 : i32
    %c0_i32_1 = arith.constant 0 : i32
    return %arg0, %c0_i32, %c0_i32_0 : i32, i32, i32
  }
  func.func @transform_1(%arg0: i32) -> (i32, i32, i32) {
    %c0_i32 = arith.constant 0 : i32
    %c0_i32_0 = arith.constant 0 : i32
    %c0_i32_1 = arith.constant 0 : i32
    return %arg0, %c0_i32, %c0_i32_0 : i32, i32, i32
  }
  func.func @transform_2(%arg0: i32) -> (i32, i32) {
    %c0_i32 = arith.constant 0 : i32
    %c0_i32_0 = arith.constant 0 : i32
    %c0_i32_1 = arith.constant 0 : i32
    return %c0_i32, %c0_i32_0 : i32, i32
  }
  func.func @transform_3(%arg0: i32) -> (i32, i32, i32) {
    %c0_i32 = arith.constant 0 : i32
    %c0_i32_0 = arith.constant 0 : i32
    %c0_i32_1 = arith.constant 0 : i32
    %c0_i32_2 = arith.constant 0 : i32
    return %c0_i32, %c0_i32_0, %c0_i32_1 : i32, i32, i32
  }
  func.func @transform_4(%arg0: i32) -> (i32, i32, i32) {
    %c0_i32 = arith.constant 0 : i32
    %c0_i32_0 = arith.constant 0 : i32
    %c0_i32_1 = arith.constant 0 : i32
    %c0_i32_2 = arith.constant 0 : i32
    return %c0_i32, %c0_i32_0, %c0_i32_1 : i32, i32, i32
  }
  func.func @transform_5(%arg0: i32) -> (i32, i32, i32) {
    %c0_i32 = arith.constant 0 : i32
    %c0_i32_0 = arith.constant 0 : i32
    %c0_i32_1 = arith.constant 0 : i32
    %c0_i32_2 = arith.constant 0 : i32
    return %c0_i32, %c0_i32_0, %c0_i32_1 : i32, i32, i32
  }
  func.func @transform_6(%arg0: i32) -> (i32, i32, i32) {
    %c0_i32 = arith.constant 0 : i32
    %c0_i32_0 = arith.constant 0 : i32
    %c0_i32_1 = arith.constant 0 : i32
    %c0_i32_2 = arith.constant 0 : i32
    return %c0_i32, %c0_i32_0, %c0_i32_1 : i32, i32, i32
  }
  func.func @transform_7(%arg0: i32) -> (i32, i32, i32) {
    %c0_i32 = arith.constant 0 : i32
    %c0_i32_0 = arith.constant 0 : i32
    %c0_i32_1 = arith.constant 0 : i32
    %c0_i32_2 = arith.constant 0 : i32
    return %c0_i32, %c0_i32_0, %c0_i32_1 : i32, i32, i32
  }
  func.func @transform_8(%arg0: i32) -> (i32, i32, i32) {
    %c0_i32 = arith.constant 0 : i32
    %c0_i32_0 = arith.constant 0 : i32
    %c0_i32_1 = arith.constant 0 : i32
    %c0_i32_2 = arith.constant 0 : i32
    return %c0_i32, %c0_i32_0, %c0_i32_1 : i32, i32, i32
  }
  func.func @transform_9(%arg0: i32) -> (i32, i32, i32) {
    %c0_i32 = arith.constant 0 : i32
    %c0_i32_0 = arith.constant 0 : i32
    %c0_i32_1 = arith.constant 0 : i32
    %c0_i32_2 = arith.constant 0 : i32
    return %c0_i32, %c0_i32_0, %c0_i32_1 : i32, i32, i32
  }
  func.func @transform_10(%arg0: i32) -> (i32, i32, i32) {
    %c0_i32 = arith.constant 0 : i32
    %c0_i32_0 = arith.constant 0 : i32
    %c0_i32_1 = arith.constant 0 : i32
    %c0_i32_2 = arith.constant 0 : i32
    return %c0_i32, %c0_i32_0, %c0_i32_1 : i32, i32, i32
  }
  func.func @transform_11(%arg0: i32) -> (i32, i32, i32) {
    %c0_i32 = arith.constant 0 : i32
    %c0_i32_0 = arith.constant 0 : i32
    %c0_i32_1 = arith.constant 0 : i32
    %c0_i32_2 = arith.constant 0 : i32
    return %c0_i32, %c0_i32_0, %c0_i32_1 : i32, i32, i32
  }
  func.func @transform_12(%arg0: i32) -> (i32, i32, i32) {
    %c0_i32 = arith.constant 0 : i32
    %c0_i32_0 = arith.constant 0 : i32
    %c0_i32_1 = arith.constant 0 : i32
    %c0_i32_2 = arith.constant 0 : i32
    return %c0_i32, %c0_i32_0, %c0_i32_1 : i32, i32, i32
  }
  func.func @transform_13(%arg0: i32) -> (i32, i32) {
    %c0_i32 = arith.constant 0 : i32
    %c0_i32_0 = arith.constant 0 : i32
    %c0_i32_1 = arith.constant 0 : i32
    return %c0_i32, %c0_i32_0 : i32, i32
  }
  func.func @transform_14(%arg0: i32) -> (i32, i32) {
    %c0_i32 = arith.constant 0 : i32
    %c0_i32_0 = arith.constant 0 : i32
    %c0_i32_1 = arith.constant 0 : i32
    return %c0_i32, %c0_i32_0 : i32, i32
  }
  func.func @transform_15(%arg0: i32) -> (i32, i32) {
    %c0_i32 = arith.constant 0 : i32
    %c0_i32_0 = arith.constant 0 : i32
    %c0_i32_1 = arith.constant 0 : i32
    return %c0_i32, %c0_i32_0 : i32, i32
  }
  func.func @transform_16(%arg0: i32) -> (i32, i32) {
    %c0_i32 = arith.constant 0 : i32
    %c0_i32_0 = arith.constant 0 : i32
    %c0_i32_1 = arith.constant 0 : i32
    return %c0_i32, %c0_i32_0 : i32, i32
  }
  func.func @transform_17(%arg0: i32) -> (i32, i32) {
    %c0_i32 = arith.constant 0 : i32
    %c0_i32_0 = arith.constant 0 : i32
    %c0_i32_1 = arith.constant 0 : i32
    return %c0_i32, %c0_i32_0 : i32, i32
  }
  func.func @transform_18(%arg0: i32) -> (i32, i32) {
    %c0_i32 = arith.constant 0 : i32
    %c0_i32_0 = arith.constant 0 : i32
    %c0_i32_1 = arith.constant 0 : i32
    return %c0_i32, %c0_i32_0 : i32, i32
  }
  func.func @transform_19(%arg0: i32) -> (i32, i32) {
    %c0_i32 = arith.constant 0 : i32
    %c0_i32_0 = arith.constant 0 : i32
    %c0_i32_1 = arith.constant 0 : i32
    return %c0_i32, %c0_i32_0 : i32, i32
  }
  func.func @transform_20(%arg0: i32) -> (i32, i32) {
    %c0_i32 = arith.constant 0 : i32
    %c0_i32_0 = arith.constant 0 : i32
    %c0_i32_1 = arith.constant 0 : i32
    return %c0_i32, %c0_i32_0 : i32, i32
  }
  func.func @transform_21(%arg0: i32) -> (i32, i32) {
    %c0_i32 = arith.constant 0 : i32
    %c0_i32_0 = arith.constant 0 : i32
    %c0_i32_1 = arith.constant 0 : i32
    return %c0_i32, %c0_i32_0 : i32, i32
  }
  func.func @transform_22(%arg0: i32) -> (i32, i32) {
    %c0_i32 = arith.constant 0 : i32
    %c0_i32_0 = arith.constant 0 : i32
    %c0_i32_1 = arith.constant 0 : i32
    return %c0_i32, %c0_i32_0 : i32, i32
  }
  func.func @transform_23(%arg0: i32) -> (i32, i32, i32, i32) {
    %c0_i32 = arith.constant 0 : i32
    %c0_i32_0 = arith.constant 0 : i32
    %c0_i32_1 = arith.constant 0 : i32
    %c0_i32_2 = arith.constant 0 : i32
    return %arg0, %c0_i32, %c0_i32_0, %c0_i32_1 : i32, i32, i32, i32
  }
  func.func @transform_24(%arg0: i32) -> (i32, i32, i32) {
    %c0_i32 = arith.constant 0 : i32
    %c0_i32_0 = arith.constant 0 : i32
    %c0_i32_1 = arith.constant 0 : i32
    return %arg0, %c0_i32, %c0_i32_0 : i32, i32, i32
  }
  func.func @transform_25(%arg0: i32) -> (i32, i32, i32) {
    %c0_i32 = arith.constant 0 : i32
    %c0_i32_0 = arith.constant 0 : i32
    %c0_i32_1 = arith.constant 0 : i32
    return %arg0, %c0_i32, %c0_i32_0 : i32, i32, i32
  }
  func.func @transform_26(%arg0: i32) -> (i32, i32, i32) {
    %c0_i32 = arith.constant 0 : i32
    %c0_i32_0 = arith.constant 0 : i32
    %c0_i32_1 = arith.constant 0 : i32
    return %arg0, %c0_i32, %c0_i32_0 : i32, i32, i32
  }
  func.func @transform_27(%arg0: i32) -> (i32, i32, i32) {
    %c0_i32 = arith.constant 0 : i32
    %c0_i32_0 = arith.constant 0 : i32
    %c0_i32_1 = arith.constant 0 : i32
    return %arg0, %c0_i32, %c0_i32_0 : i32, i32, i32
  }
}

</mosaic_0001>

<llo_original>
// kernel: mul.44
$region0: #{mul.44}
  %s0 = inlined_call_operand.vmem [shape: f32[4,4], index: 0, kind: input, shape index: {}]
  %s1 = inlined_call_operand.vmem [shape: f32[16], index: 1, kind: output, shape index: {}]
  $region1: #{mul.44} parent=0
    #allocation0 [shape = 'u8[4096]{0}', space=vmem, size = 0x1000, scoped, tag = 'scoped mem for output reshape']
    #allocation1 [shape = 'u8[4096]{0}', space=vmem, size = 0x1000, scoped, tag = 'scoped mem for input reshape']
    %s3 = sshll.u32 1, 4
    %s4 = ssub.s32 %s3, 1
    %v5 = vld [vmem:[%s0] sm:%s4]
    %6 = vst [vmem:[#allocation1] sm:%s4] %v5
    %v7 = vld [vmem:[#allocation1] sm:$0x1]
    %vm8 = vcmask 31744
    %9 = vst.msk [vmem:[#allocation0] sm:$0x1] %vm8, %v7
    %s10 = scalar_lea.vmem [#allocation1], 3
    %v11 = vld [vmem:[%s10] sm:$0x1]
    %12 = vrot.lane.b32.xlu0 %v11, 12
    %v13 = vpop.permute.xlu0 %12
    %vm14 = vcmask 130144
    %15 = vst.msk [vmem:[#allocation0] sm:$0x1] %vm14, %v13
    %s16 = scalar_lea.vmem [#allocation1], 2
    %v17 = vld [vmem:[%s16] sm:$0x1]
    %18 = vrot.lane.b32.xlu0 %v17, 8
    %v19 = vpop.permute.xlu0 %18
    %vm20 = vcmask 97344
    %21 = vst.msk [vmem:[#allocation0] sm:$0x1] %vm20, %v19
    %s22 = scalar_lea.vmem [#allocation1], 1
    %v23 = vld [vmem:[%s22] sm:$0x1]
    %24 = vrot.lane.b32.xlu0 %v23, 4
    %v25 = vpop.permute.xlu0 %24
    %vm26 = vcmask 64544
    %27 = vst.msk [vmem:[#allocation0] sm:$0x1] %vm26, %v25
    %s29 = sshll.u32 1, 1
    %s30 = ssub.s32 %s29, 1
    %v32 = vld [vmem:[#allocation0] sm:%s30]
    %s33 = sshll.u32 1, 1
    %s34 = ssub.s32 %s33, 1
    %35 = vst [vmem:[%s1] sm:%s34] %v32

// kernel: tile.28
$region0: #{tile.28}
  #allocation0 [shape = 's32[1]{0}', space=sflag, size = 0x4, scoped, tag = 'scoped memory for tile.28']
  %s0 = inlined_call_operand.vmem [shape: f32[32], index: 0, kind: input, shape index: {}]
  %s1 = inlined_call_operand.vmem [shape: f32[4,32], index: 1, kind: output, shape index: {}]
  // Predicated region
  $region2: #{tile.28} parent=0 // pred_check
    _
  $region3: #{tile.28} parent=0 // pred_check_branch
    %3 = sbr.rel (0) target = $region5
  $region4: #{tile.28} parent=0 // pred_region
    _
  $region5: #{tile.28} parent=0 // pred_fallthru
    _
  %v4 = vld [vmem:[%s0] ss:$0 sm:$0xff]
  %5 = vst [vmem:[%s1] sm:$0xf] %v4

// kernel: tile.29
$region0: #{tile.29}
  %s0 = inlined_call_operand.vmem [shape: f32[4,32], index: 0, kind: input, shape index: {}]
  %s1 = inlined_call_operand.vmem [shape: f32[1,128], index: 1, kind: output, shape index: {}]
  $region1: #{tile.29} parent=0
    #allocation0 [shape = 'u8[4096]{0}', space=vmem, size = 0x1000, scoped, tag = 'scoped mem for output reshape']
    #allocation1 [shape = 'u8[4096]{0}', space=vmem, size = 0x1000, scoped, tag = 'scoped mem for input reshape']
    %s3 = sshll.u32 1, 4
    %s4 = ssub.s32 %s3, 1
    %v5 = vld [vmem:[%s0] sm:%s4]
    %6 = vst [vmem:[#allocation1] sm:%s4] %v5
    %v7 = vld [vmem:[#allocation1] sm:$0x1]
    %vm8 = vcmask 261120
    %9 = vst.msk [vmem:[#allocation0] sm:$0x1] %vm8, %v7
    %s10 = scalar_lea.vmem [#allocation1], 3
    %v11 = vld [vmem:[%s10] sm:$0x1]
    %12 = vrot.lane.b32.xlu0 %v11, 96
    %v13 = vpop.permute.xlu0 %12
    %vm14 = vcmask 1048320
    %15 = vst.msk [vmem:[#allocation0] sm:$0x1] %vm14, %v13
    %s16 = scalar_lea.vmem [#allocation1], 2
    %v17 = vld [vmem:[%s16] sm:$0x1]
    %18 = vrot.lane.b32.xlu0 %v17, 64
    %v19 = vpop.permute.xlu0 %18
    %vm20 = vcmask 785920
    %21 = vst.msk [vmem:[#allocation0] sm:$0x1] %vm20, %v19
    %s22 = scalar_lea.vmem [#allocation1], 1
    %v23 = vld [vmem:[%s22] sm:$0x1]
    %24 = vrot.lane.b32.xlu0 %v23, 32
    %v25 = vpop.permute.xlu0 %24
    %vm26 = vcmask 523520
    %27 = vst.msk [vmem:[#allocation0] sm:$0x1] %vm26, %v25
    %s29 = sshll.u32 1, 1
    %s30 = ssub.s32 %s29, 1
    %v32 = vld [vmem:[#allocation0] sm:%s30]
    %s33 = sshll.u32 1, 1
    %s34 = ssub.s32 %s33, 1
    %35 = vst [vmem:[%s1] sm:%s34] %v32

// kernel: segment_encoder_forward.2
$region0: #{segment_encoder_forward.2}
  #allocation0 [shape = 'u32[]', space=smem, size = 0x4, offset = 0x4, fixed_abs, tag = 'smem constant byte address 0x4 - core index']
  #allocation1 [shape = 'u32[144,128]{1,0:T(1,128)}', space=vmem, size = 0x12000, scoped, tag = 'internal scratch']
  %s0 = inlined_call_operand.vmem [shape: f32[4,128], index: 0, kind: input, shape index: {}]
  %s1 = inlined_call_operand.vmem [shape: f32[128,128], index: 1, kind: input, shape index: {}]
  %s2 = inlined_call_operand.vmem [shape: f32[1,128], index: 2, kind: input, shape index: {}]
  %s3 = inlined_call_operand.vmem [shape: f32[128,128], index: 3, kind: input, shape index: {}]
  %s4 = inlined_call_operand.vmem [shape: f32[1,128], index: 4, kind: input, shape index: {}]
  %s5 = inlined_call_operand.vmem [shape: f32[128,2048], index: 5, kind: input, shape index: {}]
  %s6 = inlined_call_operand.vmem [shape: f32[1,2048], index: 6, kind: input, shape index: {}]
  %s7 = inlined_call_operand.vmem [shape: f32[128,32], index: 7, kind: input, shape index: {}]
  %s8 = inlined_call_operand.vmem [shape: f32[1,32], index: 8, kind: input, shape index: {}]
  %s9 = inlined_call_operand.vmem [shape: f32[4,2048], index: 9, kind: output, shape index: {0}]
  %s10 = inlined_call_operand.vmem [shape: f32[1,32], index: 10, kind: output, shape index: {1}]
  %11 = xla_tuple %s9, %s10
  %s12 = sld [smem:[#allocation0]]
  $region54: #{segment_encoder_forward.2} parent=0
    _
  %s14 = ssub.s32 1, %s12
  %s15 = scalar_select 0, %s14, %s12
  // Predicated region
  $region2: #{segment_encoder_forward.2} parent=0 // pred_check
    _
  $region3: #{segment_encoder_forward.2} parent=0 // pred_check_branch
    %17 = sbr.rel (0) target = $region5
  $region4: #{segment_encoder_forward.2} parent=0 // pred_region
    _
  $region5: #{segment_encoder_forward.2} parent=0 // pred_fallthru
    _
  // Predicated region
  $region6: #{segment_encoder_forward.2} parent=0 // pred_check
    _
  $region7: #{segment_encoder_forward.2} parent=0 // pred_check_branch
    %19 = sbr.rel (0) target = $region9
  $region8: #{segment_encoder_forward.2} parent=0 // pred_region
    _
  $region9: #{segment_encoder_forward.2} parent=0 // pred_fallthru
    _
  // Predicated region
  $region10: #{segment_encoder_forward.2} parent=0 // pred_check
    _
  $region11: #{segment_encoder_forward.2} parent=0 // pred_check_branch
    %21 = sbr.rel (0) target = $region13
  $region12: #{segment_encoder_forward.2} parent=0 // pred_region
    _
  $region13: #{segment_encoder_forward.2} parent=0 // pred_fallthru
    _
  // Predicated region
  $region14: #{segment_encoder_forward.2} parent=0 // pred_check
    _
  $region15: #{segment_encoder_forward.2} parent=0 // pred_check_branch
    %23 = sbr.rel (0) target = $region17
  $region16: #{segment_encoder_forward.2} parent=0 // pred_region
    _
  $region17: #{segment_encoder_forward.2} parent=0 // pred_fallthru
    _
  // Predicated region
  $region18: #{segment_encoder_forward.2} parent=0 // pred_check
    _
  $region19: #{segment_encoder_forward.2} parent=0 // pred_check_branch
    %25 = sbr.rel (0) target = $region21
  $region20: #{segment_encoder_forward.2} parent=0 // pred_region
    _
  $region21: #{segment_encoder_forward.2} parent=0 // pred_fallthru
    _
  // Predicated region
  $region22: #{segment_encoder_forward.2} parent=0 // pred_check
    _
  $region23: #{segment_encoder_forward.2} parent=0 // pred_check_branch
    %27 = sbr.rel (0) target = $region25
  $region24: #{segment_encoder_forward.2} parent=0 // pred_region
    _
  $region25: #{segment_encoder_forward.2} parent=0 // pred_fallthru
    _
  // Predicated region
  $region26: #{segment_encoder_forward.2} parent=0 // pred_check
    _
  $region27: #{segment_encoder_forward.2} parent=0 // pred_check_branch
    %29 = sbr.rel (0) target = $region29
  $region28: #{segment_encoder_forward.2} parent=0 // pred_region
    _
  $region29: #{segment_encoder_forward.2} parent=0 // pred_fallthru
    _
  // Predicated region
  $region30: #{segment_encoder_forward.2} parent=0 // pred_check
    _
  $region31: #{segment_encoder_forward.2} parent=0 // pred_check_branch
    %31 = sbr.rel (0) target = $region33
  $region32: #{segment_encoder_forward.2} parent=0 // pred_region
    _
  $region33: #{segment_encoder_forward.2} parent=0 // pred_fallthru
    _
  // Predicated region
  $region34: #{segment_encoder_forward.2} parent=0 // pred_check
    _
  $region35: #{segment_encoder_forward.2} parent=0 // pred_check_branch
    %33 = sbr.rel (0) target = $region37
  $region36: #{segment_encoder_forward.2} parent=0 // pred_region
    _
  $region37: #{segment_encoder_forward.2} parent=0 // pred_fallthru
    _
  %v35 = vld [vmem:[%s0] sm:$0xf]
  %v36 = vld [vmem:[%s1] sm:$0xff]
  %v37 = vld [vmem:[%s1 + $0x8] sm:$0xff]
  %v38 = vld [vmem:[%s1 + $0x10] sm:$0xff]
  %v39 = vld [vmem:[%s1 + $0x18] sm:$0xff]
  %v40 = vld [vmem:[%s1 + $0x20] sm:$0xff]
  %v41 = vld [vmem:[%s1 + $0x28] sm:$0xff]
  %v42 = vld [vmem:[%s1 + $0x30] sm:$0xff]
  %v43 = vld [vmem:[%s1 + $0x38] sm:$0xff]
  %v44 = vld [vmem:[%s1 + $0x40] sm:$0xff]
  %v45 = vld [vmem:[%s1 + $0x48] sm:$0xff]
  %v46 = vld [vmem:[%s1 + $0x50] sm:$0xff]
  %v47 = vld [vmem:[%s1 + $0x58] sm:$0xff]
  %v48 = vld [vmem:[%s1 + $0x60] sm:$0xff]
  %v49 = vld [vmem:[%s1 + $0x68] sm:$0xff]
  %v50 = vld [vmem:[%s1 + $0x70] sm:$0xff]
  %v51 = vld [vmem:[%s1 + $0x78] sm:$0xff]
  %v52 = vpack.c.bf16 %v35, %v35
  %v53 = vpack.c.bf16 %v37, %v36
  %v54 = vpack.c.bf16 %v39, %v38
  %v55 = vpack.c.bf16 %v41, %v40
  %v56 = vpack.c.bf16 %v43, %v42
  %v57 = vpack.c.bf16 %v45, %v44
  %v58 = vpack.c.bf16 %v47, %v46
  %v59 = vpack.c.bf16 %v49, %v48
  %v60 = vpack.c.bf16 %v51, %v50
  %v61 = vld [vmem:[%s2] sm:$0x1]
  %v63 = vlaneseq
  %v64 = vshrl.u32 %v63, 7
  %v65 = vsub.s32 0, %v64
  %v66 = vrot.slane %v61, %v65
  %68 = vmatprep.subr.bf16.mxu0 0
  %69 = vmatpush1.bf16.msra.mxu0 %v60
  %70 = vmatprep.subr.bf16.mxu0 0
  %71 = vmatpush1.bf16.msra.mxu0 %v59
  %72 = vmatprep.subr.bf16.mxu0 0
  %73 = vmatpush1.bf16.msra.mxu0 %v58
  %74 = vmatprep.subr.bf16.mxu0 0
  %75 = vmatpush1.bf16.msra.mxu0 %v57
  %76 = vmatprep.subr.bf16.mxu0 0
  %77 = vmatpush1.bf16.msra.mxu0 %v56
  %78 = vmatprep.subr.bf16.mxu0 0
  %79 = vmatpush1.bf16.msra.mxu0 %v55
  %80 = vmatprep.subr.bf16.mxu0 0
  %81 = vmatpush1.bf16.msra.mxu0 %v54
  %82 = vmatprep.subr.bf16.mxu0 0
  %83 = vmatpush1.bf16.msra.mxu0 %v53
  %84 = vmatprep.subr.bf16.mxu0 0
  %85 = vmatpush2.bf16.msra.mxu0 0
  %86 = vmatprep.subr.bf16.mxu0 0
  %87 = vmatpush2.bf16.msra.mxu0 0
  %88 = vmatprep.subr.bf16.mxu0 0
  %89 = vmatpush2.bf16.msra.mxu0 0
  %90 = vmatprep.subr.bf16.mxu0 0
  %91 = vmatpush2.bf16.msra.mxu0 0
  %92 = vmatprep.subr.bf16.mxu0 0
  %93 = vmatpush2.bf16.msra.mxu0 0
  %94 = vmatprep.subr.bf16.mxu0 0
  %95 = vmatpush2.bf16.msra.mxu0 0
  %96 = vmatprep.subr.bf16.mxu0 0
  %97 = vmatpush2.bf16.msra.mxu0 0
  %98 = vmatprep.subr.bf16.mxu0 0
  %99 = vmatpush2.bf16.msra.mxu0 0
  %100 = vmatprep.mubr.bf16.mxu0 0
  %101 = vmatmul.mubr.bf16.gmra.mxu0 %v52
  %v102 = vpop.f32.mrf.mxu0
  %v103 = vadd.f32 %v66, %v102
  %v104 = vpop.f32.mrf.mxu0
  %v105 = vpop.f32.mrf.mxu0
  %v106 = vpop.f32.mrf.mxu0
  %107 = vdwg.mxu0
  %v108 = vmul.f32 %v103, 0.5
  %v109 = vmul.f32 %v103, 0.044715
  %v110 = vmul.f32 %v109, %v103
  %v111 = vmul.f32 %v110, %v103
  %v112 = vadd.f32 %v103, %v111
  %v113 = vmul.f32 %v112, 0.7978846
  %v114 = vtanh.pop %v113
  %v115 = vadd.f32 %v114, 1.0
  %v116 = vmul.f32 %v108, %v115
  %v117 = vld [vmem:[%s3] sm:$0xff]
  %v118 = vld [vmem:[%s3 + $0x8] sm:$0xff]
  %v119 = vld [vmem:[%s3 + $0x10] sm:$0xff]
  %v120 = vld [vmem:[%s3 + $0x18] sm:$0xff]
  %v121 = vld [vmem:[%s3 + $0x20] sm:$0xff]
  %v122 = vld [vmem:[%s3 + $0x28] sm:$0xff]
  %v123 = vld [vmem:[%s3 + $0x30] sm:$0xff]
  %v124 = vld [vmem:[%s3 + $0x38] sm:$0xff]
  %v125 = vld [vmem:[%s3 + $0x40] sm:$0xff]
  %v126 = vld [vmem:[%s3 + $0x48] sm:$0xff]
  %v127 = vld [vmem:[%s3 + $0x50] sm:$0xff]
  %v128 = vld [vmem:[%s3 + $0x58] sm:$0xff]
  %v129 = vld [vmem:[%s3 + $0x60] sm:$0xff]
  %v130 = vld [vmem:[%s3 + $0x68] sm:$0xff]
  %v131 = vld [vmem:[%s3 + $0x70] sm:$0xff]
  %v132 = vld [vmem:[%s3 + $0x78] sm:$0xff]
  %v133 = vpack.c.bf16 %v116, %v116
  %v134 = vpack.c.bf16 %v118, %v117
  %v135 = vpack.c.bf16 %v120, %v119
  %v136 = vpack.c.bf16 %v122, %v121
  %v137 = vpack.c.bf16 %v124, %v123
  %v138 = vpack.c.bf16 %v126, %v125
  %v139 = vpack.c.bf16 %v128, %v127
  %v140 = vpack.c.bf16 %v130, %v129
  %v141 = vpack.c.bf16 %v132, %v131
  %v142 = vld [vmem:[%s4] sm:$0x1]
  %v144 = vlaneseq
  %v145 = vshrl.u32 %v144, 7
  %v146 = vsub.s32 0, %v145
  %v147 = vrot.slane %v142, %v146
  %149 = vmatprep.subr.bf16.mxu0 0
  %150 = vmatpush1.bf16.msra.mxu0 %v141
  %151 = vmatprep.subr.bf16.mxu0 0
  %152 = vmatpush1.bf16.msra.mxu0 %v140
  %153 = vmatprep.subr.bf16.mxu0 0
  %154 = vmatpush1.bf16.msra.mxu0 %v139
  %155 = vmatprep.subr.bf16.mxu0 0
  %156 = vmatpush1.bf16.msra.mxu0 %v138
  %157 = vmatprep.subr.bf16.mxu0 0
  %158 = vmatpush1.bf16.msra.mxu0 %v137
  %159 = vmatprep.subr.bf16.mxu0 0
  %160 = vmatpush1.bf16.msra.mxu0 %v136
  %161 = vmatprep.subr.bf16.mxu0 0
  %162 = vmatpush1.bf16.msra.mxu0 %v135
  %163 = vmatprep.subr.bf16.mxu0 0
  %164 = vmatpush1.bf16.msra.mxu0 %v134
  %165 = vmatprep.subr.bf16.mxu0 0
  %166 = vmatpush2.bf16.msra.mxu0 0
  %167 = vmatprep.subr.bf16.mxu0 0
  %168 = vmatpush2.bf16.msra.mxu0 0
  %169 = vmatprep.subr.bf16.mxu0 0
  %170 = vmatpush2.bf16.msra.mxu0 0
  %171 = vmatprep.subr.bf16.mxu0 0
  %172 = vmatpush2.bf16.msra.mxu0 0
  %173 = vmatprep.subr.bf16.mxu0 0
  %174 = vmatpush2.bf16.msra.mxu0 0
  %175 = vmatprep.subr.bf16.mxu0 0
  %176 = vmatpush2.bf16.msra.mxu0 0
  %177 = vmatprep.subr.bf16.mxu0 0
  %178 = vmatpush2.bf16.msra.mxu0 0
  %179 = vmatprep.subr.bf16.mxu0 0
  %180 = vmatpush2.bf16.msra.mxu0 0
  %181 = vmatprep.mubr.bf16.mxu0 0
  %182 = vmatmul.mubr.bf16.gmra.mxu0 %v133
  %v183 = vpop.f32.mrf.mxu0
  %v184 = vadd.f32 %v147, %v183
  %v185 = vpop.f32.mrf.mxu0
  %v186 = vpop.f32.mrf.mxu0
  %v187 = vpop.f32.mrf.mxu0
  %188 = vdwg.mxu0
  %v189 = vmul.f32 %v184, 0.5
  %v190 = vmul.f32 %v184, 0.044715
  %v191 = vmul.f32 %v190, %v184
  %v192 = vmul.f32 %v191, %v184
  %v193 = vadd.f32 %v184, %v192
  %v194 = vmul.f32 %v193, 0.7978846
  %v195 = vtanh.pop %v194
  %v196 = vadd.f32 %v195, 1.0
  %v197 = vmul.f32 %v189, %v196
  %v198 = vadd.f32 %v35, %v197
  %v199 = vld [vmem:[%s5] sm:$0xff]
  %v200 = vld [vmem:[%s5 + $0x8] sm:$0xff]
  %v201 = vld [vmem:[%s5 + $0x10] sm:$0xff]
  %v202 = vld [vmem:[%s5 + $0x18] sm:$0xff]
  %v203 = vld [vmem:[%s5 + $0x20] sm:$0xff]
  %v204 = vld [vmem:[%s5 + $0x28] sm:$0xff]
  %v205 = vld [vmem:[%s5 + $0x30] sm:$0xff]
  %v206 = vld [vmem:[%s5 + $0x38] sm:$0xff]
  %v207 = vld [vmem:[%s5 + $0x40] sm:$0xff]
  %v208 = vld [vmem:[%s5 + $0x48] sm:$0xff]
  %v209 = vld [vmem:[%s5 + $0x50] sm:$0xff]
  %v210 = vld [vmem:[%s5 + $0x58] sm:$0xff]
  %v211 = vld [vmem:[%s5 + $0x60] sm:$0xff]
  %v212 = vld [vmem:[%s5 + $0x68] sm:$0xff]
  %v213 = vld [vmem:[%s5 + $0x70] sm:$0xff]
  %v214 = vld [vmem:[%s5 + $0x78] sm:$0xff]
  %v215 = vld [vmem:[%s5 + $0x80] sm:$0xff]
  %v216 = vld [vmem:[%s5 + $0x88] sm:$0xff]
  %v217 = vld [vmem:[%s5 + $0x90] sm:$0xff]
  %v218 = vld [vmem:[%s5 + $0x98] sm:$0xff]
  %v219 = vld [vmem:[%s5 + $0xa0] sm:$0xff]
  %v220 = vld [vmem:[%s5 + $0xa8] sm:$0xff]
  %v221 = vld [vmem:[%s5 + $0xb0] sm:$0xff]
  %v222 = vld [vmem:[%s5 + $0xb8] sm:$0xff]
  %v223 = vld [vmem:[%s5 + $0xc0] sm:$0xff]
  %v224 = vld [vmem:[%s5 + $0xc8] sm:$0xff]
  %v225 = vld [vmem:[%s5 + $0xd0] sm:$0xff]
  %v226 = vld [vmem:[%s5 + $0xd8] sm:$0xff]
  %v227 = vld [vmem:[%s5 + $0xe0] sm:$0xff]
  %v228 = vld [vmem:[%s5 + $0xe8] sm:$0xff]
  %v229 = vld [vmem:[%s5 + $0xf0] sm:$0xff]
  %v230 = vld [vmem:[%s5 + $0xf8] sm:$0xff]
  %v231 = vld [vmem:[%s5 + $0x100] sm:$0xff]
  %v232 = vld [vmem:[%s5 + $0x108] sm:$0xff]
  %v233 = vld [vmem:[%s5 + $0x110] sm:$0xff]
  %v234 = vld [vmem:[%s5 + $0x118] sm:$0xff]
  %v235 = vld [vmem:[%s5 + $0x120] sm:$0xff]
  %v236 = vld [vmem:[%s5 + $0x128] sm:$0xff]
  %v237 = vld [vmem:[%s5 + $0x130] sm:$0xff]
  %v238 = vld [vmem:[%s5 + $0x138] sm:$0xff]
  %v239 = vld [vmem:[%s5 + $0x140] sm:$0xff]
  %v240 = vld [vmem:[%s5 + $0x148] sm:$0xff]
  %v241 = vld [vmem:[%s5 + $0x150] sm:$0xff]
  %v242 = vld [vmem:[%s5 + $0x158] sm:$0xff]
  %v243 = vld [vmem:[%s5 + $0x160] sm:$0xff]
  %v244 = vld [vmem:[%s5 + $0x168] sm:$0xff]
  %v245 = vld [vmem:[%s5 + $0x170] sm:$0xff]
  %v246 = vld [vmem:[%s5 + $0x178] sm:$0xff]
  %v247 = vld [vmem:[%s5 + $0x180] sm:$0xff]
  %v248 = vld [vmem:[%s5 + $0x188] sm:$0xff]
  %v249 = vld [vmem:[%s5 + $0x190] sm:$0xff]
  %v250 = vld [vmem:[%s5 + $0x198] sm:$0xff]
  %v251 = vld [vmem:[%s5 + $0x1a0] sm:$0xff]
  %v252 = vld [vmem:[%s5 + $0x1a8] sm:$0xff]
  %v253 = vld [vmem:[%s5 + $0x1b0] sm:$0xff]
  %v254 = vld [vmem:[%s5 + $0x1b8] sm:$0xff]
  %v255 = vld [vmem:[%s5 + $0x1c0] sm:$0xff]
  %v256 = vld [vmem:[%s5 + $0x1c8] sm:$0xff]
  %v257 = vld [vmem:[%s5 + $0x1d0] sm:$0xff]
  %v258 = vld [vmem:[%s5 + $0x1d8] sm:$0xff]
  %v259 = vld [vmem:[%s5 + $0x1e0] sm:$0xff]
  %v260 = vld [vmem:[%s5 + $0x1e8] sm:$0xff]
  %v261 = vld [vmem:[%s5 + $0x1f0] sm:$0xff]
  %v262 = vld [vmem:[%s5 + $0x1f8] sm:$0xff]
  %v263 = vld [vmem:[%s5 + $0x200] sm:$0xff]
  %v264 = vld [vmem:[%s5 + $0x208] sm:$0xff]
  %v265 = vld [vmem:[%s5 + $0x210] sm:$0xff]
  %v266 = vld [vmem:[%s5 + $0x218] sm:$0xff]
  %v267 = vld [vmem:[%s5 + $0x220] sm:$0xff]
  %v268 = vld [vmem:[%s5 + $0x228] sm:$0xff]
  %v269 = vld [vmem:[%s5 + $0x230] sm:$0xff]
  %v270 = vld [vmem:[%s5 + $0x238] sm:$0xff]
  %v271 = vld [vmem:[%s5 + $0x240] sm:$0xff]
  %v272 = vld [vmem:[%s5 + $0x248] sm:$0xff]
  %v273 = vld [vmem:[%s5 + $0x250] sm:$0xff]
  %v274 = vld [vmem:[%s5 + $0x258] sm:$0xff]
  %v275 = vld [vmem:[%s5 + $0x260] sm:$0xff]
  %v276 = vld [vmem:[%s5 + $0x268] sm:$0xff]
  %v277 = vld [vmem:[%s5 + $0x270] sm:$0xff]
  %v278 = vld [vmem:[%s5 + $0x278] sm:$0xff]
  %v279 = vld [vmem:[%s5 + $0x280] sm:$0xff]
  %v280 = vld [vmem:[%s5 + $0x288] sm:$0xff]
  %v281 = vld [vmem:[%s5 + $0x290] sm:$0xff]
  %v282 = vld [vmem:[%s5 + $0x298] sm:$0xff]
  %v283 = vld [vmem:[%s5 + $0x2a0] sm:$0xff]
  %v284 = vld [vmem:[%s5 + $0x2a8] sm:$0xff]
  %v285 = vld [vmem:[%s5 + $0x2b0] sm:$0xff]
  %v286 = vld [vmem:[%s5 + $0x2b8] sm:$0xff]
  %v287 = vld [vmem:[%s5 + $0x2c0] sm:$0xff]
  %v288 = vld [vmem:[%s5 + $0x2c8] sm:$0xff]
  %v289 = vld [vmem:[%s5 + $0x2d0] sm:$0xff]
  %v290 = vld [vmem:[%s5 + $0x2d8] sm:$0xff]
  %v291 = vld [vmem:[%s5 + $0x2e0] sm:$0xff]
  %v292 = vld [vmem:[%s5 + $0x2e8] sm:$0xff]
  %v293 = vld [vmem:[%s5 + $0x2f0] sm:$0xff]
  %v294 = vld [vmem:[%s5 + $0x2f8] sm:$0xff]
  %v295 = vld [vmem:[%s5 + $0x300] sm:$0xff]
  %v296 = vld [vmem:[%s5 + $0x308] sm:$0xff]
  %v297 = vld [vmem:[%s5 + $0x310] sm:$0xff]
  %v298 = vld [vmem:[%s5 + $0x318] sm:$0xff]
  %v299 = vld [vmem:[%s5 + $0x320] sm:$0xff]
  %v300 = vld [vmem:[%s5 + $0x328] sm:$0xff]
  %v301 = vld [vmem:[%s5 + $0x330] sm:$0xff]
  %v302 = vld [vmem:[%s5 + $0x338] sm:$0xff]
  %v303 = vld [vmem:[%s5 + $0x340] sm:$0xff]
  %v304 = vld [vmem:[%s5 + $0x348] sm:$0xff]
  %v305 = vld [vmem:[%s5 + $0x350] sm:$0xff]
  %v306 = vld [vmem:[%s5 + $0x358] sm:$0xff]
  %v307 = vld [vmem:[%s5 + $0x360] sm:$0xff]
  %v308 = vld [vmem:[%s5 + $0x368] sm:$0xff]
  %v309 = vld [vmem:[%s5 + $0x370] sm:$0xff]
  %v310 = vld [vmem:[%s5 + $0x378] sm:$0xff]
  %v311 = vld [vmem:[%s5 + $0x380] sm:$0xff]
  %v312 = vld [vmem:[%s5 + $0x388] sm:$0xff]
  %v313 = vld [vmem:[%s5 + $0x390] sm:$0xff]
  %v314 = vld [vmem:[%s5 + $0x398] sm:$0xff]
  %v315 = vld [vmem:[%s5 + $0x3a0] sm:$0xff]
  %v316 = vld [vmem:[%s5 + $0x3a8] sm:$0xff]
  %v317 = vld [vmem:[%s5 + $0x3b0] sm:$0xff]
  %v318 = vld [vmem:[%s5 + $0x3b8] sm:$0xff]
  %v319 = vld [vmem:[%s5 + $0x3c0] sm:$0xff]
  %v320 = vld [vmem:[%s5 + $0x3c8] sm:$0xff]
  %v321 = vld [vmem:[%s5 + $0x3d0] sm:$0xff]
  %v322 = vld [vmem:[%s5 + $0x3d8] sm:$0xff]
  %v323 = vld [vmem:[%s5 + $0x3e0] sm:$0xff]
  %v324 = vld [vmem:[%s5 + $0x3e8] sm:$0xff]
  %v325 = vld [vmem:[%s5 + $0x3f0] sm:$0xff]
  %v326 = vld [vmem:[%s5 + $0x3f8] sm:$0xff]
  %v327 = vld [vmem:[%s5 + $0x400] sm:$0xff]
  %v328 = vld [vmem:[%s5 + $0x408] sm:$0xff]
  %v329 = vld [vmem:[%s5 + $0x410] sm:$0xff]
  %v330 = vld [vmem:[%s5 + $0x418] sm:$0xff]
  %v331 = vld [vmem:[%s5 + $0x420] sm:$0xff]
  %v332 = vld [vmem:[%s5 + $0x428] sm:$0xff]
  %v333 = vld [vmem:[%s5 + $0x430] sm:$0xff]
  %v334 = vld [vmem:[%s5 + $0x438] sm:$0xff]
  %v335 = vld [vmem:[%s5 + $0x440] sm:$0xff]
  %v336 = vld [vmem:[%s5 + $0x448] sm:$0xff]
  %v337 = vld [vmem:[%s5 + $0x450] sm:$0xff]
  %v338 = vld [vmem:[%s5 + $0x458] sm:$0xff]
  %v339 = vld [vmem:[%s5 + $0x460] sm:$0xff]
  %v340 = vld [vmem:[%s5 + $0x468] sm:$0xff]
  %v341 = vld [vmem:[%s5 + $0x470] sm:$0xff]
  %v342 = vld [vmem:[%s5 + $0x478] sm:$0xff]
  %v343 = vld [vmem:[%s5 + $0x480] sm:$0xff]
  %v344 = vld [vmem:[%s5 + $0x488] sm:$0xff]
  %v345 = vld [vmem:[%s5 + $0x490] sm:$0xff]
  %v346 = vld [vmem:[%s5 + $0x498] sm:$0xff]
  %v347 = vld [vmem:[%s5 + $0x4a0] sm:$0xff]
  %v348 = vld [vmem:[%s5 + $0x4a8] sm:$0xff]
  %v349 = vld [vmem:[%s5 + $0x4b0] sm:$0xff]
  %v350 = vld [vmem:[%s5 + $0x4b8] sm:$0xff]
  %v351 = vld [vmem:[%s5 + $0x4c0] sm:$0xff]
  %v352 = vld [vmem:[%s5 + $0x4c8] sm:$0xff]
  %v353 = vld [vmem:[%s5 + $0x4d0] sm:$0xff]
  %v354 = vld [vmem:[%s5 + $0x4d8] sm:$0xff]
  %v355 = vld [vmem:[%s5 + $0x4e0] sm:$0xff]
  %v356 = vld [vmem:[%s5 + $0x4e8] sm:$0xff]
  %v357 = vld [vmem:[%s5 + $0x4f0] sm:$0xff]
  %v358 = vld [vmem:[%s5 + $0x4f8] sm:$0xff]
  %v359 = vld [vmem:[%s5 + $0x500] sm:$0xff]
  %v360 = vld [vmem:[%s5 + $0x508] sm:$0xff]
  %v361 = vld [vmem:[%s5 + $0x510] sm:$0xff]
  %v362 = vld [vmem:[%s5 + $0x518] sm:$0xff]
  %v363 = vld [vmem:[%s5 + $0x520] sm:$0xff]
  %v364 = vld [vmem:[%s5 + $0x528] sm:$0xff]
  %v365 = vld [vmem:[%s5 + $0x530] sm:$0xff]
  %v366 = vld [vmem:[%s5 + $0x538] sm:$0xff]
  %v367 = vld [vmem:[%s5 + $0x540] sm:$0xff]
  %v368 = vld [vmem:[%s5 + $0x548] sm:$0xff]
  %v369 = vld [vmem:[%s5 + $0x550] sm:$0xff]
  %v370 = vld [vmem:[%s5 + $0x558] sm:$0xff]
  %v371 = vld [vmem:[%s5 + $0x560] sm:$0xff]
  %v372 = vld [vmem:[%s5 + $0x568] sm:$0xff]
  %v373 = vld [vmem:[%s5 + $0x570] sm:$0xff]
  %v374 = vld [vmem:[%s5 + $0x578] sm:$0xff]
  %v375 = vld [vmem:[%s5 + $0x580] sm:$0xff]
  %v376 = vld [vmem:[%s5 + $0x588] sm:$0xff]
  %v377 = vld [vmem:[%s5 + $0x590] sm:$0xff]
  %v378 = vld [vmem:[%s5 + $0x598] sm:$0xff]
  %v379 = vld [vmem:[%s5 + $0x5a0] sm:$0xff]
  %v380 = vld [vmem:[%s5 + $0x5a8] sm:$0xff]
  %v381 = vld [vmem:[%s5 + $0x5b0] sm:$0xff]
  %v382 = vld [vmem:[%s5 + $0x5b8] sm:$0xff]
  %v383 = vld [vmem:[%s5 + $0x5c0] sm:$0xff]
  %v384 = vld [vmem:[%s5 + $0x5c8] sm:$0xff]
  %v385 = vld [vmem:[%s5 + $0x5d0] sm:$0xff]
  %v386 = vld [vmem:[%s5 + $0x5d8] sm:$0xff]
  %v387 = vld [vmem:[%s5 + $0x5e0] sm:$0xff]
  %v388 = vld [vmem:[%s5 + $0x5e8] sm:$0xff]
  %v389 = vld [vmem:[%s5 + $0x5f0] sm:$0xff]
  %v390 = vld [vmem:[%s5 + $0x5f8] sm:$0xff]
  %v391 = vld [vmem:[%s5 + $0x600] sm:$0xff]
  %v392 = vld [vmem:[%s5 + $0x608] sm:$0xff]
  %v393 = vld [vmem:[%s5 + $0x610] sm:$0xff]
  %v394 = vld [vmem:[%s5 + $0x618] sm:$0xff]
  %v395 = vld [vmem:[%s5 + $0x620] sm:$0xff]
  %v396 = vld [vmem:[%s5 + $0x628] sm:$0xff]
  %v397 = vld [vmem:[%s5 + $0x630] sm:$0xff]
  %v398 = vld [vmem:[%s5 + $0x638] sm:$0xff]
  %v399 = vld [vmem:[%s5 + $0x640] sm:$0xff]
  %v400 = vld [vmem:[%s5 + $0x648] sm:$0xff]
  %v401 = vld [vmem:[%s5 + $0x650] sm:$0xff]
  %v402 = vld [vmem:[%s5 + $0x658] sm:$0xff]
  %v403 = vld [vmem:[%s5 + $0x660] sm:$0xff]
  %v404 = vld [vmem:[%s5 + $0x668] sm:$0xff]
  %v405 = vld [vmem:[%s5 + $0x670] sm:$0xff]
  %v406 = vld [vmem:[%s5 + $0x678] sm:$0xff]
  %v407 = vld [vmem:[%s5 + $0x680] sm:$0xff]
  %v408 = vld [vmem:[%s5 + $0x688] sm:$0xff]
  %v409 = vld [vmem:[%s5 + $0x690] sm:$0xff]
  %v410 = vld [vmem:[%s5 + $0x698] sm:$0xff]
  %v411 = vld [vmem:[%s5 + $0x6a0] sm:$0xff]
  %v412 = vld [vmem:[%s5 + $0x6a8] sm:$0xff]
  %v413 = vld [vmem:[%s5 + $0x6b0] sm:$0xff]
  %v414 = vld [vmem:[%s5 + $0x6b8] sm:$0xff]
  %v415 = vld [vmem:[%s5 + $0x6c0] sm:$0xff]
  %v416 = vld [vmem:[%s5 + $0x6c8] sm:$0xff]
  %v417 = vld [vmem:[%s5 + $0x6d0] sm:$0xff]
  %v418 = vld [vmem:[%s5 + $0x6d8] sm:$0xff]
  %v419 = vld [vmem:[%s5 + $0x6e0] sm:$0xff]
  %v420 = vld [vmem:[%s5 + $0x6e8] sm:$0xff]
  %v421 = vld [vmem:[%s5 + $0x6f0] sm:$0xff]
  %v422 = vld [vmem:[%s5 + $0x6f8] sm:$0xff]
  %v423 = vld [vmem:[%s5 + $0x700] sm:$0xff]
  %v424 = vld [vmem:[%s5 + $0x708] sm:$0xff]
  %v425 = vld [vmem:[%s5 + $0x710] sm:$0xff]
  %v426 = vld [vmem:[%s5 + $0x718] sm:$0xff]
  %v427 = vld [vmem:[%s5 + $0x720] sm:$0xff]
  %v428 = vld [vmem:[%s5 + $0x728] sm:$0xff]
  %v429 = vld [vmem:[%s5 + $0x730] sm:$0xff]
  %v430 = vld [vmem:[%s5 + $0x738] sm:$0xff]
  %v431 = vld [vmem:[%s5 + $0x740] sm:$0xff]
  %v432 = vld [vmem:[%s5 + $0x748] sm:$0xff]
  %v433 = vld [vmem:[%s5 + $0x750] sm:$0xff]
  %v434 = vld [vmem:[%s5 + $0x758] sm:$0xff]
  %v435 = vld [vmem:[%s5 + $0x760] sm:$0xff]
  %v436 = vld [vmem:[%s5 + $0x768] sm:$0xff]
  %v437 = vld [vmem:[%s5 + $0x770] sm:$0xff]
  %v438 = vld [vmem:[%s5 + $0x778] sm:$0xff]
  %v439 = vld [vmem:[%s5 + $0x780] sm:$0xff]
  %v440 = vld [vmem:[%s5 + $0x788] sm:$0xff]
  %v441 = vld [vmem:[%s5 + $0x790] sm:$0xff]
  %v442 = vld [vmem:[%s5 + $0x798] sm:$0xff]
  %v443 = vld [vmem:[%s5 + $0x7a0] sm:$0xff]
  %v444 = vld [vmem:[%s5 + $0x7a8] sm:$0xff]
  %v445 = vld [vmem:[%s5 + $0x7b0] sm:$0xff]
  %v446 = vld [vmem:[%s5 + $0x7b8] sm:$0xff]
  %v447 = vld [vmem:[%s5 + $0x7c0] sm:$0xff]
  %v448 = vld [vmem:[%s5 + $0x7c8] sm:$0xff]
  %v449 = vld [vmem:[%s5 + $0x7d0] sm:$0xff]
  %v450 = vld [vmem:[%s5 + $0x7d8] sm:$0xff]
  %v451 = vld [vmem:[%s5 + $0x7e0] sm:$0xff]
  %v452 = vld [vmem:[%s5 + $0x7e8] sm:$0xff]
  %v453 = vld [vmem:[%s5 + $0x7f0] sm:$0xff]
  %v454 = vld [vmem:[%s5 + $0x7f8] sm:$0xff]
  %v455 = vpack.c.bf16 %v198, %v198
  %v456 = vpack.c.bf16 %v215, %v199
  %v457 = vpack.c.bf16 %v216, %v200
  %v458 = vpack.c.bf16 %v217, %v201
  %v459 = vpack.c.bf16 %v218, %v202
  %v460 = vpack.c.bf16 %v219, %v203
  %v461 = vpack.c.bf16 %v220, %v204
  %v462 = vpack.c.bf16 %v221, %v205
  %v463 = vpack.c.bf16 %v222, %v206
  %v464 = vpack.c.bf16 %v223, %v207
  %v465 = vpack.c.bf16 %v224, %v208
  %v466 = vpack.c.bf16 %v225, %v209
  %v467 = vpack.c.bf16 %v226, %v210
  %v468 = vpack.c.bf16 %v227, %v211
  %v469 = vpack.c.bf16 %v228, %v212
  %v470 = vpack.c.bf16 %v229, %v213
  %v471 = vpack.c.bf16 %v230, %v214
  %v472 = vpack.c.bf16 %v247, %v231
  %v473 = vpack.c.bf16 %v248, %v232
  %v474 = vpack.c.bf16 %v249, %v233
  %v475 = vpack.c.bf16 %v250, %v234
  %v476 = vpack.c.bf16 %v251, %v235
  %v477 = vpack.c.bf16 %v252, %v236
  %v478 = vpack.c.bf16 %v253, %v237
  %v479 = vpack.c.bf16 %v254, %v238
  %v480 = vpack.c.bf16 %v255, %v239
  %v481 = vpack.c.bf16 %v256, %v240
  %v482 = vpack.c.bf16 %v257, %v241
  %v483 = vpack.c.bf16 %v258, %v242
  %v484 = vpack.c.bf16 %v259, %v243
  %v485 = vpack.c.bf16 %v260, %v244
  %v486 = vpack.c.bf16 %v261, %v245
  %v487 = vpack.c.bf16 %v262, %v246
  %v488 = vpack.c.bf16 %v279, %v263
  %v489 = vpack.c.bf16 %v280, %v264
  %v490 = vpack.c.bf16 %v281, %v265
  %v491 = vpack.c.bf16 %v282, %v266
  %v492 = vpack.c.bf16 %v283, %v267
  %v493 = vpack.c.bf16 %v284, %v268
  %v494 = vpack.c.bf16 %v285, %v269
  %v495 = vpack.c.bf16 %v286, %v270
  %v496 = vpack.c.bf16 %v287, %v271
  %v497 = vpack.c.bf16 %v288, %v272
  %v498 = vpack.c.bf16 %v289, %v273
  %v499 = vpack.c.bf16 %v290, %v274
  %v500 = vpack.c.bf16 %v291, %v275
  %v501 = vpack.c.bf16 %v292, %v276
  %v502 = vpack.c.bf16 %v293, %v277
  %v503 = vpack.c.bf16 %v294, %v278
  %v504 = vpack.c.bf16 %v311, %v295
  %v505 = vpack.c.bf16 %v312, %v296
  %v506 = vpack.c.bf16 %v313, %v297
  %v507 = vpack.c.bf16 %v314, %v298
  %v508 = vpack.c.bf16 %v315, %v299
  %v509 = vpack.c.bf16 %v316, %v300
  %v510 = vpack.c.bf16 %v317, %v301
  %v511 = vpack.c.bf16 %v318, %v302
  %v512 = vpack.c.bf16 %v319, %v303
  %v513 = vpack.c.bf16 %v320, %v304
  %v514 = vpack.c.bf16 %v321, %v305
  %v515 = vpack.c.bf16 %v322, %v306
  %v516 = vpack.c.bf16 %v323, %v307
  %v517 = vpack.c.bf16 %v324, %v308
  %v518 = vpack.c.bf16 %v325, %v309
  %v519 = vpack.c.bf16 %v326, %v310
  %v520 = vpack.c.bf16 %v343, %v327
  %v521 = vpack.c.bf16 %v344, %v328
  %v522 = vpack.c.bf16 %v345, %v329
  %v523 = vpack.c.bf16 %v346, %v330
  %v524 = vpack.c.bf16 %v347, %v331
  %v525 = vpack.c.bf16 %v348, %v332
  %v526 = vpack.c.bf16 %v349, %v333
  %v527 = vpack.c.bf16 %v350, %v334
  %v528 = vpack.c.bf16 %v351, %v335
  %v529 = vpack.c.bf16 %v352, %v336
  %v530 = vpack.c.bf16 %v353, %v337
  %v531 = vpack.c.bf16 %v354, %v338
  %v532 = vpack.c.bf16 %v355, %v339
  %v533 = vpack.c.bf16 %v356, %v340
  %v534 = vpack.c.bf16 %v357, %v341
  %v535 = vpack.c.bf16 %v358, %v342
  %v536 = vpack.c.bf16 %v375, %v359
  %v537 = vpack.c.bf16 %v376, %v360
  %v538 = vpack.c.bf16 %v377, %v361
  %v539 = vpack.c.bf16 %v378, %v362
  %v540 = vpack.c.bf16 %v379, %v363
  %v541 = vpack.c.bf16 %v380, %v364
  %v542 = vpack.c.bf16 %v381, %v365
  %v543 = vpack.c.bf16 %v382, %v366
  %v544 = vpack.c.bf16 %v383, %v367
  %v545 = vpack.c.bf16 %v384, %v368
  %v546 = vpack.c.bf16 %v385, %v369
  %v547 = vpack.c.bf16 %v386, %v370
  %v548 = vpack.c.bf16 %v387, %v371
  %v549 = vpack.c.bf16 %v388, %v372
  %v550 = vpack.c.bf16 %v389, %v373
  %v551 = vpack.c.bf16 %v390, %v374
  %v552 = vpack.c.bf16 %v407, %v391
  %v553 = vpack.c.bf16 %v408, %v392
  %v554 = vpack.c.bf16 %v409, %v393
  %v555 = vpack.c.bf16 %v410, %v394
  %v556 = vpack.c.bf16 %v411, %v395
  %v557 = vpack.c.bf16 %v412, %v396
  %v558 = vpack.c.bf16 %v413, %v397
  %v559 = vpack.c.bf16 %v414, %v398
  %v560 = vpack.c.bf16 %v415, %v399
  %v561 = vpack.c.bf16 %v416, %v400
  %v562 = vpack.c.bf16 %v417, %v401
  %v563 = vpack.c.bf16 %v418, %v402
  %v564 = vpack.c.bf16 %v419, %v403
  %v565 = vpack.c.bf16 %v420, %v404
  %v566 = vpack.c.bf16 %v421, %v405
  %v567 = vpack.c.bf16 %v422, %v406
  %v568 = vpack.c.bf16 %v439, %v423
  %v569 = vpack.c.bf16 %v440, %v424
  %v570 = vpack.c.bf16 %v441, %v425
  %v571 = vpack.c.bf16 %v442, %v426
  %v572 = vpack.c.bf16 %v443, %v427
  %v573 = vpack.c.bf16 %v444, %v428
  %v574 = vpack.c.bf16 %v445, %v429
  %v575 = vpack.c.bf16 %v446, %v430
  %v576 = vpack.c.bf16 %v447, %v431
  %v577 = vpack.c.bf16 %v448, %v432
  %v578 = vpack.c.bf16 %v449, %v433
  %v579 = vpack.c.bf16 %v450, %v434
  %v580 = vpack.c.bf16 %v451, %v435
  %v581 = vpack.c.bf16 %v452, %v436
  %v582 = vpack.c.bf16 %v453, %v437
  %v583 = vpack.c.bf16 %v454, %v438
  %v584 = vld [vmem:[%s6] sm:$0xff]
  %v585 = vld [vmem:[%s6 + $0x8] sm:$0xff]
  %v588 = vlaneseq
  %v589 = vshrl.u32 %v588, 7
  %v590 = vsub.s32 0, %v589
  %v591 = vrot.slane %v584, %v590
  %v592 = vlaneseq
  %v593 = vshrl.u32 %v592, 7
  %v594 = vsub.s32 1, %v593
  %v595 = vrot.slane %v584, %v594
  %v596 = vlaneseq
  %v597 = vshrl.u32 %v596, 7
  %v598 = vsub.s32 2, %v597
  %v599 = vrot.slane %v584, %v598
  %v600 = vlaneseq
  %v601 = vshrl.u32 %v600, 7
  %v602 = vsub.s32 3, %v601
  %v603 = vrot.slane %v584, %v602
  %v604 = vlaneseq
  %v605 = vshrl.u32 %v604, 7
  %v606 = vsub.s32 4, %v605
  %v607 = vrot.slane %v584, %v606
  %v608 = vlaneseq
  %v609 = vshrl.u32 %v608, 7
  %v610 = vsub.s32 5, %v609
  %v611 = vrot.slane %v584, %v610
  %v612 = vlaneseq
  %v613 = vshrl.u32 %v612, 7
  %v614 = vsub.s32 6, %v613
  %v615 = vrot.slane %v584, %v614
  %v616 = vlaneseq
  %v617 = vshrl.u32 %v616, 7
  %v618 = vsub.s32 7, %v617
  %v619 = vrot.slane %v584, %v618
  %v620 = vlaneseq
  %v621 = vshrl.u32 %v620, 7
  %v622 = vsub.s32 0, %v621
  %v623 = vrot.slane %v585, %v622
  %v624 = vlaneseq
  %v625 = vshrl.u32 %v624, 7
  %v626 = vsub.s32 1, %v625
  %v627 = vrot.slane %v585, %v626
  %v628 = vlaneseq
  %v629 = vshrl.u32 %v628, 7
  %v630 = vsub.s32 2, %v629
  %v631 = vrot.slane %v585, %v630
  %v632 = vlaneseq
  %v633 = vshrl.u32 %v632, 7
  %v634 = vsub.s32 3, %v633
  %v635 = vrot.slane %v585, %v634
  %v636 = vlaneseq
  %v637 = vshrl.u32 %v636, 7
  %v638 = vsub.s32 4, %v637
  %v639 = vrot.slane %v585, %v638
  %v640 = vlaneseq
  %v641 = vshrl.u32 %v640, 7
  %v642 = vsub.s32 5, %v641
  %v643 = vrot.slane %v585, %v642
  %v644 = vlaneseq
  %v645 = vshrl.u32 %v644, 7
  %v646 = vsub.s32 6, %v645
  %v647 = vrot.slane %v585, %v646
  %v648 = vlaneseq
  %v649 = vshrl.u32 %v648, 7
  %v650 = vsub.s32 7, %v649
  %v651 = vrot.slane %v585, %v650
  %668 = vmatprep.subr.bf16.mxu0 %v569
  %669 = vmatpush1.bf16.msra.mxu0 %v568
  %670 = vmatprep.subr.bf16.mxu0 %v553
  %671 = vmatpush1.bf16.msra.mxu0 %v552
  %672 = vmatprep.subr.bf16.mxu0 %v537
  %673 = vmatpush1.bf16.msra.mxu0 %v536
  %674 = vmatprep.subr.bf16.mxu0 %v521
  %675 = vmatpush1.bf16.msra.mxu0 %v520
  %676 = vmatprep.subr.bf16.mxu0 %v505
  %677 = vmatpush1.bf16.msra.mxu0 %v504
  %678 = vmatprep.subr.bf16.mxu0 %v489
  %679 = vmatpush1.bf16.msra.mxu0 %v488
  %680 = vmatprep.subr.bf16.mxu0 %v473
  %681 = vmatpush1.bf16.msra.mxu0 %v472
  %682 = vmatprep.subr.bf16.mxu0 %v457
  %683 = vmatpush1.bf16.msra.mxu0 %v456
  %684 = vmatprep.subr.bf16.mxu0 0
  %685 = vmatpush2.bf16.msra.mxu0 0
  %686 = vmatprep.subr.bf16.mxu0 0
  %687 = vmatpush2.bf16.msra.mxu0 0
  %688 = vmatprep.subr.bf16.mxu0 0
  %689 = vmatpush2.bf16.msra.mxu0 0
  %690 = vmatprep.subr.bf16.mxu0 0
  %691 = vmatpush2.bf16.msra.mxu0 0
  %692 = vmatprep.subr.bf16.mxu0 0
  %693 = vmatpush2.bf16.msra.mxu0 0
  %694 = vmatprep.subr.bf16.mxu0 0
  %695 = vmatpush2.bf16.msra.mxu0 0
  %696 = vmatprep.subr.bf16.mxu0 0
  %697 = vmatpush2.bf16.msra.mxu0 0
  %698 = vmatprep.subr.bf16.mxu0 0
  %699 = vmatpush2.bf16.msra.mxu0 0
  %700 = vmatprep.mubr.bf16.mxu0 0
  %701 = vmatmul.mubr.bf16.gmra.mxu0 %v455
  %v702 = vpop.f32.mrf.mxu0
  %v703 = vadd.f32 %v591, %v702
  %v704 = vpop.f32.mrf.mxu0
  %v705 = vadd.f32 %v595, %v704
  %v706 = vpop.f32.mrf.mxu0
  %v707 = vpop.f32.mrf.mxu0
  %708 = vdwg.mxu0
  %709 = vmatprep.subr.bf16.mxu0 %v571
  %710 = vmatpush1.bf16.msra.mxu0 %v570
  %711 = vmatprep.subr.bf16.mxu0 %v555
  %712 = vmatpush1.bf16.msra.mxu0 %v554
  %713 = vmatprep.subr.bf16.mxu0 %v539
  %714 = vmatpush1.bf16.msra.mxu0 %v538
  %715 = vmatprep.subr.bf16.mxu0 %v523
  %716 = vmatpush1.bf16.msra.mxu0 %v522
  %717 = vmatprep.subr.bf16.mxu0 %v507
  %718 = vmatpush1.bf16.msra.mxu0 %v506
  %719 = vmatprep.subr.bf16.mxu0 %v491
  %720 = vmatpush1.bf16.msra.mxu0 %v490
  %721 = vmatprep.subr.bf16.mxu0 %v475
  %722 = vmatpush1.bf16.msra.mxu0 %v474
  %723 = vmatprep.subr.bf16.mxu0 %v459
  %724 = vmatpush1.bf16.msra.mxu0 %v458
  %725 = vmatprep.subr.bf16.mxu0 0
  %726 = vmatpush2.bf16.msra.mxu0 0
  %727 = vmatprep.subr.bf16.mxu0 0
  %728 = vmatpush2.bf16.msra.mxu0 0
  %729 = vmatprep.subr.bf16.mxu0 0
  %730 = vmatpush2.bf16.msra.mxu0 0
  %731 = vmatprep.subr.bf16.mxu0 0
  %732 = vmatpush2.bf16.msra.mxu0 0
  %733 = vmatprep.subr.bf16.mxu0 0
  %734 = vmatpush2.bf16.msra.mxu0 0
  %735 = vmatprep.subr.bf16.mxu0 0
  %736 = vmatpush2.bf16.msra.mxu0 0
  %737 = vmatprep.subr.bf16.mxu0 0
  %738 = vmatpush2.bf16.msra.mxu0 0
  %739 = vmatprep.subr.bf16.mxu0 0
  %740 = vmatpush2.bf16.msra.mxu0 0
  %741 = vmatprep.mubr.bf16.mxu0 0
  %742 = vmatmul.mubr.bf16.gmra.mxu0 %v455
  %v743 = vpop.f32.mrf.mxu0
  %v744 = vadd.f32 %v599, %v743
  %v745 = vpop.f32.mrf.mxu0
  %v746 = vadd.f32 %v603, %v745
  %v747 = vpop.f32.mrf.mxu0
  %v748 = vpop.f32.mrf.mxu0
  %749 = vdwg.mxu0
  %750 = vmatprep.subr.bf16.mxu0 %v573
  %751 = vmatpush1.bf16.msra.mxu0 %v572
  %752 = vmatprep.subr.bf16.mxu0 %v557
  %753 = vmatpush1.bf16.msra.mxu0 %v556
  %754 = vmatprep.subr.bf16.mxu0 %v541
  %755 = vmatpush1.bf16.msra.mxu0 %v540
  %756 = vmatprep.subr.bf16.mxu0 %v525
  %757 = vmatpush1.bf16.msra.mxu0 %v524
  %758 = vmatprep.subr.bf16.mxu0 %v509
  %759 = vmatpush1.bf16.msra.mxu0 %v508
  %760 = vmatprep.subr.bf16.mxu0 %v493
  %761 = vmatpush1.bf16.msra.mxu0 %v492
  %762 = vmatprep.subr.bf16.mxu0 %v477
  %763 = vmatpush1.bf16.msra.mxu0 %v476
  %764 = vmatprep.subr.bf16.mxu0 %v461
  %765 = vmatpush1.bf16.msra.mxu0 %v460
  %766 = vmatprep.subr.bf16.mxu0 0
  %767 = vmatpush2.bf16.msra.mxu0 0
  %768 = vmatprep.subr.bf16.mxu0 0
  %769 = vmatpush2.bf16.msra.mxu0 0
  %770 = vmatprep.subr.bf16.mxu0 0
  %771 = vmatpush2.bf16.msra.mxu0 0
  %772 = vmatprep.subr.bf16.mxu0 0
  %773 = vmatpush2.bf16.msra.mxu0 0
  %774 = vmatprep.subr.bf16.mxu0 0
  %775 = vmatpush2.bf16.msra.mxu0 0
  %776 = vmatprep.subr.bf16.mxu0 0
  %777 = vmatpush2.bf16.msra.mxu0 0
  %778 = vmatprep.subr.bf16.mxu0 0
  %779 = vmatpush2.bf16.msra.mxu0 0
  %780 = vmatprep.subr.bf16.mxu0 0
  %781 = vmatpush2.bf16.msra.mxu0 0
  %782 = vmatprep.mubr.bf16.mxu0 0
  %783 = vmatmul.mubr.bf16.gmra.mxu0 %v455
  %v784 = vpop.f32.mrf.mxu0
  %v785 = vadd.f32 %v607, %v784
  %v786 = vpop.f32.mrf.mxu0
  %v787 = vadd.f32 %v611, %v786
  %v788 = vpop.f32.mrf.mxu0
  %v789 = vpop.f32.mrf.mxu0
  %790 = vdwg.mxu0
  %791 = vmatprep.subr.bf16.mxu0 %v575
  %792 = vmatpush1.bf16.msra.mxu0 %v574
  %793 = vmatprep.subr.bf16.mxu0 %v559
  %794 = vmatpush1.bf16.msra.mxu0 %v558
  %795 = vmatprep.subr.bf16.mxu0 %v543
  %796 = vmatpush1.bf16.msra.mxu0 %v542
  %797 = vmatprep.subr.bf16.mxu0 %v527
  %798 = vmatpush1.bf16.msra.mxu0 %v526
  %799 = vmatprep.subr.bf16.mxu0 %v511
  %800 = vmatpush1.bf16.msra.mxu0 %v510
  %801 = vmatprep.subr.bf16.mxu0 %v495
  %802 = vmatpush1.bf16.msra.mxu0 %v494
  %803 = vmatprep.subr.bf16.mxu0 %v479
  %804 = vmatpush1.bf16.msra.mxu0 %v478
  %805 = vmatprep.subr.bf16.mxu0 %v463
  %806 = vmatpush1.bf16.msra.mxu0 %v462
  %807 = vmatprep.subr.bf16.mxu0 0
  %808 = vmatpush2.bf16.msra.mxu0 0
  %809 = vmatprep.subr.bf16.mxu0 0
  %810 = vmatpush2.bf16.msra.mxu0 0
  %811 = vmatprep.subr.bf16.mxu0 0
  %812 = vmatpush2.bf16.msra.mxu0 0
  %813 = vmatprep.subr.bf16.mxu0 0
  %814 = vmatpush2.bf16.msra.mxu0 0
  %815 = vmatprep.subr.bf16.mxu0 0
  %816 = vmatpush2.bf16.msra.mxu0 0
  %817 = vmatprep.subr.bf16.mxu0 0
  %818 = vmatpush2.bf16.msra.mxu0 0
  %819 = vmatprep.subr.bf16.mxu0 0
  %820 = vmatpush2.bf16.msra.mxu0 0
  %821 = vmatprep.subr.bf16.mxu0 0
  %822 = vmatpush2.bf16.msra.mxu0 0
  %823 = vmatprep.mubr.bf16.mxu0 0
  %824 = vmatmul.mubr.bf16.gmra.mxu0 %v455
  %v825 = vpop.f32.mrf.mxu0
  %v826 = vadd.f32 %v615, %v825
  %v827 = vpop.f32.mrf.mxu0
  %v828 = vadd.f32 %v619, %v827
  %v829 = vpop.f32.mrf.mxu0
  %v830 = vpop.f32.mrf.mxu0
  %831 = vdwg.mxu0
  %832 = vmatprep.subr.bf16.mxu0 %v577
  %833 = vmatpush1.bf16.msra.mxu0 %v576
  %834 = vmatprep.subr.bf16.mxu0 %v561
  %835 = vmatpush1.bf16.msra.mxu0 %v560
  %836 = vmatprep.subr.bf16.mxu0 %v545
  %837 = vmatpush1.bf16.msra.mxu0 %v544
  %838 = vmatprep.subr.bf16.mxu0 %v529
  %839 = vmatpush1.bf16.msra.mxu0 %v528
  %840 = vmatprep.subr.bf16.mxu0 %v513
  %841 = vmatpush1.bf16.msra.mxu0 %v512
  %842 = vmatprep.subr.bf16.mxu0 %v497
  %843 = vmatpush1.bf16.msra.mxu0 %v496
  %844 = vmatprep.subr.bf16.mxu0 %v481
  %845 = vmatpush1.bf16.msra.mxu0 %v480
  %846 = vmatprep.subr.bf16.mxu0 %v465
  %847 = vmatpush1.bf16.msra.mxu0 %v464
  %848 = vmatprep.subr.bf16.mxu0 0
  %849 = vmatpush2.bf16.msra.mxu0 0
  %850 = vmatprep.subr.bf16.mxu0 0
  %851 = vmatpush2.bf16.msra.mxu0 0
  %852 = vmatprep.subr.bf16.mxu0 0
  %853 = vmatpush2.bf16.msra.mxu0 0
  %854 = vmatprep.subr.bf16.mxu0 0
  %855 = vmatpush2.bf16.msra.mxu0 0
  %856 = vmatprep.subr.bf16.mxu0 0
  %857 = vmatpush2.bf16.msra.mxu0 0
  %858 = vmatprep.subr.bf16.mxu0 0
  %859 = vmatpush2.bf16.msra.mxu0 0
  %860 = vmatprep.subr.bf16.mxu0 0
  %861 = vmatpush2.bf16.msra.mxu0 0
  %862 = vmatprep.subr.bf16.mxu0 0
  %863 = vmatpush2.bf16.msra.mxu0 0
  %864 = vmatprep.mubr.bf16.mxu0 0
  %865 = vmatmul.mubr.bf16.gmra.mxu0 %v455
  %v866 = vpop.f32.mrf.mxu0
  %v867 = vadd.f32 %v623, %v866
  %v868 = vpop.f32.mrf.mxu0
  %v869 = vadd.f32 %v627, %v868
  %v870 = vpop.f32.mrf.mxu0
  %v871 = vpop.f32.mrf.mxu0
  %872 = vdwg.mxu0
  %873 = vmatprep.subr.bf16.mxu0 %v579
  %874 = vmatpush1.bf16.msra.mxu0 %v578
  %875 = vmatprep.subr.bf16.mxu0 %v563
  %876 = vmatpush1.bf16.msra.mxu0 %v562
  %877 = vmatprep.subr.bf16.mxu0 %v547
  %878 = vmatpush1.bf16.msra.mxu0 %v546
  %879 = vmatprep.subr.bf16.mxu0 %v531
  %880 = vmatpush1.bf16.msra.mxu0 %v530
  %881 = vmatprep.subr.bf16.mxu0 %v515
  %882 = vmatpush1.bf16.msra.mxu0 %v514
  %883 = vmatprep.subr.bf16.mxu0 %v499
  %884 = vmatpush1.bf16.msra.mxu0 %v498
  %885 = vmatprep.subr.bf16.mxu0 %v483
  %886 = vmatpush1.bf16.msra.mxu0 %v482
  %887 = vmatprep.subr.bf16.mxu0 %v467
  %888 = vmatpush1.bf16.msra.mxu0 %v466
  %889 = vmatprep.subr.bf16.mxu0 0
  %890 = vmatpush2.bf16.msra.mxu0 0
  %891 = vmatprep.subr.bf16.mxu0 0
  %892 = vmatpush2.bf16.msra.mxu0 0
  %893 = vmatprep.subr.bf16.mxu0 0
  %894 = vmatpush2.bf16.msra.mxu0 0
  %895 = vmatprep.subr.bf16.mxu0 0
  %896 = vmatpush2.bf16.msra.mxu0 0
  %897 = vmatprep.subr.bf16.mxu0 0
  %898 = vmatpush2.bf16.msra.mxu0 0
  %899 = vmatprep.subr.bf16.mxu0 0
  %900 = vmatpush2.bf16.msra.mxu0 0
  %901 = vmatprep.subr.bf16.mxu0 0
  %902 = vmatpush2.bf16.msra.mxu0 0
  %903 = vmatprep.subr.bf16.mxu0 0
  %904 = vmatpush2.bf16.msra.mxu0 0
  %905 = vmatprep.mubr.bf16.mxu0 0
  %906 = vmatmul.mubr.bf16.gmra.mxu0 %v455
  %v907 = vpop.f32.mrf.mxu0
  %v908 = vadd.f32 %v631, %v907
  %v909 = vpop.f32.mrf.mxu0
  %v910 = vadd.f32 %v635, %v909
  %v911 = vpop.f32.mrf.mxu0
  %v912 = vpop.f32.mrf.mxu0
  %913 = vdwg.mxu0
  %914 = vmatprep.subr.bf16.mxu0 %v581
  %915 = vmatpush1.bf16.msra.mxu0 %v580
  %916 = vmatprep.subr.bf16.mxu0 %v565
  %917 = vmatpush1.bf16.msra.mxu0 %v564
  %918 = vmatprep.subr.bf16.mxu0 %v549
  %919 = vmatpush1.bf16.msra.mxu0 %v548
  %920 = vmatprep.subr.bf16.mxu0 %v533
  %921 = vmatpush1.bf16.msra.mxu0 %v532
  %922 = vmatprep.subr.bf16.mxu0 %v517
  %923 = vmatpush1.bf16.msra.mxu0 %v516
  %924 = vmatprep.subr.bf16.mxu0 %v501
  %925 = vmatpush1.bf16.msra.mxu0 %v500
  %926 = vmatprep.subr.bf16.mxu0 %v485
  %927 = vmatpush1.bf16.msra.mxu0 %v484
  %928 = vmatprep.subr.bf16.mxu0 %v469
  %929 = vmatpush1.bf16.msra.mxu0 %v468
  %930 = vmatprep.subr.bf16.mxu0 0
  %931 = vmatpush2.bf16.msra.mxu0 0
  %932 = vmatprep.subr.bf16.mxu0 0
  %933 = vmatpush2.bf16.msra.mxu0 0
  %934 = vmatprep.subr.bf16.mxu0 0
  %935 = vmatpush2.bf16.msra.mxu0 0
  %936 = vmatprep.subr.bf16.mxu0 0
  %937 = vmatpush2.bf16.msra.mxu0 0
  %938 = vmatprep.subr.bf16.mxu0 0
  %939 = vmatpush2.bf16.msra.mxu0 0
  %940 = vmatprep.subr.bf16.mxu0 0
  %941 = vmatpush2.bf16.msra.mxu0 0
  %942 = vmatprep.subr.bf16.mxu0 0
  %943 = vmatpush2.bf16.msra.mxu0 0
  %944 = vmatprep.subr.bf16.mxu0 0
  %945 = vmatpush2.bf16.msra.mxu0 0
  %946 = vmatprep.mubr.bf16.mxu0 0
  %947 = vmatmul.mubr.bf16.gmra.mxu0 %v455
  %v948 = vpop.f32.mrf.mxu0
  %v949 = vadd.f32 %v639, %v948
  %v950 = vpop.f32.mrf.mxu0
  %v951 = vadd.f32 %v643, %v950
  %v952 = vpop.f32.mrf.mxu0
  %v953 = vpop.f32.mrf.mxu0
  %954 = vdwg.mxu0
  %955 = vmatprep.subr.bf16.mxu0 %v583
  %956 = vmatpush1.bf16.msra.mxu0 %v582
  %957 = vmatprep.subr.bf16.mxu0 %v567
  %958 = vmatpush1.bf16.msra.mxu0 %v566
  %959 = vmatprep.subr.bf16.mxu0 %v551
  %960 = vmatpush1.bf16.msra.mxu0 %v550
  %961 = vmatprep.subr.bf16.mxu0 %v535
  %962 = vmatpush1.bf16.msra.mxu0 %v534
  %963 = vmatprep.subr.bf16.mxu0 %v519
  %964 = vmatpush1.bf16.msra.mxu0 %v518
  %965 = vmatprep.subr.bf16.mxu0 %v503
  %966 = vmatpush1.bf16.msra.mxu0 %v502
  %967 = vmatprep.subr.bf16.mxu0 %v487
  %968 = vmatpush1.bf16.msra.mxu0 %v486
  %969 = vmatprep.subr.bf16.mxu0 %v471
  %970 = vmatpush1.bf16.msra.mxu0 %v470
  %971 = vmatprep.subr.bf16.mxu0 0
  %972 = vmatpush2.bf16.msra.mxu0 0
  %973 = vmatprep.subr.bf16.mxu0 0
  %974 = vmatpush2.bf16.msra.mxu0 0
  %975 = vmatprep.subr.bf16.mxu0 0
  %976 = vmatpush2.bf16.msra.mxu0 0
  %977 = vmatprep.subr.bf16.mxu0 0
  %978 = vmatpush2.bf16.msra.mxu0 0
  %979 = vmatprep.subr.bf16.mxu0 0
  %980 = vmatpush2.bf16.msra.mxu0 0
  %981 = vmatprep.subr.bf16.mxu0 0
  %982 = vmatpush2.bf16.msra.mxu0 0
  %983 = vmatprep.subr.bf16.mxu0 0
  %984 = vmatpush2.bf16.msra.mxu0 0
  %985 = vmatprep.subr.bf16.mxu0 0
  %986 = vmatpush2.bf16.msra.mxu0 0
  %987 = vmatprep.mubr.bf16.mxu0 0
  %988 = vmatmul.mubr.bf16.gmra.mxu0 %v455
  %v989 = vpop.f32.mrf.mxu0
  %v990 = vadd.f32 %v647, %v989
  %v991 = vpop.f32.mrf.mxu0
  %v992 = vadd.f32 %v651, %v991
  %v993 = vpop.f32.mrf.mxu0
  %v994 = vpop.f32.mrf.mxu0
  %995 = vdwg.mxu0
  %v996 = vmul.f32 %v703, 0.02
  %v997 = vmul.f32 %v705, 0.02
  %v998 = vmul.f32 %v744, 0.02
  %v999 = vmul.f32 %v746, 0.02
  %v1000 = vmul.f32 %v785, 0.02
  %v1001 = vmul.f32 %v787, 0.02
  %v1002 = vmul.f32 %v826, 0.02
  %v1003 = vmul.f32 %v828, 0.02
  %v1004 = vmul.f32 %v867, 0.02
  %v1005 = vmul.f32 %v869, 0.02
  %v1006 = vmul.f32 %v908, 0.02
  %v1007 = vmul.f32 %v910, 0.02
  %v1008 = vmul.f32 %v949, 0.02
  %v1009 = vmul.f32 %v951, 0.02
  %v1010 = vmul.f32 %v990, 0.02
  %v1011 = vmul.f32 %v992, 0.02
  %v1028 = vcombine.low %v996, %v997
  %v1029 = vcombine.low %v998, %v999
  %v1030 = vcombine.low %v1000, %v1001
  %v1031 = vcombine.low %v1002, %v1003
  %v1032 = vcombine.low %v1004, %v1005
  %v1033 = vcombine.low %v1006, %v1007
  %v1034 = vcombine.low %v1008, %v1009
  %v1035 = vcombine.low %v1010, %v1011
  %1044 = vst [vmem:[%s9] sm:$0xff] %v1028
  %1045 = vst [vmem:[%s9 + $0x8] sm:$0xff] %v1029
  %1046 = vst [vmem:[%s9 + $0x10] sm:$0xff] %v1030
  %1047 = vst [vmem:[%s9 + $0x18] sm:$0xff] %v1031
  %1048 = vst [vmem:[%s9 + $0x20] sm:$0xff] %v1032
  %1049 = vst [vmem:[%s9 + $0x28] sm:$0xff] %v1033
  %1050 = vst [vmem:[%s9 + $0x30] sm:$0xff] %v1034
  %1051 = vst [vmem:[%s9 + $0x38] sm:$0xff] %v1035
  %vm1052 = vcmask 1043456
  %v1053 = vsel %vm1052, %v198, 0.0
  %v1054 = vrot.slane %v1053, 4
  %v1055 = vadd.f32 %v1053, %v1054
  %v1056 = vrot.slane %v1055, 2
  %v1057 = vadd.f32 %v1055, %v1056
  %v1058 = vrot.slane %v1057, 1
  %v1059 = vadd.f32 %v1057, %v1058
  %v1060 = vrcp.pop 4.0
  %v1061 = vmul.f32 %v1059, %v1060
  %v1062 = vld [vmem:[%s7] sm:$0xff]
  %v1063 = vld [vmem:[%s7 + $0x8] sm:$0xff]
  %v1064 = vld [vmem:[%s7 + $0x10] sm:$0xff]
  %v1065 = vld [vmem:[%s7 + $0x18] sm:$0xff]
  %v1066 = vld [vmem:[%s7 + $0x20] sm:$0xff]
  %v1067 = vld [vmem:[%s7 + $0x28] sm:$0xff]
  %v1068 = vld [vmem:[%s7 + $0x30] sm:$0xff]
  %v1069 = vld [vmem:[%s7 + $0x38] sm:$0xff]
  %v1070 = vld [vmem:[%s7 + $0x40] sm:$0xff]
  %v1071 = vld [vmem:[%s7 + $0x48] sm:$0xff]
  %v1072 = vld [vmem:[%s7 + $0x50] sm:$0xff]
  %v1073 = vld [vmem:[%s7 + $0x58] sm:$0xff]
  %v1074 = vld [vmem:[%s7 + $0x60] sm:$0xff]
  %v1075 = vld [vmem:[%s7 + $0x68] sm:$0xff]
  %v1076 = vld [vmem:[%s7 + $0x70] sm:$0xff]
  %v1077 = vld [vmem:[%s7 + $0x78] sm:$0xff]
  %v1078 = vpack.c.bf16 %v1061, %v1061
  %v1079 = vpack.c.bf16 %v1063, %v1062
  %v1080 = vpack.c.bf16 %v1065, %v1064
  %v1081 = vpack.c.bf16 %v1067, %v1066
  %v1082 = vpack.c.bf16 %v1069, %v1068
  %v1083 = vpack.c.bf16 %v1071, %v1070
  %v1084 = vpack.c.bf16 %v1073, %v1072
  %v1085 = vpack.c.bf16 %v1075, %v1074
  %v1086 = vpack.c.bf16 %v1077, %v1076
  %v1087 = vld [vmem:[%s8] sm:$0x1]
  %1088 = vmatprep.subr.bf16.mxu0 0
  %1089 = vmatpush1.bf16.msra.mxu0 %v1086
  %1090 = vmatprep.subr.bf16.mxu0 0
  %1091 = vmatpush1.bf16.msra.mxu0 %v1085
  %1092 = vmatprep.subr.bf16.mxu0 0
  %1093 = vmatpush1.bf16.msra.mxu0 %v1084
  %1094 = vmatprep.subr.bf16.mxu0 0
  %1095 = vmatpush1.bf16.msra.mxu0 %v1083
  %1096 = vmatprep.subr.bf16.mxu0 0
  %1097 = vmatpush1.bf16.msra.mxu0 %v1082
  %1098 = vmatprep.subr.bf16.mxu0 0
  %1099 = vmatpush1.bf16.msra.mxu0 %v1081
  %1100 = vmatprep.subr.bf16.mxu0 0
  %1101 = vmatpush1.bf16.msra.mxu0 %v1080
  %1102 = vmatprep.subr.bf16.mxu0 0
  %1103 = vmatpush1.bf16.msra.mxu0 %v1079
  %1104 = vmatprep.subr.bf16.mxu0 0
  %1105 = vmatpush2.bf16.msra.mxu0 0
  %1106 = vmatprep.subr.bf16.mxu0 0
  %1107 = vmatpush2.bf16.msra.mxu0 0
  %1108 = vmatprep.subr.bf16.mxu0 0
  %1109 = vmatpush2.bf16.msra.mxu0 0
  %1110 = vmatprep.subr.bf16.mxu0 0
  %1111 = vmatpush2.bf16.msra.mxu0 0
  %1112 = vmatprep.subr.bf16.mxu0 0
  %1113 = vmatpush2.bf16.msra.mxu0 0
  %1114 = vmatprep.subr.bf16.mxu0 0
  %1115 = vmatpush2.bf16.msra.mxu0 0
  %1116 = vmatprep.subr.bf16.mxu0 0
  %1117 = vmatpush2.bf16.msra.mxu0 0
  %1118 = vmatprep.subr.bf16.mxu0 0
  %1119 = vmatpush2.bf16.msra.mxu0 0
  %1120 = vmatprep.mubr.bf16.mxu0 0
  %1121 = vmatmul.mubr.bf16.gmra.mxu0 %v1078
  %v1122 = vpop.f32.mrf.mxu0
  %v1123 = vadd.f32 %v1087, %v1122
  %v1124 = vpop.f32.mrf.mxu0
  %v1125 = vpop.f32.mrf.mxu0
  %v1126 = vpop.f32.mrf.mxu0
  %1127 = vdwg.mxu0
  %v1128 = vmul.f32 %v1123, 0.02
  %vm1129 = vcmask 253952
  %1130 = vst.msk [vmem:[%s10] sm:$0x1] %vm1129, %v1128
  // Predicated region
  $region38: #{segment_encoder_forward.2} parent=0 // pred_check
    _
  $region39: #{segment_encoder_forward.2} parent=0 // pred_check_branch
    %1132 = sbr.rel (0) target = $region41
  $region40: #{segment_encoder_forward.2} parent=0 // pred_region
    _
  $region41: #{segment_encoder_forward.2} parent=0 // pred_fallthru
    _
  // Predicated region
  $region42: #{segment_encoder_forward.2} parent=0 // pred_check
    _
  $region43: #{segment_encoder_forward.2} parent=0 // pred_check_branch
    %1134 = sbr.rel (0) target = $region45
  $region44: #{segment_encoder_forward.2} parent=0 // pred_region
    _
  $region45: #{segment_encoder_forward.2} parent=0 // pred_fallthru
    _
  // Predicated region
  $region46: #{segment_encoder_forward.2} parent=0 // pred_check
    _
  $region47: #{segment_encoder_forward.2} parent=0 // pred_check_branch
    %1136 = sbr.rel (0) target = $region49
  $region48: #{segment_encoder_forward.2} parent=0 // pred_region
    _
  $region49: #{segment_encoder_forward.2} parent=0 // pred_fallthru
    _
  // Predicated region
  $region50: #{segment_encoder_forward.2} parent=0 // pred_check
    _
  $region51: #{segment_encoder_forward.2} parent=0 // pred_check_branch
    %1138 = sbr.rel (0) target = $region53
  $region52: #{segment_encoder_forward.2} parent=0 // pred_region
    _
  $region53: #{segment_encoder_forward.2} parent=0 // pred_fallthru
    _

// kernel: segment_encoder_forward.3
$region0: #{segment_encoder_forward.3}
  #allocation0 [shape = 'u32[]', space=smem, size = 0x4, offset = 0x4, fixed_abs, tag = 'smem constant byte address 0x4 - core index']
  #allocation1 [shape = 'u32[144,128]{1,0:T(1,128)}', space=vmem, size = 0x12000, scoped, tag = 'internal scratch']
  %s0 = inlined_call_operand.vmem [shape: f32[2,17,256], index: 0, kind: input, shape index: {}]
  %s1 = inlined_call_operand.vmem [shape: f32[2,17,32], index: 1, kind: input, shape index: {}]
  %s2 = inlined_call_operand.vmem [shape: bf16[256,32], index: 2, kind: input, shape index: {}]
  %s3 = inlined_call_operand.vmem [shape: f32[4,1,32], index: 3, kind: input, shape index: {}]
  %s4 = inlined_call_operand.vmem [shape: f32[4,1,32], index: 4, kind: input, shape index: {}]
  %s5 = inlined_call_operand.vmem [shape: bf16[4,32,96], index: 5, kind: input, shape index: {}]
  %s6 = inlined_call_operand.vmem [shape: bf16[4,32,32], index: 6, kind: input, shape index: {}]
  %s7 = inlined_call_operand.vmem [shape: f32[4,1,32], index: 7, kind: input, shape index: {}]
  %s8 = inlined_call_operand.vmem [shape: f32[4,1,32], index: 8, kind: input, shape index: {}]
  %s9 = inlined_call_operand.vmem [shape: bf16[4,32,128], index: 9, kind: input, shape index: {}]
  %s10 = inlined_call_operand.vmem [shape: f32[4,1,128], index: 10, kind: input, shape index: {}]
  %s11 = inlined_call_operand.vmem [shape: bf16[4,128,32], index: 11, kind: input, shape index: {}]
  %s12 = inlined_call_operand.vmem [shape: f32[4,1,32], index: 12, kind: input, shape index: {}]
  %s13 = inlined_call_operand.vmem [shape: f32[1,32], index: 13, kind: input, shape index: {}]
  %s14 = inlined_call_operand.vmem [shape: f32[1,32], index: 14, kind: input, shape index: {}]
  %s15 = inlined_call_operand.vmem [shape: bf16[32,128], index: 15, kind: input, shape index: {}]
  %s16 = inlined_call_operand.vmem [shape: f32[1,128], index: 16, kind: input, shape index: {}]
  %s17 = inlined_call_operand.vmem [shape: f32[1,128], index: 17, kind: input, shape index: {}]
  %s18 = inlined_call_operand.vmem [shape: f32[1,128], index: 18, kind: input, shape index: {}]
  %s19 = inlined_call_operand.vmem [shape: bf16[32,128], index: 19, kind: input, shape index: {}]
  %s20 = inlined_call_operand.vmem [shape: f32[1,128], index: 20, kind: input, shape index: {}]
  %s21 = inlined_call_operand.vmem [shape: bf16[32,128], index: 21, kind: input, shape index: {}]
  %s22 = inlined_call_operand.vmem [shape: f32[1,128], index: 22, kind: input, shape index: {}]
  %s23 = inlined_call_operand.vmem [shape: f32[2,4,16,128], index: 23, kind: output, shape index: {0}]
  %s24 = inlined_call_operand.vmem [shape: f32[2,16,128], index: 24, kind: output, shape index: {1}]
  %s25 = inlined_call_operand.hbm [shape: f32[2,16,32], index: 25, kind: output, shape index: {2}]
  %s26 = inlined_call_operand.hbm [shape: f32[2,4,32], index: 26, kind: output, shape index: {3}]
  %s27 = inlined_call_operand.hbm [shape: f32[2,16,32], index: 27, kind: output, shape index: {4}]
  %28 = xla_tuple %s23, %s24, %s25, %s26, %s27
  %s29 = sld [smem:[#allocation0]]
  $region157: #{segment_encoder_forward.3} parent=0
    _
  %s31 = ssub.s32 1, %s29
  %s32 = scalar_select 0, %s31, %s29
  $region1: #{segment_encoder_forward.3} parent=0
    #allocation2 [shape = 'u8[16384]{0}', space=vmem, size = 0x4000, scoped, tag = 'output window, operand 2']
    #allocation3 [shape = 's32[2]{0}', space=sflag, size = 0x8, scoped, tag = 'scoped memory for segment_encoder_forward.3']
    #allocation4 [shape = 'u8[4096]{0}', space=vmem, size = 0x1000, scoped, tag = 'output window, operand 3']
    #allocation5 [shape = 's32[2]{0}', space=sflag, size = 0x8, scoped, tag = 'scoped memory for segment_encoder_forward.3']
    #allocation6 [shape = 'u8[16384]{0}', space=vmem, size = 0x4000, scoped, tag = 'output window, operand 4']
    %33 = vsyncpa [#allocation3], 0
    %s34 = scalar_lea.sflag [#allocation3], 1
    %35 = vsyncpa %s34, 0
    %36 = vsyncpa [#allocation5], 0
    %s37 = scalar_lea.sflag [#allocation5], 1
    %38 = vsyncpa %s37, 0
    loop: start=0, step=1, limit=4
    $region2: #{segment_encoder_forward.3} parent=1 // loop_pre_header
      _
    $region3: #{segment_encoder_forward.3} parent=1 // loop_header
      %s40 = sphi 0, %s44
      %p41 = scmp.ge.s32.totalorder %s40, 4
      %s50 = sphi 0, %s52
      %s53 = sphi 0, %s50
      %s54 = sphi 0, %s53
      %s70 = sphi 0, %s54
      %s76 = sphi 0, %s78
      %s79 = sphi 0, %s76
      %s80 = sphi 0, %s79
      %s96 = sphi 0, %s80
      %s100 = sphi 0, %s100
      %s102 = sphi 0, %s100
      %s103 = sphi 0, %s102
      %s117 = sphi 0, %s103
      %s121 = sphi 0, %s121
      %s123 = sphi 0, %s121
      %s124 = sphi 0, %s123
      %s138 = sphi 0, %s124
      %s142 = sphi 0, %s142
      %s144 = sphi 0, %s142
      %s145 = sphi 0, %s144
      %s159 = sphi 0, %s145
      %s163 = sphi 0, %s163
      %s165 = sphi 0, %s163
      %s166 = sphi 0, %s165
      %s180 = sphi 0, %s166
      %s184 = sphi 0, %s184
      %s186 = sphi 0, %s184
      %s187 = sphi 0, %s186
      %s201 = sphi 0, %s187
      %s205 = sphi 0, %s205
      %s207 = sphi 0, %s205
      %s208 = sphi 0, %s207
      %s222 = sphi 0, %s208
      %s226 = sphi 0, %s226
      %s228 = sphi 0, %s226
      %s229 = sphi 0, %s228
      %s243 = sphi 0, %s229
      %s247 = sphi 0, %s247
      %s249 = sphi 0, %s247
      %s250 = sphi 0, %s249
      %s264 = sphi 0, %s250
      %s268 = sphi 0, %s268
      %s270 = sphi 0, %s268
      %s271 = sphi 0, %s270
      %s285 = sphi 0, %s271
      %s289 = sphi 0, %s289
      %s291 = sphi 0, %s289
      %s292 = sphi 0, %s291
      %s306 = sphi 0, %s292
      %s310 = sphi 0, %s310
      %s312 = sphi 0, %s310
      %s313 = sphi 0, %s312
      %s327 = sphi 0, %s313
      %s331 = sphi 0, %s331
      %s333 = sphi 0, %s331
      %s334 = sphi 0, %s333
      %s348 = sphi 0, %s334
      %s352 = sphi 0, %s352
      %s354 = sphi 0, %s352
      %s355 = sphi 0, %s354
      %s369 = sphi 0, %s355
      %s373 = sphi 0, %s373
      %s375 = sphi 0, %s373
      %s376 = sphi 0, %s375
      %s390 = sphi 0, %s376
      %s394 = sphi 0, %s394
      %s396 = sphi 0, %s394
      %s397 = sphi 0, %s396
      %s411 = sphi 0, %s397
      %s415 = sphi 0, %s415
      %s417 = sphi 0, %s415
      %s418 = sphi 0, %s417
      %s432 = sphi 0, %s418
      %s436 = sphi 0, %s436
      %s438 = sphi 0, %s436
      %s439 = sphi 0, %s438
      %s453 = sphi 0, %s439
      %s457 = sphi 0, %s457
      %s459 = sphi 0, %s457
      %s460 = sphi 0, %s459
      %s474 = sphi 0, %s460
      %s478 = sphi 0, %s478
      %s480 = sphi 0, %s478
      %s481 = sphi 0, %s480
      %s495 = sphi 0, %s481
      %s499 = sphi 0, %s499
      %s501 = sphi 0, %s499
      %s502 = sphi 0, %s501
      %s516 = sphi 0, %s502
      %s520 = sphi 0, %s520
      %s522 = sphi 0, %s520
      %s523 = sphi 0, %s522
      %s537 = sphi 0, %s523
      %s543 = sphi 0, %s545
      %s546 = sphi 0, %s543
      %s547 = sphi 0, %s546
      %s563 = sphi 0, %s547
      %s569 = sphi 0, %s571
      %s572 = sphi 0, %s569
      %s573 = sphi 0, %s572
      %s589 = sphi 0, %s573
      %s595 = sphi 0, %s597
      %s598 = sphi 0, %s595
      %s599 = sphi 0, %s598
      %s615 = sphi 0, %s599
      %s621 = sphi 0, %s623
      %s624 = sphi 0, %s621
      %s625 = sphi 0, %s624
      %s641 = sphi 0, %s625
      %s647 = sphi 0, %s649
      %s650 = sphi 0, %s647
      %s651 = sphi 0, %s650
      %s667 = sphi 0, %s651
    $region4: #{segment_encoder_forward.3} parent=1 // loop_header_branch
      %43 = sbr.rel (%p41) target = $region8
    $region5: #{segment_encoder_forward.3} parent=1 // loop_body
      %s45 = ssub.s32 %s40, 1
      %s46 = ssub.s32 %s40, 2
      %s47 = sadd.s32 %s40, 1
      %s48 = ssub.s32 %s40, %s47
      %p49 = scmp.eq.s32.totalorder %s48, 0
      %s51 = sadd.s32 %s50, 1
      %s52 = scalar_select %p49, %s50, %s51
      %p55 = pneg %p49
      %p56 = scmp.eq.s32.totalorder %s40, 1
      %p57 = por %p55, %p56
      %p58 = scmp.ne.s32.totalorder %s50, %s53
      %p59 = scmp.eq.s32.totalorder %s40, 0
      %p60 = por %p58, %p59
      %p61 = scmp.ne.s32.totalorder %s50, %s53
      %p62 = scmp.eq.s32.totalorder %s45, 1
      %p63 = por %p61, %p62
      %p64 = scmp.ne.s32.totalorder %s53, %s54
      %p65 = scmp.eq.s32.totalorder %s45, 0
      %p66 = por %p64, %p65
      %p67 = scmp.ne.s32.totalorder %s53, %s54
      %p68 = scmp.eq.s32.totalorder %s46, 1
      %p69 = por %p67, %p68
      %p71 = scmp.ne.s32.totalorder %s54, %s70
      %p72 = scmp.eq.s32.totalorder %s46, 0
      %p73 = por %p71, %p72
      %s74 = ssub.s32 %s40, %s47
      %p75 = scmp.eq.s32.totalorder %s74, 0
      %s77 = sadd.s32 %s76, 1
      %s78 = scalar_select %p75, %s76, %s77
      %p81 = pneg %p75
      %p82 = scmp.eq.s32.totalorder %s40, 1
      %p83 = por %p81, %p82
      %p84 = scmp.ne.s32.totalorder %s76, %s79
      %p85 = scmp.eq.s32.totalorder %s40, 0
      %p86 = por %p84, %p85
      %p87 = scmp.ne.s32.totalorder %s76, %s79
      %p88 = scmp.eq.s32.totalorder %s45, 1
      %p89 = por %p87, %p88
      %p90 = scmp.ne.s32.totalorder %s79, %s80
      %p91 = scmp.eq.s32.totalorder %s45, 0
      %p92 = por %p90, %p91
      %p93 = scmp.ne.s32.totalorder %s79, %s80
      %p94 = scmp.eq.s32.totalorder %s46, 1
      %p95 = por %p93, %p94
      %p97 = scmp.ne.s32.totalorder %s80, %s96
      %p98 = scmp.eq.s32.totalorder %s46, 0
      %p99 = por %p97, %p98
      %s101 = sadd.s32 %s100, 1
      %p104 = scmp.eq.s32.totalorder %s40, 1
      %p105 = scmp.ne.s32.totalorder %s100, %s102
      %p106 = scmp.eq.s32.totalorder %s40, 0
      %p107 = por %p105, %p106
      %p108 = scmp.ne.s32.totalorder %s100, %s102
      %p109 = scmp.eq.s32.totalorder %s45, 1
      %p110 = por %p108, %p109
      %p111 = scmp.ne.s32.totalorder %s102, %s103
      %p112 = scmp.eq.s32.totalorder %s45, 0
      %p113 = por %p111, %p112
      %p114 = scmp.ne.s32.totalorder %s102, %s103
      %p115 = scmp.eq.s32.totalorder %s46, 1
      %p116 = por %p114, %p115
      %p118 = scmp.ne.s32.totalorder %s103, %s117
      %p119 = scmp.eq.s32.totalorder %s46, 0
      %p120 = por %p118, %p119
      %s122 = sadd.s32 %s121, 1
      %p125 = scmp.eq.s32.totalorder %s40, 1
      %p126 = scmp.ne.s32.totalorder %s121, %s123
      %p127 = scmp.eq.s32.totalorder %s40, 0
      %p128 = por %p126, %p127
      %p129 = scmp.ne.s32.totalorder %s121, %s123
      %p130 = scmp.eq.s32.totalorder %s45, 1
      %p131 = por %p129, %p130
      %p132 = scmp.ne.s32.totalorder %s123, %s124
      %p133 = scmp.eq.s32.totalorder %s45, 0
      %p134 = por %p132, %p133
      %p135 = scmp.ne.s32.totalorder %s123, %s124
      %p136 = scmp.eq.s32.totalorder %s46, 1
      %p137 = por %p135, %p136
      %p139 = scmp.ne.s32.totalorder %s124, %s138
      %p140 = scmp.eq.s32.totalorder %s46, 0
      %p141 = por %p139, %p140
      %s143 = sadd.s32 %s142, 1
      %p146 = scmp.eq.s32.totalorder %s40, 1
      %p147 = scmp.ne.s32.totalorder %s142, %s144
      %p148 = scmp.eq.s32.totalorder %s40, 0
      %p149 = por %p147, %p148
      %p150 = scmp.ne.s32.totalorder %s142, %s144
      %p151 = scmp.eq.s32.totalorder %s45, 1
      %p152 = por %p150, %p151
      %p153 = scmp.ne.s32.totalorder %s144, %s145
      %p154 = scmp.eq.s32.totalorder %s45, 0
      %p155 = por %p153, %p154
      %p156 = scmp.ne.s32.totalorder %s144, %s145
      %p157 = scmp.eq.s32.totalorder %s46, 1
      %p158 = por %p156, %p157
      %p160 = scmp.ne.s32.totalorder %s145, %s159
      %p161 = scmp.eq.s32.totalorder %s46, 0
      %p162 = por %p160, %p161
      %s164 = sadd.s32 %s163, 1
      %p167 = scmp.eq.s32.totalorder %s40, 1
      %p168 = scmp.ne.s32.totalorder %s163, %s165
      %p169 = scmp.eq.s32.totalorder %s40, 0
      %p170 = por %p168, %p169
      %p171 = scmp.ne.s32.totalorder %s163, %s165
      %p172 = scmp.eq.s32.totalorder %s45, 1
      %p173 = por %p171, %p172
      %p174 = scmp.ne.s32.totalorder %s165, %s166
      %p175 = scmp.eq.s32.totalorder %s45, 0
      %p176 = por %p174, %p175
      %p177 = scmp.ne.s32.totalorder %s165, %s166
      %p178 = scmp.eq.s32.totalorder %s46, 1
      %p179 = por %p177, %p178
      %p181 = scmp.ne.s32.totalorder %s166, %s180
      %p182 = scmp.eq.s32.totalorder %s46, 0
      %p183 = por %p181, %p182
      %s185 = sadd.s32 %s184, 1
      %p188 = scmp.eq.s32.totalorder %s40, 1
      %p189 = scmp.ne.s32.totalorder %s184, %s186
      %p190 = scmp.eq.s32.totalorder %s40, 0
      %p191 = por %p189, %p190
      %p192 = scmp.ne.s32.totalorder %s184, %s186
      %p193 = scmp.eq.s32.totalorder %s45, 1
      %p194 = por %p192, %p193
      %p195 = scmp.ne.s32.totalorder %s186, %s187
      %p196 = scmp.eq.s32.totalorder %s45, 0
      %p197 = por %p195, %p196
      %p198 = scmp.ne.s32.totalorder %s186, %s187
      %p199 = scmp.eq.s32.totalorder %s46, 1
      %p200 = por %p198, %p199
      %p202 = scmp.ne.s32.totalorder %s187, %s201
      %p203 = scmp.eq.s32.totalorder %s46, 0
      %p204 = por %p202, %p203
      %s206 = sadd.s32 %s205, 1
      %p209 = scmp.eq.s32.totalorder %s40, 1
      %p210 = scmp.ne.s32.totalorder %s205, %s207
      %p211 = scmp.eq.s32.totalorder %s40, 0
      %p212 = por %p210, %p211
      %p213 = scmp.ne.s32.totalorder %s205, %s207
      %p214 = scmp.eq.s32.totalorder %s45, 1
      %p215 = por %p213, %p214
      %p216 = scmp.ne.s32.totalorder %s207, %s208
      %p217 = scmp.eq.s32.totalorder %s45, 0
      %p218 = por %p216, %p217
      %p219 = scmp.ne.s32.totalorder %s207, %s208
      %p220 = scmp.eq.s32.totalorder %s46, 1
      %p221 = por %p219, %p220
      %p223 = scmp.ne.s32.totalorder %s208, %s222
      %p224 = scmp.eq.s32.totalorder %s46, 0
      %p225 = por %p223, %p224
      %s227 = sadd.s32 %s226, 1
      %p230 = scmp.eq.s32.totalorder %s40, 1
      %p231 = scmp.ne.s32.totalorder %s226, %s228
      %p232 = scmp.eq.s32.totalorder %s40, 0
      %p233 = por %p231, %p232
      %p234 = scmp.ne.s32.totalorder %s226, %s228
      %p235 = scmp.eq.s32.totalorder %s45, 1
      %p236 = por %p234, %p235
      %p237 = scmp.ne.s32.totalorder %s228, %s229
      %p238 = scmp.eq.s32.totalorder %s45, 0
      %p239 = por %p237, %p238
      %p240 = scmp.ne.s32.totalorder %s228, %s229
      %p241 = scmp.eq.s32.totalorder %s46, 1
      %p242 = por %p240, %p241
      %p244 = scmp.ne.s32.totalorder %s229, %s243
      %p245 = scmp.eq.s32.totalorder %s46, 0
      %p246 = por %p244, %p245
      %s248 = sadd.s32 %s247, 1
      %p251 = scmp.eq.s32.totalorder %s40, 1
      %p252 = scmp.ne.s32.totalorder %s247, %s249
      %p253 = scmp.eq.s32.totalorder %s40, 0
      %p254 = por %p252, %p253
      %p255 = scmp.ne.s32.totalorder %s247, %s249
      %p256 = scmp.eq.s32.totalorder %s45, 1
      %p257 = por %p255, %p256
      %p258 = scmp.ne.s32.totalorder %s249, %s250
      %p259 = scmp.eq.s32.totalorder %s45, 0
      %p260 = por %p258, %p259
      %p261 = scmp.ne.s32.totalorder %s249, %s250
      %p262 = scmp.eq.s32.totalorder %s46, 1
      %p263 = por %p261, %p262
      %p265 = scmp.ne.s32.totalorder %s250, %s264
      %p266 = scmp.eq.s32.totalorder %s46, 0
      %p267 = por %p265, %p266
      %s269 = sadd.s32 %s268, 1
      %p272 = scmp.eq.s32.totalorder %s40, 1
      %p273 = scmp.ne.s32.totalorder %s268, %s270
      %p274 = scmp.eq.s32.totalorder %s40, 0
      %p275 = por %p273, %p274
      %p276 = scmp.ne.s32.totalorder %s268, %s270
      %p277 = scmp.eq.s32.totalorder %s45, 1
      %p278 = por %p276, %p277
      %p279 = scmp.ne.s32.totalorder %s270, %s271
      %p280 = scmp.eq.s32.totalorder %s45, 0
      %p281 = por %p279, %p280
      %p282 = scmp.ne.s32.totalorder %s270, %s271
      %p283 = scmp.eq.s32.totalorder %s46, 1
      %p284 = por %p282, %p283
      %p286 = scmp.ne.s32.totalorder %s271, %s285
      %p287 = scmp.eq.s32.totalorder %s46, 0
      %p288 = por %p286, %p287
      %s290 = sadd.s32 %s289, 1
      %p293 = scmp.eq.s32.totalorder %s40, 1
      %p294 = scmp.ne.s32.totalorder %s289, %s291
      %p295 = scmp.eq.s32.totalorder %s40, 0
      %p296 = por %p294, %p295
      %p297 = scmp.ne.s32.totalorder %s289, %s291
      %p298 = scmp.eq.s32.totalorder %s45, 1
      %p299 = por %p297, %p298
      %p300 = scmp.ne.s32.totalorder %s291, %s292
      %p301 = scmp.eq.s32.totalorder %s45, 0
      %p302 = por %p300, %p301
      %p303 = scmp.ne.s32.totalorder %s291, %s292
      %p304 = scmp.eq.s32.totalorder %s46, 1
      %p305 = por %p303, %p304
      %p307 = scmp.ne.s32.totalorder %s292, %s306
      %p308 = scmp.eq.s32.totalorder %s46, 0
      %p309 = por %p307, %p308
      %s311 = sadd.s32 %s310, 1
      %p314 = scmp.eq.s32.totalorder %s40, 1
      %p315 = scmp.ne.s32.totalorder %s310, %s312
      %p316 = scmp.eq.s32.totalorder %s40, 0
      %p317 = por %p315, %p316
      %p318 = scmp.ne.s32.totalorder %s310, %s312
      %p319 = scmp.eq.s32.totalorder %s45, 1
      %p320 = por %p318, %p319
      %p321 = scmp.ne.s32.totalorder %s312, %s313
      %p322 = scmp.eq.s32.totalorder %s45, 0
      %p323 = por %p321, %p322
      %p324 = scmp.ne.s32.totalorder %s312, %s313
      %p325 = scmp.eq.s32.totalorder %s46, 1
      %p326 = por %p324, %p325
      %p328 = scmp.ne.s32.totalorder %s313, %s327
      %p329 = scmp.eq.s32.totalorder %s46, 0
      %p330 = por %p328, %p329
      %s332 = sadd.s32 %s331, 1
      %p335 = scmp.eq.s32.totalorder %s40, 1
      %p336 = scmp.ne.s32.totalorder %s331, %s333
      %p337 = scmp.eq.s32.totalorder %s40, 0
      %p338 = por %p336, %p337
      %p339 = scmp.ne.s32.totalorder %s331, %s333
      %p340 = scmp.eq.s32.totalorder %s45, 1
      %p341 = por %p339, %p340
      %p342 = scmp.ne.s32.totalorder %s333, %s334
      %p343 = scmp.eq.s32.totalorder %s45, 0
      %p344 = por %p342, %p343
      %p345 = scmp.ne.s32.totalorder %s333, %s334
      %p346 = scmp.eq.s32.totalorder %s46, 1
      %p347 = por %p345, %p346
      %p349 = scmp.ne.s32.totalorder %s334, %s348
      %p350 = scmp.eq.s32.totalorder %s46, 0
      %p351 = por %p349, %p350
      %s353 = sadd.s32 %s352, 1
      %p356 = scmp.eq.s32.totalorder %s40, 1
      %p357 = scmp.ne.s32.totalorder %s352, %s354
      %p358 = scmp.eq.s32.totalorder %s40, 0
      %p359 = por %p357, %p358
      %p360 = scmp.ne.s32.totalorder %s352, %s354
      %p361 = scmp.eq.s32.totalorder %s45, 1
      %p362 = por %p360, %p361
      %p363 = scmp.ne.s32.totalorder %s354, %s355
      %p364 = scmp.eq.s32.totalorder %s45, 0
      %p365 = por %p363, %p364
      %p366 = scmp.ne.s32.totalorder %s354, %s355
      %p367 = scmp.eq.s32.totalorder %s46, 1
      %p368 = por %p366, %p367
      %p370 = scmp.ne.s32.totalorder %s355, %s369
      %p371 = scmp.eq.s32.totalorder %s46, 0
      %p372 = por %p370, %p371
      %s374 = sadd.s32 %s373, 1
      %p377 = scmp.eq.s32.totalorder %s40, 1
      %p378 = scmp.ne.s32.totalorder %s373, %s375
      %p379 = scmp.eq.s32.totalorder %s40, 0
      %p380 = por %p378, %p379
      %p381 = scmp.ne.s32.totalorder %s373, %s375
      %p382 = scmp.eq.s32.totalorder %s45, 1
      %p383 = por %p381, %p382
      %p384 = scmp.ne.s32.totalorder %s375, %s376
      %p385 = scmp.eq.s32.totalorder %s45, 0
      %p386 = por %p384, %p385
      %p387 = scmp.ne.s32.totalorder %s375, %s376
      %p388 = scmp.eq.s32.totalorder %s46, 1
      %p389 = por %p387, %p388
      %p391 = scmp.ne.s32.totalorder %s376, %s390
      %p392 = scmp.eq.s32.totalorder %s46, 0
      %p393 = por %p391, %p392
      %s395 = sadd.s32 %s394, 1
      %p398 = scmp.eq.s32.totalorder %s40, 1
      %p399 = scmp.ne.s32.totalorder %s394, %s396
      %p400 = scmp.eq.s32.totalorder %s40, 0
      %p401 = por %p399, %p400
      %p402 = scmp.ne.s32.totalorder %s394, %s396
      %p403 = scmp.eq.s32.totalorder %s45, 1
      %p404 = por %p402, %p403
      %p405 = scmp.ne.s32.totalorder %s396, %s397
      %p406 = scmp.eq.s32.totalorder %s45, 0
      %p407 = por %p405, %p406
      %p408 = scmp.ne.s32.totalorder %s396, %s397
      %p409 = scmp.eq.s32.totalorder %s46, 1
      %p410 = por %p408, %p409
      %p412 = scmp.ne.s32.totalorder %s397, %s411
      %p413 = scmp.eq.s32.totalorder %s46, 0
      %p414 = por %p412, %p413
      %s416 = sadd.s32 %s415, 1
      %p419 = scmp.eq.s32.totalorder %s40, 1
      %p420 = scmp.ne.s32.totalorder %s415, %s417
      %p421 = scmp.eq.s32.totalorder %s40, 0
      %p422 = por %p420, %p421
      %p423 = scmp.ne.s32.totalorder %s415, %s417
      %p424 = scmp.eq.s32.totalorder %s45, 1
      %p425 = por %p423, %p424
      %p426 = scmp.ne.s32.totalorder %s417, %s418
      %p427 = scmp.eq.s32.totalorder %s45, 0
      %p428 = por %p426, %p427
      %p429 = scmp.ne.s32.totalorder %s417, %s418
      %p430 = scmp.eq.s32.totalorder %s46, 1
      %p431 = por %p429, %p430
      %p433 = scmp.ne.s32.totalorder %s418, %s432
      %p434 = scmp.eq.s32.totalorder %s46, 0
      %p435 = por %p433, %p434
      %s437 = sadd.s32 %s436, 1
      %p440 = scmp.eq.s32.totalorder %s40, 1
      %p441 = scmp.ne.s32.totalorder %s436, %s438
      %p442 = scmp.eq.s32.totalorder %s40, 0
      %p443 = por %p441, %p442
      %p444 = scmp.ne.s32.totalorder %s436, %s438
      %p445 = scmp.eq.s32.totalorder %s45, 1
      %p446 = por %p444, %p445
      %p447 = scmp.ne.s32.totalorder %s438, %s439
      %p448 = scmp.eq.s32.totalorder %s45, 0
      %p449 = por %p447, %p448
      %p450 = scmp.ne.s32.totalorder %s438, %s439
      %p451 = scmp.eq.s32.totalorder %s46, 1
      %p452 = por %p450, %p451
      %p454 = scmp.ne.s32.totalorder %s439, %s453
      %p455 = scmp.eq.s32.totalorder %s46, 0
      %p456 = por %p454, %p455
      %s458 = sadd.s32 %s457, 1
      %p461 = scmp.eq.s32.totalorder %s40, 1
      %p462 = scmp.ne.s32.totalorder %s457, %s459
      %p463 = scmp.eq.s32.totalorder %s40, 0
      %p464 = por %p462, %p463
      %p465 = scmp.ne.s32.totalorder %s457, %s459
      %p466 = scmp.eq.s32.totalorder %s45, 1
      %p467 = por %p465, %p466
      %p468 = scmp.ne.s32.totalorder %s459, %s460
      %p469 = scmp.eq.s32.totalorder %s45, 0
      %p470 = por %p468, %p469
      %p471 = scmp.ne.s32.totalorder %s459, %s460
      %p472 = scmp.eq.s32.totalorder %s46, 1
      %p473 = por %p471, %p472
      %p475 = scmp.ne.s32.totalorder %s460, %s474
      %p476 = scmp.eq.s32.totalorder %s46, 0
      %p477 = por %p475, %p476
      %s479 = sadd.s32 %s478, 1
      %p482 = scmp.eq.s32.totalorder %s40, 1
      %p483 = scmp.ne.s32.totalorder %s478, %s480
      %p484 = scmp.eq.s32.totalorder %s40, 0
      %p485 = por %p483, %p484
      %p486 = scmp.ne.s32.totalorder %s478, %s480
      %p487 = scmp.eq.s32.totalorder %s45, 1
      %p488 = por %p486, %p487
      %p489 = scmp.ne.s32.totalorder %s480, %s481
      %p490 = scmp.eq.s32.totalorder %s45, 0
      %p491 = por %p489, %p490
      %p492 = scmp.ne.s32.totalorder %s480, %s481
      %p493 = scmp.eq.s32.totalorder %s46, 1
      %p494 = por %p492, %p493
      %p496 = scmp.ne.s32.totalorder %s481, %s495
      %p497 = scmp.eq.s32.totalorder %s46, 0
      %p498 = por %p496, %p497
      %s500 = sadd.s32 %s499, 1
      %p503 = scmp.eq.s32.totalorder %s40, 1
      %p504 = scmp.ne.s32.totalorder %s499, %s501
      %p505 = scmp.eq.s32.totalorder %s40, 0
      %p506 = por %p504, %p505
      %p507 = scmp.ne.s32.totalorder %s499, %s501
      %p508 = scmp.eq.s32.totalorder %s45, 1
      %p509 = por %p507, %p508
      %p510 = scmp.ne.s32.totalorder %s501, %s502
      %p511 = scmp.eq.s32.totalorder %s45, 0
      %p512 = por %p510, %p511
      %p513 = scmp.ne.s32.totalorder %s501, %s502
      %p514 = scmp.eq.s32.totalorder %s46, 1
      %p515 = por %p513, %p514
      %p517 = scmp.ne.s32.totalorder %s502, %s516
      %p518 = scmp.eq.s32.totalorder %s46, 0
      %p519 = por %p517, %p518
      %s521 = sadd.s32 %s520, 1
      %p524 = scmp.eq.s32.totalorder %s40, 1
      %p525 = scmp.ne.s32.totalorder %s520, %s522
      %p526 = scmp.eq.s32.totalorder %s40, 0
      %p527 = por %p525, %p526
      %p528 = scmp.ne.s32.totalorder %s520, %s522
      %p529 = scmp.eq.s32.totalorder %s45, 1
      %p530 = por %p528, %p529
      %p531 = scmp.ne.s32.totalorder %s522, %s523
      %p532 = scmp.eq.s32.totalorder %s45, 0
      %p533 = por %p531, %p532
      %p534 = scmp.ne.s32.totalorder %s522, %s523
      %p535 = scmp.eq.s32.totalorder %s46, 1
      %p536 = por %p534, %p535
      %p538 = scmp.ne.s32.totalorder %s523, %s537
      %p539 = scmp.eq.s32.totalorder %s46, 0
      %p540 = por %p538, %p539
      %s541 = ssub.s32 %s40, %s47
      %p542 = scmp.eq.s32.totalorder %s541, 0
      %s544 = sadd.s32 %s543, 1
      %s545 = scalar_select %p542, %s543, %s544
      %p548 = pneg %p542
      %p549 = scmp.eq.s32.totalorder %s40, 1
      %p550 = por %p548, %p549
      %p551 = scmp.ne.s32.totalorder %s543, %s546
      %p552 = scmp.eq.s32.totalorder %s40, 0
      %p553 = por %p551, %p552
      %p554 = scmp.ne.s32.totalorder %s543, %s546
      %p555 = scmp.eq.s32.totalorder %s45, 1
      %p556 = por %p554, %p555
      %p557 = scmp.ne.s32.totalorder %s546, %s547
      %p558 = scmp.eq.s32.totalorder %s45, 0
      %p559 = por %p557, %p558
      %p560 = scmp.ne.s32.totalorder %s546, %s547
      %p561 = scmp.eq.s32.totalorder %s46, 1
      %p562 = por %p560, %p561
      %p564 = scmp.ne.s32.totalorder %s547, %s563
      %p565 = scmp.eq.s32.totalorder %s46, 0
      %p566 = por %p564, %p565
      %s567 = ssub.s32 %s40, %s47
      %p568 = scmp.eq.s32.totalorder %s567, 0
      %s570 = sadd.s32 %s569, 1
      %s571 = scalar_select %p568, %s569, %s570
      %p574 = pneg %p568
      %p575 = scmp.eq.s32.totalorder %s40, 1
      %p576 = por %p574, %p575
      %p577 = scmp.ne.s32.totalorder %s569, %s572
      %p578 = scmp.eq.s32.totalorder %s40, 0
      %p579 = por %p577, %p578
      %p580 = scmp.ne.s32.totalorder %s569, %s572
      %p581 = scmp.eq.s32.totalorder %s45, 1
      %p582 = por %p580, %p581
      %p583 = scmp.ne.s32.totalorder %s572, %s573
      %p584 = scmp.eq.s32.totalorder %s45, 0
      %p585 = por %p583, %p584
      %p586 = scmp.ne.s32.totalorder %s572, %s573
      %p587 = scmp.eq.s32.totalorder %s46, 1
      %p588 = por %p586, %p587
      %p590 = scmp.ne.s32.totalorder %s573, %s589
      %p591 = scmp.eq.s32.totalorder %s46, 0
      %p592 = por %p590, %p591
      %s593 = ssub.s32 %s40, %s47
      %p594 = scmp.eq.s32.totalorder %s593, 0
      %s596 = sadd.s32 %s595, 1
      %s597 = scalar_select %p594, %s595, %s596
      %p600 = pneg %p594
      %p601 = scmp.eq.s32.totalorder %s40, 1
      %p602 = por %p600, %p601
      %p603 = scmp.ne.s32.totalorder %s595, %s598
      %p604 = scmp.eq.s32.totalorder %s40, 0
      %p605 = por %p603, %p604
      %p606 = scmp.ne.s32.totalorder %s595, %s598
      %p607 = scmp.eq.s32.totalorder %s45, 1
      %p608 = por %p606, %p607
      %p609 = scmp.ne.s32.totalorder %s598, %s599
      %p610 = scmp.eq.s32.totalorder %s45, 0
      %p611 = por %p609, %p610
      %p612 = scmp.ne.s32.totalorder %s598, %s599
      %p613 = scmp.eq.s32.totalorder %s46, 1
      %p614 = por %p612, %p613
      %p616 = scmp.ne.s32.totalorder %s599, %s615
      %p617 = scmp.eq.s32.totalorder %s46, 0
      %p618 = por %p616, %p617
      %s619 = ssub.s32 %s40, %s47
      %p620 = scmp.eq.s32.totalorder %s619, 0
      %s622 = sadd.s32 %s621, 1
      %s623 = scalar_select %p620, %s621, %s622
      %p626 = pneg %p620
      %p627 = scmp.eq.s32.totalorder %s40, 1
      %p628 = por %p626, %p627
      %p629 = scmp.ne.s32.totalorder %s621, %s624
      %p630 = scmp.eq.s32.totalorder %s40, 0
      %p631 = por %p629, %p630
      %p632 = scmp.ne.s32.totalorder %s621, %s624
      %p633 = scmp.eq.s32.totalorder %s45, 1
      %p634 = por %p632, %p633
      %p635 = scmp.ne.s32.totalorder %s624, %s625
      %p636 = scmp.eq.s32.totalorder %s45, 0
      %p637 = por %p635, %p636
      %p638 = scmp.ne.s32.totalorder %s624, %s625
      %p639 = scmp.eq.s32.totalorder %s46, 1
      %p640 = por %p638, %p639
      %p642 = scmp.ne.s32.totalorder %s625, %s641
      %p643 = scmp.eq.s32.totalorder %s46, 0
      %p644 = por %p642, %p643
      %s645 = ssub.s32 %s40, %s47
      %p646 = scmp.eq.s32.totalorder %s645, 0
      %s648 = sadd.s32 %s647, 1
      %s649 = scalar_select %p646, %s647, %s648
      %p652 = pneg %p646
      %p653 = scmp.eq.s32.totalorder %s40, 1
      %p654 = por %p652, %p653
      %p655 = scmp.ne.s32.totalorder %s647, %s650
      %p656 = scmp.eq.s32.totalorder %s40, 0
      %p657 = por %p655, %p656
      %p658 = scmp.ne.s32.totalorder %s647, %s650
      %p659 = scmp.eq.s32.totalorder %s45, 1
      %p660 = por %p658, %p659
      %p661 = scmp.ne.s32.totalorder %s650, %s651
      %p662 = scmp.eq.s32.totalorder %s45, 0
      %p663 = por %p661, %p662
      %p664 = scmp.ne.s32.totalorder %s650, %s651
      %p665 = scmp.eq.s32.totalorder %s46, 1
      %p666 = por %p664, %p665
      %p668 = scmp.ne.s32.totalorder %s651, %s667
      %p669 = scmp.eq.s32.totalorder %s46, 0
      %p670 = por %p668, %p669
      %p671 = scmp.le.s32.totalorder 1, %s40
      %p672 = scmp.lt.s32.totalorder %s40, 3
      %p673 = pnand %p671, %p672
      %p674 = pneg %p673
      // Predicated region
      $region9: #{segment_encoder_forward.3} parent=5 // pred_check
        _
      $region10: #{segment_encoder_forward.3} parent=5 // pred_check_branch
        %676 = sbr.rel (%p673) target = $region12
      $region11: #{segment_encoder_forward.3} parent=5 // pred_region
        %s677 = ssub.s32 %s40, 1
        // Predicated region
        $region13: #{segment_encoder_forward.3} parent=11 // pred_check
          %p678 = pneg %p113
        $region14: #{segment_encoder_forward.3} parent=11 // pred_check_branch
          %680 = sbr.rel (%p678) target = $region16
        $region15: #{segment_encoder_forward.3} parent=11 // pred_region
          _
        $region16: #{segment_encoder_forward.3} parent=11 // pred_fallthru
          _
        // Predicated region
        $region17: #{segment_encoder_forward.3} parent=11 // pred_check
          %p681 = pneg %p134
        $region18: #{segment_encoder_forward.3} parent=11 // pred_check_branch
          %683 = sbr.rel (%p681) target = $region20
        $region19: #{segment_encoder_forward.3} parent=11 // pred_region
          _
        $region20: #{segment_encoder_forward.3} parent=11 // pred_fallthru
          _
        // Predicated region
        $region21: #{segment_encoder_forward.3} parent=11 // pred_check
          %p684 = pneg %p155
        $region22: #{segment_encoder_forward.3} parent=11 // pred_check_branch
          %686 = sbr.rel (%p684) target = $region24
        $region23: #{segment_encoder_forward.3} parent=11 // pred_region
          _
        $region24: #{segment_encoder_forward.3} parent=11 // pred_fallthru
          _
        // Predicated region
        $region25: #{segment_encoder_forward.3} parent=11 // pred_check
          %p687 = pneg %p176
        $region26: #{segment_encoder_forward.3} parent=11 // pred_check_branch
          %689 = sbr.rel (%p687) target = $region28
        $region27: #{segment_encoder_forward.3} parent=11 // pred_region
          _
        $region28: #{segment_encoder_forward.3} parent=11 // pred_fallthru
          _
        // Predicated region
        $region29: #{segment_encoder_forward.3} parent=11 // pred_check
          %p690 = pneg %p197
        $region30: #{segment_encoder_forward.3} parent=11 // pred_check_branch
          %692 = sbr.rel (%p690) target = $region32
        $region31: #{segment_encoder_forward.3} parent=11 // pred_region
          _
        $region32: #{segment_encoder_forward.3} parent=11 // pred_fallthru
          _
        // Predicated region
        $region33: #{segment_encoder_forward.3} parent=11 // pred_check
          %p693 = pneg %p218
        $region34: #{segment_encoder_forward.3} parent=11 // pred_check_branch
          %695 = sbr.rel (%p693) target = $region36
        $region35: #{segment_encoder_forward.3} parent=11 // pred_region
          _
        $region36: #{segment_encoder_forward.3} parent=11 // pred_fallthru
          _
        // Predicated region
        $region37: #{segment_encoder_forward.3} parent=11 // pred_check
          %p696 = pneg %p239
        $region38: #{segment_encoder_forward.3} parent=11 // pred_check_branch
          %698 = sbr.rel (%p696) target = $region40
        $region39: #{segment_encoder_forward.3} parent=11 // pred_region
          _
        $region40: #{segment_encoder_forward.3} parent=11 // pred_fallthru
          _
        // Predicated region
        $region41: #{segment_encoder_forward.3} parent=11 // pred_check
          %p699 = pneg %p260
        $region42: #{segment_encoder_forward.3} parent=11 // pred_check_branch
          %701 = sbr.rel (%p699) target = $region44
        $region43: #{segment_encoder_forward.3} parent=11 // pred_region
          _
        $region44: #{segment_encoder_forward.3} parent=11 // pred_fallthru
          _
        // Predicated region
        $region45: #{segment_encoder_forward.3} parent=11 // pred_check
          %p702 = pneg %p281
        $region46: #{segment_encoder_forward.3} parent=11 // pred_check_branch
          %704 = sbr.rel (%p702) target = $region48
        $region47: #{segment_encoder_forward.3} parent=11 // pred_region
          _
        $region48: #{segment_encoder_forward.3} parent=11 // pred_fallthru
          _
        // Predicated region
        $region49: #{segment_encoder_forward.3} parent=11 // pred_check
          %p705 = pneg %p302
        $region50: #{segment_encoder_forward.3} parent=11 // pred_check_branch
          %707 = sbr.rel (%p705) target = $region52
        $region51: #{segment_encoder_forward.3} parent=11 // pred_region
          _
        $region52: #{segment_encoder_forward.3} parent=11 // pred_fallthru
          _
        // Predicated region
        $region53: #{segment_encoder_forward.3} parent=11 // pred_check
          %p708 = pneg %p323
        $region54: #{segment_encoder_forward.3} parent=11 // pred_check_branch
          %710 = sbr.rel (%p708) target = $region56
        $region55: #{segment_encoder_forward.3} parent=11 // pred_region
          _
        $region56: #{segment_encoder_forward.3} parent=11 // pred_fallthru
          _
        // Predicated region
        $region57: #{segment_encoder_forward.3} parent=11 // pred_check
          %p711 = pneg %p344
        $region58: #{segment_encoder_forward.3} parent=11 // pred_check_branch
          %713 = sbr.rel (%p711) target = $region60
        $region59: #{segment_encoder_forward.3} parent=11 // pred_region
          _
        $region60: #{segment_encoder_forward.3} parent=11 // pred_fallthru
          _
        // Predicated region
        $region61: #{segment_encoder_forward.3} parent=11 // pred_check
          %p714 = pneg %p365
        $region62: #{segment_encoder_forward.3} parent=11 // pred_check_branch
          %716 = sbr.rel (%p714) target = $region64
        $region63: #{segment_encoder_forward.3} parent=11 // pred_region
          _
        $region64: #{segment_encoder_forward.3} parent=11 // pred_fallthru
          _
        // Predicated region
        $region65: #{segment_encoder_forward.3} parent=11 // pred_check
          %p717 = pneg %p386
        $region66: #{segment_encoder_forward.3} parent=11 // pred_check_branch
          %719 = sbr.rel (%p717) target = $region68
        $region67: #{segment_encoder_forward.3} parent=11 // pred_region
          _
        $region68: #{segment_encoder_forward.3} parent=11 // pred_fallthru
          _
        // Predicated region
        $region69: #{segment_encoder_forward.3} parent=11 // pred_check
          %p720 = pneg %p407
        $region70: #{segment_encoder_forward.3} parent=11 // pred_check_branch
          %722 = sbr.rel (%p720) target = $region72
        $region71: #{segment_encoder_forward.3} parent=11 // pred_region
          _
        $region72: #{segment_encoder_forward.3} parent=11 // pred_fallthru
          _
        // Predicated region
        $region73: #{segment_encoder_forward.3} parent=11 // pred_check
          %p723 = pneg %p428
        $region74: #{segment_encoder_forward.3} parent=11 // pred_check_branch
          %725 = sbr.rel (%p723) target = $region76
        $region75: #{segment_encoder_forward.3} parent=11 // pred_region
          _
        $region76: #{segment_encoder_forward.3} parent=11 // pred_fallthru
          _
        // Predicated region
        $region77: #{segment_encoder_forward.3} parent=11 // pred_check
          %p726 = pneg %p449
        $region78: #{segment_encoder_forward.3} parent=11 // pred_check_branch
          %728 = sbr.rel (%p726) target = $region80
        $region79: #{segment_encoder_forward.3} parent=11 // pred_region
          _
        $region80: #{segment_encoder_forward.3} parent=11 // pred_fallthru
          _
        // Predicated region
        $region81: #{segment_encoder_forward.3} parent=11 // pred_check
          %p729 = pneg %p470
        $region82: #{segment_encoder_forward.3} parent=11 // pred_check_branch
          %731 = sbr.rel (%p729) target = $region84
        $region83: #{segment_encoder_forward.3} parent=11 // pred_region
          _
        $region84: #{segment_encoder_forward.3} parent=11 // pred_fallthru
          _
        // Predicated region
        $region85: #{segment_encoder_forward.3} parent=11 // pred_check
          %p732 = pneg %p491
        $region86: #{segment_encoder_forward.3} parent=11 // pred_check_branch
          %734 = sbr.rel (%p732) target = $region88
        $region87: #{segment_encoder_forward.3} parent=11 // pred_region
          _
        $region88: #{segment_encoder_forward.3} parent=11 // pred_fallthru
          _
        // Predicated region
        $region89: #{segment_encoder_forward.3} parent=11 // pred_check
          %p735 = pneg %p512
        $region90: #{segment_encoder_forward.3} parent=11 // pred_check_branch
          %737 = sbr.rel (%p735) target = $region92
        $region91: #{segment_encoder_forward.3} parent=11 // pred_region
          _
        $region92: #{segment_encoder_forward.3} parent=11 // pred_fallthru
          _
        // Predicated region
        $region93: #{segment_encoder_forward.3} parent=11 // pred_check
          %p738 = pneg %p533
        $region94: #{segment_encoder_forward.3} parent=11 // pred_check_branch
          %740 = sbr.rel (%p738) target = $region96
        $region95: #{segment_encoder_forward.3} parent=11 // pred_region
          _
        $region96: #{segment_encoder_forward.3} parent=11 // pred_fallthru
          _
      $region12: #{segment_encoder_forward.3} parent=5 // pred_fallthru
        _
      %p741 = scmp.lt.s32.totalorder %s40, 2
      // Predicated region
      $region97: #{segment_encoder_forward.3} parent=5 // pred_check
        %p742 = pneg %p741
      $region98: #{segment_encoder_forward.3} parent=5 // pred_check_branch
        %744 = sbr.rel (%p742) target = $region100
      $region99: #{segment_encoder_forward.3} parent=5 // pred_region
        // Predicated region
        $region101: #{segment_encoder_forward.3} parent=99 // pred_check
          %p745 = pneg %p60
        $region102: #{segment_encoder_forward.3} parent=99 // pred_check_branch
          %747 = sbr.rel (%p745) target = $region104
        $region103: #{segment_encoder_forward.3} parent=99 // pred_region
          %p748 = scmp.lt.s32.totalorder %s40, 1
          %s749 = scalar_select %p748, %s40, 1
          %s750 = smul.addr %s749, 6
          %s751 = smul.addr %s750, 8
          %s752 = scalar_lea.vmem %s0, %s751
        $region104: #{segment_encoder_forward.3} parent=99 // pred_fallthru
          _
        // Predicated region
        $region105: #{segment_encoder_forward.3} parent=99 // pred_check
          %p753 = pneg %p86
        $region106: #{segment_encoder_forward.3} parent=99 // pred_check_branch
          %755 = sbr.rel (%p753) target = $region108
        $region107: #{segment_encoder_forward.3} parent=99 // pred_region
          %p756 = scmp.lt.s32.totalorder %s40, 1
          %s757 = scalar_select %p756, %s40, 1
          %s758 = smul.addr %s757, 3
          %s759 = smul.addr %s758, 8
          %s760 = scalar_lea.vmem %s1, %s759
        $region108: #{segment_encoder_forward.3} parent=99 // pred_fallthru
          _
      $region100: #{segment_encoder_forward.3} parent=5 // pred_fallthru
        _
      %p761 = scmp.le.s32.totalorder 1, %s40
      %p762 = scmp.lt.s32.totalorder %s40, 3
      %p763 = pnand %p761, %p762
      %p764 = pneg %p763
      // Predicated region
      $region109: #{segment_encoder_forward.3} parent=5 // pred_check
        _
      $region110: #{segment_encoder_forward.3} parent=5 // pred_check_branch
        %766 = sbr.rel (%p763) target = $region112
      $region111: #{segment_encoder_forward.3} parent=5 // pred_region
        %s767 = ssub.s32 %s40, 1
        %p768 = scmp.lt.s32.totalorder %s45, 1
        %s769 = scalar_select %p768, %s45, 1
        %s770 = smul.addr %s769, 6
        %s771 = smul.addr %s770, 8
        %s772 = scalar_lea.vmem %s0, %s771
        %p773 = pneg %p66
        %p774 = pneg %p63
        %p775 = scmp.lt.s32.totalorder %s45, 1
        %s776 = scalar_select %p775, %s45, 1
        %s777 = smul.addr %s776, 3
        %s778 = smul.addr %s777, 8
        %s779 = scalar_lea.vmem %s1, %s778
        %p780 = pneg %p92
        %p781 = pneg %p89
        %p782 = pneg %p113
        %p783 = pneg %p110
        %p784 = pneg %p134
        %p785 = pneg %p131
        %p786 = pneg %p155
        %p787 = pneg %p152
        %p788 = pneg %p176
        %p789 = pneg %p173
        %p790 = pneg %p197
        %p791 = pneg %p194
        %p792 = pneg %p218
        %p793 = pneg %p215
        %p794 = pneg %p239
        %p795 = pneg %p236
        %p796 = pneg %p260
        %p797 = pneg %p257
        %p798 = pneg %p281
        %p799 = pneg %p278
        %p800 = pneg %p302
        %p801 = pneg %p299
        %p802 = pneg %p323
        %p803 = pneg %p320
        %p804 = pneg %p344
        %p805 = pneg %p341
        %p806 = pneg %p365
        %p807 = pneg %p362
        %p808 = pneg %p386
        %p809 = pneg %p383
        %p810 = pneg %p407
        %p811 = pneg %p404
        %p812 = pneg %p428
        %p813 = pneg %p425
        %p814 = pneg %p449
        %p815 = pneg %p446
        %p816 = pneg %p470
        %p817 = pneg %p467
        %p818 = pneg %p491
        %p819 = pneg %p488
        %p820 = pneg %p512
        %p821 = pneg %p509
        %p822 = pneg %p533
        %p823 = pneg %p530
        %p824 = pneg %p559
        %p825 = pneg %p556
        %p826 = scmp.lt.s32.totalorder %s45, 1
        %s827 = scalar_select %p826, %s45, 1
        %s828 = smul.addr %s827, 8
        %s829 = smul.addr %s828, 8
        %s830 = scalar_lea.vmem %s23, %s829
        %p831 = pneg %p585
        %p832 = pneg %p582
        %p833 = scmp.lt.s32.totalorder %s45, 1
        %s834 = scalar_select %p833, %s45, 1
        %s835 = smul.addr %s834, 2
        %s836 = smul.addr %s835, 8
        %s837 = scalar_lea.vmem %s24, %s836
        %p838 = pneg %p611
        %p839 = pneg %p608
        %s840 = sand.u32 %s598, 1
        %s841 = scalar_lea.sflag [#allocation3], %s840
        %s842 = sand.u32 %s598, 1
        %s843 = smul.addr %s842, 16
        %s844 = scalar_lea.vmem [#allocation2], %s843
        %p845 = pneg %p637
        %p846 = pneg %p634
        %s847 = sand.u32 %s45, 1
        %s848 = scalar_lea.sflag [#allocation5], %s847
        %s849 = sand.u32 %s624, 1
        %s850 = smul.addr %s849, 4
        %s851 = scalar_lea.vmem [#allocation4], %s850
        %p852 = pneg %p663
        %p853 = pneg %p660
        %s854 = sand.u32 %s45, 1
        %s855 = scalar_lea.sflag [#allocation5], %s854
        %s856 = sand.u32 %s650, 1
        %s857 = smul.addr %s856, 16
        %s858 = scalar_lea.vmem [#allocation6], %s857
        %p859 = scmp.lt.s32.totalorder %s45, 1
        %s860 = scalar_select %p859, %s45, 1
        %s861 = smul.addr %s860, 6
        %s862 = smul.addr %s861, 8
        %s863 = scalar_lea.vmem %s0, %s862
        %p864 = scmp.lt.s32.totalorder %s45, 1
        %s865 = scalar_select %p864, %s45, 1
        %s866 = smul.addr %s865, 3
        %s867 = smul.addr %s866, 8
        %s868 = scalar_lea.vmem %s1, %s867
        %p869 = scmp.lt.s32.totalorder %s45, 1
        %s870 = scalar_select %p869, %s45, 1
        %s871 = smul.addr %s870, 8
        %s872 = smul.addr %s871, 8
        %s873 = scalar_lea.vmem %s23, %s872
        %p874 = scmp.lt.s32.totalorder %s45, 1
        %s875 = scalar_select %p874, %s45, 1
        %s876 = smul.addr %s875, 2
        %s877 = smul.addr %s876, 8
        %s878 = scalar_lea.vmem %s24, %s877
        %v880 = vld [vmem:[%s863] sm:$0xff]
        %v881 = vld [vmem:[%s863 + $0x8] sm:$0xff]
        %v882 = vld [vmem:[%s863 + $0x10] sm:$0xff]
        %v883 = vld [vmem:[%s863 + $0x18] sm:$0xff]
        %v884 = vld [vmem:[%s863 + $0x20] sm:$0x1]
        %v885 = vld [vmem:[%s863 + $0x28] sm:$0x1]
        %v886 = vld [vmem:[%s2] sm:$0xf]
        %v887 = vld [vmem:[%s2 + $0x4] sm:$0xf]
        %v888 = vld [vmem:[%s2 + $0x8] sm:$0xf]
        %v889 = vld [vmem:[%s2 + $0xc] sm:$0xf]
        %v890 = vld [vmem:[%s2 + $0x10] sm:$0xf]
        %v891 = vld [vmem:[%s2 + $0x14] sm:$0xf]
        %v892 = vld [vmem:[%s2 + $0x18] sm:$0xf]
        %v893 = vld [vmem:[%s2 + $0x1c] sm:$0xf]
        %v894 = vld [vmem:[%s2 + $0x20] sm:$0xf]
        %v895 = vld [vmem:[%s2 + $0x24] sm:$0xf]
        %v896 = vld [vmem:[%s2 + $0x28] sm:$0xf]
        %v897 = vld [vmem:[%s2 + $0x2c] sm:$0xf]
        %v898 = vld [vmem:[%s2 + $0x30] sm:$0xf]
        %v899 = vld [vmem:[%s2 + $0x34] sm:$0xf]
        %v900 = vld [vmem:[%s2 + $0x38] sm:$0xf]
        %v901 = vld [vmem:[%s2 + $0x3c] sm:$0xf]
        %v902 = vld [vmem:[%s2 + $0x40] sm:$0xf]
        %v903 = vld [vmem:[%s2 + $0x44] sm:$0xf]
        %v904 = vld [vmem:[%s2 + $0x48] sm:$0xf]
        %v905 = vld [vmem:[%s2 + $0x4c] sm:$0xf]
        %v906 = vld [vmem:[%s2 + $0x50] sm:$0xf]
        %v907 = vld [vmem:[%s2 + $0x54] sm:$0xf]
        %v908 = vld [vmem:[%s2 + $0x58] sm:$0xf]
        %v909 = vld [vmem:[%s2 + $0x5c] sm:$0xf]
        %v910 = vld [vmem:[%s2 + $0x60] sm:$0xf]
        %v911 = vld [vmem:[%s2 + $0x64] sm:$0xf]
        %v912 = vld [vmem:[%s2 + $0x68] sm:$0xf]
        %v913 = vld [vmem:[%s2 + $0x6c] sm:$0xf]
        %v914 = vld [vmem:[%s2 + $0x70] sm:$0xf]
        %v915 = vld [vmem:[%s2 + $0x74] sm:$0xf]
        %v916 = vld [vmem:[%s2 + $0x78] sm:$0xf]
        %v917 = vld [vmem:[%s2 + $0x7c] sm:$0xf]
        %v918 = vpack.c.bf16 %v882, %v880
        %v919 = vpack.c.bf16 %v883, %v881
        %v920 = vpack.c.bf16 %v884, %v884
        %v921 = vpack.c.bf16 %v885, %v885
        %v922 = vld [vmem:[%s868] sm:$0xff]
        %v923 = vld [vmem:[%s868 + $0x8] sm:$0xff]
        %v924 = vld [vmem:[%s868 + $0x10] sm:$0x1]
        %v957 = vunpack.c.l.b16 %v886
        %v958 = vunpack.c.l.b16 %v887
        %v959 = vunpack.c.l.b16 %v888
        %v960 = vunpack.c.l.b16 %v889
        %v961 = vunpack.c.l.b16 %v890
        %v962 = vunpack.c.l.b16 %v891
        %v963 = vunpack.c.l.b16 %v892
        %v964 = vunpack.c.l.b16 %v893
        %v965 = vunpack.c.l.b16 %v894
        %v966 = vunpack.c.l.b16 %v895
        %v967 = vunpack.c.l.b16 %v896
        %v968 = vunpack.c.l.b16 %v897
        %v969 = vunpack.c.l.b16 %v898
        %v970 = vunpack.c.l.b16 %v899
        %v971 = vunpack.c.l.b16 %v900
        %v972 = vunpack.c.l.b16 %v901
        %v973 = vunpack.c.l.b16 %v902
        %v974 = vunpack.c.l.b16 %v903
        %v975 = vunpack.c.l.b16 %v904
        %v976 = vunpack.c.l.b16 %v905
        %v977 = vunpack.c.l.b16 %v906
        %v978 = vunpack.c.l.b16 %v907
        %v979 = vunpack.c.l.b16 %v908
        %v980 = vunpack.c.l.b16 %v909
        %v981 = vunpack.c.l.b16 %v910
        %v982 = vunpack.c.l.b16 %v911
        %v983 = vunpack.c.l.b16 %v912
        %v984 = vunpack.c.l.b16 %v913
        %v985 = vunpack.c.l.b16 %v914
        %v986 = vunpack.c.l.b16 %v915
        %v987 = vunpack.c.l.b16 %v916
        %v988 = vunpack.c.l.b16 %v917
        %v989 = vpack.c.b16 %v958, %v957
        %v990 = vpack.c.b16 %v960, %v959
        %v991 = vpack.c.b16 %v962, %v961
        %v992 = vpack.c.b16 %v964, %v963
        %v993 = vpack.c.b16 %v966, %v965
        %v994 = vpack.c.b16 %v968, %v967
        %v995 = vpack.c.b16 %v970, %v969
        %v996 = vpack.c.b16 %v972, %v971
        %v997 = vpack.c.b16 %v974, %v973
        %v998 = vpack.c.b16 %v976, %v975
        %v999 = vpack.c.b16 %v978, %v977
        %v1000 = vpack.c.b16 %v980, %v979
        %v1001 = vpack.c.b16 %v982, %v981
        %v1002 = vpack.c.b16 %v984, %v983
        %v1003 = vpack.c.b16 %v986, %v985
        %v1004 = vpack.c.b16 %v988, %v987
        %1021 = vmatprep.subr.bf16.mxu0 0
        %1022 = vmatpush1.bf16.msra.mxu0 %v996
        %1023 = vmatprep.subr.bf16.mxu0 0
        %1024 = vmatpush1.bf16.msra.mxu0 %v995
        %1025 = vmatprep.subr.bf16.mxu0 0
        %1026 = vmatpush1.bf16.msra.mxu0 %v994
        %1027 = vmatprep.subr.bf16.mxu0 0
        %1028 = vmatpush1.bf16.msra.mxu0 %v993
        %1029 = vmatprep.subr.bf16.mxu0 0
        %1030 = vmatpush1.bf16.msra.mxu0 %v992
        %1031 = vmatprep.subr.bf16.mxu0 0
        %1032 = vmatpush1.bf16.msra.mxu0 %v991
        %1033 = vmatprep.subr.bf16.mxu0 0
        %1034 = vmatpush1.bf16.msra.mxu0 %v990
        %1035 = vmatprep.subr.bf16.mxu0 0
        %1036 = vmatpush1.bf16.msra.mxu0 %v989
        %1037 = vmatprep.subr.bf16.mxu0 0
        %1038 = vmatpush2.bf16.msra.mxu0 %v1004
        %1039 = vmatprep.subr.bf16.mxu0 0
        %1040 = vmatpush2.bf16.msra.mxu0 %v1003
        %1041 = vmatprep.subr.bf16.mxu0 0
        %1042 = vmatpush2.bf16.msra.mxu0 %v1002
        %1043 = vmatprep.subr.bf16.mxu0 0
        %1044 = vmatpush2.bf16.msra.mxu0 %v1001
        %1045 = vmatprep.subr.bf16.mxu0 0
        %1046 = vmatpush2.bf16.msra.mxu0 %v1000
        %1047 = vmatprep.subr.bf16.mxu0 0
        %1048 = vmatpush2.bf16.msra.mxu0 %v999
        %1049 = vmatprep.subr.bf16.mxu0 0
        %1050 = vmatpush2.bf16.msra.mxu0 %v998
        %1051 = vmatprep.subr.bf16.mxu0 0
        %1052 = vmatpush2.bf16.msra.mxu0 %v997
        %1053 = vmatprep.mubr.bf16.mxu0 %v919
        %1054 = vmatmul.mubr.bf16.gmra.mxu0 %v918
        %v1055 = vpop.f32.mrf.mxu0
        %v1056 = vadd.f32 %v922, %v1055
        %v1057 = vpop.f32.mrf.mxu0
        %v1058 = vpop.f32.mrf.mxu0
        %v1059 = vadd.f32 %v923, %v1058
        %v1060 = vpop.f32.mrf.mxu0
        %1061 = vmatprep.mubr.bf16.mxu0 %v921
        %1062 = vmatmul.mubr.bf16.gmra.mxu0 %v920
        %v1063 = vpop.f32.mrf.mxu0
        %v1064 = vadd.f32 %v924, %v1063
        %v1065 = vpop.f32.mrf.mxu0
        %v1066 = vpop.f32.mrf.mxu0
        %v1067 = vpop.f32.mrf.mxu0
        %1068 = vdwg.mxu0
        %v1069 = vld [vmem:[%s3] sm:$0x1]
        %v1070 = vld [vmem:[%s4] sm:$0x1]
        %vm1071 = vcmask 261120
        %v1072 = vsel %vm1071, %v1056, 0.0
        %1073 = vadd.xlane.f32.xlu0 %v1072
        %v1074 = vpop.xlane.xlu0 %1073
        %v1075 = vsel %vm1071, %v1059, 0.0
        %1076 = vadd.xlane.f32.xlu0 %v1075
        %v1077 = vpop.xlane.xlu0 %1076
        %vm1078 = vcmask 253952
        %v1079 = vsel %vm1078, %v1064, 0.0
        %1080 = vadd.xlane.f32.xlu0 %v1079
        %v1081 = vpop.xlane.xlu0 %1080
        %v1082 = vrcp.pop 32.0
        %v1083 = vmul.f32 %v1074, %v1082
        %v1084 = vmul.f32 %v1077, %v1082
        %v1085 = vmul.f32 %v1081, %v1082
        %v1086 = vsub.f32 %v1056, %v1083
        %v1087 = vsub.f32 %v1059, %v1084
        %v1088 = vsub.f32 %v1064, %v1085
        %v1089 = vmul.f32 %v1086, %v1086
        %v1090 = vmul.f32 %v1087, %v1087
        %v1091 = vmul.f32 %v1088, %v1088
        %v1092 = vsel %vm1071, %v1089, 0.0
        %1093 = vadd.xlane.f32.xlu0 %v1092
        %v1094 = vpop.xlane.xlu0 %1093
        %v1095 = vsel %vm1071, %v1090, 0.0
        %1096 = vadd.xlane.f32.xlu0 %v1095
        %v1097 = vpop.xlane.xlu0 %1096
        %v1098 = vsel %vm1078, %v1091, 0.0
        %1099 = vadd.xlane.f32.xlu0 %v1098
        %v1100 = vpop.xlane.xlu0 %1099
        %v1101 = vmul.f32 %v1094, %v1082
        %v1102 = vmul.f32 %v1097, %v1082
        %v1103 = vmul.f32 %v1100, %v1082
        %v1104 = vadd.f32 %v1101, 1e-05
        %v1105 = vadd.f32 %v1102, 1e-05
        %v1106 = vadd.f32 %v1103, 1e-05
        %v1107 = vrsqrt.pop %v1104
        %v1108 = vrsqrt.pop %v1105
        %v1109 = vrsqrt.pop %v1106
        %v1110 = vmul.f32 %v1086, %v1107
        %v1111 = vmul.f32 %v1087, %v1108
        %v1112 = vmul.f32 %v1088, %v1109
        %v1114 = vlaneseq
        %v1115 = vshrl.u32 %v1114, 7
        %v1116 = vsub.s32 0, %v1115
        %v1117 = vrot.slane %v1069, %v1116
        %v1119 = vmul.f32 %v1110, %v1117
        %v1120 = vmul.f32 %v1111, %v1117
        %v1121 = vmul.f32 %v1112, %v1117
        %v1123 = vlaneseq
        %v1124 = vshrl.u32 %v1123, 7
        %v1125 = vsub.s32 0, %v1124
        %v1126 = vrot.slane %v1070, %v1125
        %v1128 = vadd.f32 %v1119, %v1126
        %v1129 = vadd.f32 %v1120, %v1126
        %v1130 = vadd.f32 %v1121, %v1126
        %v1131 = vld [vmem:[%s5] sm:$0xf]
        %v1132 = vld [vmem:[%s5 + $0x4] sm:$0xf]
        %v1133 = vld [vmem:[%s5 + $0x8] sm:$0xf]
        %v1134 = vld [vmem:[%s5 + $0xc] sm:$0xf]
        %v1135 = vpack.c.bf16 %v1129, %v1128
        %v1136 = vpack.c.bf16 %v1130, %v1130
        %v1141 = vunpack.c.l.b16 %v1131
        %v1142 = vunpack.c.l.b16 %v1132
        %v1143 = vunpack.c.l.b16 %v1133
        %v1144 = vunpack.c.l.b16 %v1134
        %v1145 = vpack.c.b16 %v1142, %v1141
        %v1146 = vpack.c.b16 %v1144, %v1143
        %v1150 = vsel %vm1071, %v1135, 0
        %v1153 = vsel %vm1071, %v1136, 0
        %1155 = vmatprep.subr.bf16.mxu0 0
        %1156 = vmatpush1.bf16.msra.mxu0 0
        %1157 = vmatprep.subr.bf16.mxu0 0
        %1158 = vmatpush1.bf16.msra.mxu0 0
        %1159 = vmatprep.subr.bf16.mxu0 0
        %1160 = vmatpush1.bf16.msra.mxu0 0
        %1161 = vmatprep.subr.bf16.mxu0 0
        %1162 = vmatpush1.bf16.msra.mxu0 0
        %1163 = vmatprep.subr.bf16.mxu0 0
        %1164 = vmatpush1.bf16.msra.mxu0 0
        %1165 = vmatprep.subr.bf16.mxu0 0
        %1166 = vmatpush1.bf16.msra.mxu0 0
        %1167 = vmatprep.subr.bf16.mxu0 0
        %1168 = vmatpush1.bf16.msra.mxu0 %v1146
        %1169 = vmatprep.subr.bf16.mxu0 0
        %1170 = vmatpush1.bf16.msra.mxu0 %v1145
        %1171 = vmatprep.subr.bf16.mxu0 0
        %1172 = vmatpush2.bf16.msra.mxu0 0
        %1173 = vmatprep.subr.bf16.mxu0 0
        %1174 = vmatpush2.bf16.msra.mxu0 0
        %1175 = vmatprep.subr.bf16.mxu0 0
        %1176 = vmatpush2.bf16.msra.mxu0 0
        %1177 = vmatprep.subr.bf16.mxu0 0
        %1178 = vmatpush2.bf16.msra.mxu0 0
        %1179 = vmatprep.subr.bf16.mxu0 0
        %1180 = vmatpush2.bf16.msra.mxu0 0
        %1181 = vmatprep.subr.bf16.mxu0 0
        %1182 = vmatpush2.bf16.msra.mxu0 0
        %1183 = vmatprep.subr.bf16.mxu0 0
        %1184 = vmatpush2.bf16.msra.mxu0 0
        %1185 = vmatprep.subr.bf16.mxu0 0
        %1186 = vmatpush2.bf16.msra.mxu0 0
        %1187 = vmatprep.mubr.bf16.mxu0 0
        %1188 = vmatmul.mubr.bf16.gmra.mxu0 %v1150
        %v1189 = vpop.f32.mrf.mxu0
        %v1190 = vadd.f32 0.0, %v1189
        %v1191 = vpop.f32.mrf.mxu0
        %v1192 = vpop.f32.mrf.mxu0
        %v1193 = vadd.f32 0.0, %v1192
        %v1194 = vpop.f32.mrf.mxu0
        %1195 = vmatprep.mubr.bf16.mxu0 0
        %1196 = vmatmul.mubr.bf16.gmra.mxu0 %v1153
        %v1197 = vpop.f32.mrf.mxu0
        %v1198 = vadd.f32 0.0, %v1197
        %v1199 = vpop.f32.mrf.mxu0
        %v1200 = vpop.f32.mrf.mxu0
        %v1201 = vpop.f32.mrf.mxu0
        %1202 = vdwg.mxu0
        %v1203 = vpack.c.bf16 %v1193, %v1190
        %v1204 = vpack.c.bf16 %v1198, %v1198
        %1207 = vrot.lane.b32.xlu0 %v1203, 96
        %v1208 = vpop.permute.xlu0 %1207
        %1209 = vrot.lane.b32.xlu0 %v1204, 96
        %v1210 = vpop.permute.xlu0 %1209
        %vm1211 = vcmask 130048
        %v1213 = vsel %vm1211, %v1203, 0
        %v1216 = vsel %vm1211, %v1204, 0
        %v1219 = vsel %vm1211, %v1208, 0
        %v1222 = vsel %vm1211, %v1210, 0
        %1224 = vmatprep.subr.bf16.mxu0 0
        %1225 = vmatpush1.bf16.xpose.msra.mxu0 0
        %1226 = vmatprep.subr.bf16.mxu0 0
        %1227 = vmatpush1.bf16.xpose.msra.mxu0 0
        %1228 = vmatprep.subr.bf16.mxu0 0
        %1229 = vmatpush1.bf16.xpose.msra.mxu0 0
        %1230 = vmatprep.subr.bf16.mxu0 0
        %1231 = vmatpush1.bf16.xpose.msra.mxu0 0
        %1232 = vmatprep.subr.bf16.mxu0 0
        %1233 = vmatpush1.bf16.xpose.msra.mxu0 0
        %1234 = vmatprep.subr.bf16.mxu0 0
        %1235 = vmatpush1.bf16.xpose.msra.mxu0 0
        %1236 = vmatprep.subr.bf16.mxu0 0
        %1237 = vmatpush1.bf16.xpose.msra.mxu0 %v1222
        %1238 = vmatprep.subr.bf16.mxu0 0
        %1239 = vmatpush1.bf16.xpose.msra.mxu0 %v1219
        %1240 = vmatprep.subr.bf16.mxu0 0
        %1241 = vmatpush2.bf16.xpose.msra.mxu0 0
        %1242 = vmatprep.subr.bf16.mxu0 0
        %1243 = vmatpush2.bf16.xpose.msra.mxu0 0
        %1244 = vmatprep.subr.bf16.mxu0 0
        %1245 = vmatpush2.bf16.xpose.msra.mxu0 0
        %1246 = vmatprep.subr.bf16.mxu0 0
        %1247 = vmatpush2.bf16.xpose.msra.mxu0 0
        %1248 = vmatprep.subr.bf16.mxu0 0
        %1249 = vmatpush2.bf16.xpose.msra.mxu0 0
        %1250 = vmatprep.subr.bf16.mxu0 0
        %1251 = vmatpush2.bf16.xpose.msra.mxu0 0
        %1252 = vmatprep.subr.bf16.mxu0 0
        %1253 = vmatpush2.bf16.xpose.msra.mxu0 0
        %1254 = vmatprep.subr.bf16.mxu0 0
        %1255 = vmatpush2.bf16.xpose.msra.mxu0 0
        %1256 = vmatprep.mubr.bf16.mxu0 0
        %1257 = vmatmul.mubr.bf16.gmra.mxu0 %v1213
        %v1258 = vpop.f32.mrf.mxu0
        %v1259 = vadd.f32 0.0, %v1258
        %v1260 = vpop.f32.mrf.mxu0
        %v1261 = vpop.f32.mrf.mxu0
        %v1262 = vadd.f32 0.0, %v1261
        %v1263 = vpop.f32.mrf.mxu0
        %1264 = vmatprep.mubr.bf16.mxu0 0
        %1265 = vmatmul.mubr.bf16.gmra.mxu0 %v1216
        %v1266 = vpop.f32.mrf.mxu0
        %v1267 = vadd.f32 0.0, %v1266
        %v1268 = vpop.f32.mrf.mxu0
        %v1269 = vpop.f32.mrf.mxu0
        %v1270 = vpop.f32.mrf.mxu0
        %1271 = vdwg.mxu0
        %v1272 = vmul.f32 %v1259, 0.25
        %v1273 = vmul.f32 %v1262, 0.25
        %v1274 = vmul.f32 %v1267, 0.25
        %vm1275 = vcmask 138240
        %v1276 = vsel %vm1275, %v1272, -inf
        %1277 = vmax.xlane.f32.xlu0 %v1276
        %v1278 = vpop.xlane.xlu0 %1277
        %v1279 = vsel %vm1275, %v1273, -inf
        %1280 = vmax.xlane.f32.xlu0 %v1279
        %v1281 = vpop.xlane.xlu0 %1280
        %vm1282 = vcmask 131072
        %v1283 = vsel %vm1282, %v1274, -inf
        %1284 = vmax.xlane.f32.xlu0 %v1283
        %v1285 = vpop.xlane.xlu0 %1284
        %v1286 = vsub.f32 %v1272, %v1278
        %v1287 = vsub.f32 %v1273, %v1281
        %v1288 = vsub.f32 %v1274, %v1285
        %v1289 = vmul.f32 %v1286, 1.442695
        %v1290 = vpow.pop %v1289
        %v1291 = vmul.f32 %v1287, 1.442695
        %v1292 = vpow.pop %v1291
        %v1293 = vmul.f32 %v1288, 1.442695
        %v1294 = vpow.pop %v1293
        %v1295 = vsel %vm1275, %v1290, 0.0
        %1296 = vadd.xlane.f32.xlu0 %v1295
        %v1297 = vpop.xlane.xlu0 %1296
        %v1298 = vsel %vm1275, %v1292, 0.0
        %1299 = vadd.xlane.f32.xlu0 %v1298
        %v1300 = vpop.xlane.xlu0 %1299
        %v1301 = vsel %vm1282, %v1294, 0.0
        %1302 = vadd.xlane.f32.xlu0 %v1301
        %v1303 = vpop.xlane.xlu0 %1302
        %v1304 = vrcp.pop %v1297
        %v1305 = vrcp.pop %v1300
        %v1306 = vrcp.pop %v1303
        %v1307 = vmul.f32 %v1290, %v1304
        %v1308 = vmul.f32 %v1292, %v1305
        %v1309 = vmul.f32 %v1294, %v1306
        %v1310 = vpack.c.bf16 %v1308, %v1307
        %v1311 = vpack.c.bf16 %v1309, %v1309
        %1312 = vrot.lane.b32.xlu0 %v1203, 64
        %v1313 = vpop.permute.xlu0 %1312
        %1314 = vrot.lane.b32.xlu0 %v1204, 64
        %v1315 = vpop.permute.xlu0 %1314
        %v1318 = vsel %vm1275, %v1310, 0
        %v1321 = vsel %vm1275, %v1311, 0
        %vm1323 = vcmask 1040384
        %v1324 = vsel 0, 4294967295, 65535
        %v1325 = vsel %vm1323, %v1324, 0
        %v1327 = vand.u32 %v1315, %v1325
        %1329 = vmatprep.subr.bf16.mxu0 0
        %1330 = vmatpush1.bf16.msra.mxu0 0
        %1331 = vmatprep.subr.bf16.mxu0 0
        %1332 = vmatpush1.bf16.msra.mxu0 0
        %1333 = vmatprep.subr.bf16.mxu0 0
        %1334 = vmatpush1.bf16.msra.mxu0 0
        %1335 = vmatprep.subr.bf16.mxu0 0
        %1336 = vmatpush1.bf16.msra.mxu0 0
        %1337 = vmatprep.subr.bf16.mxu0 0
        %1338 = vmatpush1.bf16.msra.mxu0 0
        %1339 = vmatprep.subr.bf16.mxu0 0
        %1340 = vmatpush1.bf16.msra.mxu0 0
        %1341 = vmatprep.subr.bf16.mxu0 0
        %1342 = vmatpush1.bf16.msra.mxu0 %v1327
        %1343 = vmatprep.subr.bf16.mxu0 0
        %1344 = vmatpush1.bf16.msra.mxu0 %v1313
        %1345 = vmatprep.subr.bf16.mxu0 0
        %1346 = vmatpush2.bf16.msra.mxu0 0
        %1347 = vmatprep.subr.bf16.mxu0 0
        %1348 = vmatpush2.bf16.msra.mxu0 0
        %1349 = vmatprep.subr.bf16.mxu0 0
        %1350 = vmatpush2.bf16.msra.mxu0 0
        %1351 = vmatprep.subr.bf16.mxu0 0
        %1352 = vmatpush2.bf16.msra.mxu0 0
        %1353 = vmatprep.subr.bf16.mxu0 0
        %1354 = vmatpush2.bf16.msra.mxu0 0
        %1355 = vmatprep.subr.bf16.mxu0 0
        %1356 = vmatpush2.bf16.msra.mxu0 0
        %1357 = vmatprep.subr.bf16.mxu0 0
        %1358 = vmatpush2.bf16.msra.mxu0 0
        %1359 = vmatprep.subr.bf16.mxu0 0
        %1360 = vmatpush2.bf16.msra.mxu0 0
        %1361 = vmatprep.mubr.bf16.mxu0 0
        %1362 = vmatmul.mubr.bf16.gmra.mxu0 %v1318
        %v1363 = vpop.f32.mrf.mxu0
        %v1364 = vadd.f32 0.0, %v1363
        %v1365 = vpop.f32.mrf.mxu0
        %v1366 = vpop.f32.mrf.mxu0
        %v1367 = vadd.f32 0.0, %v1366
        %v1368 = vpop.f32.mrf.mxu0
        %1369 = vmatprep.mubr.bf16.mxu0 0
        %1370 = vmatmul.mubr.bf16.gmra.mxu0 %v1321
        %v1371 = vpop.f32.mrf.mxu0
        %v1372 = vadd.f32 0.0, %v1371
        %v1373 = vpop.f32.mrf.mxu0
        %v1374 = vpop.f32.mrf.mxu0
        %v1375 = vpop.f32.mrf.mxu0
        %1376 = vdwg.mxu0
        %1377 = vrot.lane.b32.xlu0 %v1203, 112
        %v1378 = vpop.permute.xlu0 %1377
        %1379 = vrot.lane.b32.xlu0 %v1204, 112
        %v1380 = vpop.permute.xlu0 %1379
        %1381 = vrot.lane.b32.xlu0 %v1203, 80
        %v1382 = vpop.permute.xlu0 %1381
        %1383 = vrot.lane.b32.xlu0 %v1204, 80
        %v1384 = vpop.permute.xlu0 %1383
        %v1386 = vsel %vm1211, %v1378, 0
        %v1389 = vsel %vm1211, %v1380, 0
        %v1392 = vsel %vm1211, %v1382, 0
        %v1395 = vsel %vm1211, %v1384, 0
        %1397 = vmatprep.subr.bf16.mxu0 0
        %1398 = vmatpush1.bf16.xpose.msra.mxu0 0
        %1399 = vmatprep.subr.bf16.mxu0 0
        %1400 = vmatpush1.bf16.xpose.msra.mxu0 0
        %1401 = vmatprep.subr.bf16.mxu0 0
        %1402 = vmatpush1.bf16.xpose.msra.mxu0 0
        %1403 = vmatprep.subr.bf16.mxu0 0
        %1404 = vmatpush1.bf16.xpose.msra.mxu0 0
        %1405 = vmatprep.subr.bf16.mxu0 0
        %1406 = vmatpush1.bf16.xpose.msra.mxu0 0
        %1407 = vmatprep.subr.bf16.mxu0 0
        %1408 = vmatpush1.bf16.xpose.msra.mxu0 0
        %1409 = vmatprep.subr.bf16.mxu0 0
        %1410 = vmatpush1.bf16.xpose.msra.mxu0 %v1395
        %1411 = vmatprep.subr.bf16.mxu0 0
        %1412 = vmatpush1.bf16.xpose.msra.mxu0 %v1392
        %1413 = vmatprep.subr.bf16.mxu0 0
        %1414 = vmatpush2.bf16.xpose.msra.mxu0 0
        %1415 = vmatprep.subr.bf16.mxu0 0
        %1416 = vmatpush2.bf16.xpose.msra.mxu0 0
        %1417 = vmatprep.subr.bf16.mxu0 0
        %1418 = vmatpush2.bf16.xpose.msra.mxu0 0
        %1419 = vmatprep.subr.bf16.mxu0 0
        %1420 = vmatpush2.bf16.xpose.msra.mxu0 0
        %1421 = vmatprep.subr.bf16.mxu0 0
        %1422 = vmatpush2.bf16.xpose.msra.mxu0 0
        %1423 = vmatprep.subr.bf16.mxu0 0
        %1424 = vmatpush2.bf16.xpose.msra.mxu0 0
        %1425 = vmatprep.subr.bf16.mxu0 0
        %1426 = vmatpush2.bf16.xpose.msra.mxu0 0
        %1427 = vmatprep.subr.bf16.mxu0 0
        %1428 = vmatpush2.bf16.xpose.msra.mxu0 0
        %1429 = vmatprep.mubr.bf16.mxu0 0
        %1430 = vmatmul.mubr.bf16.gmra.mxu0 %v1386
        %v1431 = vpop.f32.mrf.mxu0
        %v1432 = vadd.f32 0.0, %v1431
        %v1433 = vpop.f32.mrf.mxu0
        %v1434 = vpop.f32.mrf.mxu0
        %v1435 = vadd.f32 0.0, %v1434
        %v1436 = vpop.f32.mrf.mxu0
        %1437 = vmatprep.mubr.bf16.mxu0 0
        %1438 = vmatmul.mubr.bf16.gmra.mxu0 %v1389
        %v1439 = vpop.f32.mrf.mxu0
        %v1440 = vadd.f32 0.0, %v1439
        %v1441 = vpop.f32.mrf.mxu0
        %v1442 = vpop.f32.mrf.mxu0
        %v1443 = vpop.f32.mrf.mxu0
        %1444 = vdwg.mxu0
        %v1445 = vmul.f32 %v1432, 0.25
        %v1446 = vmul.f32 %v1435, 0.25
        %v1447 = vmul.f32 %v1440, 0.25
        %v1448 = vsel %vm1275, %v1445, -inf
        %1449 = vmax.xlane.f32.xlu0 %v1448
        %v1450 = vpop.xlane.xlu0 %1449
        %v1451 = vsel %vm1275, %v1446, -inf
        %1452 = vmax.xlane.f32.xlu0 %v1451
        %v1453 = vpop.xlane.xlu0 %1452
        %v1454 = vsel %vm1282, %v1447, -inf
        %1455 = vmax.xlane.f32.xlu0 %v1454
        %v1456 = vpop.xlane.xlu0 %1455
        %v1457 = vsub.f32 %v1445, %v1450
        %v1458 = vsub.f32 %v1446, %v1453
        %v1459 = vsub.f32 %v1447, %v1456
        %v1460 = vmul.f32 %v1457, 1.442695
        %v1461 = vpow.pop %v1460
        %v1462 = vmul.f32 %v1458, 1.442695
        %v1463 = vpow.pop %v1462
        %v1464 = vmul.f32 %v1459, 1.442695
        %v1465 = vpow.pop %v1464
        %v1466 = vsel %vm1275, %v1461, 0.0
        %1467 = vadd.xlane.f32.xlu0 %v1466
        %v1468 = vpop.xlane.xlu0 %1467
        %v1469 = vsel %vm1275, %v1463, 0.0
        %1470 = vadd.xlane.f32.xlu0 %v1469
        %v1471 = vpop.xlane.xlu0 %1470
        %v1472 = vsel %vm1282, %v1465, 0.0
        %1473 = vadd.xlane.f32.xlu0 %v1472
        %v1474 = vpop.xlane.xlu0 %1473
        %v1475 = vrcp.pop %v1468
        %v1476 = vrcp.pop %v1471
        %v1477 = vrcp.pop %v1474
        %v1478 = vmul.f32 %v1461, %v1475
        %v1479 = vmul.f32 %v1463, %v1476
        %v1480 = vmul.f32 %v1465, %v1477
        %v1481 = vpack.c.bf16 %v1479, %v1478
        %v1482 = vpack.c.bf16 %v1480, %v1480
        %1483 = vrot.lane.b32.xlu0 %v1203, 48
        %v1484 = vpop.permute.xlu0 %1483
        %1485 = vrot.lane.b32.xlu0 %v1204, 48
        %v1486 = vpop.permute.xlu0 %1485
        %v1489 = vsel %vm1275, %v1481, 0
        %v1492 = vsel %vm1275, %v1482, 0
        %v1495 = vand.u32 %v1486, %v1325
        %1497 = vmatprep.subr.bf16.mxu0 0
        %1498 = vmatpush1.bf16.msra.mxu0 0
        %1499 = vmatprep.subr.bf16.mxu0 0
        %1500 = vmatpush1.bf16.msra.mxu0 0
        %1501 = vmatprep.subr.bf16.mxu0 0
        %1502 = vmatpush1.bf16.msra.mxu0 0
        %1503 = vmatprep.subr.bf16.mxu0 0
        %1504 = vmatpush1.bf16.msra.mxu0 0
        %1505 = vmatprep.subr.bf16.mxu0 0
        %1506 = vmatpush1.bf16.msra.mxu0 0
        %1507 = vmatprep.subr.bf16.mxu0 0
        %1508 = vmatpush1.bf16.msra.mxu0 0
        %1509 = vmatprep.subr.bf16.mxu0 0
        %1510 = vmatpush1.bf16.msra.mxu0 %v1495
        %1511 = vmatprep.subr.bf16.mxu0 0
        %1512 = vmatpush1.bf16.msra.mxu0 %v1484
        %1513 = vmatprep.subr.bf16.mxu0 0
        %1514 = vmatpush2.bf16.msra.mxu0 0
        %1515 = vmatprep.subr.bf16.mxu0 0
        %1516 = vmatpush2.bf16.msra.mxu0 0
        %1517 = vmatprep.subr.bf16.mxu0 0
        %1518 = vmatpush2.bf16.msra.mxu0 0
        %1519 = vmatprep.subr.bf16.mxu0 0
        %1520 = vmatpush2.bf16.msra.mxu0 0
        %1521 = vmatprep.subr.bf16.mxu0 0
        %1522 = vmatpush2.bf16.msra.mxu0 0
        %1523 = vmatprep.subr.bf16.mxu0 0
        %1524 = vmatpush2.bf16.msra.mxu0 0
        %1525 = vmatprep.subr.bf16.mxu0 0
        %1526 = vmatpush2.bf16.msra.mxu0 0
        %1527 = vmatprep.subr.bf16.mxu0 0
        %1528 = vmatpush2.bf16.msra.mxu0 0
        %1529 = vmatprep.mubr.bf16.mxu0 0
        %1530 = vmatmul.mubr.bf16.gmra.mxu0 %v1489
        %v1531 = vpop.f32.mrf.mxu0
        %v1532 = vadd.f32 0.0, %v1531
        %v1533 = vpop.f32.mrf.mxu0
        %v1534 = vpop.f32.mrf.mxu0
        %v1535 = vadd.f32 0.0, %v1534
        %v1536 = vpop.f32.mrf.mxu0
        %1537 = vmatprep.mubr.bf16.mxu0 0
        %1538 = vmatmul.mubr.bf16.gmra.mxu0 %v1492
        %v1539 = vpop.f32.mrf.mxu0
        %v1540 = vadd.f32 0.0, %v1539
        %v1541 = vpop.f32.mrf.mxu0
        %v1542 = vpop.f32.mrf.mxu0
        %v1543 = vpop.f32.mrf.mxu0
        %1544 = vdwg.mxu0
        %1548 = vrot.lane.b32.xlu0 %v1532, 16
        %v1549 = vpop.permute.xlu0 %1548
        %1550 = vrot.lane.b32.xlu0 %v1535, 16
        %v1551 = vpop.permute.xlu0 %1550
        %1552 = vrot.lane.b32.xlu0 %v1540, 16
        %v1553 = vpop.permute.xlu0 %1552
        %v1557 = vsel %vm1211, %v1364, %v1549
        %v1558 = vsel %vm1211, %v1367, %v1551
        %v1559 = vsel %vm1211, %v1372, %v1553
        %v1560 = vld [vmem:[%s6] sm:$0xf]
        %v1561 = vld [vmem:[%s6 + $0x4] sm:$0xf]
        %v1562 = vld [vmem:[%s6 + $0x8] sm:$0xf]
        %v1563 = vld [vmem:[%s6 + $0xc] sm:$0xf]
        %v1564 = vpack.c.bf16 %v1558, %v1557
        %v1565 = vpack.c.bf16 %v1559, %v1559
        %v1570 = vunpack.c.l.b16 %v1560
        %v1571 = vunpack.c.l.b16 %v1561
        %v1572 = vunpack.c.l.b16 %v1562
        %v1573 = vunpack.c.l.b16 %v1563
        %v1574 = vpack.c.b16 %v1571, %v1570
        %v1575 = vpack.c.b16 %v1573, %v1572
        %v1579 = vsel %vm1071, %v1564, 0
        %v1582 = vsel %vm1071, %v1565, 0
        %1584 = vmatprep.subr.bf16.mxu0 0
        %1585 = vmatpush1.bf16.msra.mxu0 0
        %1586 = vmatprep.subr.bf16.mxu0 0
        %1587 = vmatpush1.bf16.msra.mxu0 0
        %1588 = vmatprep.subr.bf16.mxu0 0
        %1589 = vmatpush1.bf16.msra.mxu0 0
        %1590 = vmatprep.subr.bf16.mxu0 0
        %1591 = vmatpush1.bf16.msra.mxu0 0
        %1592 = vmatprep.subr.bf16.mxu0 0
        %1593 = vmatpush1.bf16.msra.mxu0 0
        %1594 = vmatprep.subr.bf16.mxu0 0
        %1595 = vmatpush1.bf16.msra.mxu0 0
        %1596 = vmatprep.subr.bf16.mxu0 0
        %1597 = vmatpush1.bf16.msra.mxu0 %v1575
        %1598 = vmatprep.subr.bf16.mxu0 0
        %1599 = vmatpush1.bf16.msra.mxu0 %v1574
        %1600 = vmatprep.subr.bf16.mxu0 0
        %1601 = vmatpush2.bf16.msra.mxu0 0
        %1602 = vmatprep.subr.bf16.mxu0 0
        %1603 = vmatpush2.bf16.msra.mxu0 0
        %1604 = vmatprep.subr.bf16.mxu0 0
        %1605 = vmatpush2.bf16.msra.mxu0 0
        %1606 = vmatprep.subr.bf16.mxu0 0
        %1607 = vmatpush2.bf16.msra.mxu0 0
        %1608 = vmatprep.subr.bf16.mxu0 0
        %1609 = vmatpush2.bf16.msra.mxu0 0
        %1610 = vmatprep.subr.bf16.mxu0 0
        %1611 = vmatpush2.bf16.msra.mxu0 0
        %1612 = vmatprep.subr.bf16.mxu0 0
        %1613 = vmatpush2.bf16.msra.mxu0 0
        %1614 = vmatprep.subr.bf16.mxu0 0
        %1615 = vmatpush2.bf16.msra.mxu0 0
        %1616 = vmatprep.mubr.bf16.mxu0 0
        %1617 = vmatmul.mubr.bf16.gmra.mxu0 %v1579
        %v1618 = vpop.f32.mrf.mxu0
        %v1619 = vadd.f32 0.0, %v1618
        %v1620 = vpop.f32.mrf.mxu0
        %v1621 = vpop.f32.mrf.mxu0
        %v1622 = vadd.f32 0.0, %v1621
        %v1623 = vpop.f32.mrf.mxu0
        %1624 = vmatprep.mubr.bf16.mxu0 0
        %1625 = vmatmul.mubr.bf16.gmra.mxu0 %v1582
        %v1626 = vpop.f32.mrf.mxu0
        %v1627 = vadd.f32 0.0, %v1626
        %v1628 = vpop.f32.mrf.mxu0
        %v1629 = vpop.f32.mrf.mxu0
        %v1630 = vpop.f32.mrf.mxu0
        %1631 = vdwg.mxu0
        %v1632 = vadd.f32 %v1056, %v1619
        %v1633 = vadd.f32 %v1059, %v1622
        %v1634 = vadd.f32 %v1064, %v1627
        %v1635 = vld [vmem:[%s7] sm:$0x1]
        %v1636 = vld [vmem:[%s8] sm:$0x1]
        %v1637 = vsel %vm1071, %v1632, 0.0
        %1638 = vadd.xlane.f32.xlu0 %v1637
        %v1639 = vpop.xlane.xlu0 %1638
        %v1640 = vsel %vm1071, %v1633, 0.0
        %1641 = vadd.xlane.f32.xlu0 %v1640
        %v1642 = vpop.xlane.xlu0 %1641
        %v1643 = vsel %vm1078, %v1634, 0.0
        %1644 = vadd.xlane.f32.xlu0 %v1643
        %v1645 = vpop.xlane.xlu0 %1644
        %v1646 = vmul.f32 %v1639, %v1082
        %v1647 = vmul.f32 %v1642, %v1082
        %v1648 = vmul.f32 %v1645, %v1082
        %v1649 = vsub.f32 %v1632, %v1646
        %v1650 = vsub.f32 %v1633, %v1647
        %v1651 = vsub.f32 %v1634, %v1648
        %v1652 = vmul.f32 %v1649, %v1649
        %v1653 = vmul.f32 %v1650, %v1650
        %v1654 = vmul.f32 %v1651, %v1651
        %v1655 = vsel %vm1071, %v1652, 0.0
        %1656 = vadd.xlane.f32.xlu0 %v1655
        %v1657 = vpop.xlane.xlu0 %1656
        %v1658 = vsel %vm1071, %v1653, 0.0
        %1659 = vadd.xlane.f32.xlu0 %v1658
        %v1660 = vpop.xlane.xlu0 %1659
        %v1661 = vsel %vm1078, %v1654, 0.0
        %1662 = vadd.xlane.f32.xlu0 %v1661
        %v1663 = vpop.xlane.xlu0 %1662
        %v1664 = vmul.f32 %v1657, %v1082
        %v1665 = vmul.f32 %v1660, %v1082
        %v1666 = vmul.f32 %v1663, %v1082
        %v1667 = vadd.f32 %v1664, 1e-05
        %v1668 = vadd.f32 %v1665, 1e-05
        %v1669 = vadd.f32 %v1666, 1e-05
        %v1670 = vrsqrt.pop %v1667
        %v1671 = vrsqrt.pop %v1668
        %v1672 = vrsqrt.pop %v1669
        %v1673 = vmul.f32 %v1649, %v1670
        %v1674 = vmul.f32 %v1650, %v1671
        %v1675 = vmul.f32 %v1651, %v1672
        %v1677 = vlaneseq
        %v1678 = vshrl.u32 %v1677, 7
        %v1679 = vsub.s32 0, %v1678
        %v1680 = vrot.slane %v1635, %v1679
        %v1682 = vmul.f32 %v1673, %v1680
        %v1683 = vmul.f32 %v1674, %v1680
        %v1684 = vmul.f32 %v1675, %v1680
        %v1686 = vlaneseq
        %v1687 = vshrl.u32 %v1686, 7
        %v1688 = vsub.s32 0, %v1687
        %v1689 = vrot.slane %v1636, %v1688
        %v1691 = vadd.f32 %v1682, %v1689
        %v1692 = vadd.f32 %v1683, %v1689
        %v1693 = vadd.f32 %v1684, %v1689
        %v1694 = vld [vmem:[%s9] sm:$0xf]
        %v1695 = vld [vmem:[%s9 + $0x4] sm:$0xf]
        %v1696 = vld [vmem:[%s9 + $0x8] sm:$0xf]
        %v1697 = vld [vmem:[%s9 + $0xc] sm:$0xf]
        %v1698 = vpack.c.bf16 %v1692, %v1691
        %v1699 = vpack.c.bf16 %v1693, %v1693
        %v1700 = vld [vmem:[%s10] sm:$0x1]
        %v1702 = vlaneseq
        %v1703 = vshrl.u32 %v1702, 7
        %v1704 = vsub.s32 0, %v1703
        %v1705 = vrot.slane %v1700, %v1704
        %v1711 = vunpack.c.l.b16 %v1694
        %v1712 = vunpack.c.l.b16 %v1695
        %v1713 = vunpack.c.l.b16 %v1696
        %v1714 = vunpack.c.l.b16 %v1697
        %v1715 = vpack.c.b16 %v1712, %v1711
        %v1716 = vpack.c.b16 %v1714, %v1713
        %v1720 = vsel %vm1071, %v1698, 0
        %v1723 = vsel %vm1071, %v1699, 0
        %1725 = vmatprep.subr.bf16.mxu0 0
        %1726 = vmatpush1.bf16.msra.mxu0 0
        %1727 = vmatprep.subr.bf16.mxu0 0
        %1728 = vmatpush1.bf16.msra.mxu0 0
        %1729 = vmatprep.subr.bf16.mxu0 0
        %1730 = vmatpush1.bf16.msra.mxu0 0
        %1731 = vmatprep.subr.bf16.mxu0 0
        %1732 = vmatpush1.bf16.msra.mxu0 0
        %1733 = vmatprep.subr.bf16.mxu0 0
        %1734 = vmatpush1.bf16.msra.mxu0 0
        %1735 = vmatprep.subr.bf16.mxu0 0
        %1736 = vmatpush1.bf16.msra.mxu0 0
        %1737 = vmatprep.subr.bf16.mxu0 0
        %1738 = vmatpush1.bf16.msra.mxu0 %v1716
        %1739 = vmatprep.subr.bf16.mxu0 0
        %1740 = vmatpush1.bf16.msra.mxu0 %v1715
        %1741 = vmatprep.subr.bf16.mxu0 0
        %1742 = vmatpush2.bf16.msra.mxu0 0
        %1743 = vmatprep.subr.bf16.mxu0 0
        %1744 = vmatpush2.bf16.msra.mxu0 0
        %1745 = vmatprep.subr.bf16.mxu0 0
        %1746 = vmatpush2.bf16.msra.mxu0 0
        %1747 = vmatprep.subr.bf16.mxu0 0
        %1748 = vmatpush2.bf16.msra.mxu0 0
        %1749 = vmatprep.subr.bf16.mxu0 0
        %1750 = vmatpush2.bf16.msra.mxu0 0
        %1751 = vmatprep.subr.bf16.mxu0 0
        %1752 = vmatpush2.bf16.msra.mxu0 0
        %1753 = vmatprep.subr.bf16.mxu0 0
        %1754 = vmatpush2.bf16.msra.mxu0 0
        %1755 = vmatprep.subr.bf16.mxu0 0
        %1756 = vmatpush2.bf16.msra.mxu0 0
        %1757 = vmatprep.mubr.bf16.mxu0 0
        %1758 = vmatmul.mubr.bf16.gmra.mxu0 %v1720
        %v1759 = vpop.f32.mrf.mxu0
        %v1760 = vadd.f32 %v1705, %v1759
        %v1761 = vpop.f32.mrf.mxu0
        %v1762 = vpop.f32.mrf.mxu0
        %v1763 = vadd.f32 %v1705, %v1762
        %v1764 = vpop.f32.mrf.mxu0
        %1765 = vmatprep.mubr.bf16.mxu0 0
        %1766 = vmatmul.mubr.bf16.gmra.mxu0 %v1723
        %v1767 = vpop.f32.mrf.mxu0
        %v1768 = vadd.f32 %v1705, %v1767
        %v1769 = vpop.f32.mrf.mxu0
        %v1770 = vpop.f32.mrf.mxu0
        %v1771 = vpop.f32.mrf.mxu0
        %1772 = vdwg.mxu0
        %v1773 = vmul.f32 %v1760, 0.5
        %v1774 = vmul.f32 %v1763, 0.5
        %v1775 = vmul.f32 %v1768, 0.5
        %v1776 = vmul.f32 %v1760, 0.044715
        %v1777 = vmul.f32 %v1763, 0.044715
        %v1778 = vmul.f32 %v1768, 0.044715
        %v1779 = vmul.f32 %v1776, %v1760
        %v1780 = vmul.f32 %v1777, %v1763
        %v1781 = vmul.f32 %v1778, %v1768
        %v1782 = vmul.f32 %v1779, %v1760
        %v1783 = vmul.f32 %v1780, %v1763
        %v1784 = vmul.f32 %v1781, %v1768
        %v1785 = vadd.f32 %v1760, %v1782
        %v1786 = vadd.f32 %v1763, %v1783
        %v1787 = vadd.f32 %v1768, %v1784
        %v1788 = vmul.f32 %v1785, 0.7978846
        %v1789 = vmul.f32 %v1786, 0.7978846
        %v1790 = vmul.f32 %v1787, 0.7978846
        %v1791 = vtanh.pop %v1788
        %v1792 = vtanh.pop %v1789
        %v1793 = vtanh.pop %v1790
        %v1794 = vadd.f32 %v1791, 1.0
        %v1795 = vadd.f32 %v1792, 1.0
        %v1796 = vadd.f32 %v1793, 1.0
        %v1797 = vmul.f32 %v1773, %v1794
        %v1798 = vmul.f32 %v1774, %v1795
        %v1799 = vmul.f32 %v1775, %v1796
        %v1800 = vld [vmem:[%s11] sm:$0xf]
        %v1801 = vld [vmem:[%s11 + $0x4] sm:$0xf]
        %v1802 = vld [vmem:[%s11 + $0x8] sm:$0xf]
        %v1803 = vld [vmem:[%s11 + $0xc] sm:$0xf]
        %v1804 = vld [vmem:[%s11 + $0x10] sm:$0xf]
        %v1805 = vld [vmem:[%s11 + $0x14] sm:$0xf]
        %v1806 = vld [vmem:[%s11 + $0x18] sm:$0xf]
        %v1807 = vld [vmem:[%s11 + $0x1c] sm:$0xf]
        %v1808 = vld [vmem:[%s11 + $0x20] sm:$0xf]
        %v1809 = vld [vmem:[%s11 + $0x24] sm:$0xf]
        %v1810 = vld [vmem:[%s11 + $0x28] sm:$0xf]
        %v1811 = vld [vmem:[%s11 + $0x2c] sm:$0xf]
        %v1812 = vld [vmem:[%s11 + $0x30] sm:$0xf]
        %v1813 = vld [vmem:[%s11 + $0x34] sm:$0xf]
        %v1814 = vld [vmem:[%s11 + $0x38] sm:$0xf]
        %v1815 = vld [vmem:[%s11 + $0x3c] sm:$0xf]
        %v1816 = vpack.c.bf16 %v1798, %v1797
        %v1817 = vpack.c.bf16 %v1799, %v1799
        %v1834 = vunpack.c.l.b16 %v1800
        %v1835 = vunpack.c.l.b16 %v1801
        %v1836 = vunpack.c.l.b16 %v1802
        %v1837 = vunpack.c.l.b16 %v1803
        %v1838 = vunpack.c.l.b16 %v1804
        %v1839 = vunpack.c.l.b16 %v1805
        %v1840 = vunpack.c.l.b16 %v1806
        %v1841 = vunpack.c.l.b16 %v1807
        %v1842 = vunpack.c.l.b16 %v1808
        %v1843 = vunpack.c.l.b16 %v1809
        %v1844 = vunpack.c.l.b16 %v1810
        %v1845 = vunpack.c.l.b16 %v1811
        %v1846 = vunpack.c.l.b16 %v1812
        %v1847 = vunpack.c.l.b16 %v1813
        %v1848 = vunpack.c.l.b16 %v1814
        %v1849 = vunpack.c.l.b16 %v1815
        %v1850 = vpack.c.b16 %v1835, %v1834
        %v1851 = vpack.c.b16 %v1837, %v1836
        %v1852 = vpack.c.b16 %v1839, %v1838
        %v1853 = vpack.c.b16 %v1841, %v1840
        %v1854 = vpack.c.b16 %v1843, %v1842
        %v1855 = vpack.c.b16 %v1845, %v1844
        %v1856 = vpack.c.b16 %v1847, %v1846
        %v1857 = vpack.c.b16 %v1849, %v1848
        %1866 = vmatprep.subr.bf16.mxu0 0
        %1867 = vmatpush1.bf16.msra.mxu0 %v1857
        %1868 = vmatprep.subr.bf16.mxu0 0
        %1869 = vmatpush1.bf16.msra.mxu0 %v1856
        %1870 = vmatprep.subr.bf16.mxu0 0
        %1871 = vmatpush1.bf16.msra.mxu0 %v1855
        %1872 = vmatprep.subr.bf16.mxu0 0
        %1873 = vmatpush1.bf16.msra.mxu0 %v1854
        %1874 = vmatprep.subr.bf16.mxu0 0
        %1875 = vmatpush1.bf16.msra.mxu0 %v1853
        %1876 = vmatprep.subr.bf16.mxu0 0
        %1877 = vmatpush1.bf16.msra.mxu0 %v1852
        %1878 = vmatprep.subr.bf16.mxu0 0
        %1879 = vmatpush1.bf16.msra.mxu0 %v1851
        %1880 = vmatprep.subr.bf16.mxu0 0
        %1881 = vmatpush1.bf16.msra.mxu0 %v1850
        %1882 = vmatprep.subr.bf16.mxu0 0
        %1883 = vmatpush2.bf16.msra.mxu0 0
        %1884 = vmatprep.subr.bf16.mxu0 0
        %1885 = vmatpush2.bf16.msra.mxu0 0
        %1886 = vmatprep.subr.bf16.mxu0 0
        %1887 = vmatpush2.bf16.msra.mxu0 0
        %1888 = vmatprep.subr.bf16.mxu0 0
        %1889 = vmatpush2.bf16.msra.mxu0 0
        %1890 = vmatprep.subr.bf16.mxu0 0
        %1891 = vmatpush2.bf16.msra.mxu0 0
        %1892 = vmatprep.subr.bf16.mxu0 0
        %1893 = vmatpush2.bf16.msra.mxu0 0
        %1894 = vmatprep.subr.bf16.mxu0 0
        %1895 = vmatpush2.bf16.msra.mxu0 0
        %1896 = vmatprep.subr.bf16.mxu0 0
        %1897 = vmatpush2.bf16.msra.mxu0 0
        %1898 = vmatprep.mubr.bf16.mxu0 0
        %1899 = vmatmul.mubr.bf16.gmra.mxu0 %v1816
        %v1900 = vpop.f32.mrf.mxu0
        %v1901 = vadd.f32 0.0, %v1900
        %v1902 = vpop.f32.mrf.mxu0
        %v1903 = vpop.f32.mrf.mxu0
        %v1904 = vadd.f32 0.0, %v1903
        %v1905 = vpop.f32.mrf.mxu0
        %1906 = vmatprep.mubr.bf16.mxu0 0
        %1907 = vmatmul.mubr.bf16.gmra.mxu0 %v1817
        %v1908 = vpop.f32.mrf.mxu0
        %v1909 = vadd.f32 0.0, %v1908
        %v1910 = vpop.f32.mrf.mxu0
        %v1911 = vpop.f32.mrf.mxu0
        %v1912 = vpop.f32.mrf.mxu0
        %1913 = vdwg.mxu0
        %v1914 = vadd.f32 %v1632, %v1901
        %v1915 = vadd.f32 %v1633, %v1904
        %v1916 = vadd.f32 %v1634, %v1909
        %v1917 = vld [vmem:[%s12] sm:$0x1]
        %v1919 = vlaneseq
        %v1920 = vshrl.u32 %v1919, 7
        %v1921 = vsub.s32 0, %v1920
        %v1922 = vrot.slane %v1917, %v1921
        %v1924 = vadd.f32 %v1914, %v1922
        %v1925 = vadd.f32 %v1915, %v1922
        %v1926 = vadd.f32 %v1916, %v1922
        %s1927 = scalar_lea.vmem %s3, 1
        %v1928 = vld [vmem:[%s1927] sm:$0x1]
        %s1929 = scalar_lea.vmem %s4, 1
        %v1930 = vld [vmem:[%s1929] sm:$0x1]
        %v1931 = vsel %vm1071, %v1924, 0.0
        %1932 = vadd.xlane.f32.xlu0 %v1931
        %v1933 = vpop.xlane.xlu0 %1932
        %v1934 = vsel %vm1071, %v1925, 0.0
        %1935 = vadd.xlane.f32.xlu0 %v1934
        %v1936 = vpop.xlane.xlu0 %1935
        %v1937 = vsel %vm1078, %v1926, 0.0
        %1938 = vadd.xlane.f32.xlu0 %v1937
        %v1939 = vpop.xlane.xlu0 %1938
        %v1940 = vmul.f32 %v1933, %v1082
        %v1941 = vmul.f32 %v1936, %v1082
        %v1942 = vmul.f32 %v1939, %v1082
        %v1943 = vsub.f32 %v1924, %v1940
        %v1944 = vsub.f32 %v1925, %v1941
        %v1945 = vsub.f32 %v1926, %v1942
        %v1946 = vmul.f32 %v1943, %v1943
        %v1947 = vmul.f32 %v1944, %v1944
        %v1948 = vmul.f32 %v1945, %v1945
        %v1949 = vsel %vm1071, %v1946, 0.0
        %1950 = vadd.xlane.f32.xlu0 %v1949
        %v1951 = vpop.xlane.xlu0 %1950
        %v1952 = vsel %vm1071, %v1947, 0.0
        %1953 = vadd.xlane.f32.xlu0 %v1952
        %v1954 = vpop.xlane.xlu0 %1953
        %v1955 = vsel %vm1078, %v1948, 0.0
        %1956 = vadd.xlane.f32.xlu0 %v1955
        %v1957 = vpop.xlane.xlu0 %1956
        %v1958 = vmul.f32 %v1951, %v1082
        %v1959 = vmul.f32 %v1954, %v1082
        %v1960 = vmul.f32 %v1957, %v1082
        %v1961 = vadd.f32 %v1958, 1e-05
        %v1962 = vadd.f32 %v1959, 1e-05
        %v1963 = vadd.f32 %v1960, 1e-05
        %v1964 = vrsqrt.pop %v1961
        %v1965 = vrsqrt.pop %v1962
        %v1966 = vrsqrt.pop %v1963
        %v1967 = vmul.f32 %v1943, %v1964
        %v1968 = vmul.f32 %v1944, %v1965
        %v1969 = vmul.f32 %v1945, %v1966
        %v1971 = vlaneseq
        %v1972 = vshrl.u32 %v1971, 7
        %v1973 = vsub.s32 0, %v1972
        %v1974 = vrot.slane %v1928, %v1973
        %v1976 = vmul.f32 %v1967, %v1974
        %v1977 = vmul.f32 %v1968, %v1974
        %v1978 = vmul.f32 %v1969, %v1974
        %v1980 = vlaneseq
        %v1981 = vshrl.u32 %v1980, 7
        %v1982 = vsub.s32 0, %v1981
        %v1983 = vrot.slane %v1930, %v1982
        %v1985 = vadd.f32 %v1976, %v1983
        %v1986 = vadd.f32 %v1977, %v1983
        %v1987 = vadd.f32 %v1978, %v1983
        %s1988 = scalar_lea.vmem %s5, 16
        %v1989 = vld [vmem:[%s1988] sm:$0xf]
        %v1990 = vld [vmem:[%s1988 + $0x4] sm:$0xf]
        %v1991 = vld [vmem:[%s1988 + $0x8] sm:$0xf]
        %v1992 = vld [vmem:[%s1988 + $0xc] sm:$0xf]
        %v1993 = vpack.c.bf16 %v1986, %v1985
        %v1994 = vpack.c.bf16 %v1987, %v1987
        %v1999 = vunpack.c.l.b16 %v1989
        %v2000 = vunpack.c.l.b16 %v1990
        %v2001 = vunpack.c.l.b16 %v1991
        %v2002 = vunpack.c.l.b16 %v1992
        %v2003 = vpack.c.b16 %v2000, %v1999
        %v2004 = vpack.c.b16 %v2002, %v2001
        %v2008 = vsel %vm1071, %v1993, 0
        %v2011 = vsel %vm1071, %v1994, 0
        %2013 = vmatprep.subr.bf16.mxu0 0
        %2014 = vmatpush1.bf16.msra.mxu0 0
        %2015 = vmatprep.subr.bf16.mxu0 0
        %2016 = vmatpush1.bf16.msra.mxu0 0
        %2017 = vmatprep.subr.bf16.mxu0 0
        %2018 = vmatpush1.bf16.msra.mxu0 0
        %2019 = vmatprep.subr.bf16.mxu0 0
        %2020 = vmatpush1.bf16.msra.mxu0 0
        %2021 = vmatprep.subr.bf16.mxu0 0
        %2022 = vmatpush1.bf16.msra.mxu0 0
        %2023 = vmatprep.subr.bf16.mxu0 0
        %2024 = vmatpush1.bf16.msra.mxu0 0
        %2025 = vmatprep.subr.bf16.mxu0 0
        %2026 = vmatpush1.bf16.msra.mxu0 %v2004
        %2027 = vmatprep.subr.bf16.mxu0 0
        %2028 = vmatpush1.bf16.msra.mxu0 %v2003
        %2029 = vmatprep.subr.bf16.mxu0 0
        %2030 = vmatpush2.bf16.msra.mxu0 0
        %2031 = vmatprep.subr.bf16.mxu0 0
        %2032 = vmatpush2.bf16.msra.mxu0 0
        %2033 = vmatprep.subr.bf16.mxu0 0
        %2034 = vmatpush2.bf16.msra.mxu0 0
        %2035 = vmatprep.subr.bf16.mxu0 0
        %2036 = vmatpush2.bf16.msra.mxu0 0
        %2037 = vmatprep.subr.bf16.mxu0 0
        %2038 = vmatpush2.bf16.msra.mxu0 0
        %2039 = vmatprep.subr.bf16.mxu0 0
        %2040 = vmatpush2.bf16.msra.mxu0 0
        %2041 = vmatprep.subr.bf16.mxu0 0
        %2042 = vmatpush2.bf16.msra.mxu0 0
        %2043 = vmatprep.subr.bf16.mxu0 0
        %2044 = vmatpush2.bf16.msra.mxu0 0
        %2045 = vmatprep.mubr.bf16.mxu0 0
        %2046 = vmatmul.mubr.bf16.gmra.mxu0 %v2008
        %v2047 = vpop.f32.mrf.mxu0
        %v2048 = vadd.f32 0.0, %v2047
        %v2049 = vpop.f32.mrf.mxu0
        %v2050 = vpop.f32.mrf.mxu0
        %v2051 = vadd.f32 0.0, %v2050
        %v2052 = vpop.f32.mrf.mxu0
        %2053 = vmatprep.mubr.bf16.mxu0 0
        %2054 = vmatmul.mubr.bf16.gmra.mxu0 %v2011
        %v2055 = vpop.f32.mrf.mxu0
        %v2056 = vadd.f32 0.0, %v2055
        %v2057 = vpop.f32.mrf.mxu0
        %v2058 = vpop.f32.mrf.mxu0
        %v2059 = vpop.f32.mrf.mxu0
        %2060 = vdwg.mxu0
        %v2061 = vpack.c.bf16 %v2051, %v2048
        %v2062 = vpack.c.bf16 %v2056, %v2056
        %2065 = vrot.lane.b32.xlu0 %v2061, 96
        %v2066 = vpop.permute.xlu0 %2065
        %2067 = vrot.lane.b32.xlu0 %v2062, 96
        %v2068 = vpop.permute.xlu0 %2067
        %v2070 = vsel %vm1211, %v2061, 0
        %v2073 = vsel %vm1211, %v2062, 0
        %v2076 = vsel %vm1211, %v2066, 0
        %v2079 = vsel %vm1211, %v2068, 0
        %2081 = vmatprep.subr.bf16.mxu0 0
        %2082 = vmatpush1.bf16.xpose.msra.mxu0 0
        %2083 = vmatprep.subr.bf16.mxu0 0
        %2084 = vmatpush1.bf16.xpose.msra.mxu0 0
        %2085 = vmatprep.subr.bf16.mxu0 0
        %2086 = vmatpush1.bf16.xpose.msra.mxu0 0
        %2087 = vmatprep.subr.bf16.mxu0 0
        %2088 = vmatpush1.bf16.xpose.msra.mxu0 0
        %2089 = vmatprep.subr.bf16.mxu0 0
        %2090 = vmatpush1.bf16.xpose.msra.mxu0 0
        %2091 = vmatprep.subr.bf16.mxu0 0
        %2092 = vmatpush1.bf16.xpose.msra.mxu0 0
        %2093 = vmatprep.subr.bf16.mxu0 0
        %2094 = vmatpush1.bf16.xpose.msra.mxu0 %v2079
        %2095 = vmatprep.subr.bf16.mxu0 0
        %2096 = vmatpush1.bf16.xpose.msra.mxu0 %v2076
        %2097 = vmatprep.subr.bf16.mxu0 0
        %2098 = vmatpush2.bf16.xpose.msra.mxu0 0
        %2099 = vmatprep.subr.bf16.mxu0 0
        %2100 = vmatpush2.bf16.xpose.msra.mxu0 0
        %2101 = vmatprep.subr.bf16.mxu0 0
        %2102 = vmatpush2.bf16.xpose.msra.mxu0 0
        %2103 = vmatprep.subr.bf16.mxu0 0
        %2104 = vmatpush2.bf16.xpose.msra.mxu0 0
        %2105 = vmatprep.subr.bf16.mxu0 0
        %2106 = vmatpush2.bf16.xpose.msra.mxu0 0
        %2107 = vmatprep.subr.bf16.mxu0 0
        %2108 = vmatpush2.bf16.xpose.msra.mxu0 0
        %2109 = vmatprep.subr.bf16.mxu0 0
        %2110 = vmatpush2.bf16.xpose.msra.mxu0 0
        %2111 = vmatprep.subr.bf16.mxu0 0
        %2112 = vmatpush2.bf16.xpose.msra.mxu0 0
        %2113 = vmatprep.mubr.bf16.mxu0 0
        %2114 = vmatmul.mubr.bf16.gmra.mxu0 %v2070
        %v2115 = vpop.f32.mrf.mxu0
        %v2116 = vadd.f32 0.0, %v2115
        %v2117 = vpop.f32.mrf.mxu0
        %v2118 = vpop.f32.mrf.mxu0
        %v2119 = vadd.f32 0.0, %v2118
        %v2120 = vpop.f32.mrf.mxu0
        %2121 = vmatprep.mubr.bf16.mxu0 0
        %2122 = vmatmul.mubr.bf16.gmra.mxu0 %v2073
        %v2123 = vpop.f32.mrf.mxu0
        %v2124 = vadd.f32 0.0, %v2123
        %v2125 = vpop.f32.mrf.mxu0
        %v2126 = vpop.f32.mrf.mxu0
        %v2127 = vpop.f32.mrf.mxu0
        %2128 = vdwg.mxu0
        %v2129 = vmul.f32 %v2116, 0.25
        %v2130 = vmul.f32 %v2119, 0.25
        %v2131 = vmul.f32 %v2124, 0.25
        %v2132 = vsel %vm1275, %v2129, -inf
        %2133 = vmax.xlane.f32.xlu0 %v2132
        %v2134 = vpop.xlane.xlu0 %2133
        %v2135 = vsel %vm1275, %v2130, -inf
        %2136 = vmax.xlane.f32.xlu0 %v2135
        %v2137 = vpop.xlane.xlu0 %2136
        %v2138 = vsel %vm1282, %v2131, -inf
        %2139 = vmax.xlane.f32.xlu0 %v2138
        %v2140 = vpop.xlane.xlu0 %2139
        %v2141 = vsub.f32 %v2129, %v2134
        %v2142 = vsub.f32 %v2130, %v2137
        %v2143 = vsub.f32 %v2131, %v2140
        %v2144 = vmul.f32 %v2141, 1.442695
        %v2145 = vpow.pop %v2144
        %v2146 = vmul.f32 %v2142, 1.442695
        %v2147 = vpow.pop %v2146
        %v2148 = vmul.f32 %v2143, 1.442695
        %v2149 = vpow.pop %v2148
        %v2150 = vsel %vm1275, %v2145, 0.0
        %2151 = vadd.xlane.f32.xlu0 %v2150
        %v2152 = vpop.xlane.xlu0 %2151
        %v2153 = vsel %vm1275, %v2147, 0.0
        %2154 = vadd.xlane.f32.xlu0 %v2153
        %v2155 = vpop.xlane.xlu0 %2154
        %v2156 = vsel %vm1282, %v2149, 0.0
        %2157 = vadd.xlane.f32.xlu0 %v2156
        %v2158 = vpop.xlane.xlu0 %2157
        %v2159 = vrcp.pop %v2152
        %v2160 = vrcp.pop %v2155
        %v2161 = vrcp.pop %v2158
        %v2162 = vmul.f32 %v2145, %v2159
        %v2163 = vmul.f32 %v2147, %v2160
        %v2164 = vmul.f32 %v2149, %v2161
        %v2165 = vpack.c.bf16 %v2163, %v2162
        %v2166 = vpack.c.bf16 %v2164, %v2164
        %2167 = vrot.lane.b32.xlu0 %v2061, 64
        %v2168 = vpop.permute.xlu0 %2167
        %2169 = vrot.lane.b32.xlu0 %v2062, 64
        %v2170 = vpop.permute.xlu0 %2169
        %v2173 = vsel %vm1275, %v2165, 0
        %v2176 = vsel %vm1275, %v2166, 0
        %v2179 = vand.u32 %v2170, %v1325
        %2181 = vmatprep.subr.bf16.mxu0 0
        %2182 = vmatpush1.bf16.msra.mxu0 0
        %2183 = vmatprep.subr.bf16.mxu0 0
        %2184 = vmatpush1.bf16.msra.mxu0 0
        %2185 = vmatprep.subr.bf16.mxu0 0
        %2186 = vmatpush1.bf16.msra.mxu0 0
        %2187 = vmatprep.subr.bf16.mxu0 0
        %2188 = vmatpush1.bf16.msra.mxu0 0
        %2189 = vmatprep.subr.bf16.mxu0 0
        %2190 = vmatpush1.bf16.msra.mxu0 0
        %2191 = vmatprep.subr.bf16.mxu0 0
        %2192 = vmatpush1.bf16.msra.mxu0 0
        %2193 = vmatprep.subr.bf16.mxu0 0
        %2194 = vmatpush1.bf16.msra.mxu0 %v2179
        %2195 = vmatprep.subr.bf16.mxu0 0
        %2196 = vmatpush1.bf16.msra.mxu0 %v2168
        %2197 = vmatprep.subr.bf16.mxu0 0
        %2198 = vmatpush2.bf16.msra.mxu0 0
        %2199 = vmatprep.subr.bf16.mxu0 0
        %2200 = vmatpush2.bf16.msra.mxu0 0
        %2201 = vmatprep.subr.bf16.mxu0 0
        %2202 = vmatpush2.bf16.msra.mxu0 0
        %2203 = vmatprep.subr.bf16.mxu0 0
        %2204 = vmatpush2.bf16.msra.mxu0 0
        %2205 = vmatprep.subr.bf16.mxu0 0
        %2206 = vmatpush2.bf16.msra.mxu0 0
        %2207 = vmatprep.subr.bf16.mxu0 0
        %2208 = vmatpush2.bf16.msra.mxu0 0
        %2209 = vmatprep.subr.bf16.mxu0 0
        %2210 = vmatpush2.bf16.msra.mxu0 0
        %2211 = vmatprep.subr.bf16.mxu0 0
        %2212 = vmatpush2.bf16.msra.mxu0 0
        %2213 = vmatprep.mubr.bf16.mxu0 0
        %2214 = vmatmul.mubr.bf16.gmra.mxu0 %v2173
        %v2215 = vpop.f32.mrf.mxu0
        %v2216 = vadd.f32 0.0, %v2215
        %v2217 = vpop.f32.mrf.mxu0
        %v2218 = vpop.f32.mrf.mxu0
        %v2219 = vadd.f32 0.0, %v2218
        %v2220 = vpop.f32.mrf.mxu0
        %2221 = vmatprep.mubr.bf16.mxu0 0
        %2222 = vmatmul.mubr.bf16.gmra.mxu0 %v2176
        %v2223 = vpop.f32.mrf.mxu0
        %v2224 = vadd.f32 0.0, %v2223
        %v2225 = vpop.f32.mrf.mxu0
        %v2226 = vpop.f32.mrf.mxu0
        %v2227 = vpop.f32.mrf.mxu0
        %2228 = vdwg.mxu0
        %2229 = vrot.lane.b32.xlu0 %v2061, 112
        %v2230 = vpop.permute.xlu0 %2229
        %2231 = vrot.lane.b32.xlu0 %v2062, 112
        %v2232 = vpop.permute.xlu0 %2231
        %2233 = vrot.lane.b32.xlu0 %v2061, 80
        %v2234 = vpop.permute.xlu0 %2233
        %2235 = vrot.lane.b32.xlu0 %v2062, 80
        %v2236 = vpop.permute.xlu0 %2235
        %v2238 = vsel %vm1211, %v2230, 0
        %v2241 = vsel %vm1211, %v2232, 0
        %v2244 = vsel %vm1211, %v2234, 0
        %v2247 = vsel %vm1211, %v2236, 0
        %2249 = vmatprep.subr.bf16.mxu0 0
        %2250 = vmatpush1.bf16.xpose.msra.mxu0 0
        %2251 = vmatprep.subr.bf16.mxu0 0
        %2252 = vmatpush1.bf16.xpose.msra.mxu0 0
        %2253 = vmatprep.subr.bf16.mxu0 0
        %2254 = vmatpush1.bf16.xpose.msra.mxu0 0
        %2255 = vmatprep.subr.bf16.mxu0 0
        %2256 = vmatpush1.bf16.xpose.msra.mxu0 0
        %2257 = vmatprep.subr.bf16.mxu0 0
        %2258 = vmatpush1.bf16.xpose.msra.mxu0 0
        %2259 = vmatprep.subr.bf16.mxu0 0
        %2260 = vmatpush1.bf16.xpose.msra.mxu0 0
        %2261 = vmatprep.subr.bf16.mxu0 0
        %2262 = vmatpush1.bf16.xpose.msra.mxu0 %v2247
        %2263 = vmatprep.subr.bf16.mxu0 0
        %2264 = vmatpush1.bf16.xpose.msra.mxu0 %v2244
        %2265 = vmatprep.subr.bf16.mxu0 0
        %2266 = vmatpush2.bf16.xpose.msra.mxu0 0
        %2267 = vmatprep.subr.bf16.mxu0 0
        %2268 = vmatpush2.bf16.xpose.msra.mxu0 0
        %2269 = vmatprep.subr.bf16.mxu0 0
        %2270 = vmatpush2.bf16.xpose.msra.mxu0 0
        %2271 = vmatprep.subr.bf16.mxu0 0
        %2272 = vmatpush2.bf16.xpose.msra.mxu0 0
        %2273 = vmatprep.subr.bf16.mxu0 0
        %2274 = vmatpush2.bf16.xpose.msra.mxu0 0
        %2275 = vmatprep.subr.bf16.mxu0 0
        %2276 = vmatpush2.bf16.xpose.msra.mxu0 0
        %2277 = vmatprep.subr.bf16.mxu0 0
        %2278 = vmatpush2.bf16.xpose.msra.mxu0 0
        %2279 = vmatprep.subr.bf16.mxu0 0
        %2280 = vmatpush2.bf16.xpose.msra.mxu0 0
        %2281 = vmatprep.mubr.bf16.mxu0 0
        %2282 = vmatmul.mubr.bf16.gmra.mxu0 %v2238
        %v2283 = vpop.f32.mrf.mxu0
        %v2284 = vadd.f32 0.0, %v2283
        %v2285 = vpop.f32.mrf.mxu0
        %v2286 = vpop.f32.mrf.mxu0
        %v2287 = vadd.f32 0.0, %v2286
        %v2288 = vpop.f32.mrf.mxu0
        %2289 = vmatprep.mubr.bf16.mxu0 0
        %2290 = vmatmul.mubr.bf16.gmra.mxu0 %v2241
        %v2291 = vpop.f32.mrf.mxu0
        %v2292 = vadd.f32 0.0, %v2291
        %v2293 = vpop.f32.mrf.mxu0
        %v2294 = vpop.f32.mrf.mxu0
        %v2295 = vpop.f32.mrf.mxu0
        %2296 = vdwg.mxu0
        %v2297 = vmul.f32 %v2284, 0.25
        %v2298 = vmul.f32 %v2287, 0.25
        %v2299 = vmul.f32 %v2292, 0.25
        %v2300 = vsel %vm1275, %v2297, -inf
        %2301 = vmax.xlane.f32.xlu0 %v2300
        %v2302 = vpop.xlane.xlu0 %2301
        %v2303 = vsel %vm1275, %v2298, -inf
        %2304 = vmax.xlane.f32.xlu0 %v2303
        %v2305 = vpop.xlane.xlu0 %2304
        %v2306 = vsel %vm1282, %v2299, -inf
        %2307 = vmax.xlane.f32.xlu0 %v2306
        %v2308 = vpop.xlane.xlu0 %2307
        %v2309 = vsub.f32 %v2297, %v2302
        %v2310 = vsub.f32 %v2298, %v2305
        %v2311 = vsub.f32 %v2299, %v2308
        %v2312 = vmul.f32 %v2309, 1.442695
        %v2313 = vpow.pop %v2312
        %v2314 = vmul.f32 %v2310, 1.442695
        %v2315 = vpow.pop %v2314
        %v2316 = vmul.f32 %v2311, 1.442695
        %v2317 = vpow.pop %v2316
        %v2318 = vsel %vm1275, %v2313, 0.0
        %2319 = vadd.xlane.f32.xlu0 %v2318
        %v2320 = vpop.xlane.xlu0 %2319
        %v2321 = vsel %vm1275, %v2315, 0.0
        %2322 = vadd.xlane.f32.xlu0 %v2321
        %v2323 = vpop.xlane.xlu0 %2322
        %v2324 = vsel %vm1282, %v2317, 0.0
        %2325 = vadd.xlane.f32.xlu0 %v2324
        %v2326 = vpop.xlane.xlu0 %2325
        %v2327 = vrcp.pop %v2320
        %v2328 = vrcp.pop %v2323
        %v2329 = vrcp.pop %v2326
        %v2330 = vmul.f32 %v2313, %v2327
        %v2331 = vmul.f32 %v2315, %v2328
        %v2332 = vmul.f32 %v2317, %v2329
        %v2333 = vpack.c.bf16 %v2331, %v2330
        %v2334 = vpack.c.bf16 %v2332, %v2332
        %2335 = vrot.lane.b32.xlu0 %v2061, 48
        %v2336 = vpop.permute.xlu0 %2335
        %2337 = vrot.lane.b32.xlu0 %v2062, 48
        %v2338 = vpop.permute.xlu0 %2337
        %v2341 = vsel %vm1275, %v2333, 0
        %v2344 = vsel %vm1275, %v2334, 0
        %v2347 = vand.u32 %v2338, %v1325
        %2349 = vmatprep.subr.bf16.mxu0 0
        %2350 = vmatpush1.bf16.msra.mxu0 0
        %2351 = vmatprep.subr.bf16.mxu0 0
        %2352 = vmatpush1.bf16.msra.mxu0 0
        %2353 = vmatprep.subr.bf16.mxu0 0
        %2354 = vmatpush1.bf16.msra.mxu0 0
        %2355 = vmatprep.subr.bf16.mxu0 0
        %2356 = vmatpush1.bf16.msra.mxu0 0
        %2357 = vmatprep.subr.bf16.mxu0 0
        %2358 = vmatpush1.bf16.msra.mxu0 0
        %2359 = vmatprep.subr.bf16.mxu0 0
        %2360 = vmatpush1.bf16.msra.mxu0 0
        %2361 = vmatprep.subr.bf16.mxu0 0
        %2362 = vmatpush1.bf16.msra.mxu0 %v2347
        %2363 = vmatprep.subr.bf16.mxu0 0
        %2364 = vmatpush1.bf16.msra.mxu0 %v2336
        %2365 = vmatprep.subr.bf16.mxu0 0
        %2366 = vmatpush2.bf16.msra.mxu0 0
        %2367 = vmatprep.subr.bf16.mxu0 0
        %2368 = vmatpush2.bf16.msra.mxu0 0
        %2369 = vmatprep.subr.bf16.mxu0 0
        %2370 = vmatpush2.bf16.msra.mxu0 0
        %2371 = vmatprep.subr.bf16.mxu0 0
        %2372 = vmatpush2.bf16.msra.mxu0 0
        %2373 = vmatprep.subr.bf16.mxu0 0
        %2374 = vmatpush2.bf16.msra.mxu0 0
        %2375 = vmatprep.subr.bf16.mxu0 0
        %2376 = vmatpush2.bf16.msra.mxu0 0
        %2377 = vmatprep.subr.bf16.mxu0 0
        %2378 = vmatpush2.bf16.msra.mxu0 0
        %2379 = vmatprep.subr.bf16.mxu0 0
        %2380 = vmatpush2.bf16.msra.mxu0 0
        %2381 = vmatprep.mubr.bf16.mxu0 0
        %2382 = vmatmul.mubr.bf16.gmra.mxu0 %v2341
        %v2383 = vpop.f32.mrf.mxu0
        %v2384 = vadd.f32 0.0, %v2383
        %v2385 = vpop.f32.mrf.mxu0
        %v2386 = vpop.f32.mrf.mxu0
        %v2387 = vadd.f32 0.0, %v2386
        %v2388 = vpop.f32.mrf.mxu0
        %2389 = vmatprep.mubr.bf16.mxu0 0
        %2390 = vmatmul.mubr.bf16.gmra.mxu0 %v2344
        %v2391 = vpop.f32.mrf.mxu0
        %v2392 = vadd.f32 0.0, %v2391
        %v2393 = vpop.f32.mrf.mxu0
        %v2394 = vpop.f32.mrf.mxu0
        %v2395 = vpop.f32.mrf.mxu0
        %2396 = vdwg.mxu0
        %2400 = vrot.lane.b32.xlu0 %v2384, 16
        %v2401 = vpop.permute.xlu0 %2400
        %2402 = vrot.lane.b32.xlu0 %v2387, 16
        %v2403 = vpop.permute.xlu0 %2402
        %2404 = vrot.lane.b32.xlu0 %v2392, 16
        %v2405 = vpop.permute.xlu0 %2404
        %v2409 = vsel %vm1211, %v2216, %v2401
        %v2410 = vsel %vm1211, %v2219, %v2403
        %v2411 = vsel %vm1211, %v2224, %v2405
        %s2412 = scalar_lea.vmem %s6, 16
        %v2413 = vld [vmem:[%s2412] sm:$0xf]
        %v2414 = vld [vmem:[%s2412 + $0x4] sm:$0xf]
        %v2415 = vld [vmem:[%s2412 + $0x8] sm:$0xf]
        %v2416 = vld [vmem:[%s2412 + $0xc] sm:$0xf]
        %v2417 = vpack.c.bf16 %v2410, %v2409
        %v2418 = vpack.c.bf16 %v2411, %v2411
        %v2423 = vunpack.c.l.b16 %v2413
        %v2424 = vunpack.c.l.b16 %v2414
        %v2425 = vunpack.c.l.b16 %v2415
        %v2426 = vunpack.c.l.b16 %v2416
        %v2427 = vpack.c.b16 %v2424, %v2423
        %v2428 = vpack.c.b16 %v2426, %v2425
        %v2432 = vsel %vm1071, %v2417, 0
        %v2435 = vsel %vm1071, %v2418, 0
        %2437 = vmatprep.subr.bf16.mxu0 0
        %2438 = vmatpush1.bf16.msra.mxu0 0
        %2439 = vmatprep.subr.bf16.mxu0 0
        %2440 = vmatpush1.bf16.msra.mxu0 0
        %2441 = vmatprep.subr.bf16.mxu0 0
        %2442 = vmatpush1.bf16.msra.mxu0 0
        %2443 = vmatprep.subr.bf16.mxu0 0
        %2444 = vmatpush1.bf16.msra.mxu0 0
        %2445 = vmatprep.subr.bf16.mxu0 0
        %2446 = vmatpush1.bf16.msra.mxu0 0
        %2447 = vmatprep.subr.bf16.mxu0 0
        %2448 = vmatpush1.bf16.msra.mxu0 0
        %2449 = vmatprep.subr.bf16.mxu0 0
        %2450 = vmatpush1.bf16.msra.mxu0 %v2428
        %2451 = vmatprep.subr.bf16.mxu0 0
        %2452 = vmatpush1.bf16.msra.mxu0 %v2427
        %2453 = vmatprep.subr.bf16.mxu0 0
        %2454 = vmatpush2.bf16.msra.mxu0 0
        %2455 = vmatprep.subr.bf16.mxu0 0
        %2456 = vmatpush2.bf16.msra.mxu0 0
        %2457 = vmatprep.subr.bf16.mxu0 0
        %2458 = vmatpush2.bf16.msra.mxu0 0
        %2459 = vmatprep.subr.bf16.mxu0 0
        %2460 = vmatpush2.bf16.msra.mxu0 0
        %2461 = vmatprep.subr.bf16.mxu0 0
        %2462 = vmatpush2.bf16.msra.mxu0 0
        %2463 = vmatprep.subr.bf16.mxu0 0
        %2464 = vmatpush2.bf16.msra.mxu0 0
        %2465 = vmatprep.subr.bf16.mxu0 0
        %2466 = vmatpush2.bf16.msra.mxu0 0
        %2467 = vmatprep.subr.bf16.mxu0 0
        %2468 = vmatpush2.bf16.msra.mxu0 0
        %2469 = vmatprep.mubr.bf16.mxu0 0
        %2470 = vmatmul.mubr.bf16.gmra.mxu0 %v2432
        %v2471 = vpop.f32.mrf.mxu0
        %v2472 = vadd.f32 0.0, %v2471
        %v2473 = vpop.f32.mrf.mxu0
        %v2474 = vpop.f32.mrf.mxu0
        %v2475 = vadd.f32 0.0, %v2474
        %v2476 = vpop.f32.mrf.mxu0
        %2477 = vmatprep.mubr.bf16.mxu0 0
        %2478 = vmatmul.mubr.bf16.gmra.mxu0 %v2435
        %v2479 = vpop.f32.mrf.mxu0
        %v2480 = vadd.f32 0.0, %v2479
        %v2481 = vpop.f32.mrf.mxu0
        %v2482 = vpop.f32.mrf.mxu0
        %v2483 = vpop.f32.mrf.mxu0
        %2484 = vdwg.mxu0
        %v2485 = vadd.f32 %v1924, %v2472
        %v2486 = vadd.f32 %v1925, %v2475
        %v2487 = vadd.f32 %v1926, %v2480
        %s2488 = scalar_lea.vmem %s7, 1
        %v2489 = vld [vmem:[%s2488] sm:$0x1]
        %s2490 = scalar_lea.vmem %s8, 1
        %v2491 = vld [vmem:[%s2490] sm:$0x1]
        %v2492 = vsel %vm1071, %v2485, 0.0
        %2493 = vadd.xlane.f32.xlu0 %v2492
        %v2494 = vpop.xlane.xlu0 %2493
        %v2495 = vsel %vm1071, %v2486, 0.0
        %2496 = vadd.xlane.f32.xlu0 %v2495
        %v2497 = vpop.xlane.xlu0 %2496
        %v2498 = vsel %vm1078, %v2487, 0.0
        %2499 = vadd.xlane.f32.xlu0 %v2498
        %v2500 = vpop.xlane.xlu0 %2499
        %v2501 = vmul.f32 %v2494, %v1082
        %v2502 = vmul.f32 %v2497, %v1082
        %v2503 = vmul.f32 %v2500, %v1082
        %v2504 = vsub.f32 %v2485, %v2501
        %v2505 = vsub.f32 %v2486, %v2502
        %v2506 = vsub.f32 %v2487, %v2503
        %v2507 = vmul.f32 %v2504, %v2504
        %v2508 = vmul.f32 %v2505, %v2505
        %v2509 = vmul.f32 %v2506, %v2506
        %v2510 = vsel %vm1071, %v2507, 0.0
        %2511 = vadd.xlane.f32.xlu0 %v2510
        %v2512 = vpop.xlane.xlu0 %2511
        %v2513 = vsel %vm1071, %v2508, 0.0
        %2514 = vadd.xlane.f32.xlu0 %v2513
        %v2515 = vpop.xlane.xlu0 %2514
        %v2516 = vsel %vm1078, %v2509, 0.0
        %2517 = vadd.xlane.f32.xlu0 %v2516
        %v2518 = vpop.xlane.xlu0 %2517
        %v2519 = vmul.f32 %v2512, %v1082
        %v2520 = vmul.f32 %v2515, %v1082
        %v2521 = vmul.f32 %v2518, %v1082
        %v2522 = vadd.f32 %v2519, 1e-05
        %v2523 = vadd.f32 %v2520, 1e-05
        %v2524 = vadd.f32 %v2521, 1e-05
        %v2525 = vrsqrt.pop %v2522
        %v2526 = vrsqrt.pop %v2523
        %v2527 = vrsqrt.pop %v2524
        %v2528 = vmul.f32 %v2504, %v2525
        %v2529 = vmul.f32 %v2505, %v2526
        %v2530 = vmul.f32 %v2506, %v2527
        %v2532 = vlaneseq
        %v2533 = vshrl.u32 %v2532, 7
        %v2534 = vsub.s32 0, %v2533
        %v2535 = vrot.slane %v2489, %v2534
        %v2537 = vmul.f32 %v2528, %v2535
        %v2538 = vmul.f32 %v2529, %v2535
        %v2539 = vmul.f32 %v2530, %v2535
        %v2541 = vlaneseq
        %v2542 = vshrl.u32 %v2541, 7
        %v2543 = vsub.s32 0, %v2542
        %v2544 = vrot.slane %v2491, %v2543
        %v2546 = vadd.f32 %v2537, %v2544
        %v2547 = vadd.f32 %v2538, %v2544
        %v2548 = vadd.f32 %v2539, %v2544
        %s2549 = scalar_lea.vmem %s9, 16
        %v2550 = vld [vmem:[%s2549] sm:$0xf]
        %v2551 = vld [vmem:[%s2549 + $0x4] sm:$0xf]
        %v2552 = vld [vmem:[%s2549 + $0x8] sm:$0xf]
        %v2553 = vld [vmem:[%s2549 + $0xc] sm:$0xf]
        %v2554 = vpack.c.bf16 %v2547, %v2546
        %v2555 = vpack.c.bf16 %v2548, %v2548
        %s2556 = scalar_lea.vmem %s10, 1
        %v2557 = vld [vmem:[%s2556] sm:$0x1]
        %v2559 = vlaneseq
        %v2560 = vshrl.u32 %v2559, 7
        %v2561 = vsub.s32 0, %v2560
        %v2562 = vrot.slane %v2557, %v2561
        %v2568 = vunpack.c.l.b16 %v2550
        %v2569 = vunpack.c.l.b16 %v2551
        %v2570 = vunpack.c.l.b16 %v2552
        %v2571 = vunpack.c.l.b16 %v2553
        %v2572 = vpack.c.b16 %v2569, %v2568
        %v2573 = vpack.c.b16 %v2571, %v2570
        %v2577 = vsel %vm1071, %v2554, 0
        %v2580 = vsel %vm1071, %v2555, 0
        %2582 = vmatprep.subr.bf16.mxu0 0
        %2583 = vmatpush1.bf16.msra.mxu0 0
        %2584 = vmatprep.subr.bf16.mxu0 0
        %2585 = vmatpush1.bf16.msra.mxu0 0
        %2586 = vmatprep.subr.bf16.mxu0 0
        %2587 = vmatpush1.bf16.msra.mxu0 0
        %2588 = vmatprep.subr.bf16.mxu0 0
        %2589 = vmatpush1.bf16.msra.mxu0 0
        %2590 = vmatprep.subr.bf16.mxu0 0
        %2591 = vmatpush1.bf16.msra.mxu0 0
        %2592 = vmatprep.subr.bf16.mxu0 0
        %2593 = vmatpush1.bf16.msra.mxu0 0
        %2594 = vmatprep.subr.bf16.mxu0 0
        %2595 = vmatpush1.bf16.msra.mxu0 %v2573
        %2596 = vmatprep.subr.bf16.mxu0 0
        %2597 = vmatpush1.bf16.msra.mxu0 %v2572
        %2598 = vmatprep.subr.bf16.mxu0 0
        %2599 = vmatpush2.bf16.msra.mxu0 0
        %2600 = vmatprep.subr.bf16.mxu0 0
        %2601 = vmatpush2.bf16.msra.mxu0 0
        %2602 = vmatprep.subr.bf16.mxu0 0
        %2603 = vmatpush2.bf16.msra.mxu0 0
        %2604 = vmatprep.subr.bf16.mxu0 0
        %2605 = vmatpush2.bf16.msra.mxu0 0
        %2606 = vmatprep.subr.bf16.mxu0 0
        %2607 = vmatpush2.bf16.msra.mxu0 0
        %2608 = vmatprep.subr.bf16.mxu0 0
        %2609 = vmatpush2.bf16.msra.mxu0 0
        %2610 = vmatprep.subr.bf16.mxu0 0
        %2611 = vmatpush2.bf16.msra.mxu0 0
        %2612 = vmatprep.subr.bf16.mxu0 0
        %2613 = vmatpush2.bf16.msra.mxu0 0
        %2614 = vmatprep.mubr.bf16.mxu0 0
        %2615 = vmatmul.mubr.bf16.gmra.mxu0 %v2577
        %v2616 = vpop.f32.mrf.mxu0
        %v2617 = vadd.f32 %v2562, %v2616
        %v2618 = vpop.f32.mrf.mxu0
        %v2619 = vpop.f32.mrf.mxu0
        %v2620 = vadd.f32 %v2562, %v2619
        %v2621 = vpop.f32.mrf.mxu0
        %2622 = vmatprep.mubr.bf16.mxu0 0
        %2623 = vmatmul.mubr.bf16.gmra.mxu0 %v2580
        %v2624 = vpop.f32.mrf.mxu0
        %v2625 = vadd.f32 %v2562, %v2624
        %v2626 = vpop.f32.mrf.mxu0
        %v2627 = vpop.f32.mrf.mxu0
        %v2628 = vpop.f32.mrf.mxu0
        %2629 = vdwg.mxu0
        %v2630 = vmul.f32 %v2617, 0.5
        %v2631 = vmul.f32 %v2620, 0.5
        %v2632 = vmul.f32 %v2625, 0.5
        %v2633 = vmul.f32 %v2617, 0.044715
        %v2634 = vmul.f32 %v2620, 0.044715
        %v2635 = vmul.f32 %v2625, 0.044715
        %v2636 = vmul.f32 %v2633, %v2617
        %v2637 = vmul.f32 %v2634, %v2620
        %v2638 = vmul.f32 %v2635, %v2625
        %v2639 = vmul.f32 %v2636, %v2617
        %v2640 = vmul.f32 %v2637, %v2620
        %v2641 = vmul.f32 %v2638, %v2625
        %v2642 = vadd.f32 %v2617, %v2639
        %v2643 = vadd.f32 %v2620, %v2640
        %v2644 = vadd.f32 %v2625, %v2641
        %v2645 = vmul.f32 %v2642, 0.7978846
        %v2646 = vmul.f32 %v2643, 0.7978846
        %v2647 = vmul.f32 %v2644, 0.7978846
        %v2648 = vtanh.pop %v2645
        %v2649 = vtanh.pop %v2646
        %v2650 = vtanh.pop %v2647
        %v2651 = vadd.f32 %v2648, 1.0
        %v2652 = vadd.f32 %v2649, 1.0
        %v2653 = vadd.f32 %v2650, 1.0
        %v2654 = vmul.f32 %v2630, %v2651
        %v2655 = vmul.f32 %v2631, %v2652
        %v2656 = vmul.f32 %v2632, %v2653
        %s2657 = scalar_lea.vmem %s11, 64
        %v2658 = vld [vmem:[%s2657] sm:$0xf]
        %v2659 = vld [vmem:[%s2657 + $0x4] sm:$0xf]
        %v2660 = vld [vmem:[%s2657 + $0x8] sm:$0xf]
        %v2661 = vld [vmem:[%s2657 + $0xc] sm:$0xf]
        %v2662 = vld [vmem:[%s2657 + $0x10] sm:$0xf]
        %v2663 = vld [vmem:[%s2657 + $0x14] sm:$0xf]
        %v2664 = vld [vmem:[%s2657 + $0x18] sm:$0xf]
        %v2665 = vld [vmem:[%s2657 + $0x1c] sm:$0xf]
        %v2666 = vld [vmem:[%s2657 + $0x20] sm:$0xf]
        %v2667 = vld [vmem:[%s2657 + $0x24] sm:$0xf]
        %v2668 = vld [vmem:[%s2657 + $0x28] sm:$0xf]
        %v2669 = vld [vmem:[%s2657 + $0x2c] sm:$0xf]
        %v2670 = vld [vmem:[%s2657 + $0x30] sm:$0xf]
        %v2671 = vld [vmem:[%s2657 + $0x34] sm:$0xf]
        %v2672 = vld [vmem:[%s2657 + $0x38] sm:$0xf]
        %v2673 = vld [vmem:[%s2657 + $0x3c] sm:$0xf]
        %v2674 = vpack.c.bf16 %v2655, %v2654
        %v2675 = vpack.c.bf16 %v2656, %v2656
        %v2692 = vunpack.c.l.b16 %v2658
        %v2693 = vunpack.c.l.b16 %v2659
        %v2694 = vunpack.c.l.b16 %v2660
        %v2695 = vunpack.c.l.b16 %v2661
        %v2696 = vunpack.c.l.b16 %v2662
        %v2697 = vunpack.c.l.b16 %v2663
        %v2698 = vunpack.c.l.b16 %v2664
        %v2699 = vunpack.c.l.b16 %v2665
        %v2700 = vunpack.c.l.b16 %v2666
        %v2701 = vunpack.c.l.b16 %v2667
        %v2702 = vunpack.c.l.b16 %v2668
        %v2703 = vunpack.c.l.b16 %v2669
        %v2704 = vunpack.c.l.b16 %v2670
        %v2705 = vunpack.c.l.b16 %v2671
        %v2706 = vunpack.c.l.b16 %v2672
        %v2707 = vunpack.c.l.b16 %v2673
        %v2708 = vpack.c.b16 %v2693, %v2692
        %v2709 = vpack.c.b16 %v2695, %v2694
        %v2710 = vpack.c.b16 %v2697, %v2696
        %v2711 = vpack.c.b16 %v2699, %v2698
        %v2712 = vpack.c.b16 %v2701, %v2700
        %v2713 = vpack.c.b16 %v2703, %v2702
        %v2714 = vpack.c.b16 %v2705, %v2704
        %v2715 = vpack.c.b16 %v2707, %v2706
        %2724 = vmatprep.subr.bf16.mxu0 0
        %2725 = vmatpush1.bf16.msra.mxu0 %v2715
        %2726 = vmatprep.subr.bf16.mxu0 0
        %2727 = vmatpush1.bf16.msra.mxu0 %v2714
        %2728 = vmatprep.subr.bf16.mxu0 0
        %2729 = vmatpush1.bf16.msra.mxu0 %v2713
        %2730 = vmatprep.subr.bf16.mxu0 0
        %2731 = vmatpush1.bf16.msra.mxu0 %v2712
        %2732 = vmatprep.subr.bf16.mxu0 0
        %2733 = vmatpush1.bf16.msra.mxu0 %v2711
        %2734 = vmatprep.subr.bf16.mxu0 0
        %2735 = vmatpush1.bf16.msra.mxu0 %v2710
        %2736 = vmatprep.subr.bf16.mxu0 0
        %2737 = vmatpush1.bf16.msra.mxu0 %v2709
        %2738 = vmatprep.subr.bf16.mxu0 0
        %2739 = vmatpush1.bf16.msra.mxu0 %v2708
        %2740 = vmatprep.subr.bf16.mxu0 0
        %2741 = vmatpush2.bf16.msra.mxu0 0
        %2742 = vmatprep.subr.bf16.mxu0 0
        %2743 = vmatpush2.bf16.msra.mxu0 0
        %2744 = vmatprep.subr.bf16.mxu0 0
        %2745 = vmatpush2.bf16.msra.mxu0 0
        %2746 = vmatprep.subr.bf16.mxu0 0
        %2747 = vmatpush2.bf16.msra.mxu0 0
        %2748 = vmatprep.subr.bf16.mxu0 0
        %2749 = vmatpush2.bf16.msra.mxu0 0
        %2750 = vmatprep.subr.bf16.mxu0 0
        %2751 = vmatpush2.bf16.msra.mxu0 0
        %2752 = vmatprep.subr.bf16.mxu0 0
        %2753 = vmatpush2.bf16.msra.mxu0 0
        %2754 = vmatprep.subr.bf16.mxu0 0
        %2755 = vmatpush2.bf16.msra.mxu0 0
        %2756 = vmatprep.mubr.bf16.mxu0 0
        %2757 = vmatmul.mubr.bf16.gmra.mxu0 %v2674
        %v2758 = vpop.f32.mrf.mxu0
        %v2759 = vadd.f32 0.0, %v2758
        %v2760 = vpop.f32.mrf.mxu0
        %v2761 = vpop.f32.mrf.mxu0
        %v2762 = vadd.f32 0.0, %v2761
        %v2763 = vpop.f32.mrf.mxu0
        %2764 = vmatprep.mubr.bf16.mxu0 0
        %2765 = vmatmul.mubr.bf16.gmra.mxu0 %v2675
        %v2766 = vpop.f32.mrf.mxu0
        %v2767 = vadd.f32 0.0, %v2766
        %v2768 = vpop.f32.mrf.mxu0
        %v2769 = vpop.f32.mrf.mxu0
        %v2770 = vpop.f32.mrf.mxu0
        %2771 = vdwg.mxu0
        %v2772 = vadd.f32 %v2485, %v2759
        %v2773 = vadd.f32 %v2486, %v2762
        %v2774 = vadd.f32 %v2487, %v2767
        %s2775 = scalar_lea.vmem %s12, 1
        %v2776 = vld [vmem:[%s2775] sm:$0x1]
        %v2778 = vlaneseq
        %v2779 = vshrl.u32 %v2778, 7
        %v2780 = vsub.s32 0, %v2779
        %v2781 = vrot.slane %v2776, %v2780
        %v2783 = vadd.f32 %v2772, %v2781
        %v2784 = vadd.f32 %v2773, %v2781
        %v2785 = vadd.f32 %v2774, %v2781
        %s2786 = scalar_lea.vmem %s3, 2
        %v2787 = vld [vmem:[%s2786] sm:$0x1]
        %s2788 = scalar_lea.vmem %s4, 2
        %v2789 = vld [vmem:[%s2788] sm:$0x1]
        %v2790 = vsel %vm1071, %v2783, 0.0
        %2791 = vadd.xlane.f32.xlu0 %v2790
        %v2792 = vpop.xlane.xlu0 %2791
        %v2793 = vsel %vm1071, %v2784, 0.0
        %2794 = vadd.xlane.f32.xlu0 %v2793
        %v2795 = vpop.xlane.xlu0 %2794
        %v2796 = vsel %vm1078, %v2785, 0.0
        %2797 = vadd.xlane.f32.xlu0 %v2796
        %v2798 = vpop.xlane.xlu0 %2797
        %v2799 = vmul.f32 %v2792, %v1082
        %v2800 = vmul.f32 %v2795, %v1082
        %v2801 = vmul.f32 %v2798, %v1082
        %v2802 = vsub.f32 %v2783, %v2799
        %v2803 = vsub.f32 %v2784, %v2800
        %v2804 = vsub.f32 %v2785, %v2801
        %v2805 = vmul.f32 %v2802, %v2802
        %v2806 = vmul.f32 %v2803, %v2803
        %v2807 = vmul.f32 %v2804, %v2804
        %v2808 = vsel %vm1071, %v2805, 0.0
        %2809 = vadd.xlane.f32.xlu0 %v2808
        %v2810 = vpop.xlane.xlu0 %2809
        %v2811 = vsel %vm1071, %v2806, 0.0
        %2812 = vadd.xlane.f32.xlu0 %v2811
        %v2813 = vpop.xlane.xlu0 %2812
        %v2814 = vsel %vm1078, %v2807, 0.0
        %2815 = vadd.xlane.f32.xlu0 %v2814
        %v2816 = vpop.xlane.xlu0 %2815
        %v2817 = vmul.f32 %v2810, %v1082
        %v2818 = vmul.f32 %v2813, %v1082
        %v2819 = vmul.f32 %v2816, %v1082
        %v2820 = vadd.f32 %v2817, 1e-05
        %v2821 = vadd.f32 %v2818, 1e-05
        %v2822 = vadd.f32 %v2819, 1e-05
        %v2823 = vrsqrt.pop %v2820
        %v2824 = vrsqrt.pop %v2821
        %v2825 = vrsqrt.pop %v2822
        %v2826 = vmul.f32 %v2802, %v2823
        %v2827 = vmul.f32 %v2803, %v2824
        %v2828 = vmul.f32 %v2804, %v2825
        %v2830 = vlaneseq
        %v2831 = vshrl.u32 %v2830, 7
        %v2832 = vsub.s32 0, %v2831
        %v2833 = vrot.slane %v2787, %v2832
        %v2835 = vmul.f32 %v2826, %v2833
        %v2836 = vmul.f32 %v2827, %v2833
        %v2837 = vmul.f32 %v2828, %v2833
        %v2839 = vlaneseq
        %v2840 = vshrl.u32 %v2839, 7
        %v2841 = vsub.s32 0, %v2840
        %v2842 = vrot.slane %v2789, %v2841
        %v2844 = vadd.f32 %v2835, %v2842
        %v2845 = vadd.f32 %v2836, %v2842
        %v2846 = vadd.f32 %v2837, %v2842
        %s2847 = scalar_lea.vmem %s5, 32
        %v2848 = vld [vmem:[%s2847] sm:$0xf]
        %v2849 = vld [vmem:[%s2847 + $0x4] sm:$0xf]
        %v2850 = vld [vmem:[%s2847 + $0x8] sm:$0xf]
        %v2851 = vld [vmem:[%s2847 + $0xc] sm:$0xf]
        %v2852 = vpack.c.bf16 %v2845, %v2844
        %v2853 = vpack.c.bf16 %v2846, %v2846
        %v2858 = vunpack.c.l.b16 %v2848
        %v2859 = vunpack.c.l.b16 %v2849
        %v2860 = vunpack.c.l.b16 %v2850
        %v2861 = vunpack.c.l.b16 %v2851
        %v2862 = vpack.c.b16 %v2859, %v2858
        %v2863 = vpack.c.b16 %v2861, %v2860
        %v2867 = vsel %vm1071, %v2852, 0
        %v2870 = vsel %vm1071, %v2853, 0
        %2872 = vmatprep.subr.bf16.mxu0 0
        %2873 = vmatpush1.bf16.msra.mxu0 0
        %2874 = vmatprep.subr.bf16.mxu0 0
        %2875 = vmatpush1.bf16.msra.mxu0 0
        %2876 = vmatprep.subr.bf16.mxu0 0
        %2877 = vmatpush1.bf16.msra.mxu0 0
        %2878 = vmatprep.subr.bf16.mxu0 0
        %2879 = vmatpush1.bf16.msra.mxu0 0
        %2880 = vmatprep.subr.bf16.mxu0 0
        %2881 = vmatpush1.bf16.msra.mxu0 0
        %2882 = vmatprep.subr.bf16.mxu0 0
        %2883 = vmatpush1.bf16.msra.mxu0 0
        %2884 = vmatprep.subr.bf16.mxu0 0
        %2885 = vmatpush1.bf16.msra.mxu0 %v2863
        %2886 = vmatprep.subr.bf16.mxu0 0
        %2887 = vmatpush1.bf16.msra.mxu0 %v2862
        %2888 = vmatprep.subr.bf16.mxu0 0
        %2889 = vmatpush2.bf16.msra.mxu0 0
        %2890 = vmatprep.subr.bf16.mxu0 0
        %2891 = vmatpush2.bf16.msra.mxu0 0
        %2892 = vmatprep.subr.bf16.mxu0 0
        %2893 = vmatpush2.bf16.msra.mxu0 0
        %2894 = vmatprep.subr.bf16.mxu0 0
        %2895 = vmatpush2.bf16.msra.mxu0 0
        %2896 = vmatprep.subr.bf16.mxu0 0
        %2897 = vmatpush2.bf16.msra.mxu0 0
        %2898 = vmatprep.subr.bf16.mxu0 0
        %2899 = vmatpush2.bf16.msra.mxu0 0
        %2900 = vmatprep.subr.bf16.mxu0 0
        %2901 = vmatpush2.bf16.msra.mxu0 0
        %2902 = vmatprep.subr.bf16.mxu0 0
        %2903 = vmatpush2.bf16.msra.mxu0 0
        %2904 = vmatprep.mubr.bf16.mxu0 0
        %2905 = vmatmul.mubr.bf16.gmra.mxu0 %v2867
        %v2906 = vpop.f32.mrf.mxu0
        %v2907 = vadd.f32 0.0, %v2906
        %v2908 = vpop.f32.mrf.mxu0
        %v2909 = vpop.f32.mrf.mxu0
        %v2910 = vadd.f32 0.0, %v2909
        %v2911 = vpop.f32.mrf.mxu0
        %2912 = vmatprep.mubr.bf16.mxu0 0
        %2913 = vmatmul.mubr.bf16.gmra.mxu0 %v2870
        %v2914 = vpop.f32.mrf.mxu0
        %v2915 = vadd.f32 0.0, %v2914
        %v2916 = vpop.f32.mrf.mxu0
        %v2917 = vpop.f32.mrf.mxu0
        %v2918 = vpop.f32.mrf.mxu0
        %2919 = vdwg.mxu0
        %v2920 = vpack.c.bf16 %v2910, %v2907
        %v2921 = vpack.c.bf16 %v2915, %v2915
        %2924 = vrot.lane.b32.xlu0 %v2920, 96
        %v2925 = vpop.permute.xlu0 %2924
        %2926 = vrot.lane.b32.xlu0 %v2921, 96
        %v2927 = vpop.permute.xlu0 %2926
        %v2929 = vsel %vm1211, %v2920, 0
        %v2932 = vsel %vm1211, %v2921, 0
        %v2935 = vsel %vm1211, %v2925, 0
        %v2938 = vsel %vm1211, %v2927, 0
        %2940 = vmatprep.subr.bf16.mxu0 0
        %2941 = vmatpush1.bf16.xpose.msra.mxu0 0
        %2942 = vmatprep.subr.bf16.mxu0 0
        %2943 = vmatpush1.bf16.xpose.msra.mxu0 0
        %2944 = vmatprep.subr.bf16.mxu0 0
        %2945 = vmatpush1.bf16.xpose.msra.mxu0 0
        %2946 = vmatprep.subr.bf16.mxu0 0
        %2947 = vmatpush1.bf16.xpose.msra.mxu0 0
        %2948 = vmatprep.subr.bf16.mxu0 0
        %2949 = vmatpush1.bf16.xpose.msra.mxu0 0
        %2950 = vmatprep.subr.bf16.mxu0 0
        %2951 = vmatpush1.bf16.xpose.msra.mxu0 0
        %2952 = vmatprep.subr.bf16.mxu0 0
        %2953 = vmatpush1.bf16.xpose.msra.mxu0 %v2938
        %2954 = vmatprep.subr.bf16.mxu0 0
        %2955 = vmatpush1.bf16.xpose.msra.mxu0 %v2935
        %2956 = vmatprep.subr.bf16.mxu0 0
        %2957 = vmatpush2.bf16.xpose.msra.mxu0 0
        %2958 = vmatprep.subr.bf16.mxu0 0
        %2959 = vmatpush2.bf16.xpose.msra.mxu0 0
        %2960 = vmatprep.subr.bf16.mxu0 0
        %2961 = vmatpush2.bf16.xpose.msra.mxu0 0
        %2962 = vmatprep.subr.bf16.mxu0 0
        %2963 = vmatpush2.bf16.xpose.msra.mxu0 0
        %2964 = vmatprep.subr.bf16.mxu0 0
        %2965 = vmatpush2.bf16.xpose.msra.mxu0 0
        %2966 = vmatprep.subr.bf16.mxu0 0
        %2967 = vmatpush2.bf16.xpose.msra.mxu0 0
        %2968 = vmatprep.subr.bf16.mxu0 0
        %2969 = vmatpush2.bf16.xpose.msra.mxu0 0
        %2970 = vmatprep.subr.bf16.mxu0 0
        %2971 = vmatpush2.bf16.xpose.msra.mxu0 0
        %2972 = vmatprep.mubr.bf16.mxu0 0
        %2973 = vmatmul.mubr.bf16.gmra.mxu0 %v2929
        %v2974 = vpop.f32.mrf.mxu0
        %v2975 = vadd.f32 0.0, %v2974
        %v2976 = vpop.f32.mrf.mxu0
        %v2977 = vpop.f32.mrf.mxu0
        %v2978 = vadd.f32 0.0, %v2977
        %v2979 = vpop.f32.mrf.mxu0
        %2980 = vmatprep.mubr.bf16.mxu0 0
        %2981 = vmatmul.mubr.bf16.gmra.mxu0 %v2932
        %v2982 = vpop.f32.mrf.mxu0
        %v2983 = vadd.f32 0.0, %v2982
        %v2984 = vpop.f32.mrf.mxu0
        %v2985 = vpop.f32.mrf.mxu0
        %v2986 = vpop.f32.mrf.mxu0
        %2987 = vdwg.mxu0
        %v2988 = vmul.f32 %v2975, 0.25
        %v2989 = vmul.f32 %v2978, 0.25
        %v2990 = vmul.f32 %v2983, 0.25
        %v2991 = vsel %vm1275, %v2988, -inf
        %2992 = vmax.xlane.f32.xlu0 %v2991
        %v2993 = vpop.xlane.xlu0 %2992
        %v2994 = vsel %vm1275, %v2989, -inf
        %2995 = vmax.xlane.f32.xlu0 %v2994
        %v2996 = vpop.xlane.xlu0 %2995
        %v2997 = vsel %vm1282, %v2990, -inf
        %2998 = vmax.xlane.f32.xlu0 %v2997
        %v2999 = vpop.xlane.xlu0 %2998
        %v3000 = vsub.f32 %v2988, %v2993
        %v3001 = vsub.f32 %v2989, %v2996
        %v3002 = vsub.f32 %v2990, %v2999
        %v3003 = vmul.f32 %v3000, 1.442695
        %v3004 = vpow.pop %v3003
        %v3005 = vmul.f32 %v3001, 1.442695
        %v3006 = vpow.pop %v3005
        %v3007 = vmul.f32 %v3002, 1.442695
        %v3008 = vpow.pop %v3007
        %v3009 = vsel %vm1275, %v3004, 0.0
        %3010 = vadd.xlane.f32.xlu0 %v3009
        %v3011 = vpop.xlane.xlu0 %3010
        %v3012 = vsel %vm1275, %v3006, 0.0
        %3013 = vadd.xlane.f32.xlu0 %v3012
        %v3014 = vpop.xlane.xlu0 %3013
        %v3015 = vsel %vm1282, %v3008, 0.0
        %3016 = vadd.xlane.f32.xlu0 %v3015
        %v3017 = vpop.xlane.xlu0 %3016
        %v3018 = vrcp.pop %v3011
        %v3019 = vrcp.pop %v3014
        %v3020 = vrcp.pop %v3017
        %v3021 = vmul.f32 %v3004, %v3018
        %v3022 = vmul.f32 %v3006, %v3019
        %v3023 = vmul.f32 %v3008, %v3020
        %v3024 = vpack.c.bf16 %v3022, %v3021
        %v3025 = vpack.c.bf16 %v3023, %v3023
        %3026 = vrot.lane.b32.xlu0 %v2920, 64
        %v3027 = vpop.permute.xlu0 %3026
        %3028 = vrot.lane.b32.xlu0 %v2921, 64
        %v3029 = vpop.permute.xlu0 %3028
        %v3032 = vsel %vm1275, %v3024, 0
        %v3035 = vsel %vm1275, %v3025, 0
        %v3038 = vand.u32 %v3029, %v1325
        %3040 = vmatprep.subr.bf16.mxu0 0
        %3041 = vmatpush1.bf16.msra.mxu0 0
        %3042 = vmatprep.subr.bf16.mxu0 0
        %3043 = vmatpush1.bf16.msra.mxu0 0
        %3044 = vmatprep.subr.bf16.mxu0 0
        %3045 = vmatpush1.bf16.msra.mxu0 0
        %3046 = vmatprep.subr.bf16.mxu0 0
        %3047 = vmatpush1.bf16.msra.mxu0 0
        %3048 = vmatprep.subr.bf16.mxu0 0
        %3049 = vmatpush1.bf16.msra.mxu0 0
        %3050 = vmatprep.subr.bf16.mxu0 0
        %3051 = vmatpush1.bf16.msra.mxu0 0
        %3052 = vmatprep.subr.bf16.mxu0 0
        %3053 = vmatpush1.bf16.msra.mxu0 %v3038
        %3054 = vmatprep.subr.bf16.mxu0 0
        %3055 = vmatpush1.bf16.msra.mxu0 %v3027
        %3056 = vmatprep.subr.bf16.mxu0 0
        %3057 = vmatpush2.bf16.msra.mxu0 0
        %3058 = vmatprep.subr.bf16.mxu0 0
        %3059 = vmatpush2.bf16.msra.mxu0 0
        %3060 = vmatprep.subr.bf16.mxu0 0
        %3061 = vmatpush2.bf16.msra.mxu0 0
        %3062 = vmatprep.subr.bf16.mxu0 0
        %3063 = vmatpush2.bf16.msra.mxu0 0
        %3064 = vmatprep.subr.bf16.mxu0 0
        %3065 = vmatpush2.bf16.msra.mxu0 0
        %3066 = vmatprep.subr.bf16.mxu0 0
        %3067 = vmatpush2.bf16.msra.mxu0 0
        %3068 = vmatprep.subr.bf16.mxu0 0
        %3069 = vmatpush2.bf16.msra.mxu0 0
        %3070 = vmatprep.subr.bf16.mxu0 0
        %3071 = vmatpush2.bf16.msra.mxu0 0
        %3072 = vmatprep.mubr.bf16.mxu0 0
        %3073 = vmatmul.mubr.bf16.gmra.mxu0 %v3032
        %v3074 = vpop.f32.mrf.mxu0
        %v3075 = vadd.f32 0.0, %v3074
        %v3076 = vpop.f32.mrf.mxu0
        %v3077 = vpop.f32.mrf.mxu0
        %v3078 = vadd.f32 0.0, %v3077
        %v3079 = vpop.f32.mrf.mxu0
        %3080 = vmatprep.mubr.bf16.mxu0 0
        %3081 = vmatmul.mubr.bf16.gmra.mxu0 %v3035
        %v3082 = vpop.f32.mrf.mxu0
        %v3083 = vadd.f32 0.0, %v3082
        %v3084 = vpop.f32.mrf.mxu0
        %v3085 = vpop.f32.mrf.mxu0
        %v3086 = vpop.f32.mrf.mxu0
        %3087 = vdwg.mxu0
        %3088 = vrot.lane.b32.xlu0 %v2920, 112
        %v3089 = vpop.permute.xlu0 %3088
        %3090 = vrot.lane.b32.xlu0 %v2921, 112
        %v3091 = vpop.permute.xlu0 %3090
        %3092 = vrot.lane.b32.xlu0 %v2920, 80
        %v3093 = vpop.permute.xlu0 %3092
        %3094 = vrot.lane.b32.xlu0 %v2921, 80
        %v3095 = vpop.permute.xlu0 %3094
        %v3097 = vsel %vm1211, %v3089, 0
        %v3100 = vsel %vm1211, %v3091, 0
        %v3103 = vsel %vm1211, %v3093, 0
        %v3106 = vsel %vm1211, %v3095, 0
        %3108 = vmatprep.subr.bf16.mxu0 0
        %3109 = vmatpush1.bf16.xpose.msra.mxu0 0
        %3110 = vmatprep.subr.bf16.mxu0 0
        %3111 = vmatpush1.bf16.xpose.msra.mxu0 0
        %3112 = vmatprep.subr.bf16.mxu0 0
        %3113 = vmatpush1.bf16.xpose.msra.mxu0 0
        %3114 = vmatprep.subr.bf16.mxu0 0
        %3115 = vmatpush1.bf16.xpose.msra.mxu0 0
        %3116 = vmatprep.subr.bf16.mxu0 0
        %3117 = vmatpush1.bf16.xpose.msra.mxu0 0
        %3118 = vmatprep.subr.bf16.mxu0 0
        %3119 = vmatpush1.bf16.xpose.msra.mxu0 0
        %3120 = vmatprep.subr.bf16.mxu0 0
        %3121 = vmatpush1.bf16.xpose.msra.mxu0 %v3106
        %3122 = vmatprep.subr.bf16.mxu0 0
        %3123 = vmatpush1.bf16.xpose.msra.mxu0 %v3103
        %3124 = vmatprep.subr.bf16.mxu0 0
        %3125 = vmatpush2.bf16.xpose.msra.mxu0 0
        %3126 = vmatprep.subr.bf16.mxu0 0
        %3127 = vmatpush2.bf16.xpose.msra.mxu0 0
        %3128 = vmatprep.subr.bf16.mxu0 0
        %3129 = vmatpush2.bf16.xpose.msra.mxu0 0
        %3130 = vmatprep.subr.bf16.mxu0 0
        %3131 = vmatpush2.bf16.xpose.msra.mxu0 0
        %3132 = vmatprep.subr.bf16.mxu0 0
        %3133 = vmatpush2.bf16.xpose.msra.mxu0 0
        %3134 = vmatprep.subr.bf16.mxu0 0
        %3135 = vmatpush2.bf16.xpose.msra.mxu0 0
        %3136 = vmatprep.subr.bf16.mxu0 0
        %3137 = vmatpush2.bf16.xpose.msra.mxu0 0
        %3138 = vmatprep.subr.bf16.mxu0 0
        %3139 = vmatpush2.bf16.xpose.msra.mxu0 0
        %3140 = vmatprep.mubr.bf16.mxu0 0
        %3141 = vmatmul.mubr.bf16.gmra.mxu0 %v3097
        %v3142 = vpop.f32.mrf.mxu0
        %v3143 = vadd.f32 0.0, %v3142
        %v3144 = vpop.f32.mrf.mxu0
        %v3145 = vpop.f32.mrf.mxu0
        %v3146 = vadd.f32 0.0, %v3145
        %v3147 = vpop.f32.mrf.mxu0
        %3148 = vmatprep.mubr.bf16.mxu0 0
        %3149 = vmatmul.mubr.bf16.gmra.mxu0 %v3100
        %v3150 = vpop.f32.mrf.mxu0
        %v3151 = vadd.f32 0.0, %v3150
        %v3152 = vpop.f32.mrf.mxu0
        %v3153 = vpop.f32.mrf.mxu0
        %v3154 = vpop.f32.mrf.mxu0
        %3155 = vdwg.mxu0
        %v3156 = vmul.f32 %v3143, 0.25
        %v3157 = vmul.f32 %v3146, 0.25
        %v3158 = vmul.f32 %v3151, 0.25
        %v3159 = vsel %vm1275, %v3156, -inf
        %3160 = vmax.xlane.f32.xlu0 %v3159
        %v3161 = vpop.xlane.xlu0 %3160
        %v3162 = vsel %vm1275, %v3157, -inf
        %3163 = vmax.xlane.f32.xlu0 %v3162
        %v3164 = vpop.xlane.xlu0 %3163
        %v3165 = vsel %vm1282, %v3158, -inf
        %3166 = vmax.xlane.f32.xlu0 %v3165
        %v3167 = vpop.xlane.xlu0 %3166
        %v3168 = vsub.f32 %v3156, %v3161
        %v3169 = vsub.f32 %v3157, %v3164
        %v3170 = vsub.f32 %v3158, %v3167
        %v3171 = vmul.f32 %v3168, 1.442695
        %v3172 = vpow.pop %v3171
        %v3173 = vmul.f32 %v3169, 1.442695
        %v3174 = vpow.pop %v3173
        %v3175 = vmul.f32 %v3170, 1.442695
        %v3176 = vpow.pop %v3175
        %v3177 = vsel %vm1275, %v3172, 0.0
        %3178 = vadd.xlane.f32.xlu0 %v3177
        %v3179 = vpop.xlane.xlu0 %3178
        %v3180 = vsel %vm1275, %v3174, 0.0
        %3181 = vadd.xlane.f32.xlu0 %v3180
        %v3182 = vpop.xlane.xlu0 %3181
        %v3183 = vsel %vm1282, %v3176, 0.0
        %3184 = vadd.xlane.f32.xlu0 %v3183
        %v3185 = vpop.xlane.xlu0 %3184
        %v3186 = vrcp.pop %v3179
        %v3187 = vrcp.pop %v3182
        %v3188 = vrcp.pop %v3185
        %v3189 = vmul.f32 %v3172, %v3186
        %v3190 = vmul.f32 %v3174, %v3187
        %v3191 = vmul.f32 %v3176, %v3188
        %v3192 = vpack.c.bf16 %v3190, %v3189
        %v3193 = vpack.c.bf16 %v3191, %v3191
        %3194 = vrot.lane.b32.xlu0 %v2920, 48
        %v3195 = vpop.permute.xlu0 %3194
        %3196 = vrot.lane.b32.xlu0 %v2921, 48
        %v3197 = vpop.permute.xlu0 %3196
        %v3200 = vsel %vm1275, %v3192, 0
        %v3203 = vsel %vm1275, %v3193, 0
        %v3206 = vand.u32 %v3197, %v1325
        %3208 = vmatprep.subr.bf16.mxu0 0
        %3209 = vmatpush1.bf16.msra.mxu0 0
        %3210 = vmatprep.subr.bf16.mxu0 0
        %3211 = vmatpush1.bf16.msra.mxu0 0
        %3212 = vmatprep.subr.bf16.mxu0 0
        %3213 = vmatpush1.bf16.msra.mxu0 0
        %3214 = vmatprep.subr.bf16.mxu0 0
        %3215 = vmatpush1.bf16.msra.mxu0 0
        %3216 = vmatprep.subr.bf16.mxu0 0
        %3217 = vmatpush1.bf16.msra.mxu0 0
        %3218 = vmatprep.subr.bf16.mxu0 0
        %3219 = vmatpush1.bf16.msra.mxu0 0
        %3220 = vmatprep.subr.bf16.mxu0 0
        %3221 = vmatpush1.bf16.msra.mxu0 %v3206
        %3222 = vmatprep.subr.bf16.mxu0 0
        %3223 = vmatpush1.bf16.msra.mxu0 %v3195
        %3224 = vmatprep.subr.bf16.mxu0 0
        %3225 = vmatpush2.bf16.msra.mxu0 0
        %3226 = vmatprep.subr.bf16.mxu0 0
        %3227 = vmatpush2.bf16.msra.mxu0 0
        %3228 = vmatprep.subr.bf16.mxu0 0
        %3229 = vmatpush2.bf16.msra.mxu0 0
        %3230 = vmatprep.subr.bf16.mxu0 0
        %3231 = vmatpush2.bf16.msra.mxu0 0
        %3232 = vmatprep.subr.bf16.mxu0 0
        %3233 = vmatpush2.bf16.msra.mxu0 0
        %3234 = vmatprep.subr.bf16.mxu0 0
        %3235 = vmatpush2.bf16.msra.mxu0 0
        %3236 = vmatprep.subr.bf16.mxu0 0
        %3237 = vmatpush2.bf16.msra.mxu0 0
        %3238 = vmatprep.subr.bf16.mxu0 0
        %3239 = vmatpush2.bf16.msra.mxu0 0
        %3240 = vmatprep.mubr.bf16.mxu0 0
        %3241 = vmatmul.mubr.bf16.gmra.mxu0 %v3200
        %v3242 = vpop.f32.mrf.mxu0
        %v3243 = vadd.f32 0.0, %v3242
        %v3244 = vpop.f32.mrf.mxu0
        %v3245 = vpop.f32.mrf.mxu0
        %v3246 = vadd.f32 0.0, %v3245
        %v3247 = vpop.f32.mrf.mxu0
        %3248 = vmatprep.mubr.bf16.mxu0 0
        %3249 = vmatmul.mubr.bf16.gmra.mxu0 %v3203
        %v3250 = vpop.f32.mrf.mxu0
        %v3251 = vadd.f32 0.0, %v3250
        %v3252 = vpop.f32.mrf.mxu0
        %v3253 = vpop.f32.mrf.mxu0
        %v3254 = vpop.f32.mrf.mxu0
        %3255 = vdwg.mxu0
        %3259 = vrot.lane.b32.xlu0 %v3243, 16
        %v3260 = vpop.permute.xlu0 %3259
        %3261 = vrot.lane.b32.xlu0 %v3246, 16
        %v3262 = vpop.permute.xlu0 %3261
        %3263 = vrot.lane.b32.xlu0 %v3251, 16
        %v3264 = vpop.permute.xlu0 %3263
        %v3268 = vsel %vm1211, %v3075, %v3260
        %v3269 = vsel %vm1211, %v3078, %v3262
        %v3270 = vsel %vm1211, %v3083, %v3264
        %s3271 = scalar_lea.vmem %s6, 32
        %v3272 = vld [vmem:[%s3271] sm:$0xf]
        %v3273 = vld [vmem:[%s3271 + $0x4] sm:$0xf]
        %v3274 = vld [vmem:[%s3271 + $0x8] sm:$0xf]
        %v3275 = vld [vmem:[%s3271 + $0xc] sm:$0xf]
        %v3276 = vpack.c.bf16 %v3269, %v3268
        %v3277 = vpack.c.bf16 %v3270, %v3270
        %v3282 = vunpack.c.l.b16 %v3272
        %v3283 = vunpack.c.l.b16 %v3273
        %v3284 = vunpack.c.l.b16 %v3274
        %v3285 = vunpack.c.l.b16 %v3275
        %v3286 = vpack.c.b16 %v3283, %v3282
        %v3287 = vpack.c.b16 %v3285, %v3284
        %v3291 = vsel %vm1071, %v3276, 0
        %v3294 = vsel %vm1071, %v3277, 0
        %3296 = vmatprep.subr.bf16.mxu0 0
        %3297 = vmatpush1.bf16.msra.mxu0 0
        %3298 = vmatprep.subr.bf16.mxu0 0
        %3299 = vmatpush1.bf16.msra.mxu0 0
        %3300 = vmatprep.subr.bf16.mxu0 0
        %3301 = vmatpush1.bf16.msra.mxu0 0
        %3302 = vmatprep.subr.bf16.mxu0 0
        %3303 = vmatpush1.bf16.msra.mxu0 0
        %3304 = vmatprep.subr.bf16.mxu0 0
        %3305 = vmatpush1.bf16.msra.mxu0 0
        %3306 = vmatprep.subr.bf16.mxu0 0
        %3307 = vmatpush1.bf16.msra.mxu0 0
        %3308 = vmatprep.subr.bf16.mxu0 0
        %3309 = vmatpush1.bf16.msra.mxu0 %v3287
        %3310 = vmatprep.subr.bf16.mxu0 0
        %3311 = vmatpush1.bf16.msra.mxu0 %v3286
        %3312 = vmatprep.subr.bf16.mxu0 0
        %3313 = vmatpush2.bf16.msra.mxu0 0
        %3314 = vmatprep.subr.bf16.mxu0 0
        %3315 = vmatpush2.bf16.msra.mxu0 0
        %3316 = vmatprep.subr.bf16.mxu0 0
        %3317 = vmatpush2.bf16.msra.mxu0 0
        %3318 = vmatprep.subr.bf16.mxu0 0
        %3319 = vmatpush2.bf16.msra.mxu0 0
        %3320 = vmatprep.subr.bf16.mxu0 0
        %3321 = vmatpush2.bf16.msra.mxu0 0
        %3322 = vmatprep.subr.bf16.mxu0 0
        %3323 = vmatpush2.bf16.msra.mxu0 0
        %3324 = vmatprep.subr.bf16.mxu0 0
        %3325 = vmatpush2.bf16.msra.mxu0 0
        %3326 = vmatprep.subr.bf16.mxu0 0
        %3327 = vmatpush2.bf16.msra.mxu0 0
        %3328 = vmatprep.mubr.bf16.mxu0 0
        %3329 = vmatmul.mubr.bf16.gmra.mxu0 %v3291
        %v3330 = vpop.f32.mrf.mxu0
        %v3331 = vadd.f32 0.0, %v3330
        %v3332 = vpop.f32.mrf.mxu0
        %v3333 = vpop.f32.mrf.mxu0
        %v3334 = vadd.f32 0.0, %v3333
        %v3335 = vpop.f32.mrf.mxu0
        %3336 = vmatprep.mubr.bf16.mxu0 0
        %3337 = vmatmul.mubr.bf16.gmra.mxu0 %v3294
        %v3338 = vpop.f32.mrf.mxu0
        %v3339 = vadd.f32 0.0, %v3338
        %v3340 = vpop.f32.mrf.mxu0
        %v3341 = vpop.f32.mrf.mxu0
        %v3342 = vpop.f32.mrf.mxu0
        %3343 = vdwg.mxu0
        %v3344 = vadd.f32 %v2783, %v3331
        %v3345 = vadd.f32 %v2784, %v3334
        %v3346 = vadd.f32 %v2785, %v3339
        %s3347 = scalar_lea.vmem %s7, 2
        %v3348 = vld [vmem:[%s3347] sm:$0x1]
        %s3349 = scalar_lea.vmem %s8, 2
        %v3350 = vld [vmem:[%s3349] sm:$0x1]
        %v3351 = vsel %vm1071, %v3344, 0.0
        %3352 = vadd.xlane.f32.xlu0 %v3351
        %v3353 = vpop.xlane.xlu0 %3352
        %v3354 = vsel %vm1071, %v3345, 0.0
        %3355 = vadd.xlane.f32.xlu0 %v3354
        %v3356 = vpop.xlane.xlu0 %3355
        %v3357 = vsel %vm1078, %v3346, 0.0
        %3358 = vadd.xlane.f32.xlu0 %v3357
        %v3359 = vpop.xlane.xlu0 %3358
        %v3360 = vmul.f32 %v3353, %v1082
        %v3361 = vmul.f32 %v3356, %v1082
        %v3362 = vmul.f32 %v3359, %v1082
        %v3363 = vsub.f32 %v3344, %v3360
        %v3364 = vsub.f32 %v3345, %v3361
        %v3365 = vsub.f32 %v3346, %v3362
        %v3366 = vmul.f32 %v3363, %v3363
        %v3367 = vmul.f32 %v3364, %v3364
        %v3368 = vmul.f32 %v3365, %v3365
        %v3369 = vsel %vm1071, %v3366, 0.0
        %3370 = vadd.xlane.f32.xlu0 %v3369
        %v3371 = vpop.xlane.xlu0 %3370
        %v3372 = vsel %vm1071, %v3367, 0.0
        %3373 = vadd.xlane.f32.xlu0 %v3372
        %v3374 = vpop.xlane.xlu0 %3373
        %v3375 = vsel %vm1078, %v3368, 0.0
        %3376 = vadd.xlane.f32.xlu0 %v3375
        %v3377 = vpop.xlane.xlu0 %3376
        %v3378 = vmul.f32 %v3371, %v1082
        %v3379 = vmul.f32 %v3374, %v1082
        %v3380 = vmul.f32 %v3377, %v1082
        %v3381 = vadd.f32 %v3378, 1e-05
        %v3382 = vadd.f32 %v3379, 1e-05
        %v3383 = vadd.f32 %v3380, 1e-05
        %v3384 = vrsqrt.pop %v3381
        %v3385 = vrsqrt.pop %v3382
        %v3386 = vrsqrt.pop %v3383
        %v3387 = vmul.f32 %v3363, %v3384
        %v3388 = vmul.f32 %v3364, %v3385
        %v3389 = vmul.f32 %v3365, %v3386
        %v3391 = vlaneseq
        %v3392 = vshrl.u32 %v3391, 7
        %v3393 = vsub.s32 0, %v3392
        %v3394 = vrot.slane %v3348, %v3393
        %v3396 = vmul.f32 %v3387, %v3394
        %v3397 = vmul.f32 %v3388, %v3394
        %v3398 = vmul.f32 %v3389, %v3394
        %v3400 = vlaneseq
        %v3401 = vshrl.u32 %v3400, 7
        %v3402 = vsub.s32 0, %v3401
        %v3403 = vrot.slane %v3350, %v3402
        %v3405 = vadd.f32 %v3396, %v3403
        %v3406 = vadd.f32 %v3397, %v3403
        %v3407 = vadd.f32 %v3398, %v3403
        %s3408 = scalar_lea.vmem %s9, 32
        %v3409 = vld [vmem:[%s3408] sm:$0xf]
        %v3410 = vld [vmem:[%s3408 + $0x4] sm:$0xf]
        %v3411 = vld [vmem:[%s3408 + $0x8] sm:$0xf]
        %v3412 = vld [vmem:[%s3408 + $0xc] sm:$0xf]
        %v3413 = vpack.c.bf16 %v3406, %v3405
        %v3414 = vpack.c.bf16 %v3407, %v3407
        %s3415 = scalar_lea.vmem %s10, 2
        %v3416 = vld [vmem:[%s3415] sm:$0x1]
        %v3418 = vlaneseq
        %v3419 = vshrl.u32 %v3418, 7
        %v3420 = vsub.s32 0, %v3419
        %v3421 = vrot.slane %v3416, %v3420
        %v3427 = vunpack.c.l.b16 %v3409
        %v3428 = vunpack.c.l.b16 %v3410
        %v3429 = vunpack.c.l.b16 %v3411
        %v3430 = vunpack.c.l.b16 %v3412
        %v3431 = vpack.c.b16 %v3428, %v3427
        %v3432 = vpack.c.b16 %v3430, %v3429
        %v3436 = vsel %vm1071, %v3413, 0
        %v3439 = vsel %vm1071, %v3414, 0
        %3441 = vmatprep.subr.bf16.mxu0 0
        %3442 = vmatpush1.bf16.msra.mxu0 0
        %3443 = vmatprep.subr.bf16.mxu0 0
        %3444 = vmatpush1.bf16.msra.mxu0 0
        %3445 = vmatprep.subr.bf16.mxu0 0
        %3446 = vmatpush1.bf16.msra.mxu0 0
        %3447 = vmatprep.subr.bf16.mxu0 0
        %3448 = vmatpush1.bf16.msra.mxu0 0
        %3449 = vmatprep.subr.bf16.mxu0 0
        %3450 = vmatpush1.bf16.msra.mxu0 0
        %3451 = vmatprep.subr.bf16.mxu0 0
        %3452 = vmatpush1.bf16.msra.mxu0 0
        %3453 = vmatprep.subr.bf16.mxu0 0
        %3454 = vmatpush1.bf16.msra.mxu0 %v3432
        %3455 = vmatprep.subr.bf16.mxu0 0
        %3456 = vmatpush1.bf16.msra.mxu0 %v3431
        %3457 = vmatprep.subr.bf16.mxu0 0
        %3458 = vmatpush2.bf16.msra.mxu0 0
        %3459 = vmatprep.subr.bf16.mxu0 0
        %3460 = vmatpush2.bf16.msra.mxu0 0
        %3461 = vmatprep.subr.bf16.mxu0 0
        %3462 = vmatpush2.bf16.msra.mxu0 0
        %3463 = vmatprep.subr.bf16.mxu0 0
        %3464 = vmatpush2.bf16.msra.mxu0 0
        %3465 = vmatprep.subr.bf16.mxu0 0
        %3466 = vmatpush2.bf16.msra.mxu0 0
        %3467 = vmatprep.subr.bf16.mxu0 0
        %3468 = vmatpush2.bf16.msra.mxu0 0
        %3469 = vmatprep.subr.bf16.mxu0 0
        %3470 = vmatpush2.bf16.msra.mxu0 0
        %3471 = vmatprep.subr.bf16.mxu0 0
        %3472 = vmatpush2.bf16.msra.mxu0 0
        %3473 = vmatprep.mubr.bf16.mxu0 0
        %3474 = vmatmul.mubr.bf16.gmra.mxu0 %v3436
        %v3475 = vpop.f32.mrf.mxu0
        %v3476 = vadd.f32 %v3421, %v3475
        %v3477 = vpop.f32.mrf.mxu0
        %v3478 = vpop.f32.mrf.mxu0
        %v3479 = vadd.f32 %v3421, %v3478
        %v3480 = vpop.f32.mrf.mxu0
        %3481 = vmatprep.mubr.bf16.mxu0 0
        %3482 = vmatmul.mubr.bf16.gmra.mxu0 %v3439
        %v3483 = vpop.f32.mrf.mxu0
        %v3484 = vadd.f32 %v3421, %v3483
        %v3485 = vpop.f32.mrf.mxu0
        %v3486 = vpop.f32.mrf.mxu0
        %v3487 = vpop.f32.mrf.mxu0
        %3488 = vdwg.mxu0
        %v3489 = vmul.f32 %v3476, 0.5
        %v3490 = vmul.f32 %v3479, 0.5
        %v3491 = vmul.f32 %v3484, 0.5
        %v3492 = vmul.f32 %v3476, 0.044715
        %v3493 = vmul.f32 %v3479, 0.044715
        %v3494 = vmul.f32 %v3484, 0.044715
        %v3495 = vmul.f32 %v3492, %v3476
        %v3496 = vmul.f32 %v3493, %v3479
        %v3497 = vmul.f32 %v3494, %v3484
        %v3498 = vmul.f32 %v3495, %v3476
        %v3499 = vmul.f32 %v3496, %v3479
        %v3500 = vmul.f32 %v3497, %v3484
        %v3501 = vadd.f32 %v3476, %v3498
        %v3502 = vadd.f32 %v3479, %v3499
        %v3503 = vadd.f32 %v3484, %v3500
        %v3504 = vmul.f32 %v3501, 0.7978846
        %v3505 = vmul.f32 %v3502, 0.7978846
        %v3506 = vmul.f32 %v3503, 0.7978846
        %v3507 = vtanh.pop %v3504
        %v3508 = vtanh.pop %v3505
        %v3509 = vtanh.pop %v3506
        %v3510 = vadd.f32 %v3507, 1.0
        %v3511 = vadd.f32 %v3508, 1.0
        %v3512 = vadd.f32 %v3509, 1.0
        %v3513 = vmul.f32 %v3489, %v3510
        %v3514 = vmul.f32 %v3490, %v3511
        %v3515 = vmul.f32 %v3491, %v3512
        %s3516 = scalar_lea.vmem %s11, 128
        %v3517 = vld [vmem:[%s3516] sm:$0xf]
        %v3518 = vld [vmem:[%s3516 + $0x4] sm:$0xf]
        %v3519 = vld [vmem:[%s3516 + $0x8] sm:$0xf]
        %v3520 = vld [vmem:[%s3516 + $0xc] sm:$0xf]
        %v3521 = vld [vmem:[%s3516 + $0x10] sm:$0xf]
        %v3522 = vld [vmem:[%s3516 + $0x14] sm:$0xf]
        %v3523 = vld [vmem:[%s3516 + $0x18] sm:$0xf]
        %v3524 = vld [vmem:[%s3516 + $0x1c] sm:$0xf]
        %v3525 = vld [vmem:[%s3516 + $0x20] sm:$0xf]
        %v3526 = vld [vmem:[%s3516 + $0x24] sm:$0xf]
        %v3527 = vld [vmem:[%s3516 + $0x28] sm:$0xf]
        %v3528 = vld [vmem:[%s3516 + $0x2c] sm:$0xf]
        %v3529 = vld [vmem:[%s3516 + $0x30] sm:$0xf]
        %v3530 = vld [vmem:[%s3516 + $0x34] sm:$0xf]
        %v3531 = vld [vmem:[%s3516 + $0x38] sm:$0xf]
        %v3532 = vld [vmem:[%s3516 + $0x3c] sm:$0xf]
        %v3533 = vpack.c.bf16 %v3514, %v3513
        %v3534 = vpack.c.bf16 %v3515, %v3515
        %v3551 = vunpack.c.l.b16 %v3517
        %v3552 = vunpack.c.l.b16 %v3518
        %v3553 = vunpack.c.l.b16 %v3519
        %v3554 = vunpack.c.l.b16 %v3520
        %v3555 = vunpack.c.l.b16 %v3521
        %v3556 = vunpack.c.l.b16 %v3522
        %v3557 = vunpack.c.l.b16 %v3523
        %v3558 = vunpack.c.l.b16 %v3524
        %v3559 = vunpack.c.l.b16 %v3525
        %v3560 = vunpack.c.l.b16 %v3526
        %v3561 = vunpack.c.l.b16 %v3527
        %v3562 = vunpack.c.l.b16 %v3528
        %v3563 = vunpack.c.l.b16 %v3529
        %v3564 = vunpack.c.l.b16 %v3530
        %v3565 = vunpack.c.l.b16 %v3531
        %v3566 = vunpack.c.l.b16 %v3532
        %v3567 = vpack.c.b16 %v3552, %v3551
        %v3568 = vpack.c.b16 %v3554, %v3553
        %v3569 = vpack.c.b16 %v3556, %v3555
        %v3570 = vpack.c.b16 %v3558, %v3557
        %v3571 = vpack.c.b16 %v3560, %v3559
        %v3572 = vpack.c.b16 %v3562, %v3561
        %v3573 = vpack.c.b16 %v3564, %v3563
        %v3574 = vpack.c.b16 %v3566, %v3565
        %3583 = vmatprep.subr.bf16.mxu0 0
        %3584 = vmatpush1.bf16.msra.mxu0 %v3574
        %3585 = vmatprep.subr.bf16.mxu0 0
        %3586 = vmatpush1.bf16.msra.mxu0 %v3573
        %3587 = vmatprep.subr.bf16.mxu0 0
        %3588 = vmatpush1.bf16.msra.mxu0 %v3572
        %3589 = vmatprep.subr.bf16.mxu0 0
        %3590 = vmatpush1.bf16.msra.mxu0 %v3571
        %3591 = vmatprep.subr.bf16.mxu0 0
        %3592 = vmatpush1.bf16.msra.mxu0 %v3570
        %3593 = vmatprep.subr.bf16.mxu0 0
        %3594 = vmatpush1.bf16.msra.mxu0 %v3569
        %3595 = vmatprep.subr.bf16.mxu0 0
        %3596 = vmatpush1.bf16.msra.mxu0 %v3568
        %3597 = vmatprep.subr.bf16.mxu0 0
        %3598 = vmatpush1.bf16.msra.mxu0 %v3567
        %3599 = vmatprep.subr.bf16.mxu0 0
        %3600 = vmatpush2.bf16.msra.mxu0 0
        %3601 = vmatprep.subr.bf16.mxu0 0
        %3602 = vmatpush2.bf16.msra.mxu0 0
        %3603 = vmatprep.subr.bf16.mxu0 0
        %3604 = vmatpush2.bf16.msra.mxu0 0
        %3605 = vmatprep.subr.bf16.mxu0 0
        %3606 = vmatpush2.bf16.msra.mxu0 0
        %3607 = vmatprep.subr.bf16.mxu0 0
        %3608 = vmatpush2.bf16.msra.mxu0 0
        %3609 = vmatprep.subr.bf16.mxu0 0
        %3610 = vmatpush2.bf16.msra.mxu0 0
        %3611 = vmatprep.subr.bf16.mxu0 0
        %3612 = vmatpush2.bf16.msra.mxu0 0
        %3613 = vmatprep.subr.bf16.mxu0 0
        %3614 = vmatpush2.bf16.msra.mxu0 0
        %3615 = vmatprep.mubr.bf16.mxu0 0
        %3616 = vmatmul.mubr.bf16.gmra.mxu0 %v3533
        %v3617 = vpop.f32.mrf.mxu0
        %v3618 = vadd.f32 0.0, %v3617
        %v3619 = vpop.f32.mrf.mxu0
        %v3620 = vpop.f32.mrf.mxu0
        %v3621 = vadd.f32 0.0, %v3620
        %v3622 = vpop.f32.mrf.mxu0
        %3623 = vmatprep.mubr.bf16.mxu0 0
        %3624 = vmatmul.mubr.bf16.gmra.mxu0 %v3534
        %v3625 = vpop.f32.mrf.mxu0
        %v3626 = vadd.f32 0.0, %v3625
        %v3627 = vpop.f32.mrf.mxu0
        %v3628 = vpop.f32.mrf.mxu0
        %v3629 = vpop.f32.mrf.mxu0
        %3630 = vdwg.mxu0
        %v3631 = vadd.f32 %v3344, %v3618
        %v3632 = vadd.f32 %v3345, %v3621
        %v3633 = vadd.f32 %v3346, %v3626
        %s3634 = scalar_lea.vmem %s12, 2
        %v3635 = vld [vmem:[%s3634] sm:$0x1]
        %v3637 = vlaneseq
        %v3638 = vshrl.u32 %v3637, 7
        %v3639 = vsub.s32 0, %v3638
        %v3640 = vrot.slane %v3635, %v3639
        %v3642 = vadd.f32 %v3631, %v3640
        %v3643 = vadd.f32 %v3632, %v3640
        %v3644 = vadd.f32 %v3633, %v3640
        %s3645 = scalar_lea.vmem %s3, 3
        %v3646 = vld [vmem:[%s3645] sm:$0x1]
        %s3647 = scalar_lea.vmem %s4, 3
        %v3648 = vld [vmem:[%s3647] sm:$0x1]
        %v3649 = vsel %vm1071, %v3642, 0.0
        %3650 = vadd.xlane.f32.xlu0 %v3649
        %v3651 = vpop.xlane.xlu0 %3650
        %v3652 = vsel %vm1071, %v3643, 0.0
        %3653 = vadd.xlane.f32.xlu0 %v3652
        %v3654 = vpop.xlane.xlu0 %3653
        %v3655 = vsel %vm1078, %v3644, 0.0
        %3656 = vadd.xlane.f32.xlu0 %v3655
        %v3657 = vpop.xlane.xlu0 %3656
        %v3658 = vmul.f32 %v3651, %v1082
        %v3659 = vmul.f32 %v3654, %v1082
        %v3660 = vmul.f32 %v3657, %v1082
        %v3661 = vsub.f32 %v3642, %v3658
        %v3662 = vsub.f32 %v3643, %v3659
        %v3663 = vsub.f32 %v3644, %v3660
        %v3664 = vmul.f32 %v3661, %v3661
        %v3665 = vmul.f32 %v3662, %v3662
        %v3666 = vmul.f32 %v3663, %v3663
        %v3667 = vsel %vm1071, %v3664, 0.0
        %3668 = vadd.xlane.f32.xlu0 %v3667
        %v3669 = vpop.xlane.xlu0 %3668
        %v3670 = vsel %vm1071, %v3665, 0.0
        %3671 = vadd.xlane.f32.xlu0 %v3670
        %v3672 = vpop.xlane.xlu0 %3671
        %v3673 = vsel %vm1078, %v3666, 0.0
        %3674 = vadd.xlane.f32.xlu0 %v3673
        %v3675 = vpop.xlane.xlu0 %3674
        %v3676 = vmul.f32 %v3669, %v1082
        %v3677 = vmul.f32 %v3672, %v1082
        %v3678 = vmul.f32 %v3675, %v1082
        %v3679 = vadd.f32 %v3676, 1e-05
        %v3680 = vadd.f32 %v3677, 1e-05
        %v3681 = vadd.f32 %v3678, 1e-05
        %v3682 = vrsqrt.pop %v3679
        %v3683 = vrsqrt.pop %v3680
        %v3684 = vrsqrt.pop %v3681
        %v3685 = vmul.f32 %v3661, %v3682
        %v3686 = vmul.f32 %v3662, %v3683
        %v3687 = vmul.f32 %v3663, %v3684
        %v3689 = vlaneseq
        %v3690 = vshrl.u32 %v3689, 7
        %v3691 = vsub.s32 0, %v3690
        %v3692 = vrot.slane %v3646, %v3691
        %v3694 = vmul.f32 %v3685, %v3692
        %v3695 = vmul.f32 %v3686, %v3692
        %v3696 = vmul.f32 %v3687, %v3692
        %v3698 = vlaneseq
        %v3699 = vshrl.u32 %v3698, 7
        %v3700 = vsub.s32 0, %v3699
        %v3701 = vrot.slane %v3648, %v3700
        %v3703 = vadd.f32 %v3694, %v3701
        %v3704 = vadd.f32 %v3695, %v3701
        %v3705 = vadd.f32 %v3696, %v3701
        %s3706 = scalar_lea.vmem %s5, 48
        %v3707 = vld [vmem:[%s3706] sm:$0xf]
        %v3708 = vld [vmem:[%s3706 + $0x4] sm:$0xf]
        %v3709 = vld [vmem:[%s3706 + $0x8] sm:$0xf]
        %v3710 = vld [vmem:[%s3706 + $0xc] sm:$0xf]
        %v3711 = vpack.c.bf16 %v3704, %v3703
        %v3712 = vpack.c.bf16 %v3705, %v3705
        %v3717 = vunpack.c.l.b16 %v3707
        %v3718 = vunpack.c.l.b16 %v3708
        %v3719 = vunpack.c.l.b16 %v3709
        %v3720 = vunpack.c.l.b16 %v3710
        %v3721 = vpack.c.b16 %v3718, %v3717
        %v3722 = vpack.c.b16 %v3720, %v3719
        %v3726 = vsel %vm1071, %v3711, 0
        %v3729 = vsel %vm1071, %v3712, 0
        %3731 = vmatprep.subr.bf16.mxu0 0
        %3732 = vmatpush1.bf16.msra.mxu0 0
        %3733 = vmatprep.subr.bf16.mxu0 0
        %3734 = vmatpush1.bf16.msra.mxu0 0
        %3735 = vmatprep.subr.bf16.mxu0 0
        %3736 = vmatpush1.bf16.msra.mxu0 0
        %3737 = vmatprep.subr.bf16.mxu0 0
        %3738 = vmatpush1.bf16.msra.mxu0 0
        %3739 = vmatprep.subr.bf16.mxu0 0
        %3740 = vmatpush1.bf16.msra.mxu0 0
        %3741 = vmatprep.subr.bf16.mxu0 0
        %3742 = vmatpush1.bf16.msra.mxu0 0
        %3743 = vmatprep.subr.bf16.mxu0 0
        %3744 = vmatpush1.bf16.msra.mxu0 %v3722
        %3745 = vmatprep.subr.bf16.mxu0 0
        %3746 = vmatpush1.bf16.msra.mxu0 %v3721
        %3747 = vmatprep.subr.bf16.mxu0 0
        %3748 = vmatpush2.bf16.msra.mxu0 0
        %3749 = vmatprep.subr.bf16.mxu0 0
        %3750 = vmatpush2.bf16.msra.mxu0 0
        %3751 = vmatprep.subr.bf16.mxu0 0
        %3752 = vmatpush2.bf16.msra.mxu0 0
        %3753 = vmatprep.subr.bf16.mxu0 0
        %3754 = vmatpush2.bf16.msra.mxu0 0
        %3755 = vmatprep.subr.bf16.mxu0 0
        %3756 = vmatpush2.bf16.msra.mxu0 0
        %3757 = vmatprep.subr.bf16.mxu0 0
        %3758 = vmatpush2.bf16.msra.mxu0 0
        %3759 = vmatprep.subr.bf16.mxu0 0
        %3760 = vmatpush2.bf16.msra.mxu0 0
        %3761 = vmatprep.subr.bf16.mxu0 0
        %3762 = vmatpush2.bf16.msra.mxu0 0
        %3763 = vmatprep.mubr.bf16.mxu0 0
        %3764 = vmatmul.mubr.bf16.gmra.mxu0 %v3726
        %v3765 = vpop.f32.mrf.mxu0
        %v3766 = vadd.f32 0.0, %v3765
        %v3767 = vpop.f32.mrf.mxu0
        %v3768 = vpop.f32.mrf.mxu0
        %v3769 = vadd.f32 0.0, %v3768
        %v3770 = vpop.f32.mrf.mxu0
        %3771 = vmatprep.mubr.bf16.mxu0 0
        %3772 = vmatmul.mubr.bf16.gmra.mxu0 %v3729
        %v3773 = vpop.f32.mrf.mxu0
        %v3774 = vadd.f32 0.0, %v3773
        %v3775 = vpop.f32.mrf.mxu0
        %v3776 = vpop.f32.mrf.mxu0
        %v3777 = vpop.f32.mrf.mxu0
        %3778 = vdwg.mxu0
        %v3779 = vpack.c.bf16 %v3769, %v3766
        %v3780 = vpack.c.bf16 %v3774, %v3774
        %3783 = vrot.lane.b32.xlu0 %v3779, 96
        %v3784 = vpop.permute.xlu0 %3783
        %3785 = vrot.lane.b32.xlu0 %v3780, 96
        %v3786 = vpop.permute.xlu0 %3785
        %v3788 = vsel %vm1211, %v3779, 0
        %v3791 = vsel %vm1211, %v3780, 0
        %v3794 = vsel %vm1211, %v3784, 0
        %v3797 = vsel %vm1211, %v3786, 0
        %3799 = vmatprep.subr.bf16.mxu0 0
        %3800 = vmatpush1.bf16.xpose.msra.mxu0 0
        %3801 = vmatprep.subr.bf16.mxu0 0
        %3802 = vmatpush1.bf16.xpose.msra.mxu0 0
        %3803 = vmatprep.subr.bf16.mxu0 0
        %3804 = vmatpush1.bf16.xpose.msra.mxu0 0
        %3805 = vmatprep.subr.bf16.mxu0 0
        %3806 = vmatpush1.bf16.xpose.msra.mxu0 0
        %3807 = vmatprep.subr.bf16.mxu0 0
        %3808 = vmatpush1.bf16.xpose.msra.mxu0 0
        %3809 = vmatprep.subr.bf16.mxu0 0
        %3810 = vmatpush1.bf16.xpose.msra.mxu0 0
        %3811 = vmatprep.subr.bf16.mxu0 0
        %3812 = vmatpush1.bf16.xpose.msra.mxu0 %v3797
        %3813 = vmatprep.subr.bf16.mxu0 0
        %3814 = vmatpush1.bf16.xpose.msra.mxu0 %v3794
        %3815 = vmatprep.subr.bf16.mxu0 0
        %3816 = vmatpush2.bf16.xpose.msra.mxu0 0
        %3817 = vmatprep.subr.bf16.mxu0 0
        %3818 = vmatpush2.bf16.xpose.msra.mxu0 0
        %3819 = vmatprep.subr.bf16.mxu0 0
        %3820 = vmatpush2.bf16.xpose.msra.mxu0 0
        %3821 = vmatprep.subr.bf16.mxu0 0
        %3822 = vmatpush2.bf16.xpose.msra.mxu0 0
        %3823 = vmatprep.subr.bf16.mxu0 0
        %3824 = vmatpush2.bf16.xpose.msra.mxu0 0
        %3825 = vmatprep.subr.bf16.mxu0 0
        %3826 = vmatpush2.bf16.xpose.msra.mxu0 0
        %3827 = vmatprep.subr.bf16.mxu0 0
        %3828 = vmatpush2.bf16.xpose.msra.mxu0 0
        %3829 = vmatprep.subr.bf16.mxu0 0
        %3830 = vmatpush2.bf16.xpose.msra.mxu0 0
        %3831 = vmatprep.mubr.bf16.mxu0 0
        %3832 = vmatmul.mubr.bf16.gmra.mxu0 %v3788
        %v3833 = vpop.f32.mrf.mxu0
        %v3834 = vadd.f32 0.0, %v3833
        %v3835 = vpop.f32.mrf.mxu0
        %v3836 = vpop.f32.mrf.mxu0
        %v3837 = vadd.f32 0.0, %v3836
        %v3838 = vpop.f32.mrf.mxu0
        %3839 = vmatprep.mubr.bf16.mxu0 0
        %3840 = vmatmul.mubr.bf16.gmra.mxu0 %v3791
        %v3841 = vpop.f32.mrf.mxu0
        %v3842 = vadd.f32 0.0, %v3841
        %v3843 = vpop.f32.mrf.mxu0
        %v3844 = vpop.f32.mrf.mxu0
        %v3845 = vpop.f32.mrf.mxu0
        %3846 = vdwg.mxu0
        %v3847 = vmul.f32 %v3834, 0.25
        %v3848 = vmul.f32 %v3837, 0.25
        %v3849 = vmul.f32 %v3842, 0.25
        %v3850 = vsel %vm1275, %v3847, -inf
        %3851 = vmax.xlane.f32.xlu0 %v3850
        %v3852 = vpop.xlane.xlu0 %3851
        %v3853 = vsel %vm1275, %v3848, -inf
        %3854 = vmax.xlane.f32.xlu0 %v3853
        %v3855 = vpop.xlane.xlu0 %3854
        %v3856 = vsel %vm1282, %v3849, -inf
        %3857 = vmax.xlane.f32.xlu0 %v3856
        %v3858 = vpop.xlane.xlu0 %3857
        %v3859 = vsub.f32 %v3847, %v3852
        %v3860 = vsub.f32 %v3848, %v3855
        %v3861 = vsub.f32 %v3849, %v3858
        %v3862 = vmul.f32 %v3859, 1.442695
        %v3863 = vpow.pop %v3862
        %v3864 = vmul.f32 %v3860, 1.442695
        %v3865 = vpow.pop %v3864
        %v3866 = vmul.f32 %v3861, 1.442695
        %v3867 = vpow.pop %v3866
        %v3868 = vsel %vm1275, %v3863, 0.0
        %3869 = vadd.xlane.f32.xlu0 %v3868
        %v3870 = vpop.xlane.xlu0 %3869
        %v3871 = vsel %vm1275, %v3865, 0.0
        %3872 = vadd.xlane.f32.xlu0 %v3871
        %v3873 = vpop.xlane.xlu0 %3872
        %v3874 = vsel %vm1282, %v3867, 0.0
        %3875 = vadd.xlane.f32.xlu0 %v3874
        %v3876 = vpop.xlane.xlu0 %3875
        %v3877 = vrcp.pop %v3870
        %v3878 = vrcp.pop %v3873
        %v3879 = vrcp.pop %v3876
        %v3880 = vmul.f32 %v3863, %v3877
        %v3881 = vmul.f32 %v3865, %v3878
        %v3882 = vmul.f32 %v3867, %v3879
        %v3883 = vpack.c.bf16 %v3881, %v3880
        %v3884 = vpack.c.bf16 %v3882, %v3882
        %3885 = vrot.lane.b32.xlu0 %v3779, 64
        %v3886 = vpop.permute.xlu0 %3885
        %3887 = vrot.lane.b32.xlu0 %v3780, 64
        %v3888 = vpop.permute.xlu0 %3887
        %v3891 = vsel %vm1275, %v3883, 0
        %v3894 = vsel %vm1275, %v3884, 0
        %v3897 = vand.u32 %v3888, %v1325
        %3899 = vmatprep.subr.bf16.mxu0 0
        %3900 = vmatpush1.bf16.msra.mxu0 0
        %3901 = vmatprep.subr.bf16.mxu0 0
        %3902 = vmatpush1.bf16.msra.mxu0 0
        %3903 = vmatprep.subr.bf16.mxu0 0
        %3904 = vmatpush1.bf16.msra.mxu0 0
        %3905 = vmatprep.subr.bf16.mxu0 0
        %3906 = vmatpush1.bf16.msra.mxu0 0
        %3907 = vmatprep.subr.bf16.mxu0 0
        %3908 = vmatpush1.bf16.msra.mxu0 0
        %3909 = vmatprep.subr.bf16.mxu0 0
        %3910 = vmatpush1.bf16.msra.mxu0 0
        %3911 = vmatprep.subr.bf16.mxu0 0
        %3912 = vmatpush1.bf16.msra.mxu0 %v3897
        %3913 = vmatprep.subr.bf16.mxu0 0
        %3914 = vmatpush1.bf16.msra.mxu0 %v3886
        %3915 = vmatprep.subr.bf16.mxu0 0
        %3916 = vmatpush2.bf16.msra.mxu0 0
        %3917 = vmatprep.subr.bf16.mxu0 0
        %3918 = vmatpush2.bf16.msra.mxu0 0
        %3919 = vmatprep.subr.bf16.mxu0 0
        %3920 = vmatpush2.bf16.msra.mxu0 0
        %3921 = vmatprep.subr.bf16.mxu0 0
        %3922 = vmatpush2.bf16.msra.mxu0 0
        %3923 = vmatprep.subr.bf16.mxu0 0
        %3924 = vmatpush2.bf16.msra.mxu0 0
        %3925 = vmatprep.subr.bf16.mxu0 0
        %3926 = vmatpush2.bf16.msra.mxu0 0
        %3927 = vmatprep.subr.bf16.mxu0 0
        %3928 = vmatpush2.bf16.msra.mxu0 0
        %3929 = vmatprep.subr.bf16.mxu0 0
        %3930 = vmatpush2.bf16.msra.mxu0 0
        %3931 = vmatprep.mubr.bf16.mxu0 0
        %3932 = vmatmul.mubr.bf16.gmra.mxu0 %v3891
        %v3933 = vpop.f32.mrf.mxu0
        %v3934 = vadd.f32 0.0, %v3933
        %v3935 = vpop.f32.mrf.mxu0
        %v3936 = vpop.f32.mrf.mxu0
        %v3937 = vadd.f32 0.0, %v3936
        %v3938 = vpop.f32.mrf.mxu0
        %3939 = vmatprep.mubr.bf16.mxu0 0
        %3940 = vmatmul.mubr.bf16.gmra.mxu0 %v3894
        %v3941 = vpop.f32.mrf.mxu0
        %v3942 = vadd.f32 0.0, %v3941
        %v3943 = vpop.f32.mrf.mxu0
        %v3944 = vpop.f32.mrf.mxu0
        %v3945 = vpop.f32.mrf.mxu0
        %3946 = vdwg.mxu0
        %3947 = vrot.lane.b32.xlu0 %v3779, 112
        %v3948 = vpop.permute.xlu0 %3947
        %3949 = vrot.lane.b32.xlu0 %v3780, 112
        %v3950 = vpop.permute.xlu0 %3949
        %3951 = vrot.lane.b32.xlu0 %v3779, 80
        %v3952 = vpop.permute.xlu0 %3951
        %3953 = vrot.lane.b32.xlu0 %v3780, 80
        %v3954 = vpop.permute.xlu0 %3953
        %v3956 = vsel %vm1211, %v3948, 0
        %v3959 = vsel %vm1211, %v3950, 0
        %v3962 = vsel %vm1211, %v3952, 0
        %v3965 = vsel %vm1211, %v3954, 0
        %3967 = vmatprep.subr.bf16.mxu0 0
        %3968 = vmatpush1.bf16.xpose.msra.mxu0 0
        %3969 = vmatprep.subr.bf16.mxu0 0
        %3970 = vmatpush1.bf16.xpose.msra.mxu0 0
        %3971 = vmatprep.subr.bf16.mxu0 0
        %3972 = vmatpush1.bf16.xpose.msra.mxu0 0
        %3973 = vmatprep.subr.bf16.mxu0 0
        %3974 = vmatpush1.bf16.xpose.msra.mxu0 0
        %3975 = vmatprep.subr.bf16.mxu0 0
        %3976 = vmatpush1.bf16.xpose.msra.mxu0 0
        %3977 = vmatprep.subr.bf16.mxu0 0
        %3978 = vmatpush1.bf16.xpose.msra.mxu0 0
        %3979 = vmatprep.subr.bf16.mxu0 0
        %3980 = vmatpush1.bf16.xpose.msra.mxu0 %v3965
        %3981 = vmatprep.subr.bf16.mxu0 0
        %3982 = vmatpush1.bf16.xpose.msra.mxu0 %v3962
        %3983 = vmatprep.subr.bf16.mxu0 0
        %3984 = vmatpush2.bf16.xpose.msra.mxu0 0
        %3985 = vmatprep.subr.bf16.mxu0 0
        %3986 = vmatpush2.bf16.xpose.msra.mxu0 0
        %3987 = vmatprep.subr.bf16.mxu0 0
        %3988 = vmatpush2.bf16.xpose.msra.mxu0 0
        %3989 = vmatprep.subr.bf16.mxu0 0
        %3990 = vmatpush2.bf16.xpose.msra.mxu0 0
        %3991 = vmatprep.subr.bf16.mxu0 0
        %3992 = vmatpush2.bf16.xpose.msra.mxu0 0
        %3993 = vmatprep.subr.bf16.mxu0 0
        %3994 = vmatpush2.bf16.xpose.msra.mxu0 0
        %3995 = vmatprep.subr.bf16.mxu0 0
        %3996 = vmatpush2.bf16.xpose.msra.mxu0 0
        %3997 = vmatprep.subr.bf16.mxu0 0
        %3998 = vmatpush2.bf16.xpose.msra.mxu0 0
        %3999 = vmatprep.mubr.bf16.mxu0 0
        %4000 = vmatmul.mubr.bf16.gmra.mxu0 %v3956
        %v4001 = vpop.f32.mrf.mxu0
        %v4002 = vadd.f32 0.0, %v4001
        %v4003 = vpop.f32.mrf.mxu0
        %v4004 = vpop.f32.mrf.mxu0
        %v4005 = vadd.f32 0.0, %v4004
        %v4006 = vpop.f32.mrf.mxu0
        %4007 = vmatprep.mubr.bf16.mxu0 0
        %4008 = vmatmul.mubr.bf16.gmra.mxu0 %v3959
        %v4009 = vpop.f32.mrf.mxu0
        %v4010 = vadd.f32 0.0, %v4009
        %v4011 = vpop.f32.mrf.mxu0
        %v4012 = vpop.f32.mrf.mxu0
        %v4013 = vpop.f32.mrf.mxu0
        %4014 = vdwg.mxu0
        %v4015 = vmul.f32 %v4002, 0.25
        %v4016 = vmul.f32 %v4005, 0.25
        %v4017 = vmul.f32 %v4010, 0.25
        %v4018 = vsel %vm1275, %v4015, -inf
        %4019 = vmax.xlane.f32.xlu0 %v4018
        %v4020 = vpop.xlane.xlu0 %4019
        %v4021 = vsel %vm1275, %v4016, -inf
        %4022 = vmax.xlane.f32.xlu0 %v4021
        %v4023 = vpop.xlane.xlu0 %4022
        %v4024 = vsel %vm1282, %v4017, -inf
        %4025 = vmax.xlane.f32.xlu0 %v4024
        %v4026 = vpop.xlane.xlu0 %4025
        %v4027 = vsub.f32 %v4015, %v4020
        %v4028 = vsub.f32 %v4016, %v4023
        %v4029 = vsub.f32 %v4017, %v4026
        %v4030 = vmul.f32 %v4027, 1.442695
        %v4031 = vpow.pop %v4030
        %v4032 = vmul.f32 %v4028, 1.442695
        %v4033 = vpow.pop %v4032
        %v4034 = vmul.f32 %v4029, 1.442695
        %v4035 = vpow.pop %v4034
        %v4036 = vsel %vm1275, %v4031, 0.0
        %4037 = vadd.xlane.f32.xlu0 %v4036
        %v4038 = vpop.xlane.xlu0 %4037
        %v4039 = vsel %vm1275, %v4033, 0.0
        %4040 = vadd.xlane.f32.xlu0 %v4039
        %v4041 = vpop.xlane.xlu0 %4040
        %v4042 = vsel %vm1282, %v4035, 0.0
        %4043 = vadd.xlane.f32.xlu0 %v4042
        %v4044 = vpop.xlane.xlu0 %4043
        %v4045 = vrcp.pop %v4038
        %v4046 = vrcp.pop %v4041
        %v4047 = vrcp.pop %v4044
        %v4048 = vmul.f32 %v4031, %v4045
        %v4049 = vmul.f32 %v4033, %v4046
        %v4050 = vmul.f32 %v4035, %v4047
        %v4051 = vpack.c.bf16 %v4049, %v4048
        %v4052 = vpack.c.bf16 %v4050, %v4050
        %4053 = vrot.lane.b32.xlu0 %v3779, 48
        %v4054 = vpop.permute.xlu0 %4053
        %4055 = vrot.lane.b32.xlu0 %v3780, 48
        %v4056 = vpop.permute.xlu0 %4055
        %v4059 = vsel %vm1275, %v4051, 0
        %v4062 = vsel %vm1275, %v4052, 0
        %v4065 = vand.u32 %v4056, %v1325
        %4067 = vmatprep.subr.bf16.mxu0 0
        %4068 = vmatpush1.bf16.msra.mxu0 0
        %4069 = vmatprep.subr.bf16.mxu0 0
        %4070 = vmatpush1.bf16.msra.mxu0 0
        %4071 = vmatprep.subr.bf16.mxu0 0
        %4072 = vmatpush1.bf16.msra.mxu0 0
        %4073 = vmatprep.subr.bf16.mxu0 0
        %4074 = vmatpush1.bf16.msra.mxu0 0
        %4075 = vmatprep.subr.bf16.mxu0 0
        %4076 = vmatpush1.bf16.msra.mxu0 0
        %4077 = vmatprep.subr.bf16.mxu0 0
        %4078 = vmatpush1.bf16.msra.mxu0 0
        %4079 = vmatprep.subr.bf16.mxu0 0
        %4080 = vmatpush1.bf16.msra.mxu0 %v4065
        %4081 = vmatprep.subr.bf16.mxu0 0
        %4082 = vmatpush1.bf16.msra.mxu0 %v4054
        %4083 = vmatprep.subr.bf16.mxu0 0
        %4084 = vmatpush2.bf16.msra.mxu0 0
        %4085 = vmatprep.subr.bf16.mxu0 0
        %4086 = vmatpush2.bf16.msra.mxu0 0
        %4087 = vmatprep.subr.bf16.mxu0 0
        %4088 = vmatpush2.bf16.msra.mxu0 0
        %4089 = vmatprep.subr.bf16.mxu0 0
        %4090 = vmatpush2.bf16.msra.mxu0 0
        %4091 = vmatprep.subr.bf16.mxu0 0
        %4092 = vmatpush2.bf16.msra.mxu0 0
        %4093 = vmatprep.subr.bf16.mxu0 0
        %4094 = vmatpush2.bf16.msra.mxu0 0
        %4095 = vmatprep.subr.bf16.mxu0 0
        %4096 = vmatpush2.bf16.msra.mxu0 0
        %4097 = vmatprep.subr.bf16.mxu0 0
        %4098 = vmatpush2.bf16.msra.mxu0 0
        %4099 = vmatprep.mubr.bf16.mxu0 0
        %4100 = vmatmul.mubr.bf16.gmra.mxu0 %v4059
        %v4101 = vpop.f32.mrf.mxu0
        %v4102 = vadd.f32 0.0, %v4101
        %v4103 = vpop.f32.mrf.mxu0
        %v4104 = vpop.f32.mrf.mxu0
        %v4105 = vadd.f32 0.0, %v4104
        %v4106 = vpop.f32.mrf.mxu0
        %4107 = vmatprep.mubr.bf16.mxu0 0
        %4108 = vmatmul.mubr.bf16.gmra.mxu0 %v4062
        %v4109 = vpop.f32.mrf.mxu0
        %v4110 = vadd.f32 0.0, %v4109
        %v4111 = vpop.f32.mrf.mxu0
        %v4112 = vpop.f32.mrf.mxu0
        %v4113 = vpop.f32.mrf.mxu0
        %4114 = vdwg.mxu0
        %4118 = vrot.lane.b32.xlu0 %v4102, 16
        %v4119 = vpop.permute.xlu0 %4118
        %4120 = vrot.lane.b32.xlu0 %v4105, 16
        %v4121 = vpop.permute.xlu0 %4120
        %4122 = vrot.lane.b32.xlu0 %v4110, 16
        %v4123 = vpop.permute.xlu0 %4122
        %v4127 = vsel %vm1211, %v3934, %v4119
        %v4128 = vsel %vm1211, %v3937, %v4121
        %v4129 = vsel %vm1211, %v3942, %v4123
        %s4130 = scalar_lea.vmem %s6, 48
        %v4131 = vld [vmem:[%s4130] sm:$0xf]
        %v4132 = vld [vmem:[%s4130 + $0x4] sm:$0xf]
        %v4133 = vld [vmem:[%s4130 + $0x8] sm:$0xf]
        %v4134 = vld [vmem:[%s4130 + $0xc] sm:$0xf]
        %v4135 = vpack.c.bf16 %v4128, %v4127
        %v4136 = vpack.c.bf16 %v4129, %v4129
        %v4141 = vunpack.c.l.b16 %v4131
        %v4142 = vunpack.c.l.b16 %v4132
        %v4143 = vunpack.c.l.b16 %v4133
        %v4144 = vunpack.c.l.b16 %v4134
        %v4145 = vpack.c.b16 %v4142, %v4141
        %v4146 = vpack.c.b16 %v4144, %v4143
        %v4150 = vsel %vm1071, %v4135, 0
        %v4153 = vsel %vm1071, %v4136, 0
        %4155 = vmatprep.subr.bf16.mxu0 0
        %4156 = vmatpush1.bf16.msra.mxu0 0
        %4157 = vmatprep.subr.bf16.mxu0 0
        %4158 = vmatpush1.bf16.msra.mxu0 0
        %4159 = vmatprep.subr.bf16.mxu0 0
        %4160 = vmatpush1.bf16.msra.mxu0 0
        %4161 = vmatprep.subr.bf16.mxu0 0
        %4162 = vmatpush1.bf16.msra.mxu0 0
        %4163 = vmatprep.subr.bf16.mxu0 0
        %4164 = vmatpush1.bf16.msra.mxu0 0
        %4165 = vmatprep.subr.bf16.mxu0 0
        %4166 = vmatpush1.bf16.msra.mxu0 0
        %4167 = vmatprep.subr.bf16.mxu0 0
        %4168 = vmatpush1.bf16.msra.mxu0 %v4146
        %4169 = vmatprep.subr.bf16.mxu0 0
        %4170 = vmatpush1.bf16.msra.mxu0 %v4145
        %4171 = vmatprep.subr.bf16.mxu0 0
        %4172 = vmatpush2.bf16.msra.mxu0 0
        %4173 = vmatprep.subr.bf16.mxu0 0
        %4174 = vmatpush2.bf16.msra.mxu0 0
        %4175 = vmatprep.subr.bf16.mxu0 0
        %4176 = vmatpush2.bf16.msra.mxu0 0
        %4177 = vmatprep.subr.bf16.mxu0 0
        %4178 = vmatpush2.bf16.msra.mxu0 0
        %4179 = vmatprep.subr.bf16.mxu0 0
        %4180 = vmatpush2.bf16.msra.mxu0 0
        %4181 = vmatprep.subr.bf16.mxu0 0
        %4182 = vmatpush2.bf16.msra.mxu0 0
        %4183 = vmatprep.subr.bf16.mxu0 0
        %4184 = vmatpush2.bf16.msra.mxu0 0
        %4185 = vmatprep.subr.bf16.mxu0 0
        %4186 = vmatpush2.bf16.msra.mxu0 0
        %4187 = vmatprep.mubr.bf16.mxu0 0
        %4188 = vmatmul.mubr.bf16.gmra.mxu0 %v4150
        %v4189 = vpop.f32.mrf.mxu0
        %v4190 = vadd.f32 0.0, %v4189
        %v4191 = vpop.f32.mrf.mxu0
        %v4192 = vpop.f32.mrf.mxu0
        %v4193 = vadd.f32 0.0, %v4192
        %v4194 = vpop.f32.mrf.mxu0
        %4195 = vmatprep.mubr.bf16.mxu0 0
        %4196 = vmatmul.mubr.bf16.gmra.mxu0 %v4153
        %v4197 = vpop.f32.mrf.mxu0
        %v4198 = vadd.f32 0.0, %v4197
        %v4199 = vpop.f32.mrf.mxu0
        %v4200 = vpop.f32.mrf.mxu0
        %v4201 = vpop.f32.mrf.mxu0
        %4202 = vdwg.mxu0
        %v4203 = vadd.f32 %v3642, %v4190
        %v4204 = vadd.f32 %v3643, %v4193
        %v4205 = vadd.f32 %v3644, %v4198
        %s4206 = scalar_lea.vmem %s7, 3
        %v4207 = vld [vmem:[%s4206] sm:$0x1]
        %s4208 = scalar_lea.vmem %s8, 3
        %v4209 = vld [vmem:[%s4208] sm:$0x1]
        %v4210 = vsel %vm1071, %v4203, 0.0
        %4211 = vadd.xlane.f32.xlu0 %v4210
        %v4212 = vpop.xlane.xlu0 %4211
        %v4213 = vsel %vm1071, %v4204, 0.0
        %4214 = vadd.xlane.f32.xlu0 %v4213
        %v4215 = vpop.xlane.xlu0 %4214
        %v4216 = vsel %vm1078, %v4205, 0.0
        %4217 = vadd.xlane.f32.xlu0 %v4216
        %v4218 = vpop.xlane.xlu0 %4217
        %v4219 = vmul.f32 %v4212, %v1082
        %v4220 = vmul.f32 %v4215, %v1082
        %v4221 = vmul.f32 %v4218, %v1082
        %v4222 = vsub.f32 %v4203, %v4219
        %v4223 = vsub.f32 %v4204, %v4220
        %v4224 = vsub.f32 %v4205, %v4221
        %v4225 = vmul.f32 %v4222, %v4222
        %v4226 = vmul.f32 %v4223, %v4223
        %v4227 = vmul.f32 %v4224, %v4224
        %v4228 = vsel %vm1071, %v4225, 0.0
        %4229 = vadd.xlane.f32.xlu0 %v4228
        %v4230 = vpop.xlane.xlu0 %4229
        %v4231 = vsel %vm1071, %v4226, 0.0
        %4232 = vadd.xlane.f32.xlu0 %v4231
        %v4233 = vpop.xlane.xlu0 %4232
        %v4234 = vsel %vm1078, %v4227, 0.0
        %4235 = vadd.xlane.f32.xlu0 %v4234
        %v4236 = vpop.xlane.xlu0 %4235
        %v4237 = vmul.f32 %v4230, %v1082
        %v4238 = vmul.f32 %v4233, %v1082
        %v4239 = vmul.f32 %v4236, %v1082
        %v4240 = vadd.f32 %v4237, 1e-05
        %v4241 = vadd.f32 %v4238, 1e-05
        %v4242 = vadd.f32 %v4239, 1e-05
        %v4243 = vrsqrt.pop %v4240
        %v4244 = vrsqrt.pop %v4241
        %v4245 = vrsqrt.pop %v4242
        %v4246 = vmul.f32 %v4222, %v4243
        %v4247 = vmul.f32 %v4223, %v4244
        %v4248 = vmul.f32 %v4224, %v4245
        %v4250 = vlaneseq
        %v4251 = vshrl.u32 %v4250, 7
        %v4252 = vsub.s32 0, %v4251
        %v4253 = vrot.slane %v4207, %v4252
        %v4255 = vmul.f32 %v4246, %v4253
        %v4256 = vmul.f32 %v4247, %v4253
        %v4257 = vmul.f32 %v4248, %v4253
        %v4259 = vlaneseq
        %v4260 = vshrl.u32 %v4259, 7
        %v4261 = vsub.s32 0, %v4260
        %v4262 = vrot.slane %v4209, %v4261
        %v4264 = vadd.f32 %v4255, %v4262
        %v4265 = vadd.f32 %v4256, %v4262
        %v4266 = vadd.f32 %v4257, %v4262
        %s4267 = scalar_lea.vmem %s9, 48
        %v4268 = vld [vmem:[%s4267] sm:$0xf]
        %v4269 = vld [vmem:[%s4267 + $0x4] sm:$0xf]
        %v4270 = vld [vmem:[%s4267 + $0x8] sm:$0xf]
        %v4271 = vld [vmem:[%s4267 + $0xc] sm:$0xf]
        %v4272 = vpack.c.bf16 %v4265, %v4264
        %v4273 = vpack.c.bf16 %v4266, %v4266
        %s4274 = scalar_lea.vmem %s10, 3
        %v4275 = vld [vmem:[%s4274] sm:$0x1]
        %v4277 = vlaneseq
        %v4278 = vshrl.u32 %v4277, 7
        %v4279 = vsub.s32 0, %v4278
        %v4280 = vrot.slane %v4275, %v4279
        %v4286 = vunpack.c.l.b16 %v4268
        %v4287 = vunpack.c.l.b16 %v4269
        %v4288 = vunpack.c.l.b16 %v4270
        %v4289 = vunpack.c.l.b16 %v4271
        %v4290 = vpack.c.b16 %v4287, %v4286
        %v4291 = vpack.c.b16 %v4289, %v4288
        %v4295 = vsel %vm1071, %v4272, 0
        %v4298 = vsel %vm1071, %v4273, 0
        %4300 = vmatprep.subr.bf16.mxu0 0
        %4301 = vmatpush1.bf16.msra.mxu0 0
        %4302 = vmatprep.subr.bf16.mxu0 0
        %4303 = vmatpush1.bf16.msra.mxu0 0
        %4304 = vmatprep.subr.bf16.mxu0 0
        %4305 = vmatpush1.bf16.msra.mxu0 0
        %4306 = vmatprep.subr.bf16.mxu0 0
        %4307 = vmatpush1.bf16.msra.mxu0 0
        %4308 = vmatprep.subr.bf16.mxu0 0
        %4309 = vmatpush1.bf16.msra.mxu0 0
        %4310 = vmatprep.subr.bf16.mxu0 0
        %4311 = vmatpush1.bf16.msra.mxu0 0
        %4312 = vmatprep.subr.bf16.mxu0 0
        %4313 = vmatpush1.bf16.msra.mxu0 %v4291
        %4314 = vmatprep.subr.bf16.mxu0 0
        %4315 = vmatpush1.bf16.msra.mxu0 %v4290
        %4316 = vmatprep.subr.bf16.mxu0 0
        %4317 = vmatpush2.bf16.msra.mxu0 0
        %4318 = vmatprep.subr.bf16.mxu0 0
        %4319 = vmatpush2.bf16.msra.mxu0 0
        %4320 = vmatprep.subr.bf16.mxu0 0
        %4321 = vmatpush2.bf16.msra.mxu0 0
        %4322 = vmatprep.subr.bf16.mxu0 0
        %4323 = vmatpush2.bf16.msra.mxu0 0
        %4324 = vmatprep.subr.bf16.mxu0 0
        %4325 = vmatpush2.bf16.msra.mxu0 0
        %4326 = vmatprep.subr.bf16.mxu0 0
        %4327 = vmatpush2.bf16.msra.mxu0 0
        %4328 = vmatprep.subr.bf16.mxu0 0
        %4329 = vmatpush2.bf16.msra.mxu0 0
        %4330 = vmatprep.subr.bf16.mxu0 0
        %4331 = vmatpush2.bf16.msra.mxu0 0
        %4332 = vmatprep.mubr.bf16.mxu0 0
        %4333 = vmatmul.mubr.bf16.gmra.mxu0 %v4295
        %v4334 = vpop.f32.mrf.mxu0
        %v4335 = vadd.f32 %v4280, %v4334
        %v4336 = vpop.f32.mrf.mxu0
        %v4337 = vpop.f32.mrf.mxu0
        %v4338 = vadd.f32 %v4280, %v4337
        %v4339 = vpop.f32.mrf.mxu0
        %4340 = vmatprep.mubr.bf16.mxu0 0
        %4341 = vmatmul.mubr.bf16.gmra.mxu0 %v4298
        %v4342 = vpop.f32.mrf.mxu0
        %v4343 = vadd.f32 %v4280, %v4342
        %v4344 = vpop.f32.mrf.mxu0
        %v4345 = vpop.f32.mrf.mxu0
        %v4346 = vpop.f32.mrf.mxu0
        %4347 = vdwg.mxu0
        %v4348 = vmul.f32 %v4335, 0.5
        %v4349 = vmul.f32 %v4338, 0.5
        %v4350 = vmul.f32 %v4343, 0.5
        %v4351 = vmul.f32 %v4335, 0.044715
        %v4352 = vmul.f32 %v4338, 0.044715
        %v4353 = vmul.f32 %v4343, 0.044715
        %v4354 = vmul.f32 %v4351, %v4335
        %v4355 = vmul.f32 %v4352, %v4338
        %v4356 = vmul.f32 %v4353, %v4343
        %v4357 = vmul.f32 %v4354, %v4335
        %v4358 = vmul.f32 %v4355, %v4338
        %v4359 = vmul.f32 %v4356, %v4343
        %v4360 = vadd.f32 %v4335, %v4357
        %v4361 = vadd.f32 %v4338, %v4358
        %v4362 = vadd.f32 %v4343, %v4359
        %v4363 = vmul.f32 %v4360, 0.7978846
        %v4364 = vmul.f32 %v4361, 0.7978846
        %v4365 = vmul.f32 %v4362, 0.7978846
        %v4366 = vtanh.pop %v4363
        %v4367 = vtanh.pop %v4364
        %v4368 = vtanh.pop %v4365
        %v4369 = vadd.f32 %v4366, 1.0
        %v4370 = vadd.f32 %v4367, 1.0
        %v4371 = vadd.f32 %v4368, 1.0
        %v4372 = vmul.f32 %v4348, %v4369
        %v4373 = vmul.f32 %v4349, %v4370
        %v4374 = vmul.f32 %v4350, %v4371
        %s4375 = scalar_lea.vmem %s11, 192
        %v4376 = vld [vmem:[%s4375] sm:$0xf]
        %v4377 = vld [vmem:[%s4375 + $0x4] sm:$0xf]
        %v4378 = vld [vmem:[%s4375 + $0x8] sm:$0xf]
        %v4379 = vld [vmem:[%s4375 + $0xc] sm:$0xf]
        %v4380 = vld [vmem:[%s4375 + $0x10] sm:$0xf]
        %v4381 = vld [vmem:[%s4375 + $0x14] sm:$0xf]
        %v4382 = vld [vmem:[%s4375 + $0x18] sm:$0xf]
        %v4383 = vld [vmem:[%s4375 + $0x1c] sm:$0xf]
        %v4384 = vld [vmem:[%s4375 + $0x20] sm:$0xf]
        %v4385 = vld [vmem:[%s4375 + $0x24] sm:$0xf]
        %v4386 = vld [vmem:[%s4375 + $0x28] sm:$0xf]
        %v4387 = vld [vmem:[%s4375 + $0x2c] sm:$0xf]
        %v4388 = vld [vmem:[%s4375 + $0x30] sm:$0xf]
        %v4389 = vld [vmem:[%s4375 + $0x34] sm:$0xf]
        %v4390 = vld [vmem:[%s4375 + $0x38] sm:$0xf]
        %v4391 = vld [vmem:[%s4375 + $0x3c] sm:$0xf]
        %v4392 = vpack.c.bf16 %v4373, %v4372
        %v4393 = vpack.c.bf16 %v4374, %v4374
        %v4410 = vunpack.c.l.b16 %v4376
        %v4411 = vunpack.c.l.b16 %v4377
        %v4412 = vunpack.c.l.b16 %v4378
        %v4413 = vunpack.c.l.b16 %v4379
        %v4414 = vunpack.c.l.b16 %v4380
        %v4415 = vunpack.c.l.b16 %v4381
        %v4416 = vunpack.c.l.b16 %v4382
        %v4417 = vunpack.c.l.b16 %v4383
        %v4418 = vunpack.c.l.b16 %v4384
        %v4419 = vunpack.c.l.b16 %v4385
        %v4420 = vunpack.c.l.b16 %v4386
        %v4421 = vunpack.c.l.b16 %v4387
        %v4422 = vunpack.c.l.b16 %v4388
        %v4423 = vunpack.c.l.b16 %v4389
        %v4424 = vunpack.c.l.b16 %v4390
        %v4425 = vunpack.c.l.b16 %v4391
        %v4426 = vpack.c.b16 %v4411, %v4410
        %v4427 = vpack.c.b16 %v4413, %v4412
        %v4428 = vpack.c.b16 %v4415, %v4414
        %v4429 = vpack.c.b16 %v4417, %v4416
        %v4430 = vpack.c.b16 %v4419, %v4418
        %v4431 = vpack.c.b16 %v4421, %v4420
        %v4432 = vpack.c.b16 %v4423, %v4422
        %v4433 = vpack.c.b16 %v4425, %v4424
        %4442 = vmatprep.subr.bf16.mxu0 0
        %4443 = vmatpush1.bf16.msra.mxu0 %v4433
        %4444 = vmatprep.subr.bf16.mxu0 0
        %4445 = vmatpush1.bf16.msra.mxu0 %v4432
        %4446 = vmatprep.subr.bf16.mxu0 0
        %4447 = vmatpush1.bf16.msra.mxu0 %v4431
        %4448 = vmatprep.subr.bf16.mxu0 0
        %4449 = vmatpush1.bf16.msra.mxu0 %v4430
        %4450 = vmatprep.subr.bf16.mxu0 0
        %4451 = vmatpush1.bf16.msra.mxu0 %v4429
        %4452 = vmatprep.subr.bf16.mxu0 0
        %4453 = vmatpush1.bf16.msra.mxu0 %v4428
        %4454 = vmatprep.subr.bf16.mxu0 0
        %4455 = vmatpush1.bf16.msra.mxu0 %v4427
        %4456 = vmatprep.subr.bf16.mxu0 0
        %4457 = vmatpush1.bf16.msra.mxu0 %v4426
        %4458 = vmatprep.subr.bf16.mxu0 0
        %4459 = vmatpush2.bf16.msra.mxu0 0
        %4460 = vmatprep.subr.bf16.mxu0 0
        %4461 = vmatpush2.bf16.msra.mxu0 0
        %4462 = vmatprep.subr.bf16.mxu0 0
        %4463 = vmatpush2.bf16.msra.mxu0 0
        %4464 = vmatprep.subr.bf16.mxu0 0
        %4465 = vmatpush2.bf16.msra.mxu0 0
        %4466 = vmatprep.subr.bf16.mxu0 0
        %4467 = vmatpush2.bf16.msra.mxu0 0
        %4468 = vmatprep.subr.bf16.mxu0 0
        %4469 = vmatpush2.bf16.msra.mxu0 0
        %4470 = vmatprep.subr.bf16.mxu0 0
        %4471 = vmatpush2.bf16.msra.mxu0 0
        %4472 = vmatprep.subr.bf16.mxu0 0
        %4473 = vmatpush2.bf16.msra.mxu0 0
        %4474 = vmatprep.mubr.bf16.mxu0 0
        %4475 = vmatmul.mubr.bf16.gmra.mxu0 %v4392
        %v4476 = vpop.f32.mrf.mxu0
        %v4477 = vadd.f32 0.0, %v4476
        %v4478 = vpop.f32.mrf.mxu0
        %v4479 = vpop.f32.mrf.mxu0
        %v4480 = vadd.f32 0.0, %v4479
        %v4481 = vpop.f32.mrf.mxu0
        %4482 = vmatprep.mubr.bf16.mxu0 0
        %4483 = vmatmul.mubr.bf16.gmra.mxu0 %v4393
        %v4484 = vpop.f32.mrf.mxu0
        %v4485 = vpop.f32.mrf.mxu0
        %v4486 = vpop.f32.mrf.mxu0
        %v4487 = vpop.f32.mrf.mxu0
        %4488 = vdwg.mxu0
        %v4489 = vadd.f32 %v4203, %v4477
        %v4490 = vadd.f32 %v4204, %v4480
        %s4491 = scalar_lea.vmem %s12, 3
        %v4492 = vld [vmem:[%s4491] sm:$0x1]
        %v4494 = vlaneseq
        %v4495 = vshrl.u32 %v4494, 7
        %v4496 = vsub.s32 0, %v4495
        %v4497 = vrot.slane %v4492, %v4496
        %v4499 = vadd.f32 %v4489, %v4497
        %v4500 = vadd.f32 %v4490, %v4497
        %v4501 = vld [vmem:[%s13] sm:$0x1]
        %v4502 = vld [vmem:[%s14] sm:$0x1]
        %v4503 = vsel %vm1071, %v4499, 0.0
        %4504 = vadd.xlane.f32.xlu0 %v4503
        %v4505 = vpop.xlane.xlu0 %4504
        %v4506 = vsel %vm1071, %v4500, 0.0
        %4507 = vadd.xlane.f32.xlu0 %v4506
        %v4508 = vpop.xlane.xlu0 %4507
        %v4509 = vmul.f32 %v4505, %v1082
        %v4510 = vmul.f32 %v4508, %v1082
        %v4511 = vsub.f32 %v4499, %v4509
        %v4512 = vsub.f32 %v4500, %v4510
        %v4513 = vmul.f32 %v4511, %v4511
        %v4514 = vmul.f32 %v4512, %v4512
        %v4515 = vsel %vm1071, %v4513, 0.0
        %4516 = vadd.xlane.f32.xlu0 %v4515
        %v4517 = vpop.xlane.xlu0 %4516
        %v4518 = vsel %vm1071, %v4514, 0.0
        %4519 = vadd.xlane.f32.xlu0 %v4518
        %v4520 = vpop.xlane.xlu0 %4519
        %v4521 = vmul.f32 %v4517, %v1082
        %v4522 = vmul.f32 %v4520, %v1082
        %v4523 = vadd.f32 %v4521, 1e-05
        %v4524 = vadd.f32 %v4522, 1e-05
        %v4525 = vrsqrt.pop %v4523
        %v4526 = vrsqrt.pop %v4524
        %v4527 = vmul.f32 %v4511, %v4525
        %v4528 = vmul.f32 %v4512, %v4526
        %v4530 = vlaneseq
        %v4531 = vshrl.u32 %v4530, 7
        %v4532 = vsub.s32 0, %v4531
        %v4533 = vrot.slane %v4501, %v4532
        %v4535 = vmul.f32 %v4527, %v4533
        %v4536 = vmul.f32 %v4528, %v4533
        %v4538 = vlaneseq
        %v4539 = vshrl.u32 %v4538, 7
        %v4540 = vsub.s32 0, %v4539
        %v4541 = vrot.slane %v4502, %v4540
        %v4543 = vadd.f32 %v4535, %v4541
        %v4544 = vadd.f32 %v4536, %v4541
        %v4545 = vld [vmem:[%s16] sm:$0x1]
        %v4546 = vld [vmem:[%s17] sm:$0x1]
        %v4547 = vld [vmem:[%s18] sm:$0x1]
        %v4548 = vld [vmem:[%s19] sm:$0xf]
        %v4549 = vld [vmem:[%s19 + $0x4] sm:$0xf]
        %v4550 = vld [vmem:[%s19 + $0x8] sm:$0xf]
        %v4551 = vld [vmem:[%s19 + $0xc] sm:$0xf]
        %v4552 = vld [vmem:[%s20] sm:$0x1]
        %v4553 = vld [vmem:[%s15] sm:$0xf]
        %v4554 = vld [vmem:[%s15 + $0x4] sm:$0xf]
        %v4555 = vld [vmem:[%s15 + $0x8] sm:$0xf]
        %v4556 = vld [vmem:[%s15 + $0xc] sm:$0xf]
        %v4557 = vpack.c.bf16 %v1925, %v1924
        %v4559 = vlaneseq
        %v4560 = vshrl.u32 %v4559, 7
        %v4561 = vsub.s32 0, %v4560
        %v4562 = vrot.slane %v4545, %v4561
        %v4568 = vunpack.c.l.b16 %v4553
        %v4569 = vunpack.c.l.b16 %v4554
        %v4570 = vunpack.c.l.b16 %v4555
        %v4571 = vunpack.c.l.b16 %v4556
        %v4572 = vpack.c.b16 %v4569, %v4568
        %v4573 = vpack.c.b16 %v4571, %v4570
        %v4577 = vsel %vm1071, %v4557, 0
        %4579 = vmatprep.subr.bf16.mxu0 0
        %4580 = vmatpush1.bf16.msra.mxu0 0
        %4581 = vmatprep.subr.bf16.mxu0 0
        %4582 = vmatpush1.bf16.msra.mxu0 0
        %4583 = vmatprep.subr.bf16.mxu0 0
        %4584 = vmatpush1.bf16.msra.mxu0 0
        %4585 = vmatprep.subr.bf16.mxu0 0
        %4586 = vmatpush1.bf16.msra.mxu0 0
        %4587 = vmatprep.subr.bf16.mxu0 0
        %4588 = vmatpush1.bf16.msra.mxu0 0
        %4589 = vmatprep.subr.bf16.mxu0 0
        %4590 = vmatpush1.bf16.msra.mxu0 0
        %4591 = vmatprep.subr.bf16.mxu0 0
        %4592 = vmatpush1.bf16.msra.mxu0 %v4573
        %4593 = vmatprep.subr.bf16.mxu0 0
        %4594 = vmatpush1.bf16.msra.mxu0 %v4572
        %4595 = vmatprep.subr.bf16.mxu0 0
        %4596 = vmatpush2.bf16.msra.mxu0 0
        %4597 = vmatprep.subr.bf16.mxu0 0
        %4598 = vmatpush2.bf16.msra.mxu0 0
        %4599 = vmatprep.subr.bf16.mxu0 0
        %4600 = vmatpush2.bf16.msra.mxu0 0
        %4601 = vmatprep.subr.bf16.mxu0 0
        %4602 = vmatpush2.bf16.msra.mxu0 0
        %4603 = vmatprep.subr.bf16.mxu0 0
        %4604 = vmatpush2.bf16.msra.mxu0 0
        %4605 = vmatprep.subr.bf16.mxu0 0
        %4606 = vmatpush2.bf16.msra.mxu0 0
        %4607 = vmatprep.subr.bf16.mxu0 0
        %4608 = vmatpush2.bf16.msra.mxu0 0
        %4609 = vmatprep.subr.bf16.mxu0 0
        %4610 = vmatpush2.bf16.msra.mxu0 0
        %4611 = vmatprep.mubr.bf16.mxu0 0
        %4612 = vmatmul.mubr.bf16.gmra.mxu0 %v4577
        %v4613 = vpop.f32.mrf.mxu0
        %v4614 = vadd.f32 %v4562, %v4613
        %v4615 = vpop.f32.mrf.mxu0
        %v4616 = vpop.f32.mrf.mxu0
        %v4617 = vadd.f32 %v4562, %v4616
        %v4618 = vpop.f32.mrf.mxu0
        %4619 = vdwg.mxu0
        %v4621 = vlaneseq
        %v4622 = vshrl.u32 %v4621, 7
        %v4623 = vsub.s32 0, %v4622
        %v4624 = vrot.slane %v4546, %v4623
        %v4626 = vmul.f32 %v4614, %v4624
        %v4627 = vmul.f32 %v4617, %v4624
        %v4629 = vlaneseq
        %v4630 = vshrl.u32 %v4629, 7
        %v4631 = vsub.s32 0, %v4630
        %v4632 = vrot.slane %v4547, %v4631
        %v4634 = vadd.f32 %v4626, %v4632
        %v4635 = vadd.f32 %v4627, %v4632
        %v4636 = vmul.f32 %v4634, 0.5
        %v4637 = vmul.f32 %v4635, 0.5
        %v4638 = vmul.f32 %v4634, 0.044715
        %v4639 = vmul.f32 %v4635, 0.044715
        %v4640 = vmul.f32 %v4638, %v4634
        %v4641 = vmul.f32 %v4639, %v4635
        %v4642 = vmul.f32 %v4640, %v4634
        %v4643 = vmul.f32 %v4641, %v4635
        %v4644 = vadd.f32 %v4634, %v4642
        %v4645 = vadd.f32 %v4635, %v4643
        %v4646 = vmul.f32 %v4644, 0.7978846
        %v4647 = vmul.f32 %v4645, 0.7978846
        %v4648 = vtanh.pop %v4646
        %v4649 = vtanh.pop %v4647
        %v4650 = vadd.f32 %v4648, 1.0
        %v4651 = vadd.f32 %v4649, 1.0
        %v4652 = vmul.f32 %v4636, %v4650
        %v4653 = vmul.f32 %v4637, %v4651
        %v4654 = vpack.c.bf16 %v4653, %v4652
        %v4656 = vlaneseq
        %v4657 = vshrl.u32 %v4656, 7
        %v4658 = vsub.s32 0, %v4657
        %v4659 = vrot.slane %v4552, %v4658
        %v4665 = vunpack.c.l.b16 %v4548
        %v4666 = vunpack.c.l.b16 %v4549
        %v4667 = vunpack.c.l.b16 %v4550
        %v4668 = vunpack.c.l.b16 %v4551
        %v4669 = vpack.c.b16 %v4666, %v4665
        %v4670 = vpack.c.b16 %v4668, %v4667
        %v4674 = vsel %vm1071, %v4654, 0
        %4676 = vmatprep.subr.bf16.mxu0 0
        %4677 = vmatpush1.bf16.msra.mxu0 0
        %4678 = vmatprep.subr.bf16.mxu0 0
        %4679 = vmatpush1.bf16.msra.mxu0 0
        %4680 = vmatprep.subr.bf16.mxu0 0
        %4681 = vmatpush1.bf16.msra.mxu0 0
        %4682 = vmatprep.subr.bf16.mxu0 0
        %4683 = vmatpush1.bf16.msra.mxu0 0
        %4684 = vmatprep.subr.bf16.mxu0 0
        %4685 = vmatpush1.bf16.msra.mxu0 0
        %4686 = vmatprep.subr.bf16.mxu0 0
        %4687 = vmatpush1.bf16.msra.mxu0 0
        %4688 = vmatprep.subr.bf16.mxu0 0
        %4689 = vmatpush1.bf16.msra.mxu0 %v4670
        %4690 = vmatprep.subr.bf16.mxu0 0
        %4691 = vmatpush1.bf16.msra.mxu0 %v4669
        %4692 = vmatprep.subr.bf16.mxu0 0
        %4693 = vmatpush2.bf16.msra.mxu0 0
        %4694 = vmatprep.subr.bf16.mxu0 0
        %4695 = vmatpush2.bf16.msra.mxu0 0
        %4696 = vmatprep.subr.bf16.mxu0 0
        %4697 = vmatpush2.bf16.msra.mxu0 0
        %4698 = vmatprep.subr.bf16.mxu0 0
        %4699 = vmatpush2.bf16.msra.mxu0 0
        %4700 = vmatprep.subr.bf16.mxu0 0
        %4701 = vmatpush2.bf16.msra.mxu0 0
        %4702 = vmatprep.subr.bf16.mxu0 0
        %4703 = vmatpush2.bf16.msra.mxu0 0
        %4704 = vmatprep.subr.bf16.mxu0 0
        %4705 = vmatpush2.bf16.msra.mxu0 0
        %4706 = vmatprep.subr.bf16.mxu0 0
        %4707 = vmatpush2.bf16.msra.mxu0 0
        %4708 = vmatprep.mubr.bf16.mxu0 0
        %4709 = vmatmul.mubr.bf16.gmra.mxu0 %v4674
        %v4710 = vpop.f32.mrf.mxu0
        %v4711 = vadd.f32 %v4659, %v4710
        %v4712 = vpop.f32.mrf.mxu0
        %v4713 = vpop.f32.mrf.mxu0
        %v4714 = vadd.f32 %v4659, %v4713
        %v4715 = vpop.f32.mrf.mxu0
        %4716 = vdwg.mxu0
        %4717 = vst [vmem:[%s873] sm:$0xff] %v4711
        %4718 = vst [vmem:[%s873 + $0x8] sm:$0xff] %v4714
        %4720 = vrot.lane.b32.xlu0 %v4654, 96
        %v4721 = vpop.permute.xlu0 %4720
        %v4723 = vsel %vm1071, %v4721, 0
        %4725 = vmatprep.subr.bf16.mxu0 0
        %4726 = vmatpush1.bf16.msra.mxu0 0
        %4727 = vmatprep.subr.bf16.mxu0 0
        %4728 = vmatpush1.bf16.msra.mxu0 0
        %4729 = vmatprep.subr.bf16.mxu0 0
        %4730 = vmatpush1.bf16.msra.mxu0 0
        %4731 = vmatprep.subr.bf16.mxu0 0
        %4732 = vmatpush1.bf16.msra.mxu0 0
        %4733 = vmatprep.subr.bf16.mxu0 0
        %4734 = vmatpush1.bf16.msra.mxu0 0
        %4735 = vmatprep.subr.bf16.mxu0 0
        %4736 = vmatpush1.bf16.msra.mxu0 0
        %4737 = vmatprep.subr.bf16.mxu0 0
        %4738 = vmatpush1.bf16.msra.mxu0 %v4670
        %4739 = vmatprep.subr.bf16.mxu0 0
        %4740 = vmatpush1.bf16.msra.mxu0 %v4669
        %4741 = vmatprep.subr.bf16.mxu0 0
        %4742 = vmatpush2.bf16.msra.mxu0 0
        %4743 = vmatprep.subr.bf16.mxu0 0
        %4744 = vmatpush2.bf16.msra.mxu0 0
        %4745 = vmatprep.subr.bf16.mxu0 0
        %4746 = vmatpush2.bf16.msra.mxu0 0
        %4747 = vmatprep.subr.bf16.mxu0 0
        %4748 = vmatpush2.bf16.msra.mxu0 0
        %4749 = vmatprep.subr.bf16.mxu0 0
        %4750 = vmatpush2.bf16.msra.mxu0 0
        %4751 = vmatprep.subr.bf16.mxu0 0
        %4752 = vmatpush2.bf16.msra.mxu0 0
        %4753 = vmatprep.subr.bf16.mxu0 0
        %4754 = vmatpush2.bf16.msra.mxu0 0
        %4755 = vmatprep.subr.bf16.mxu0 0
        %4756 = vmatpush2.bf16.msra.mxu0 0
        %4757 = vmatprep.mubr.bf16.mxu0 0
        %4758 = vmatmul.mubr.bf16.gmra.mxu0 %v4723
        %v4759 = vpop.f32.mrf.mxu0
        %v4760 = vadd.f32 %v4659, %v4759
        %v4761 = vpop.f32.mrf.mxu0
        %v4762 = vpop.f32.mrf.mxu0
        %v4763 = vadd.f32 %v4659, %v4762
        %v4764 = vpop.f32.mrf.mxu0
        %4765 = vdwg.mxu0
        %s4766 = scalar_lea.vmem %s873, 16
        %4767 = vst [vmem:[%s4766] sm:$0xff] %v4760
        %4768 = vst [vmem:[%s4766 + $0x8] sm:$0xff] %v4763
        %4769 = vrot.lane.b32.xlu0 %v4654, 64
        %v4770 = vpop.permute.xlu0 %4769
        %v4772 = vsel %vm1071, %v4770, 0
        %4774 = vmatprep.subr.bf16.mxu0 0
        %4775 = vmatpush1.bf16.msra.mxu0 0
        %4776 = vmatprep.subr.bf16.mxu0 0
        %4777 = vmatpush1.bf16.msra.mxu0 0
        %4778 = vmatprep.subr.bf16.mxu0 0
        %4779 = vmatpush1.bf16.msra.mxu0 0
        %4780 = vmatprep.subr.bf16.mxu0 0
        %4781 = vmatpush1.bf16.msra.mxu0 0
        %4782 = vmatprep.subr.bf16.mxu0 0
        %4783 = vmatpush1.bf16.msra.mxu0 0
        %4784 = vmatprep.subr.bf16.mxu0 0
        %4785 = vmatpush1.bf16.msra.mxu0 0
        %4786 = vmatprep.subr.bf16.mxu0 0
        %4787 = vmatpush1.bf16.msra.mxu0 %v4670
        %4788 = vmatprep.subr.bf16.mxu0 0
        %4789 = vmatpush1.bf16.msra.mxu0 %v4669
        %4790 = vmatprep.subr.bf16.mxu0 0
        %4791 = vmatpush2.bf16.msra.mxu0 0
        %4792 = vmatprep.subr.bf16.mxu0 0
        %4793 = vmatpush2.bf16.msra.mxu0 0
        %4794 = vmatprep.subr.bf16.mxu0 0
        %4795 = vmatpush2.bf16.msra.mxu0 0
        %4796 = vmatprep.subr.bf16.mxu0 0
        %4797 = vmatpush2.bf16.msra.mxu0 0
        %4798 = vmatprep.subr.bf16.mxu0 0
        %4799 = vmatpush2.bf16.msra.mxu0 0
        %4800 = vmatprep.subr.bf16.mxu0 0
        %4801 = vmatpush2.bf16.msra.mxu0 0
        %4802 = vmatprep.subr.bf16.mxu0 0
        %4803 = vmatpush2.bf16.msra.mxu0 0
        %4804 = vmatprep.subr.bf16.mxu0 0
        %4805 = vmatpush2.bf16.msra.mxu0 0
        %4806 = vmatprep.mubr.bf16.mxu0 0
        %4807 = vmatmul.mubr.bf16.gmra.mxu0 %v4772
        %v4808 = vpop.f32.mrf.mxu0
        %v4809 = vadd.f32 %v4659, %v4808
        %v4810 = vpop.f32.mrf.mxu0
        %v4811 = vpop.f32.mrf.mxu0
        %v4812 = vadd.f32 %v4659, %v4811
        %v4813 = vpop.f32.mrf.mxu0
        %4814 = vdwg.mxu0
        %s4815 = scalar_lea.vmem %s873, 32
        %4816 = vst [vmem:[%s4815] sm:$0xff] %v4809
        %4817 = vst [vmem:[%s4815 + $0x8] sm:$0xff] %v4812
        %4818 = vrot.lane.b32.xlu0 %v4654, 32
        %v4819 = vpop.permute.xlu0 %4818
        %v4821 = vsel %vm1071, %v4819, 0
        %4823 = vmatprep.subr.bf16.mxu0 0
        %4824 = vmatpush1.bf16.msra.mxu0 0
        %4825 = vmatprep.subr.bf16.mxu0 0
        %4826 = vmatpush1.bf16.msra.mxu0 0
        %4827 = vmatprep.subr.bf16.mxu0 0
        %4828 = vmatpush1.bf16.msra.mxu0 0
        %4829 = vmatprep.subr.bf16.mxu0 0
        %4830 = vmatpush1.bf16.msra.mxu0 0
        %4831 = vmatprep.subr.bf16.mxu0 0
        %4832 = vmatpush1.bf16.msra.mxu0 0
        %4833 = vmatprep.subr.bf16.mxu0 0
        %4834 = vmatpush1.bf16.msra.mxu0 0
        %4835 = vmatprep.subr.bf16.mxu0 0
        %4836 = vmatpush1.bf16.msra.mxu0 %v4670
        %4837 = vmatprep.subr.bf16.mxu0 0
        %4838 = vmatpush1.bf16.msra.mxu0 %v4669
        %4839 = vmatprep.subr.bf16.mxu0 0
        %4840 = vmatpush2.bf16.msra.mxu0 0
        %4841 = vmatprep.subr.bf16.mxu0 0
        %4842 = vmatpush2.bf16.msra.mxu0 0
        %4843 = vmatprep.subr.bf16.mxu0 0
        %4844 = vmatpush2.bf16.msra.mxu0 0
        %4845 = vmatprep.subr.bf16.mxu0 0
        %4846 = vmatpush2.bf16.msra.mxu0 0
        %4847 = vmatprep.subr.bf16.mxu0 0
        %4848 = vmatpush2.bf16.msra.mxu0 0
        %4849 = vmatprep.subr.bf16.mxu0 0
        %4850 = vmatpush2.bf16.msra.mxu0 0
        %4851 = vmatprep.subr.bf16.mxu0 0
        %4852 = vmatpush2.bf16.msra.mxu0 0
        %4853 = vmatprep.subr.bf16.mxu0 0
        %4854 = vmatpush2.bf16.msra.mxu0 0
        %4855 = vmatprep.mubr.bf16.mxu0 0
        %4856 = vmatmul.mubr.bf16.gmra.mxu0 %v4821
        %v4857 = vpop.f32.mrf.mxu0
        %v4858 = vadd.f32 %v4659, %v4857
        %v4859 = vpop.f32.mrf.mxu0
        %v4860 = vpop.f32.mrf.mxu0
        %v4861 = vadd.f32 %v4659, %v4860
        %v4862 = vpop.f32.mrf.mxu0
        %4863 = vdwg.mxu0
        %s4864 = scalar_lea.vmem %s873, 48
        %4865 = vst [vmem:[%s4864] sm:$0xff] %v4858
        %4866 = vst [vmem:[%s4864 + $0x8] sm:$0xff] %v4861
        %v4867 = vld [vmem:[%s21] sm:$0xf]
        %v4868 = vld [vmem:[%s21 + $0x4] sm:$0xf]
        %v4869 = vld [vmem:[%s21 + $0x8] sm:$0xf]
        %v4870 = vld [vmem:[%s21 + $0xc] sm:$0xf]
        %v4871 = vpack.c.bf16 %v2784, %v2783
        %v4872 = vld [vmem:[%s22] sm:$0x1]
        %v4874 = vlaneseq
        %v4875 = vshrl.u32 %v4874, 7
        %v4876 = vsub.s32 0, %v4875
        %v4877 = vrot.slane %v4872, %v4876
        %v4883 = vunpack.c.l.b16 %v4867
        %v4884 = vunpack.c.l.b16 %v4868
        %v4885 = vunpack.c.l.b16 %v4869
        %v4886 = vunpack.c.l.b16 %v4870
        %v4887 = vpack.c.b16 %v4884, %v4883
        %v4888 = vpack.c.b16 %v4886, %v4885
        %v4892 = vsel %vm1071, %v4871, 0
        %4894 = vmatprep.subr.bf16.mxu0 0
        %4895 = vmatpush1.bf16.msra.mxu0 0
        %4896 = vmatprep.subr.bf16.mxu0 0
        %4897 = vmatpush1.bf16.msra.mxu0 0
        %4898 = vmatprep.subr.bf16.mxu0 0
        %4899 = vmatpush1.bf16.msra.mxu0 0
        %4900 = vmatprep.subr.bf16.mxu0 0
        %4901 = vmatpush1.bf16.msra.mxu0 0
        %4902 = vmatprep.subr.bf16.mxu0 0
        %4903 = vmatpush1.bf16.msra.mxu0 0
        %4904 = vmatprep.subr.bf16.mxu0 0
        %4905 = vmatpush1.bf16.msra.mxu0 0
        %4906 = vmatprep.subr.bf16.mxu0 0
        %4907 = vmatpush1.bf16.msra.mxu0 %v4888
        %4908 = vmatprep.subr.bf16.mxu0 0
        %4909 = vmatpush1.bf16.msra.mxu0 %v4887
        %4910 = vmatprep.subr.bf16.mxu0 0
        %4911 = vmatpush2.bf16.msra.mxu0 0
        %4912 = vmatprep.subr.bf16.mxu0 0
        %4913 = vmatpush2.bf16.msra.mxu0 0
        %4914 = vmatprep.subr.bf16.mxu0 0
        %4915 = vmatpush2.bf16.msra.mxu0 0
        %4916 = vmatprep.subr.bf16.mxu0 0
        %4917 = vmatpush2.bf16.msra.mxu0 0
        %4918 = vmatprep.subr.bf16.mxu0 0
        %4919 = vmatpush2.bf16.msra.mxu0 0
        %4920 = vmatprep.subr.bf16.mxu0 0
        %4921 = vmatpush2.bf16.msra.mxu0 0
        %4922 = vmatprep.subr.bf16.mxu0 0
        %4923 = vmatpush2.bf16.msra.mxu0 0
        %4924 = vmatprep.subr.bf16.mxu0 0
        %4925 = vmatpush2.bf16.msra.mxu0 0
        %4926 = vmatprep.mubr.bf16.mxu0 0
        %4927 = vmatmul.mubr.bf16.gmra.mxu0 %v4892
        %v4928 = vpop.f32.mrf.mxu0
        %v4929 = vadd.f32 %v4877, %v4928
        %v4930 = vpop.f32.mrf.mxu0
        %v4931 = vpop.f32.mrf.mxu0
        %v4932 = vadd.f32 %v4877, %v4931
        %v4933 = vpop.f32.mrf.mxu0
        %4934 = vdwg.mxu0
        %4935 = vst [vmem:[%s878] sm:$0xff] %v4929
        %4936 = vst [vmem:[%s878 + $0x8] sm:$0xff] %v4932
        %4937 = vst.msk [vmem:[%s844] sm:$0xff] %vm1071, %v3642
        %4938 = vst.msk [vmem:[%s844 + $0x8] sm:$0xff] %vm1071, %v3643
        %v4941 = vcombine.high %v4499, %v4499
        %v4943 = vunpack.c.l.s4 1983009808
        %v4944 = vunpack.c.0.s8 %v4943
        %v4945 = vlaneseq
        %v4946 = vshrl.u32 %v4945, 7
        %v4947 = vsub.s32 %v4944, %v4946
        %v4948 = vrot.slane %v4499, %v4947
        %v4950 = vunpack.c.l.s4 1983009808
        %v4951 = vunpack.c.0.s8 %v4950
        %v4952 = vlaneseq
        %v4953 = vshrl.u32 %v4952, 7
        %v4954 = vsub.s32 %v4951, %v4953
        %v4955 = vrot.slane %v4941, %v4954
        %v4956 = vcombine.high %v4948, %v4948
        %v4957 = vcombine.high %v4955, %v4955
        %v4958 = vcombine.high %v4500, %v4500
        %v4960 = vunpack.c.l.s4 1983009808
        %v4961 = vunpack.c.0.s8 %v4960
        %v4962 = vlaneseq
        %v4963 = vshrl.u32 %v4962, 7
        %v4964 = vsub.s32 %v4961, %v4963
        %v4965 = vrot.slane %v4500, %v4964
        %v4967 = vunpack.c.l.s4 1983009808
        %v4968 = vunpack.c.0.s8 %v4967
        %v4969 = vlaneseq
        %v4970 = vshrl.u32 %v4969, 7
        %v4971 = vsub.s32 %v4968, %v4970
        %v4972 = vrot.slane %v4958, %v4971
        %v4973 = vcombine.high %v4965, %v4965
        %v4974 = vcombine.high %v4972, %v4972
        %v4983 = vrot.slane %v4948, 7
        %v4984 = vrot.slane %v4983, 2
        %v4985 = vrot.slane %v4956, 7
        %v4986 = vrot.slane %v4985, 2
        %v4987 = vrot.slane %v4955, 7
        %v4988 = vrot.slane %v4987, 2
        %v4989 = vrot.slane %v4957, 7
        %v4990 = vrot.slane %v4989, 2
        %v4991 = vrot.slane %v4965, 7
        %v4992 = vrot.slane %v4991, 2
        %v4993 = vrot.slane %v4973, 7
        %v4994 = vrot.slane %v4993, 2
        %v4995 = vrot.slane %v4972, 7
        %v4996 = vrot.slane %v4995, 2
        %v4997 = vrot.slane %v4974, 7
        %v4998 = vrot.slane %v4997, 2
        %v5007 = vmax.f32 %v4948, %v4984
        %v5008 = vmax.f32 %v4956, %v4986
        %v5009 = vmax.f32 %v4955, %v4988
        %v5010 = vmax.f32 %v4957, %v4990
        %v5011 = vmax.f32 %v4965, %v4992
        %v5012 = vmax.f32 %v4973, %v4994
        %v5013 = vmax.f32 %v4972, %v4996
        %v5014 = vmax.f32 %v4974, %v4998
        %v5015 = vmax.f32 %v5007, %v5009
        %v5016 = vmax.f32 %v5008, %v5010
        %v5017 = vmax.f32 %v5011, %v5013
        %v5018 = vmax.f32 %v5012, %v5014
        %v5023 = vlaneseq
        %v5024 = vshrl.u32 %v5023, 7
        %v5025 = vsub.s32 0, %v5024
        %v5026 = vrot.slane %v5015, %v5025
        %v5027 = vlaneseq
        %v5028 = vshrl.u32 %v5027, 7
        %v5029 = vsub.s32 0, %v5028
        %v5030 = vrot.slane %v5016, %v5029
        %v5031 = vlaneseq
        %v5032 = vshrl.u32 %v5031, 7
        %v5033 = vsub.s32 0, %v5032
        %v5034 = vrot.slane %v5017, %v5033
        %v5035 = vlaneseq
        %v5036 = vshrl.u32 %v5035, 7
        %v5037 = vsub.s32 0, %v5036
        %v5038 = vrot.slane %v5018, %v5037
        %vm5039 = vcmask 1041409
        %v5040 = vsel %vm5039, %v5030, %v5026
        %vm5041 = vcmask 1042434
        %v5042 = vsel %vm5041, %v5034, %v5040
        %vm5043 = vcmask 1043459
        %v5044 = vsel %vm5043, %v5038, %v5042
        %vm5046 = vcmask 257024
        %5047 = vst.msk [vmem:[%s851] sm:$0xf] %vm5046, %v5044
        %5048 = vst.msk [vmem:[%s858] sm:$0xff] %vm1071, %v4543
        %5049 = vst.msk [vmem:[%s858 + $0x8] sm:$0xff] %vm1071, %v4544
        %p5050 = scmp.lt.s32.totalorder %s45, 1
        %s5051 = scalar_select %p5050, %s45, 1
        %s5052 = smul.addr %s5051, 8
        %s5053 = smul.addr %s5052, 8
        %s5054 = scalar_lea.vmem %s23, %s5053
        %p5055 = scmp.lt.s32.totalorder %s45, 1
        %s5056 = scalar_select %p5055, %s45, 1
        %s5057 = smul.addr %s5056, 2
        %s5058 = smul.addr %s5057, 8
        %s5059 = scalar_lea.vmem %s24, %s5058
        %s5060 = sand.u32 %s598, 1
        %s5061 = scalar_lea.sflag [#allocation3], %s5060
        %s5062 = sand.u32 %s598, 1
        %s5063 = smul.addr %s5062, 16
        %s5064 = scalar_lea.vmem [#allocation2], %s5063
        %s5065 = sand.u32 %s45, 1
        %s5066 = scalar_lea.sflag [#allocation5], %s5065
        %s5067 = sand.u32 %s624, 1
        %s5068 = smul.addr %s5067, 4
        %s5069 = scalar_lea.vmem [#allocation4], %s5068
        %s5070 = sand.u32 %s45, 1
        %s5071 = scalar_lea.sflag [#allocation5], %s5070
        %s5072 = sand.u32 %s650, 1
        %s5073 = smul.addr %s5072, 16
        %s5074 = scalar_lea.vmem [#allocation6], %s5073
        // Predicated region
        $region113: #{segment_encoder_forward.3} parent=111 // pred_check
          %p5075 = pneg %p556
        $region114: #{segment_encoder_forward.3} parent=111 // pred_check_branch
          %5077 = sbr.rel (%p5075) target = $region116
        $region115: #{segment_encoder_forward.3} parent=111 // pred_region
          _
        $region116: #{segment_encoder_forward.3} parent=111 // pred_fallthru
          _
        // Predicated region
        $region117: #{segment_encoder_forward.3} parent=111 // pred_check
          %p5078 = pneg %p582
        $region118: #{segment_encoder_forward.3} parent=111 // pred_check_branch
          %5080 = sbr.rel (%p5078) target = $region120
        $region119: #{segment_encoder_forward.3} parent=111 // pred_region
          _
        $region120: #{segment_encoder_forward.3} parent=111 // pred_fallthru
          _
        // Predicated region
        $region121: #{segment_encoder_forward.3} parent=111 // pred_check
          %p5081 = pneg %p608
        $region122: #{segment_encoder_forward.3} parent=111 // pred_check_branch
          %5083 = sbr.rel (%p5081) target = $region124
        $region123: #{segment_encoder_forward.3} parent=111 // pred_region
          %s5085 = ssub.s32 256, 256
          %5086 = vsyncadd %s5061, %s5085
          %s5087 = smul.addr %s45, 2
          %s5088 = smul.addr %s5087, 128
          %s5089 = scalar_lea.hbm %s25, %s5088
          %s5090 = sshll.u32 %s5064, 4
          %s5091 = int_to_ptr.vmem [resolvable:$true] %s5090
          %5096 = dma.vmem_to_hbm [thread:$0]  %s5091, 256, %s5089, %s5061, 128, 128, 8
        $region124: #{segment_encoder_forward.3} parent=111 // pred_fallthru
          _
        // Predicated region
        $region125: #{segment_encoder_forward.3} parent=111 // pred_check
          %p5097 = pneg %p634
        $region126: #{segment_encoder_forward.3} parent=111 // pred_check_branch
          %5099 = sbr.rel (%p5097) target = $region128
        $region127: #{segment_encoder_forward.3} parent=111 // pred_region
          %s5101 = ssub.s32 64, 64
          %5102 = vsyncadd %s5066, %s5101
          %s5103 = smul.addr %s45, 64
          %s5104 = scalar_lea.hbm %s26, %s5103
          %s5106 = sshll.u32 %s5069, 4
          %s5107 = int_to_ptr.vmem [resolvable:$true] %s5106
          %5109 = dma.vmem_to_hbm [thread:$0]  %s5107, 64, %s5104, %s5066
        $region128: #{segment_encoder_forward.3} parent=111 // pred_fallthru
          _
        // Predicated region
        $region129: #{segment_encoder_forward.3} parent=111 // pred_check
          %p5110 = pneg %p660
        $region130: #{segment_encoder_forward.3} parent=111 // pred_check_branch
          %5112 = sbr.rel (%p5110) target = $region132
        $region131: #{segment_encoder_forward.3} parent=111 // pred_region
          %s5114 = ssub.s32 256, 256
          %5115 = vsyncadd %s5071, %s5114
          %s5116 = smul.addr %s45, 2
          %s5117 = smul.addr %s5116, 128
          %s5118 = scalar_lea.hbm %s27, %s5117
          %s5119 = sshll.u32 %s5074, 4
          %s5120 = int_to_ptr.vmem [resolvable:$true] %s5119
          %5125 = dma.vmem_to_hbm [thread:$0]  %s5120, 256, %s5118, %s5071, 128, 128, 8
        $region132: #{segment_encoder_forward.3} parent=111 // pred_fallthru
          _
      $region112: #{segment_encoder_forward.3} parent=5 // pred_fallthru
        _
      %p5126 = scmp.le.s32.totalorder 2, %s40
      // Predicated region
      $region133: #{segment_encoder_forward.3} parent=5 // pred_check
        %p5127 = pneg %p5126
      $region134: #{segment_encoder_forward.3} parent=5 // pred_check_branch
        %5129 = sbr.rel (%p5127) target = $region136
      $region135: #{segment_encoder_forward.3} parent=5 // pred_region
        %s5130 = ssub.s32 %s40, 2
        // Predicated region
        $region137: #{segment_encoder_forward.3} parent=135 // pred_check
          %p5131 = pneg %p562
        $region138: #{segment_encoder_forward.3} parent=135 // pred_check_branch
          %5133 = sbr.rel (%p5131) target = $region140
        $region139: #{segment_encoder_forward.3} parent=135 // pred_region
          %p5134 = scmp.lt.s32.totalorder %s46, 1
          %s5135 = scalar_select %p5134, %s46, 1
          %s5136 = smul.addr %s5135, 8
          %s5137 = smul.addr %s5136, 8
          %s5138 = scalar_lea.vmem %s23, %s5137
        $region140: #{segment_encoder_forward.3} parent=135 // pred_fallthru
          _
        // Predicated region
        $region141: #{segment_encoder_forward.3} parent=135 // pred_check
          %p5139 = pneg %p588
        $region142: #{segment_encoder_forward.3} parent=135 // pred_check_branch
          %5141 = sbr.rel (%p5139) target = $region144
        $region143: #{segment_encoder_forward.3} parent=135 // pred_region
          %p5142 = scmp.lt.s32.totalorder %s46, 1
          %s5143 = scalar_select %p5142, %s46, 1
          %s5144 = smul.addr %s5143, 2
          %s5145 = smul.addr %s5144, 8
          %s5146 = scalar_lea.vmem %s24, %s5145
        $region144: #{segment_encoder_forward.3} parent=135 // pred_fallthru
          _
        // Predicated region
        $region145: #{segment_encoder_forward.3} parent=135 // pred_check
          %p5147 = pneg %p614
        $region146: #{segment_encoder_forward.3} parent=135 // pred_check_branch
          %5149 = sbr.rel (%p5147) target = $region148
        $region147: #{segment_encoder_forward.3} parent=135 // pred_region
          %s5150 = sand.u32 %s599, 1
          %s5151 = scalar_lea.sflag [#allocation3], %s5150
          %s5152 = sand.u32 %s599, 1
          %s5153 = smul.addr %s5152, 16
          %s5154 = scalar_lea.vmem [#allocation2], %s5153
          %5155 = dma.done %s5151, 256
        $region148: #{segment_encoder_forward.3} parent=135 // pred_fallthru
          _
        // Predicated region
        $region149: #{segment_encoder_forward.3} parent=135 // pred_check
          %p5156 = pneg %p640
        $region150: #{segment_encoder_forward.3} parent=135 // pred_check_branch
          %5158 = sbr.rel (%p5156) target = $region152
        $region151: #{segment_encoder_forward.3} parent=135 // pred_region
          %s5159 = sand.u32 %s46, 1
          %s5160 = scalar_lea.sflag [#allocation5], %s5159
          %s5161 = sand.u32 %s625, 1
          %s5162 = smul.addr %s5161, 4
          %s5163 = scalar_lea.vmem [#allocation4], %s5162
          %5164 = dma.done %s5160, 64
        $region152: #{segment_encoder_forward.3} parent=135 // pred_fallthru
          _
        // Predicated region
        $region153: #{segment_encoder_forward.3} parent=135 // pred_check
          %p5165 = pneg %p666
        $region154: #{segment_encoder_forward.3} parent=135 // pred_check_branch
          %5167 = sbr.rel (%p5165) target = $region156
        $region155: #{segment_encoder_forward.3} parent=135 // pred_region
          %s5168 = sand.u32 %s46, 1
          %s5169 = scalar_lea.sflag [#allocation5], %s5168
          %s5170 = sand.u32 %s651, 1
          %s5171 = smul.addr %s5170, 16
          %s5172 = scalar_lea.vmem [#allocation6], %s5171
          %5173 = dma.done %s5169, 256
        $region156: #{segment_encoder_forward.3} parent=135 // pred_fallthru
          _
      $region136: #{segment_encoder_forward.3} parent=5 // pred_fallthru
        _
    $region6: #{segment_encoder_forward.3} parent=1 // loop_footer
      %s44 = sadd.s32 1, %s40
    $region7: #{segment_encoder_forward.3} parent=1 // loop_footer_branch
      %39 = sbr.rel target = $region3
    $region8: #{segment_encoder_forward.3} parent=1 // loop_exit
      _
    %5174 = vsyncpa [#allocation3], 1
    %s5175 = scalar_lea.sflag [#allocation3], 1
    %5176 = vsyncpa %s5175, 1
    %5177 = vsyncpa [#allocation5], 1
    %s5178 = scalar_lea.sflag [#allocation5], 1
    %5179 = vsyncpa %s5178, 1

</llo_original>
